<compile_context>
chip_gen: v7x
topology: tpu7x:2x2x1
jax: 0.10.0
libtpu: 0.0.40
codegen_flags: <defaults>
</compile_context>

<pallas_src>
import functools

import numpy as np
import jax
import jax.numpy as jnp
from jax import lax
from jax.experimental import pallas as pl
from jax.experimental.pallas import tpu as pltpu

NUM_HEADS = 8  # nn.MultiheadAttention(embed_dim=channels, num_heads=8)


# ----------------------------------------------------------------------------
# Fused kernel: channel attention + spatial gate + MHA + identity + mix
# One batch element per grid step, channel-major tokens (C sublanes, L lanes).
# ----------------------------------------------------------------------------
def _fused_attention_kernel(mixw_ref, x_ref, spat_ref,
                            wqkv_ref, bqkv_ref, wo_ref, bo_ref,
                            w1_ref, b1_ref, w2_ref, b2_ref,
                            o_ref, *, num_heads):
    # mixw_ref : SMEM (4,)  softmaxed architecture weights
    # x_ref    : (1, C, L)  input tokens (channel-major)
    # spat_ref : (1, 1, L)  pre-sigmoid 7x7x7 conv of [mean_c, max_c] stats
    # wqkv_ref : (3C, C)    in-projection (Q rows pre-scaled by 1/sqrt(dh))
    # bqkv_ref : (3C, 1)
    # wo_ref   : (C, C), bo_ref: (C, 1)      out-projection
    # w1_ref   : (Cr, C), b1_ref: (Cr, 1)    channel-attention squeeze
    # w2_ref   : (C, Cr), b2_ref: (C, 1)     channel-attention excite
    # o_ref    : (1, C, L)  lane-dense output
    x = x_ref[0].astype(jnp.float32)                                    # (C, L)
    C, L = x.shape
    dh = C // num_heads

    # --- op #0: channel attention gate (AdaptiveAvgPool3d(1) == mean over L)
    pooled = jnp.mean(x, axis=1, keepdims=True)                         # (C, 1)
    h = jnp.dot(w1_ref[...], pooled,
                preferred_element_type=jnp.float32) + b1_ref[...]       # (Cr, 1)
    h = jnp.maximum(h, 0.0)                                             # ReLU
    chan = jax.nn.sigmoid(
        jnp.dot(w2_ref[...], h,
                preferred_element_type=jnp.float32) + b2_ref[...])      # (C, 1)

    # --- op #1: spatial attention gate (conv done in wrapper, sigmoid here)
    spat = jax.nn.sigmoid(spat_ref[0].astype(jnp.float32))              # (1, L)

    # --- op #2: multi-head self-attention, all heads batched on the MXU
    qkv = jnp.dot(wqkv_ref[...], x,
                  preferred_element_type=jnp.float32) + bqkv_ref[...]   # (3C, L)
    q = qkv[:C].reshape(num_heads, dh, L)      # attention scale already folded in
    k = qkv[C:2 * C].reshape(num_heads, dh, L)
    v = qkv[2 * C:].reshape(num_heads, dh, L)
    qt = jnp.swapaxes(q, 1, 2)                 # (nH, L, dh): minor-dim swap only
    # canonical batched matmul: (nH, Lq, dh) x (nH, dh, Lk) -> (nH, Lq, Lk)
    s = lax.dot_general(qt, k, (((2,), (1,)), ((0,), (0,))),
                        preferred_element_type=jnp.float32)
    s = s - jnp.max(s, axis=-1, keepdims=True)
    p = jnp.exp(s)
    p = p * pl.reciprocal(jnp.sum(p, axis=-1, keepdims=True), approx=True)
    # trans_b batched matmul: (nH, dh, Lk) x (nH, Lq, Lk) -> (nH, dh, Lq)
    o = lax.dot_general(v, p, (((2,), (2,)), ((0,), (0,))),
                        preferred_element_type=jnp.float32)
    attn = o.reshape(C, L)                                               # (C, L)
    self_att = jnp.dot(wo_ref[...], attn,
                       preferred_element_type=jnp.float32) + bo_ref[...]  # (C, L)

    # --- softmax-weighted mix of [channel, spatial, self, identity]
    out = (mixw_ref[0] * chan        # (C, 1) broadcast over tokens (N,C,1,1,1)
           + mixw_ref[1] * spat      # (1, L) broadcast over channels (N,1,D,H,W)
           + mixw_ref[2] * self_att
           + mixw_ref[3] * x)        # nn.Identity
    o_ref[0] = out.astype(o_ref.dtype)


# ----------------------------------------------------------------------------
# Wrapper: full SearchableAttentionBlock forward
# ----------------------------------------------------------------------------
def searchable_attention_block(x, arch_weights, params, *, num_heads=NUM_HEADS):
    """x: (N, C, D, H, W) float32, arch_weights: (4,) float32."""
    N, C, D, H, W = x.shape
    L = D * H * W
    dh = C // num_heads
    Cr = params["ca_w1"].shape[0]

    # Channel-major tokens: contiguous reshape of NCDHW (no transpose / copy).
    x_cl = x.reshape(N, C, L)

    # MixedOperation: weights = softmax(arch_weights, dim=0)
    mixw = jax.nn.softmax(arch_weights.astype(jnp.float32), axis=0)

    # --- op #1 prologue: 7x7x7 conv on the 2-channel [mean_c, max_c] stats.
    # TODO(synk): PyTorch's Conv3d(2, 1, 7) cannot take the C-channel input it
    # is handed; applied CBAM-style to the channel mean/max stats as intended.
    stats = jnp.concatenate([jnp.mean(x, axis=1, keepdims=True),
                             jnp.max(x, axis=1, keepdims=True)], axis=1)  # (N,2,D,H,W)
    spat_pre = lax.conv_general_dilated(
        stats, params["spatial_w"].astype(jnp.float32),
        window_strides=(1, 1, 1), padding=((3, 3), (3, 3), (3, 3)),
        dimension_numbers=("NCDHW", "OIDHW", "NCDHW")).reshape(N, 1, L)

    # --- op #2 prep: fold the 1/sqrt(dh) attention scale into the Q rows.
    # TODO(synk): nn.MultiheadAttention is called as op(x) in PyTorch (missing
    # key/value, tuple return); implemented as MHA(x, x, x)[0] over D*H*W tokens.
    scale = 1.0 / float(np.sqrt(dh))
    wqkv = params["wqkv"].astype(jnp.float32).at[:C].multiply(scale)
    bqkv = params["bqkv"].astype(jnp.float32).at[:C].multiply(scale).reshape(3 * C, 1)

    kern = functools.partial(_fused_attention_kernel, num_heads=num_heads)
    out_cl = pl.pallas_call(
        kern,
        out_shape=jax.ShapeDtypeStruct((N, C, L), jnp.float32),
        grid=(N,),
        in_specs=[
            pl.BlockSpec(memory_space=pltpu.SMEM),                 # mixw (4,)
            pl.BlockSpec((1, C, L), lambda b: (b, 0, 0)),          # x tokens
            pl.BlockSpec((1, 1, L), lambda b: (b, 0, 0)),          # spatial conv
            pl.BlockSpec((3 * C, C), lambda b: (0, 0)),            # wqkv
            pl.BlockSpec((3 * C, 1), lambda b: (0, 0)),            # bqkv
            pl.BlockSpec((C, C), lambda b: (0, 0)),                # wo
            pl.BlockSpec((C, 1), lambda b: (0, 0)),                # bo
            pl.BlockSpec((Cr, C), lambda b: (0, 0)),               # ca w1
            pl.BlockSpec((Cr, 1), lambda b: (0, 0)),               # ca b1
            pl.BlockSpec((C, Cr), lambda b: (0, 0)),               # ca w2
            pl.BlockSpec((C, 1), lambda b: (0, 0)),                # ca b2
        ],
        out_specs=pl.BlockSpec((1, C, L), lambda b: (b, 0, 0)),
        compiler_params=pltpu.CompilerParams(
            dimension_semantics=("parallel",),
            vmem_limit_bytes=48 * 1024 * 1024),
    )(mixw, x_cl, spat_pre,
      wqkv, bqkv,
      params["wo"].astype(jnp.float32),
      params["bo"].astype(jnp.float32).reshape(C, 1),
      params["ca_w1"].astype(jnp.float32),
      params["ca_b1"].astype(jnp.float32).reshape(Cr, 1),
      params["ca_w2"].astype(jnp.float32),
      params["ca_b2"].astype(jnp.float32).reshape(C, 1))

    # Channel-major tokens -> NCDHW is again a free reshape.
    return out_cl.reshape(N, C, D, H, W)


# ----------------------------------------------------------------------------
# Pure-JAX reference (same repaired semantics) for a correctness check
# ----------------------------------------------------------------------------
def reference_forward(x, arch_weights, params):
    N, C, D, H, W = x.shape
    L = D * H * W
    mixw = jax.nn.softmax(arch_weights, axis=0)
    x_tok = jnp.transpose(x, (0, 2, 3, 4, 1)).reshape(N, L, C)

    pooled = jnp.mean(x_tok, axis=1)
    h = jax.nn.relu(pooled @ params["ca_w1"].T + params["ca_b1"])
    chan = jax.nn.sigmoid(h @ params["ca_w2"].T + params["ca_b2"])[:, None, :]

    stats = jnp.concatenate(
        [jnp.mean(x, 1, keepdims=True), jnp.max(x, 1, keepdims=True)], 1)
    conv = lax.conv_general_dilated(
        stats, params["spatial_w"], window_strides=(1, 1, 1),
        padding=((3, 3), (3, 3), (3, 3)),
        dimension_numbers=("NCDHW", "OIDHW", "NCDHW"))
    spat = jnp.transpose(jax.nn.sigmoid(conv), (0, 2, 3, 4, 1)).reshape(N, L, 1)

    qkv = x_tok @ params["wqkv"].T + params["bqkv"]
    q, k, v = jnp.split(qkv, 3, axis=-1)
    dh = C // NUM_HEADS
    qh = q.reshape(N, L, NUM_HEADS, dh).transpose(0, 2, 1, 3) / np.sqrt(dh)
    kh = k.reshape(N, L, NUM_HEADS, dh).transpose(0, 2, 1, 3)
    vh = v.reshape(N, L, NUM_HEADS, dh).transpose(0, 2, 1, 3)
    p = jax.nn.softmax(jnp.einsum("nhqd,nhkd->nhqk", qh, kh), axis=-1)
    o = jnp.einsum("nhqk,nhkd->nhqd", p, vh).transpose(0, 2, 1, 3).reshape(N, L, C)
    self_att = o @ params["wo"].T + params["bo"]

    out = mixw[0] * chan + mixw[1] * spat + mixw[2] * self_att + mixw[3] * x_tok
    return jnp.transpose(out.reshape(N, D, H, W, C), (0, 4, 1, 2, 3))


if __name__ == "__main__":
    N, C, D, H, W = 2, 16, 4, 8, 8        # channels=16 so channels//16 >= 1, 8 | C
    Cr = max(C // 16, 1)

    key = jax.random.PRNGKey(0)
    ks = jax.random.split(key, 12)
    x = jax.random.normal(ks[0], (N, C, D, H, W), jnp.float32)
    arch_weights = jax.random.normal(ks[1], (4,), jnp.float32)

    params = {
        # channel attention: Conv3d(C, C//16, 1) and Conv3d(C//16, C, 1) as dense
        "ca_w1": jax.random.normal(ks[2], (Cr, C), jnp.float32) * 0.1,
        "ca_b1": jax.random.normal(ks[3], (Cr,), jnp.float32) * 0.1,
        "ca_w2": jax.random.normal(ks[4], (C, Cr), jnp.float32) * 0.1,
        "ca_b2": jax.random.normal(ks[5], (C,), jnp.float32) * 0.1,
        # spatial attention: Conv3d(2, 1, 7, padding=3, bias=False)
        "spatial_w": jax.random.normal(ks[6], (1, 2, 7, 7, 7), jnp.float32) * 0.05,
        # nn.MultiheadAttention(embed_dim=C, num_heads=8)
        "wqkv": jax.random.normal(ks[7], (3 * C, C), jnp.float32) * 0.1,
        "bqkv": jax.random.normal(ks[8], (3 * C,), jnp.float32) * 0.1,
        "wo": jax.random.normal(ks[9], (C, C), jnp.float32) * 0.1,
        "bo": jax.random.normal(ks[10], (C,), jnp.float32) * 0.1,
    }

    out = jax.jit(searchable_attention_block)(x, arch_weights, params)
    out = jax.block_until_ready(out)

    ref = jax.block_until_ready(reference_forward(x, arch_weights, params))
    # approx-reciprocal softmax -> slightly looser tolerances than exact f32
    np.testing.assert_allclose(np.asarray(out), np.asarray(ref), rtol=2e-3, atol=2e-3)

    print("KERNEL_OK")
</pallas_src>

<mosaic_0001>
module attributes {stable_mosaic.version = 11 : i64} {
  func.func @_fused_attention_kernel(%arg0: i32, %arg1: memref<4xf32, #tpu.memory_space<smem>>, %arg2: memref<1x16x256xf32, #tpu.memory_space<vmem>>, %arg3: memref<1x1x256xf32, #tpu.memory_space<vmem>>, %arg4: memref<48x16xf32, #tpu.memory_space<vmem>>, %arg5: memref<48x1xf32, #tpu.memory_space<vmem>>, %arg6: memref<16x16xf32, #tpu.memory_space<vmem>>, %arg7: memref<16x1xf32, #tpu.memory_space<vmem>>, %arg8: memref<1x16xf32, #tpu.memory_space<vmem>>, %arg9: memref<1x1xf32, #tpu.memory_space<vmem>>, %arg10: memref<16x1xf32, #tpu.memory_space<vmem>>, %arg11: memref<16x1xf32, #tpu.memory_space<vmem>>, %arg12: memref<1x16x256xf32, #tpu.memory_space<vmem>>) attributes {dimension_semantics = [#tpu.dimension_semantics<parallel>], iteration_bounds = array<i64: 2>, scalar_prefetch = 0 : i64, scratch_operands = 0 : i64, tpu.core_type = #tpu.core_type<tc>, window_params = [{transform_indices = @transform_0, window_bounds = array<i64: 4>}, {transform_indices = @transform_1, window_bounds = array<i64: 1, 16, 256>}, {transform_indices = @transform_2, window_bounds = array<i64: 1, 1, 256>}, {pipeline_mode = #tpu.pipeline_mode<synchronous>, transform_indices = @transform_3, window_bounds = array<i64: 48, 16>}, {pipeline_mode = #tpu.pipeline_mode<synchronous>, transform_indices = @transform_4, window_bounds = array<i64: 48, 1>}, {pipeline_mode = #tpu.pipeline_mode<synchronous>, transform_indices = @transform_5, window_bounds = array<i64: 16, 16>}, {pipeline_mode = #tpu.pipeline_mode<synchronous>, transform_indices = @transform_6, window_bounds = array<i64: 16, 1>}, {pipeline_mode = #tpu.pipeline_mode<synchronous>, transform_indices = @transform_7, window_bounds = array<i64: 1, 16>}, {pipeline_mode = #tpu.pipeline_mode<synchronous>, transform_indices = @transform_8, window_bounds = array<i64: 1, 1>}, {pipeline_mode = #tpu.pipeline_mode<synchronous>, transform_indices = @transform_9, window_bounds = array<i64: 16, 1>}, {pipeline_mode = #tpu.pipeline_mode<synchronous>, transform_indices = @transform_10, window_bounds = array<i64: 16, 1>}, {transform_indices = @transform_11, window_bounds = array<i64: 1, 16, 256>}]} {
    %c0 = arith.constant 0 : index
    %c0_0 = arith.constant 0 : index
    %c0_1 = arith.constant 0 : index
    %0 = vector.load %arg2[%c0, %c0_0, %c0_1] : memref<1x16x256xf32, #tpu.memory_space<vmem>>, vector<1x16x256xf32>
    %1 = vector.shape_cast %0 : vector<1x16x256xf32> to vector<16x256xf32>
    %cst = arith.constant dense<0.000000e+00> : vector<16xf32>
    %2 = vector.multi_reduction <add>, %1, %cst [1] : vector<16x256xf32> to vector<16xf32>
    %3 = vector.shape_cast %2 : vector<16xf32> to vector<16x1xf32>
    %cst_2 = arith.constant 2.560000e+02 : f32
    %4 = vector.broadcast %cst_2 : f32 to vector<16x1xf32>
    %5 = arith.divf %3, %4 : vector<16x1xf32>
    %c0_3 = arith.constant 0 : index
    %c0_4 = arith.constant 0 : index
    %6 = vector.load %arg8[%c0_3, %c0_4] : memref<1x16xf32, #tpu.memory_space<vmem>>, vector<1x16xf32>
    %cst_5 = arith.constant dense<0.000000e+00> : vector<1x1xf32>
    %7 = tpu.matmul %6, %5, %cst_5 {dimension_numbers = #tpu.dot_dimension_numbers<[1], [0], [0], [1], [0, 0, 1, 1], [], []>} : vector<1x16xf32>, vector<16x1xf32>, vector<1x1xf32> -> vector<1x1xf32>
    %c0_6 = arith.constant 0 : index
    %c0_7 = arith.constant 0 : index
    %8 = vector.load %arg9[%c0_6, %c0_7] : memref<1x1xf32, #tpu.memory_space<vmem>>, vector<1x1xf32>
    %9 = arith.addf %7, %8 : vector<1x1xf32>
    %cst_8 = arith.constant 0.000000e+00 : f32
    %10 = vector.broadcast %cst_8 : f32 to vector<1x1xf32>
    %11 = arith.maximumf %9, %10 : vector<1x1xf32>
    %c0_9 = arith.constant 0 : index
    %c0_10 = arith.constant 0 : index
    %12 = vector.load %arg10[%c0_9, %c0_10] : memref<16x1xf32, #tpu.memory_space<vmem>>, vector<16x1xf32>
    %cst_11 = arith.constant dense<0.000000e+00> : vector<16x1xf32>
    %13 = tpu.matmul %12, %11, %cst_11 {dimension_numbers = #tpu.dot_dimension_numbers<[1], [0], [0], [1], [0, 0, 1, 1], [], []>} : vector<16x1xf32>, vector<1x1xf32>, vector<16x1xf32> -> vector<16x1xf32>
    %c0_12 = arith.constant 0 : index
    %c0_13 = arith.constant 0 : index
    %14 = vector.load %arg11[%c0_12, %c0_13] : memref<16x1xf32, #tpu.memory_space<vmem>>, vector<16x1xf32>
    %15 = arith.addf %13, %14 : vector<16x1xf32>
    %16 = arith.negf %15 : vector<16x1xf32>
    %17 = math.exp %16 : vector<16x1xf32>
    %cst_14 = arith.constant 1.000000e+00 : f32
    %18 = vector.broadcast %cst_14 : f32 to vector<16x1xf32>
    %19 = arith.addf %18, %17 : vector<16x1xf32>
    %20 = arith.divf %18, %19 : vector<16x1xf32>
    %c0_15 = arith.constant 0 : index
    %c0_16 = arith.constant 0 : index
    %c0_17 = arith.constant 0 : index
    %21 = vector.load %arg3[%c0_15, %c0_16, %c0_17] : memref<1x1x256xf32, #tpu.memory_space<vmem>>, vector<1x1x256xf32>
    %22 = vector.shape_cast %21 : vector<1x1x256xf32> to vector<1x256xf32>
    %23 = arith.negf %22 : vector<1x256xf32>
    %24 = math.exp %23 : vector<1x256xf32>
    %cst_18 = arith.constant 1.000000e+00 : f32
    %25 = vector.broadcast %cst_18 : f32 to vector<1x256xf32>
    %26 = arith.addf %25, %24 : vector<1x256xf32>
    %27 = arith.divf %25, %26 : vector<1x256xf32>
    %c0_19 = arith.constant 0 : index
    %c0_20 = arith.constant 0 : index
    %28 = vector.load %arg4[%c0_19, %c0_20] : memref<48x16xf32, #tpu.memory_space<vmem>>, vector<48x16xf32>
    %cst_21 = arith.constant dense<0.000000e+00> : vector<48x256xf32>
    %29 = tpu.matmul %28, %1, %cst_21 {dimension_numbers = #tpu.dot_dimension_numbers<[1], [0], [0], [1], [0, 0, 1, 1], [], []>} : vector<48x16xf32>, vector<16x256xf32>, vector<48x256xf32> -> vector<48x256xf32>
    %c0_22 = arith.constant 0 : index
    %c0_23 = arith.constant 0 : index
    %30 = vector.load %arg5[%c0_22, %c0_23] : memref<48x1xf32, #tpu.memory_space<vmem>>, vector<48x1xf32>
    %31 = vector.broadcast %30 : vector<48x1xf32> to vector<48x256xf32>
    %32 = arith.addf %29, %31 : vector<48x256xf32>
    %33 = vector.extract_strided_slice %32 {offsets = [0, 0], sizes = [16, 256], strides = [1, 1]} : vector<48x256xf32> to vector<16x256xf32>
    %34 = vector.shape_cast %33 : vector<16x256xf32> to vector<8x2x256xf32>
    %35 = vector.extract_strided_slice %32 {offsets = [16, 0], sizes = [16, 256], strides = [1, 1]} : vector<48x256xf32> to vector<16x256xf32>
    %36 = vector.shape_cast %35 : vector<16x256xf32> to vector<8x2x256xf32>
    %37 = vector.extract_strided_slice %32 {offsets = [32, 0], sizes = [16, 256], strides = [1, 1]} : vector<48x256xf32> to vector<16x256xf32>
    %38 = vector.shape_cast %37 : vector<16x256xf32> to vector<8x2x256xf32>
    %39 = tpu.transpose %34, [0, 2, 1] : vector<8x2x256xf32> -> vector<8x256x2xf32>
    %cst_24 = arith.constant dense<0.000000e+00> : vector<8x256x256xf32>
    %40 = tpu.matmul %39, %36, %cst_24 {dimension_numbers = #tpu.dot_dimension_numbers<[2], [1], [1], [2], [0, 0, 0, 1, 1, 2], [0], [0]>} : vector<8x256x2xf32>, vector<8x2x256xf32>, vector<8x256x256xf32> -> vector<8x256x256xf32>
    %cst_25 = arith.constant dense<0xFF800000> : vector<8x256xf32>
    %41 = vector.multi_reduction <maximumf>, %40, %cst_25 [2] : vector<8x256x256xf32> to vector<8x256xf32>
    %42 = vector.shape_cast %41 : vector<8x256xf32> to vector<8x256x1xf32>
    %43 = vector.broadcast %42 : vector<8x256x1xf32> to vector<8x256x256xf32>
    %44 = arith.subf %40, %43 : vector<8x256x256xf32>
    %45 = math.exp %44 : vector<8x256x256xf32>
    %cst_26 = arith.constant dense<0.000000e+00> : vector<8x256xf32>
    %46 = vector.multi_reduction <add>, %45, %cst_26 [2] : vector<8x256x256xf32> to vector<8x256xf32>
    %47 = vector.shape_cast %46 : vector<8x256xf32> to vector<8x256x1xf32>
    %48 = tpu.reciprocal %47 {approx = true} : vector<8x256x1xf32> -> vector<8x256x1xf32>
    %49 = vector.broadcast %48 : vector<8x256x1xf32> to vector<8x256x256xf32>
    %50 = arith.mulf %45, %49 : vector<8x256x256xf32>
    %cst_27 = arith.constant dense<0.000000e+00> : vector<8x2x256xf32>
    %51 = tpu.matmul %38, %50, %cst_27 {dimension_numbers = #tpu.dot_dimension_numbers<[2], [2], [1], [1], [0, 0, 0, 1, 1, 1], [0], [0]>} : vector<8x2x256xf32>, vector<8x256x256xf32>, vector<8x2x256xf32> -> vector<8x2x256xf32>
    %52 = vector.shape_cast %51 : vector<8x2x256xf32> to vector<16x256xf32>
    %c0_28 = arith.constant 0 : index
    %c0_29 = arith.constant 0 : index
    %53 = vector.load %arg6[%c0_28, %c0_29] : memref<16x16xf32, #tpu.memory_space<vmem>>, vector<16x16xf32>
    %cst_30 = arith.constant dense<0.000000e+00> : vector<16x256xf32>
    %54 = tpu.matmul %53, %52, %cst_30 {dimension_numbers = #tpu.dot_dimension_numbers<[1], [0], [0], [1], [0, 0, 1, 1], [], []>} : vector<16x16xf32>, vector<16x256xf32>, vector<16x256xf32> -> vector<16x256xf32>
    %c0_31 = arith.constant 0 : index
    %c0_32 = arith.constant 0 : index
    %55 = vector.load %arg7[%c0_31, %c0_32] : memref<16x1xf32, #tpu.memory_space<vmem>>, vector<16x1xf32>
    %56 = vector.broadcast %55 : vector<16x1xf32> to vector<16x256xf32>
    %57 = arith.addf %54, %56 : vector<16x256xf32>
    %c0_33 = arith.constant 0 : index
    %58 = memref.load %arg1[%c0_33] : memref<4xf32, #tpu.memory_space<smem>>
    %59 = vector.broadcast %58 : f32 to vector<16x1xf32>
    %60 = arith.mulf %59, %20 : vector<16x1xf32>
    %c1 = arith.constant 1 : index
    %61 = memref.load %arg1[%c1] : memref<4xf32, #tpu.memory_space<smem>>
    %62 = vector.broadcast %61 : f32 to vector<1x256xf32>
    %63 = arith.mulf %62, %27 : vector<1x256xf32>
    %64 = vector.broadcast %60 : vector<16x1xf32> to vector<16x256xf32>
    %65 = vector.broadcast %63 : vector<1x256xf32> to vector<16x256xf32>
    %66 = arith.addf %64, %65 : vector<16x256xf32>
    %c2 = arith.constant 2 : index
    %67 = memref.load %arg1[%c2] : memref<4xf32, #tpu.memory_space<smem>>
    %68 = vector.broadcast %67 : f32 to vector<16x256xf32>
    %69 = arith.mulf %68, %57 : vector<16x256xf32>
    %70 = arith.addf %66, %69 : vector<16x256xf32>
    %c3 = arith.constant 3 : index
    %71 = memref.load %arg1[%c3] : memref<4xf32, #tpu.memory_space<smem>>
    %72 = vector.broadcast %71 : f32 to vector<16x256xf32>
    %73 = arith.mulf %72, %1 : vector<16x256xf32>
    %74 = arith.addf %70, %73 : vector<16x256xf32>
    %c0_34 = arith.constant 0 : index
    %c0_35 = arith.constant 0 : index
    %c0_36 = arith.constant 0 : index
    %75 = vector.load %arg12[%c0_34, %c0_35, %c0_36] : memref<1x16x256xf32, #tpu.memory_space<vmem>>, vector<1x16x256xf32>
    %76 = vector.shape_cast %75 : vector<1x16x256xf32> to vector<16x256xf32>
    %77 = vector.shape_cast %74 : vector<16x256xf32> to vector<1x16x256xf32>
    tpu.vector_store %arg12[%c0_34, %c0_35, %c0_36], %77 {strides = array<i32>} : memref<1x16x256xf32, #tpu.memory_space<vmem>>, vector<1x16x256xf32>,
    return
  }
  func.func @transform_0(%arg0: i32) -> i32 {
    %c0_i32 = arith.constant 0 : i32
    %c0_i32_0 = arith.constant 0 : i32
    return %c0_i32 : i32
  }
  func.func @transform_1(%arg0: i32) -> (i32, i32, i32) {
    %c0_i32 = arith.constant 0 : i32
    %c0_i32_0 = arith.constant 0 : i32
    %c0_i32_1 = arith.constant 0 : i32
    return %arg0, %c0_i32, %c0_i32_0 : i32, i32, i32
  }
  func.func @transform_2(%arg0: i32) -> (i32, i32, i32) {
    %c0_i32 = arith.constant 0 : i32
    %c0_i32_0 = arith.constant 0 : i32
    %c0_i32_1 = arith.constant 0 : i32
    return %arg0, %c0_i32, %c0_i32_0 : i32, i32, i32
  }
  func.func @transform_3(%arg0: i32) -> (i32, i32) {
    %c0_i32 = arith.constant 0 : i32
    %c0_i32_0 = arith.constant 0 : i32
    %c0_i32_1 = arith.constant 0 : i32
    return %c0_i32, %c0_i32_0 : i32, i32
  }
  func.func @transform_4(%arg0: i32) -> (i32, i32) {
    %c0_i32 = arith.constant 0 : i32
    %c0_i32_0 = arith.constant 0 : i32
    %c0_i32_1 = arith.constant 0 : i32
    return %c0_i32, %c0_i32_0 : i32, i32
  }
  func.func @transform_5(%arg0: i32) -> (i32, i32) {
    %c0_i32 = arith.constant 0 : i32
    %c0_i32_0 = arith.constant 0 : i32
    %c0_i32_1 = arith.constant 0 : i32
    return %c0_i32, %c0_i32_0 : i32, i32
  }
  func.func @transform_6(%arg0: i32) -> (i32, i32) {
    %c0_i32 = arith.constant 0 : i32
    %c0_i32_0 = arith.constant 0 : i32
    %c0_i32_1 = arith.constant 0 : i32
    return %c0_i32, %c0_i32_0 : i32, i32
  }
  func.func @transform_7(%arg0: i32) -> (i32, i32) {
    %c0_i32 = arith.constant 0 : i32
    %c0_i32_0 = arith.constant 0 : i32
    %c0_i32_1 = arith.constant 0 : i32
    return %c0_i32, %c0_i32_0 : i32, i32
  }
  func.func @transform_8(%arg0: i32) -> (i32, i32) {
    %c0_i32 = arith.constant 0 : i32
    %c0_i32_0 = arith.constant 0 : i32
    %c0_i32_1 = arith.constant 0 : i32
    return %c0_i32, %c0_i32_0 : i32, i32
  }
  func.func @transform_9(%arg0: i32) -> (i32, i32) {
    %c0_i32 = arith.constant 0 : i32
    %c0_i32_0 = arith.constant 0 : i32
    %c0_i32_1 = arith.constant 0 : i32
    return %c0_i32, %c0_i32_0 : i32, i32
  }
  func.func @transform_10(%arg0: i32) -> (i32, i32) {
    %c0_i32 = arith.constant 0 : i32
    %c0_i32_0 = arith.constant 0 : i32
    %c0_i32_1 = arith.constant 0 : i32
    return %c0_i32, %c0_i32_0 : i32, i32
  }
  func.func @transform_11(%arg0: i32) -> (i32, i32, i32) {
    %c0_i32 = arith.constant 0 : i32
    %c0_i32_0 = arith.constant 0 : i32
    %c0_i32_1 = arith.constant 0 : i32
    return %arg0, %c0_i32, %c0_i32_0 : i32, i32, i32
  }
}

</mosaic_0001>

<llo_original>
// kernel: reverse
$region0: #{reverse}
  %s0 = inlined_call_operand.vmem [shape: f32[1,2,7,7,7], index: 0, kind: input, shape index: {}]
  %s1 = inlined_call_operand.vmem [shape: bf16[1,2,7,7,7], index: 1, kind: output, shape index: {}]
  %v2 = vlaneseq
  %v3 = vsub.s32 6, %v2
  %4 = vset.pattern.permute.xlu0 %v3
  $region1: #{reverse} parent=0
    #allocation0 [shape = 'u8[200704]{0}', space=vmem, size = 0x31000, scoped, tag = 'operand span for operand 0']
    #allocation1 [shape = 'u8[50176]{0}', space=vmem, size = 0xc400, scoped, tag = 'packed  for operand 0']
    #allocation2 [shape = 'u8[200704]{0}', space=vmem, size = 0x31000, scoped, tag = 'operand span for operand 1']
    #allocation3 [shape = 'u8[25088]{0}', space=vmem, size = 0x6400, scoped, tag = 'packed  for operand 1']
    // Predicated region
    $region2: #{reverse} parent=1 // pred_check
      _
    $region3: #{reverse} parent=1 // pred_check_branch
      %6 = sbr.rel (0) target = $region5
    $region4: #{reverse} parent=1 // pred_region
      // Predicated region
      $region6: #{reverse} parent=4 // pred_check
        _
      $region7: #{reverse} parent=4 // pred_check_branch
        %8 = sbr.rel target = $region9
      $region8: #{reverse} parent=4 // pred_region
        // Predicated region
        $region21: #{reverse} parent=8 // pred_check
          _
        $region22: #{reverse} parent=8 // pred_check_branch
          %119 = sbr.rel (0) target = $region24
        $region23: #{reverse} parent=8 // pred_region
          loop: start=0, step=1, limit=1
          $region25: #{reverse} parent=23 // loop_pre_header
            _
          $region26: #{reverse} parent=23 // loop_header
            %s121 = sphi 0, %s125
            %p122 = scmp.ge.s32.totalorder %s121, 1
            %s126 = sphi %s0, %s0
            %s127 = sphi [#allocation1], [#allocation1]
          $region27: #{reverse} parent=23 // loop_header_branch
            %124 = sbr.rel (%p122) target = $region31
          $region28: #{reverse} parent=23 // loop_body
            _
          $region29: #{reverse} parent=23 // loop_footer
            %s125 = sadd.s32 1, %s121
          $region30: #{reverse} parent=23 // loop_footer_branch
            %120 = sbr.rel target = $region26
          $region31: #{reverse} parent=23 // loop_exit
            _
          loop: start=0, step=1, limit=1
          $region32: #{reverse} parent=23 // loop_pre_header
            _
          $region33: #{reverse} parent=23 // loop_header
            %s130 = sphi 0, %s134
            %p131 = scmp.ge.s32.totalorder %s130, 1
            %s135 = sphi %s0, %s0
            %s136 = sphi [#allocation1], [#allocation1]
          $region34: #{reverse} parent=23 // loop_header_branch
            %133 = sbr.rel (%p131) target = $region38
          $region35: #{reverse} parent=23 // loop_body
            %v137 = vld [vmem:[%s135] sm:$0x3]
            %138 = vst [vmem:[%s136] sm:$0x3] %v137
            %v139 = vld [vmem:[%s135 + $0x2] sm:$0x3]
            %140 = vst [vmem:[%s136 + $0x2] sm:$0x3] %v139
            %v141 = vld [vmem:[%s135 + $0x4] sm:$0x3]
            %142 = vst [vmem:[%s136 + $0x4] sm:$0x3] %v141
            %v143 = vld [vmem:[%s135 + $0x6] sm:$0x3]
            %144 = vst [vmem:[%s136 + $0x6] sm:$0x3] %v143
            %v145 = vld [vmem:[%s135 + $0x8] sm:$0x3]
            %146 = vst [vmem:[%s136 + $0x8] sm:$0x3] %v145
            %v147 = vld [vmem:[%s135 + $0xa] sm:$0x3]
            %148 = vst [vmem:[%s136 + $0xa] sm:$0x3] %v147
            %v149 = vld [vmem:[%s135 + $0xc] sm:$0x3]
            %150 = vst [vmem:[%s136 + $0xc] sm:$0x3] %v149
            %v151 = vld [vmem:[%s135 + $0xe] sm:$0x3]
            %152 = vst [vmem:[%s136 + $0xe] sm:$0x3] %v151
            %v153 = vld [vmem:[%s135 + $0x10] sm:$0x3]
            %154 = vst [vmem:[%s136 + $0x10] sm:$0x3] %v153
            %v155 = vld [vmem:[%s135 + $0x12] sm:$0x3]
            %156 = vst [vmem:[%s136 + $0x12] sm:$0x3] %v155
            %v157 = vld [vmem:[%s135 + $0x14] sm:$0x3]
            %158 = vst [vmem:[%s136 + $0x14] sm:$0x3] %v157
            %v159 = vld [vmem:[%s135 + $0x16] sm:$0x3]
            %160 = vst [vmem:[%s136 + $0x16] sm:$0x3] %v159
            %v161 = vld [vmem:[%s135 + $0x18] sm:$0x3]
            %162 = vst [vmem:[%s136 + $0x18] sm:$0x3] %v161
            %v163 = vld [vmem:[%s135 + $0x1a] sm:$0x3]
            %164 = vst [vmem:[%s136 + $0x1a] sm:$0x3] %v163
            %v165 = vld [vmem:[%s135 + $0x1c] sm:$0x3]
            %166 = vst [vmem:[%s136 + $0x1c] sm:$0x3] %v165
            %v167 = vld [vmem:[%s135 + $0x1e] sm:$0x3]
            %168 = vst [vmem:[%s136 + $0x1e] sm:$0x3] %v167
            %v169 = vld [vmem:[%s135 + $0x20] sm:$0x3]
            %170 = vst [vmem:[%s136 + $0x20] sm:$0x3] %v169
            %v171 = vld [vmem:[%s135 + $0x22] sm:$0x3]
            %172 = vst [vmem:[%s136 + $0x22] sm:$0x3] %v171
            %v173 = vld [vmem:[%s135 + $0x24] sm:$0x3]
            %174 = vst [vmem:[%s136 + $0x24] sm:$0x3] %v173
            %v175 = vld [vmem:[%s135 + $0x26] sm:$0x3]
            %176 = vst [vmem:[%s136 + $0x26] sm:$0x3] %v175
            %v177 = vld [vmem:[%s135 + $0x28] sm:$0x3]
            %178 = vst [vmem:[%s136 + $0x28] sm:$0x3] %v177
            %v179 = vld [vmem:[%s135 + $0x2a] sm:$0x3]
            %180 = vst [vmem:[%s136 + $0x2a] sm:$0x3] %v179
            %v181 = vld [vmem:[%s135 + $0x2c] sm:$0x3]
            %182 = vst [vmem:[%s136 + $0x2c] sm:$0x3] %v181
            %v183 = vld [vmem:[%s135 + $0x2e] sm:$0x3]
            %184 = vst [vmem:[%s136 + $0x2e] sm:$0x3] %v183
            %v185 = vld [vmem:[%s135 + $0x30] sm:$0x3]
            %186 = vst [vmem:[%s136 + $0x30] sm:$0x3] %v185
            %v187 = vld [vmem:[%s135 + $0x32] sm:$0x3]
            %188 = vst [vmem:[%s136 + $0x32] sm:$0x3] %v187
            %v189 = vld [vmem:[%s135 + $0x34] sm:$0x3]
            %190 = vst [vmem:[%s136 + $0x34] sm:$0x3] %v189
            %v191 = vld [vmem:[%s135 + $0x36] sm:$0x3]
            %192 = vst [vmem:[%s136 + $0x36] sm:$0x3] %v191
            %v193 = vld [vmem:[%s135 + $0x38] sm:$0x3]
            %194 = vst [vmem:[%s136 + $0x38] sm:$0x3] %v193
            %v195 = vld [vmem:[%s135 + $0x3a] sm:$0x3]
            %196 = vst [vmem:[%s136 + $0x3a] sm:$0x3] %v195
            %v197 = vld [vmem:[%s135 + $0x3c] sm:$0x3]
            %198 = vst [vmem:[%s136 + $0x3c] sm:$0x3] %v197
            %v199 = vld [vmem:[%s135 + $0x3e] sm:$0x3]
            %200 = vst [vmem:[%s136 + $0x3e] sm:$0x3] %v199
            %v201 = vld [vmem:[%s135 + $0x40] sm:$0x3]
            %202 = vst [vmem:[%s136 + $0x40] sm:$0x3] %v201
            %v203 = vld [vmem:[%s135 + $0x42] sm:$0x3]
            %204 = vst [vmem:[%s136 + $0x42] sm:$0x3] %v203
            %v205 = vld [vmem:[%s135 + $0x44] sm:$0x3]
            %206 = vst [vmem:[%s136 + $0x44] sm:$0x3] %v205
            %v207 = vld [vmem:[%s135 + $0x46] sm:$0x3]
            %208 = vst [vmem:[%s136 + $0x46] sm:$0x3] %v207
            %v209 = vld [vmem:[%s135 + $0x48] sm:$0x3]
            %210 = vst [vmem:[%s136 + $0x48] sm:$0x3] %v209
            %v211 = vld [vmem:[%s135 + $0x4a] sm:$0x3]
            %212 = vst [vmem:[%s136 + $0x4a] sm:$0x3] %v211
            %v213 = vld [vmem:[%s135 + $0x4c] sm:$0x3]
            %214 = vst [vmem:[%s136 + $0x4c] sm:$0x3] %v213
            %v215 = vld [vmem:[%s135 + $0x4e] sm:$0x3]
            %216 = vst [vmem:[%s136 + $0x4e] sm:$0x3] %v215
            %v217 = vld [vmem:[%s135 + $0x50] sm:$0x3]
            %218 = vst [vmem:[%s136 + $0x50] sm:$0x3] %v217
            %v219 = vld [vmem:[%s135 + $0x52] sm:$0x3]
            %220 = vst [vmem:[%s136 + $0x52] sm:$0x3] %v219
            %v221 = vld [vmem:[%s135 + $0x54] sm:$0x3]
            %222 = vst [vmem:[%s136 + $0x54] sm:$0x3] %v221
            %v223 = vld [vmem:[%s135 + $0x56] sm:$0x3]
            %224 = vst [vmem:[%s136 + $0x56] sm:$0x3] %v223
            %v225 = vld [vmem:[%s135 + $0x58] sm:$0x3]
            %226 = vst [vmem:[%s136 + $0x58] sm:$0x3] %v225
            %v227 = vld [vmem:[%s135 + $0x5a] sm:$0x3]
            %228 = vst [vmem:[%s136 + $0x5a] sm:$0x3] %v227
            %v229 = vld [vmem:[%s135 + $0x5c] sm:$0x3]
            %230 = vst [vmem:[%s136 + $0x5c] sm:$0x3] %v229
            %v231 = vld [vmem:[%s135 + $0x5e] sm:$0x3]
            %232 = vst [vmem:[%s136 + $0x5e] sm:$0x3] %v231
            %v233 = vld [vmem:[%s135 + $0x60] sm:$0x3]
            %234 = vst [vmem:[%s136 + $0x60] sm:$0x3] %v233
          $region36: #{reverse} parent=23 // loop_footer
            %s134 = sadd.s32 1, %s130
          $region37: #{reverse} parent=23 // loop_footer_branch
            %129 = sbr.rel target = $region33
          $region38: #{reverse} parent=23 // loop_exit
            _
        $region24: #{reverse} parent=8 // pred_fallthru
          _
      $region9: #{reverse} parent=4 // pred_fallthru
        _
      // Predicated region
      $region10: #{reverse} parent=4 // pred_check
        _
      $region11: #{reverse} parent=4 // pred_check_branch
        %10 = sbr.rel (0) target = $region13
      $region12: #{reverse} parent=4 // pred_region
        loop: start=0, step=1, limit=1
        $region14: #{reverse} parent=12 // loop_pre_header
          _
        $region15: #{reverse} parent=12 // loop_header
          %s13 = sphi 0, %s17
          %p14 = scmp.ge.s32.totalorder %s13, 1
          %s18 = sphi %s0, %s0
          %s19 = sphi [#allocation1], [#allocation1]
        $region16: #{reverse} parent=12 // loop_header_branch
          %16 = sbr.rel (%p14) target = $region20
        $region17: #{reverse} parent=12 // loop_body
          %v20 = vld [vmem:[%s18] sm:$0x3]
          %21 = vst [vmem:[%s19] sm:$0x3] %v20
          %v22 = vld [vmem:[%s18 + $0x2] sm:$0x3]
          %23 = vst [vmem:[%s19 + $0x2] sm:$0x3] %v22
          %v24 = vld [vmem:[%s18 + $0x4] sm:$0x3]
          %25 = vst [vmem:[%s19 + $0x4] sm:$0x3] %v24
          %v26 = vld [vmem:[%s18 + $0x6] sm:$0x3]
          %27 = vst [vmem:[%s19 + $0x6] sm:$0x3] %v26
          %v28 = vld [vmem:[%s18 + $0x8] sm:$0x3]
          %29 = vst [vmem:[%s19 + $0x8] sm:$0x3] %v28
          %v30 = vld [vmem:[%s18 + $0xa] sm:$0x3]
          %31 = vst [vmem:[%s19 + $0xa] sm:$0x3] %v30
          %v32 = vld [vmem:[%s18 + $0xc] sm:$0x3]
          %33 = vst [vmem:[%s19 + $0xc] sm:$0x3] %v32
          %v34 = vld [vmem:[%s18 + $0xe] sm:$0x3]
          %35 = vst [vmem:[%s19 + $0xe] sm:$0x3] %v34
          %v36 = vld [vmem:[%s18 + $0x10] sm:$0x3]
          %37 = vst [vmem:[%s19 + $0x10] sm:$0x3] %v36
          %v38 = vld [vmem:[%s18 + $0x12] sm:$0x3]
          %39 = vst [vmem:[%s19 + $0x12] sm:$0x3] %v38
          %v40 = vld [vmem:[%s18 + $0x14] sm:$0x3]
          %41 = vst [vmem:[%s19 + $0x14] sm:$0x3] %v40
          %v42 = vld [vmem:[%s18 + $0x16] sm:$0x3]
          %43 = vst [vmem:[%s19 + $0x16] sm:$0x3] %v42
          %v44 = vld [vmem:[%s18 + $0x18] sm:$0x3]
          %45 = vst [vmem:[%s19 + $0x18] sm:$0x3] %v44
          %v46 = vld [vmem:[%s18 + $0x1a] sm:$0x3]
          %47 = vst [vmem:[%s19 + $0x1a] sm:$0x3] %v46
          %v48 = vld [vmem:[%s18 + $0x1c] sm:$0x3]
          %49 = vst [vmem:[%s19 + $0x1c] sm:$0x3] %v48
          %v50 = vld [vmem:[%s18 + $0x1e] sm:$0x3]
          %51 = vst [vmem:[%s19 + $0x1e] sm:$0x3] %v50
          %v52 = vld [vmem:[%s18 + $0x20] sm:$0x3]
          %53 = vst [vmem:[%s19 + $0x20] sm:$0x3] %v52
          %v54 = vld [vmem:[%s18 + $0x22] sm:$0x3]
          %55 = vst [vmem:[%s19 + $0x22] sm:$0x3] %v54
          %v56 = vld [vmem:[%s18 + $0x24] sm:$0x3]
          %57 = vst [vmem:[%s19 + $0x24] sm:$0x3] %v56
          %v58 = vld [vmem:[%s18 + $0x26] sm:$0x3]
          %59 = vst [vmem:[%s19 + $0x26] sm:$0x3] %v58
          %v60 = vld [vmem:[%s18 + $0x28] sm:$0x3]
          %61 = vst [vmem:[%s19 + $0x28] sm:$0x3] %v60
          %v62 = vld [vmem:[%s18 + $0x2a] sm:$0x3]
          %63 = vst [vmem:[%s19 + $0x2a] sm:$0x3] %v62
          %v64 = vld [vmem:[%s18 + $0x2c] sm:$0x3]
          %65 = vst [vmem:[%s19 + $0x2c] sm:$0x3] %v64
          %v66 = vld [vmem:[%s18 + $0x2e] sm:$0x3]
          %67 = vst [vmem:[%s19 + $0x2e] sm:$0x3] %v66
          %v68 = vld [vmem:[%s18 + $0x30] sm:$0x3]
          %69 = vst [vmem:[%s19 + $0x30] sm:$0x3] %v68
          %v70 = vld [vmem:[%s18 + $0x32] sm:$0x3]
          %71 = vst [vmem:[%s19 + $0x32] sm:$0x3] %v70
          %v72 = vld [vmem:[%s18 + $0x34] sm:$0x3]
          %73 = vst [vmem:[%s19 + $0x34] sm:$0x3] %v72
          %v74 = vld [vmem:[%s18 + $0x36] sm:$0x3]
          %75 = vst [vmem:[%s19 + $0x36] sm:$0x3] %v74
          %v76 = vld [vmem:[%s18 + $0x38] sm:$0x3]
          %77 = vst [vmem:[%s19 + $0x38] sm:$0x3] %v76
          %v78 = vld [vmem:[%s18 + $0x3a] sm:$0x3]
          %79 = vst [vmem:[%s19 + $0x3a] sm:$0x3] %v78
          %v80 = vld [vmem:[%s18 + $0x3c] sm:$0x3]
          %81 = vst [vmem:[%s19 + $0x3c] sm:$0x3] %v80
          %v82 = vld [vmem:[%s18 + $0x3e] sm:$0x3]
          %83 = vst [vmem:[%s19 + $0x3e] sm:$0x3] %v82
          %v84 = vld [vmem:[%s18 + $0x40] sm:$0x3]
          %85 = vst [vmem:[%s19 + $0x40] sm:$0x3] %v84
          %v86 = vld [vmem:[%s18 + $0x42] sm:$0x3]
          %87 = vst [vmem:[%s19 + $0x42] sm:$0x3] %v86
          %v88 = vld [vmem:[%s18 + $0x44] sm:$0x3]
          %89 = vst [vmem:[%s19 + $0x44] sm:$0x3] %v88
          %v90 = vld [vmem:[%s18 + $0x46] sm:$0x3]
          %91 = vst [vmem:[%s19 + $0x46] sm:$0x3] %v90
          %v92 = vld [vmem:[%s18 + $0x48] sm:$0x3]
          %93 = vst [vmem:[%s19 + $0x48] sm:$0x3] %v92
          %v94 = vld [vmem:[%s18 + $0x4a] sm:$0x3]
          %95 = vst [vmem:[%s19 + $0x4a] sm:$0x3] %v94
          %v96 = vld [vmem:[%s18 + $0x4c] sm:$0x3]
          %97 = vst [vmem:[%s19 + $0x4c] sm:$0x3] %v96
          %v98 = vld [vmem:[%s18 + $0x4e] sm:$0x3]
          %99 = vst [vmem:[%s19 + $0x4e] sm:$0x3] %v98
          %v100 = vld [vmem:[%s18 + $0x50] sm:$0x3]
          %101 = vst [vmem:[%s19 + $0x50] sm:$0x3] %v100
          %v102 = vld [vmem:[%s18 + $0x52] sm:$0x3]
          %103 = vst [vmem:[%s19 + $0x52] sm:$0x3] %v102
          %v104 = vld [vmem:[%s18 + $0x54] sm:$0x3]
          %105 = vst [vmem:[%s19 + $0x54] sm:$0x3] %v104
          %v106 = vld [vmem:[%s18 + $0x56] sm:$0x3]
          %107 = vst [vmem:[%s19 + $0x56] sm:$0x3] %v106
          %v108 = vld [vmem:[%s18 + $0x58] sm:$0x3]
          %109 = vst [vmem:[%s19 + $0x58] sm:$0x3] %v108
          %v110 = vld [vmem:[%s18 + $0x5a] sm:$0x3]
          %111 = vst [vmem:[%s19 + $0x5a] sm:$0x3] %v110
          %v112 = vld [vmem:[%s18 + $0x5c] sm:$0x3]
          %113 = vst [vmem:[%s19 + $0x5c] sm:$0x3] %v112
          %v114 = vld [vmem:[%s18 + $0x5e] sm:$0x3]
          %115 = vst [vmem:[%s19 + $0x5e] sm:$0x3] %v114
          %v116 = vld [vmem:[%s18 + $0x60] sm:$0x3]
          %117 = vst [vmem:[%s19 + $0x60] sm:$0x3] %v116
        $region18: #{reverse} parent=12 // loop_footer
          %s17 = sadd.s32 1, %s13
        $region19: #{reverse} parent=12 // loop_footer_branch
          %12 = sbr.rel target = $region15
        $region20: #{reverse} parent=12 // loop_exit
          _
      $region13: #{reverse} parent=4 // pred_fallthru
        _
    $region5: #{reverse} parent=1 // pred_fallthru
      _
    %235 = vnop
    %s237 = sshllo.u32 0, 2
    %s238 = smul.addr 2, 48
    %s239 = scalar_lea.vmem [#allocation1], %s238
    %v240 = vld [vmem:[%s239] sm:%s237]
    %s241 = scalar_lea.vmem [#allocation0], 384
    %242 = vst [vmem:[%s241] sm:%s237] %v240
    %s243 = smul.addr 2, 47
    %s244 = scalar_lea.vmem [#allocation1], %s243
    %v245 = vld [vmem:[%s244] sm:%s237]
    %s246 = scalar_lea.vmem [#allocation0], 376
    %247 = vst [vmem:[%s246] sm:%s237] %v245
    %s248 = smul.addr 2, 46
    %s249 = scalar_lea.vmem [#allocation1], %s248
    %v250 = vld [vmem:[%s249] sm:%s237]
    %s251 = scalar_lea.vmem [#allocation0], 368
    %252 = vst [vmem:[%s251] sm:%s237] %v250
    %s253 = smul.addr 2, 45
    %s254 = scalar_lea.vmem [#allocation1], %s253
    %v255 = vld [vmem:[%s254] sm:%s237]
    %s256 = scalar_lea.vmem [#allocation0], 360
    %257 = vst [vmem:[%s256] sm:%s237] %v255
    %s258 = smul.addr 2, 44
    %s259 = scalar_lea.vmem [#allocation1], %s258
    %v260 = vld [vmem:[%s259] sm:%s237]
    %s261 = scalar_lea.vmem [#allocation0], 352
    %262 = vst [vmem:[%s261] sm:%s237] %v260
    %s263 = smul.addr 2, 43
    %s264 = scalar_lea.vmem [#allocation1], %s263
    %v265 = vld [vmem:[%s264] sm:%s237]
    %s266 = scalar_lea.vmem [#allocation0], 344
    %267 = vst [vmem:[%s266] sm:%s237] %v265
    %s268 = smul.addr 2, 42
    %s269 = scalar_lea.vmem [#allocation1], %s268
    %v270 = vld [vmem:[%s269] sm:%s237]
    %s271 = scalar_lea.vmem [#allocation0], 336
    %272 = vst [vmem:[%s271] sm:%s237] %v270
    %s273 = smul.addr 2, 41
    %s274 = scalar_lea.vmem [#allocation1], %s273
    %v275 = vld [vmem:[%s274] sm:%s237]
    %s276 = scalar_lea.vmem [#allocation0], 328
    %277 = vst [vmem:[%s276] sm:%s237] %v275
    %s278 = smul.addr 2, 40
    %s279 = scalar_lea.vmem [#allocation1], %s278
    %v280 = vld [vmem:[%s279] sm:%s237]
    %s281 = scalar_lea.vmem [#allocation0], 320
    %282 = vst [vmem:[%s281] sm:%s237] %v280
    %s283 = smul.addr 2, 39
    %s284 = scalar_lea.vmem [#allocation1], %s283
    %v285 = vld [vmem:[%s284] sm:%s237]
    %s286 = scalar_lea.vmem [#allocation0], 312
    %287 = vst [vmem:[%s286] sm:%s237] %v285
    %s288 = smul.addr 2, 38
    %s289 = scalar_lea.vmem [#allocation1], %s288
    %v290 = vld [vmem:[%s289] sm:%s237]
    %s291 = scalar_lea.vmem [#allocation0], 304
    %292 = vst [vmem:[%s291] sm:%s237] %v290
    %s293 = smul.addr 2, 37
    %s294 = scalar_lea.vmem [#allocation1], %s293
    %v295 = vld [vmem:[%s294] sm:%s237]
    %s296 = scalar_lea.vmem [#allocation0], 296
    %297 = vst [vmem:[%s296] sm:%s237] %v295
    %s298 = smul.addr 2, 36
    %s299 = scalar_lea.vmem [#allocation1], %s298
    %v300 = vld [vmem:[%s299] sm:%s237]
    %s301 = scalar_lea.vmem [#allocation0], 288
    %302 = vst [vmem:[%s301] sm:%s237] %v300
    %s303 = smul.addr 2, 35
    %s304 = scalar_lea.vmem [#allocation1], %s303
    %v305 = vld [vmem:[%s304] sm:%s237]
    %s306 = scalar_lea.vmem [#allocation0], 280
    %307 = vst [vmem:[%s306] sm:%s237] %v305
    %s308 = smul.addr 2, 34
    %s309 = scalar_lea.vmem [#allocation1], %s308
    %v310 = vld [vmem:[%s309] sm:%s237]
    %s311 = scalar_lea.vmem [#allocation0], 272
    %312 = vst [vmem:[%s311] sm:%s237] %v310
    %s313 = smul.addr 2, 33
    %s314 = scalar_lea.vmem [#allocation1], %s313
    %v315 = vld [vmem:[%s314] sm:%s237]
    %s316 = scalar_lea.vmem [#allocation0], 264
    %317 = vst [vmem:[%s316] sm:%s237] %v315
    %s318 = smul.addr 2, 32
    %s319 = scalar_lea.vmem [#allocation1], %s318
    %v320 = vld [vmem:[%s319] sm:%s237]
    %s321 = scalar_lea.vmem [#allocation0], 256
    %322 = vst [vmem:[%s321] sm:%s237] %v320
    %s323 = smul.addr 2, 31
    %s324 = scalar_lea.vmem [#allocation1], %s323
    %v325 = vld [vmem:[%s324] sm:%s237]
    %s326 = scalar_lea.vmem [#allocation0], 248
    %327 = vst [vmem:[%s326] sm:%s237] %v325
    %s328 = smul.addr 2, 30
    %s329 = scalar_lea.vmem [#allocation1], %s328
    %v330 = vld [vmem:[%s329] sm:%s237]
    %s331 = scalar_lea.vmem [#allocation0], 240
    %332 = vst [vmem:[%s331] sm:%s237] %v330
    %s333 = smul.addr 2, 29
    %s334 = scalar_lea.vmem [#allocation1], %s333
    %v335 = vld [vmem:[%s334] sm:%s237]
    %s336 = scalar_lea.vmem [#allocation0], 232
    %337 = vst [vmem:[%s336] sm:%s237] %v335
    %s338 = smul.addr 2, 28
    %s339 = scalar_lea.vmem [#allocation1], %s338
    %v340 = vld [vmem:[%s339] sm:%s237]
    %s341 = scalar_lea.vmem [#allocation0], 224
    %342 = vst [vmem:[%s341] sm:%s237] %v340
    %s343 = smul.addr 2, 27
    %s344 = scalar_lea.vmem [#allocation1], %s343
    %v345 = vld [vmem:[%s344] sm:%s237]
    %s346 = scalar_lea.vmem [#allocation0], 216
    %347 = vst [vmem:[%s346] sm:%s237] %v345
    %s348 = smul.addr 2, 26
    %s349 = scalar_lea.vmem [#allocation1], %s348
    %v350 = vld [vmem:[%s349] sm:%s237]
    %s351 = scalar_lea.vmem [#allocation0], 208
    %352 = vst [vmem:[%s351] sm:%s237] %v350
    %s353 = smul.addr 2, 25
    %s354 = scalar_lea.vmem [#allocation1], %s353
    %v355 = vld [vmem:[%s354] sm:%s237]
    %s356 = scalar_lea.vmem [#allocation0], 200
    %357 = vst [vmem:[%s356] sm:%s237] %v355
    %s358 = smul.addr 2, 24
    %s359 = scalar_lea.vmem [#allocation1], %s358
    %v360 = vld [vmem:[%s359] sm:%s237]
    %s361 = scalar_lea.vmem [#allocation0], 192
    %362 = vst [vmem:[%s361] sm:%s237] %v360
    %s363 = smul.addr 2, 23
    %s364 = scalar_lea.vmem [#allocation1], %s363
    %v365 = vld [vmem:[%s364] sm:%s237]
    %s366 = scalar_lea.vmem [#allocation0], 184
    %367 = vst [vmem:[%s366] sm:%s237] %v365
    %s368 = smul.addr 2, 22
    %s369 = scalar_lea.vmem [#allocation1], %s368
    %v370 = vld [vmem:[%s369] sm:%s237]
    %s371 = scalar_lea.vmem [#allocation0], 176
    %372 = vst [vmem:[%s371] sm:%s237] %v370
    %s373 = smul.addr 2, 21
    %s374 = scalar_lea.vmem [#allocation1], %s373
    %v375 = vld [vmem:[%s374] sm:%s237]
    %s376 = scalar_lea.vmem [#allocation0], 168
    %377 = vst [vmem:[%s376] sm:%s237] %v375
    %s378 = smul.addr 2, 20
    %s379 = scalar_lea.vmem [#allocation1], %s378
    %v380 = vld [vmem:[%s379] sm:%s237]
    %s381 = scalar_lea.vmem [#allocation0], 160
    %382 = vst [vmem:[%s381] sm:%s237] %v380
    %s383 = smul.addr 2, 19
    %s384 = scalar_lea.vmem [#allocation1], %s383
    %v385 = vld [vmem:[%s384] sm:%s237]
    %s386 = scalar_lea.vmem [#allocation0], 152
    %387 = vst [vmem:[%s386] sm:%s237] %v385
    %s388 = smul.addr 2, 18
    %s389 = scalar_lea.vmem [#allocation1], %s388
    %v390 = vld [vmem:[%s389] sm:%s237]
    %s391 = scalar_lea.vmem [#allocation0], 144
    %392 = vst [vmem:[%s391] sm:%s237] %v390
    %s393 = smul.addr 2, 17
    %s394 = scalar_lea.vmem [#allocation1], %s393
    %v395 = vld [vmem:[%s394] sm:%s237]
    %s396 = scalar_lea.vmem [#allocation0], 136
    %397 = vst [vmem:[%s396] sm:%s237] %v395
    %s398 = smul.addr 2, 16
    %s399 = scalar_lea.vmem [#allocation1], %s398
    %v400 = vld [vmem:[%s399] sm:%s237]
    %s401 = scalar_lea.vmem [#allocation0], 128
    %402 = vst [vmem:[%s401] sm:%s237] %v400
    %s403 = smul.addr 2, 15
    %s404 = scalar_lea.vmem [#allocation1], %s403
    %v405 = vld [vmem:[%s404] sm:%s237]
    %s406 = scalar_lea.vmem [#allocation0], 120
    %407 = vst [vmem:[%s406] sm:%s237] %v405
    %s408 = smul.addr 2, 14
    %s409 = scalar_lea.vmem [#allocation1], %s408
    %v410 = vld [vmem:[%s409] sm:%s237]
    %s411 = scalar_lea.vmem [#allocation0], 112
    %412 = vst [vmem:[%s411] sm:%s237] %v410
    %s413 = smul.addr 2, 13
    %s414 = scalar_lea.vmem [#allocation1], %s413
    %v415 = vld [vmem:[%s414] sm:%s237]
    %s416 = scalar_lea.vmem [#allocation0], 104
    %417 = vst [vmem:[%s416] sm:%s237] %v415
    %s418 = smul.addr 2, 12
    %s419 = scalar_lea.vmem [#allocation1], %s418
    %v420 = vld [vmem:[%s419] sm:%s237]
    %s421 = scalar_lea.vmem [#allocation0], 96
    %422 = vst [vmem:[%s421] sm:%s237] %v420
    %s423 = smul.addr 2, 11
    %s424 = scalar_lea.vmem [#allocation1], %s423
    %v425 = vld [vmem:[%s424] sm:%s237]
    %s426 = scalar_lea.vmem [#allocation0], 88
    %427 = vst [vmem:[%s426] sm:%s237] %v425
    %s428 = smul.addr 2, 10
    %s429 = scalar_lea.vmem [#allocation1], %s428
    %v430 = vld [vmem:[%s429] sm:%s237]
    %s431 = scalar_lea.vmem [#allocation0], 80
    %432 = vst [vmem:[%s431] sm:%s237] %v430
    %s433 = smul.addr 2, 9
    %s434 = scalar_lea.vmem [#allocation1], %s433
    %v435 = vld [vmem:[%s434] sm:%s237]
    %s436 = scalar_lea.vmem [#allocation0], 72
    %437 = vst [vmem:[%s436] sm:%s237] %v435
    %s438 = smul.addr 2, 8
    %s439 = scalar_lea.vmem [#allocation1], %s438
    %v440 = vld [vmem:[%s439] sm:%s237]
    %s441 = scalar_lea.vmem [#allocation0], 64
    %442 = vst [vmem:[%s441] sm:%s237] %v440
    %s443 = smul.addr 2, 7
    %s444 = scalar_lea.vmem [#allocation1], %s443
    %v445 = vld [vmem:[%s444] sm:%s237]
    %s446 = scalar_lea.vmem [#allocation0], 56
    %447 = vst [vmem:[%s446] sm:%s237] %v445
    %s448 = smul.addr 2, 6
    %s449 = scalar_lea.vmem [#allocation1], %s448
    %v450 = vld [vmem:[%s449] sm:%s237]
    %s451 = scalar_lea.vmem [#allocation0], 48
    %452 = vst [vmem:[%s451] sm:%s237] %v450
    %s453 = smul.addr 2, 5
    %s454 = scalar_lea.vmem [#allocation1], %s453
    %v455 = vld [vmem:[%s454] sm:%s237]
    %s456 = scalar_lea.vmem [#allocation0], 40
    %457 = vst [vmem:[%s456] sm:%s237] %v455
    %s458 = smul.addr 2, 4
    %s459 = scalar_lea.vmem [#allocation1], %s458
    %v460 = vld [vmem:[%s459] sm:%s237]
    %s461 = scalar_lea.vmem [#allocation0], 32
    %462 = vst [vmem:[%s461] sm:%s237] %v460
    %s463 = smul.addr 2, 3
    %s464 = scalar_lea.vmem [#allocation1], %s463
    %v465 = vld [vmem:[%s464] sm:%s237]
    %s466 = scalar_lea.vmem [#allocation0], 24
    %467 = vst [vmem:[%s466] sm:%s237] %v465
    %s468 = smul.addr 2, 2
    %s469 = scalar_lea.vmem [#allocation1], %s468
    %v470 = vld [vmem:[%s469] sm:%s237]
    %s471 = scalar_lea.vmem [#allocation0], 16
    %472 = vst [vmem:[%s471] sm:%s237] %v470
    %s473 = scalar_lea.vmem [#allocation1], 2
    %v474 = vld [vmem:[%s473] sm:%s237]
    %s475 = scalar_lea.vmem [#allocation0], 8
    %476 = vst [vmem:[%s475] sm:%s237] %v474
    %v477 = vld [vmem:[#allocation1] sm:%s237]
    %478 = vst [vmem:[#allocation0] sm:%s237] %v477
    %s479 = scalar_lea.vmem [#allocation0], 384
    %v480 = vld [vmem:[%s479] sm:$0xff]
    %481 = vperm.xlu0 %4, %v480
    %v482 = vpop.permute.xlu0 %481
    %483 = vst [vmem:[#allocation2] sm:$0xff] %v482
    %s484 = scalar_lea.vmem [#allocation2], 8
    %s485 = scalar_lea.vmem [#allocation0], 376
    %v486 = vld [vmem:[%s485] sm:$0xff]
    %487 = vperm.xlu0 %4, %v486
    %v488 = vpop.permute.xlu0 %487
    %489 = vst [vmem:[%s484] sm:$0xff] %v488
    %s490 = scalar_lea.vmem [#allocation2], 16
    %s491 = scalar_lea.vmem [#allocation0], 368
    %v492 = vld [vmem:[%s491] sm:$0xff]
    %493 = vperm.xlu0 %4, %v492
    %v494 = vpop.permute.xlu0 %493
    %495 = vst [vmem:[%s490] sm:$0xff] %v494
    %s496 = scalar_lea.vmem [#allocation2], 24
    %s497 = scalar_lea.vmem [#allocation0], 360
    %v498 = vld [vmem:[%s497] sm:$0xff]
    %499 = vperm.xlu0 %4, %v498
    %v500 = vpop.permute.xlu0 %499
    %501 = vst [vmem:[%s496] sm:$0xff] %v500
    %s502 = scalar_lea.vmem [#allocation2], 32
    %s503 = scalar_lea.vmem [#allocation0], 352
    %v504 = vld [vmem:[%s503] sm:$0xff]
    %505 = vperm.xlu0 %4, %v504
    %v506 = vpop.permute.xlu0 %505
    %507 = vst [vmem:[%s502] sm:$0xff] %v506
    %s508 = scalar_lea.vmem [#allocation2], 40
    %s509 = scalar_lea.vmem [#allocation0], 344
    %v510 = vld [vmem:[%s509] sm:$0xff]
    %511 = vperm.xlu0 %4, %v510
    %v512 = vpop.permute.xlu0 %511
    %513 = vst [vmem:[%s508] sm:$0xff] %v512
    %s514 = scalar_lea.vmem [#allocation2], 48
    %s515 = scalar_lea.vmem [#allocation0], 336
    %v516 = vld [vmem:[%s515] sm:$0xff]
    %517 = vperm.xlu0 %4, %v516
    %v518 = vpop.permute.xlu0 %517
    %519 = vst [vmem:[%s514] sm:$0xff] %v518
    %s520 = scalar_lea.vmem [#allocation2], 56
    %s521 = scalar_lea.vmem [#allocation0], 328
    %v522 = vld [vmem:[%s521] sm:$0xff]
    %523 = vperm.xlu0 %4, %v522
    %v524 = vpop.permute.xlu0 %523
    %525 = vst [vmem:[%s520] sm:$0xff] %v524
    %s526 = scalar_lea.vmem [#allocation2], 64
    %s527 = scalar_lea.vmem [#allocation0], 320
    %v528 = vld [vmem:[%s527] sm:$0xff]
    %529 = vperm.xlu0 %4, %v528
    %v530 = vpop.permute.xlu0 %529
    %531 = vst [vmem:[%s526] sm:$0xff] %v530
    %s532 = scalar_lea.vmem [#allocation2], 72
    %s533 = scalar_lea.vmem [#allocation0], 312
    %v534 = vld [vmem:[%s533] sm:$0xff]
    %535 = vperm.xlu0 %4, %v534
    %v536 = vpop.permute.xlu0 %535
    %537 = vst [vmem:[%s532] sm:$0xff] %v536
    %s538 = scalar_lea.vmem [#allocation2], 80
    %s539 = scalar_lea.vmem [#allocation0], 304
    %v540 = vld [vmem:[%s539] sm:$0xff]
    %541 = vperm.xlu0 %4, %v540
    %v542 = vpop.permute.xlu0 %541
    %543 = vst [vmem:[%s538] sm:$0xff] %v542
    %s544 = scalar_lea.vmem [#allocation2], 88
    %s545 = scalar_lea.vmem [#allocation0], 296
    %v546 = vld [vmem:[%s545] sm:$0xff]
    %547 = vperm.xlu0 %4, %v546
    %v548 = vpop.permute.xlu0 %547
    %549 = vst [vmem:[%s544] sm:$0xff] %v548
    %s550 = scalar_lea.vmem [#allocation2], 96
    %s551 = scalar_lea.vmem [#allocation0], 288
    %v552 = vld [vmem:[%s551] sm:$0xff]
    %553 = vperm.xlu0 %4, %v552
    %v554 = vpop.permute.xlu0 %553
    %555 = vst [vmem:[%s550] sm:$0xff] %v554
    %s556 = scalar_lea.vmem [#allocation2], 104
    %s557 = scalar_lea.vmem [#allocation0], 280
    %v558 = vld [vmem:[%s557] sm:$0xff]
    %559 = vperm.xlu0 %4, %v558
    %v560 = vpop.permute.xlu0 %559
    %561 = vst [vmem:[%s556] sm:$0xff] %v560
    %s562 = scalar_lea.vmem [#allocation2], 112
    %s563 = scalar_lea.vmem [#allocation0], 272
    %v564 = vld [vmem:[%s563] sm:$0xff]
    %565 = vperm.xlu0 %4, %v564
    %v566 = vpop.permute.xlu0 %565
    %567 = vst [vmem:[%s562] sm:$0xff] %v566
    %s568 = scalar_lea.vmem [#allocation2], 120
    %s569 = scalar_lea.vmem [#allocation0], 264
    %v570 = vld [vmem:[%s569] sm:$0xff]
    %571 = vperm.xlu0 %4, %v570
    %v572 = vpop.permute.xlu0 %571
    %573 = vst [vmem:[%s568] sm:$0xff] %v572
    %s574 = scalar_lea.vmem [#allocation2], 128
    %s575 = scalar_lea.vmem [#allocation0], 256
    %v576 = vld [vmem:[%s575] sm:$0xff]
    %577 = vperm.xlu0 %4, %v576
    %v578 = vpop.permute.xlu0 %577
    %579 = vst [vmem:[%s574] sm:$0xff] %v578
    %s580 = scalar_lea.vmem [#allocation2], 136
    %s581 = scalar_lea.vmem [#allocation0], 248
    %v582 = vld [vmem:[%s581] sm:$0xff]
    %583 = vperm.xlu0 %4, %v582
    %v584 = vpop.permute.xlu0 %583
    %585 = vst [vmem:[%s580] sm:$0xff] %v584
    %s586 = scalar_lea.vmem [#allocation2], 144
    %s587 = scalar_lea.vmem [#allocation0], 240
    %v588 = vld [vmem:[%s587] sm:$0xff]
    %589 = vperm.xlu0 %4, %v588
    %v590 = vpop.permute.xlu0 %589
    %591 = vst [vmem:[%s586] sm:$0xff] %v590
    %s592 = scalar_lea.vmem [#allocation2], 152
    %s593 = scalar_lea.vmem [#allocation0], 232
    %v594 = vld [vmem:[%s593] sm:$0xff]
    %595 = vperm.xlu0 %4, %v594
    %v596 = vpop.permute.xlu0 %595
    %597 = vst [vmem:[%s592] sm:$0xff] %v596
    %s598 = scalar_lea.vmem [#allocation2], 160
    %s599 = scalar_lea.vmem [#allocation0], 224
    %v600 = vld [vmem:[%s599] sm:$0xff]
    %601 = vperm.xlu0 %4, %v600
    %v602 = vpop.permute.xlu0 %601
    %603 = vst [vmem:[%s598] sm:$0xff] %v602
    %s604 = scalar_lea.vmem [#allocation2], 168
    %s605 = scalar_lea.vmem [#allocation0], 216
    %v606 = vld [vmem:[%s605] sm:$0xff]
    %607 = vperm.xlu0 %4, %v606
    %v608 = vpop.permute.xlu0 %607
    %609 = vst [vmem:[%s604] sm:$0xff] %v608
    %s610 = scalar_lea.vmem [#allocation2], 176
    %s611 = scalar_lea.vmem [#allocation0], 208
    %v612 = vld [vmem:[%s611] sm:$0xff]
    %613 = vperm.xlu0 %4, %v612
    %v614 = vpop.permute.xlu0 %613
    %615 = vst [vmem:[%s610] sm:$0xff] %v614
    %s616 = scalar_lea.vmem [#allocation2], 184
    %s617 = scalar_lea.vmem [#allocation0], 200
    %v618 = vld [vmem:[%s617] sm:$0xff]
    %619 = vperm.xlu0 %4, %v618
    %v620 = vpop.permute.xlu0 %619
    %621 = vst [vmem:[%s616] sm:$0xff] %v620
    %s622 = scalar_lea.vmem [#allocation2], 192
    %s623 = scalar_lea.vmem [#allocation0], 192
    %v624 = vld [vmem:[%s623] sm:$0xff]
    %625 = vperm.xlu0 %4, %v624
    %v626 = vpop.permute.xlu0 %625
    %627 = vst [vmem:[%s622] sm:$0xff] %v626
    %s628 = scalar_lea.vmem [#allocation2], 200
    %s629 = scalar_lea.vmem [#allocation0], 184
    %v630 = vld [vmem:[%s629] sm:$0xff]
    %631 = vperm.xlu0 %4, %v630
    %v632 = vpop.permute.xlu0 %631
    %633 = vst [vmem:[%s628] sm:$0xff] %v632
    %s634 = scalar_lea.vmem [#allocation2], 208
    %s635 = scalar_lea.vmem [#allocation0], 176
    %v636 = vld [vmem:[%s635] sm:$0xff]
    %637 = vperm.xlu0 %4, %v636
    %v638 = vpop.permute.xlu0 %637
    %639 = vst [vmem:[%s634] sm:$0xff] %v638
    %s640 = scalar_lea.vmem [#allocation2], 216
    %s641 = scalar_lea.vmem [#allocation0], 168
    %v642 = vld [vmem:[%s641] sm:$0xff]
    %643 = vperm.xlu0 %4, %v642
    %v644 = vpop.permute.xlu0 %643
    %645 = vst [vmem:[%s640] sm:$0xff] %v644
    %s646 = scalar_lea.vmem [#allocation2], 224
    %s647 = scalar_lea.vmem [#allocation0], 160
    %v648 = vld [vmem:[%s647] sm:$0xff]
    %649 = vperm.xlu0 %4, %v648
    %v650 = vpop.permute.xlu0 %649
    %651 = vst [vmem:[%s646] sm:$0xff] %v650
    %s652 = scalar_lea.vmem [#allocation2], 232
    %s653 = scalar_lea.vmem [#allocation0], 152
    %v654 = vld [vmem:[%s653] sm:$0xff]
    %655 = vperm.xlu0 %4, %v654
    %v656 = vpop.permute.xlu0 %655
    %657 = vst [vmem:[%s652] sm:$0xff] %v656
    %s658 = scalar_lea.vmem [#allocation2], 240
    %s659 = scalar_lea.vmem [#allocation0], 144
    %v660 = vld [vmem:[%s659] sm:$0xff]
    %661 = vperm.xlu0 %4, %v660
    %v662 = vpop.permute.xlu0 %661
    %663 = vst [vmem:[%s658] sm:$0xff] %v662
    %s664 = scalar_lea.vmem [#allocation2], 248
    %s665 = scalar_lea.vmem [#allocation0], 136
    %v666 = vld [vmem:[%s665] sm:$0xff]
    %667 = vperm.xlu0 %4, %v666
    %v668 = vpop.permute.xlu0 %667
    %669 = vst [vmem:[%s664] sm:$0xff] %v668
    %s670 = scalar_lea.vmem [#allocation2], 256
    %s671 = scalar_lea.vmem [#allocation0], 128
    %v672 = vld [vmem:[%s671] sm:$0xff]
    %673 = vperm.xlu0 %4, %v672
    %v674 = vpop.permute.xlu0 %673
    %675 = vst [vmem:[%s670] sm:$0xff] %v674
    %s676 = scalar_lea.vmem [#allocation2], 264
    %s677 = scalar_lea.vmem [#allocation0], 120
    %v678 = vld [vmem:[%s677] sm:$0xff]
    %679 = vperm.xlu0 %4, %v678
    %v680 = vpop.permute.xlu0 %679
    %681 = vst [vmem:[%s676] sm:$0xff] %v680
    %s682 = scalar_lea.vmem [#allocation2], 272
    %s683 = scalar_lea.vmem [#allocation0], 112
    %v684 = vld [vmem:[%s683] sm:$0xff]
    %685 = vperm.xlu0 %4, %v684
    %v686 = vpop.permute.xlu0 %685
    %687 = vst [vmem:[%s682] sm:$0xff] %v686
    %s688 = scalar_lea.vmem [#allocation2], 280
    %s689 = scalar_lea.vmem [#allocation0], 104
    %v690 = vld [vmem:[%s689] sm:$0xff]
    %691 = vperm.xlu0 %4, %v690
    %v692 = vpop.permute.xlu0 %691
    %693 = vst [vmem:[%s688] sm:$0xff] %v692
    %s694 = scalar_lea.vmem [#allocation2], 288
    %s695 = scalar_lea.vmem [#allocation0], 96
    %v696 = vld [vmem:[%s695] sm:$0xff]
    %697 = vperm.xlu0 %4, %v696
    %v698 = vpop.permute.xlu0 %697
    %699 = vst [vmem:[%s694] sm:$0xff] %v698
    %s700 = scalar_lea.vmem [#allocation2], 296
    %s701 = scalar_lea.vmem [#allocation0], 88
    %v702 = vld [vmem:[%s701] sm:$0xff]
    %703 = vperm.xlu0 %4, %v702
    %v704 = vpop.permute.xlu0 %703
    %705 = vst [vmem:[%s700] sm:$0xff] %v704
    %s706 = scalar_lea.vmem [#allocation2], 304
    %s707 = scalar_lea.vmem [#allocation0], 80
    %v708 = vld [vmem:[%s707] sm:$0xff]
    %709 = vperm.xlu0 %4, %v708
    %v710 = vpop.permute.xlu0 %709
    %711 = vst [vmem:[%s706] sm:$0xff] %v710
    %s712 = scalar_lea.vmem [#allocation2], 312
    %s713 = scalar_lea.vmem [#allocation0], 72
    %v714 = vld [vmem:[%s713] sm:$0xff]
    %715 = vperm.xlu0 %4, %v714
    %v716 = vpop.permute.xlu0 %715
    %717 = vst [vmem:[%s712] sm:$0xff] %v716
    %s718 = scalar_lea.vmem [#allocation2], 320
    %s719 = scalar_lea.vmem [#allocation0], 64
    %v720 = vld [vmem:[%s719] sm:$0xff]
    %721 = vperm.xlu0 %4, %v720
    %v722 = vpop.permute.xlu0 %721
    %723 = vst [vmem:[%s718] sm:$0xff] %v722
    %s724 = scalar_lea.vmem [#allocation2], 328
    %s725 = scalar_lea.vmem [#allocation0], 56
    %v726 = vld [vmem:[%s725] sm:$0xff]
    %727 = vperm.xlu0 %4, %v726
    %v728 = vpop.permute.xlu0 %727
    %729 = vst [vmem:[%s724] sm:$0xff] %v728
    %s730 = scalar_lea.vmem [#allocation2], 336
    %s731 = scalar_lea.vmem [#allocation0], 48
    %v732 = vld [vmem:[%s731] sm:$0xff]
    %733 = vperm.xlu0 %4, %v732
    %v734 = vpop.permute.xlu0 %733
    %735 = vst [vmem:[%s730] sm:$0xff] %v734
    %s736 = scalar_lea.vmem [#allocation2], 344
    %s737 = scalar_lea.vmem [#allocation0], 40
    %v738 = vld [vmem:[%s737] sm:$0xff]
    %739 = vperm.xlu0 %4, %v738
    %v740 = vpop.permute.xlu0 %739
    %741 = vst [vmem:[%s736] sm:$0xff] %v740
    %s742 = scalar_lea.vmem [#allocation2], 352
    %s743 = scalar_lea.vmem [#allocation0], 32
    %v744 = vld [vmem:[%s743] sm:$0xff]
    %745 = vperm.xlu0 %4, %v744
    %v746 = vpop.permute.xlu0 %745
    %747 = vst [vmem:[%s742] sm:$0xff] %v746
    %s748 = scalar_lea.vmem [#allocation2], 360
    %s749 = scalar_lea.vmem [#allocation0], 24
    %v750 = vld [vmem:[%s749] sm:$0xff]
    %751 = vperm.xlu0 %4, %v750
    %v752 = vpop.permute.xlu0 %751
    %753 = vst [vmem:[%s748] sm:$0xff] %v752
    %s754 = scalar_lea.vmem [#allocation2], 368
    %s755 = scalar_lea.vmem [#allocation0], 16
    %v756 = vld [vmem:[%s755] sm:$0xff]
    %757 = vperm.xlu0 %4, %v756
    %v758 = vpop.permute.xlu0 %757
    %759 = vst [vmem:[%s754] sm:$0xff] %v758
    %s760 = scalar_lea.vmem [#allocation2], 376
    %s761 = scalar_lea.vmem [#allocation0], 8
    %v762 = vld [vmem:[%s761] sm:$0xff]
    %763 = vperm.xlu0 %4, %v762
    %v764 = vpop.permute.xlu0 %763
    %765 = vst [vmem:[%s760] sm:$0xff] %v764
    %s766 = scalar_lea.vmem [#allocation2], 384
    %v767 = vld [vmem:[#allocation0] sm:$0xff]
    %768 = vperm.xlu0 %4, %v767
    %v769 = vpop.permute.xlu0 %768
    %770 = vst [vmem:[%s766] sm:$0xff] %v769
    %s772 = smul.u32 1, 2
    %s773 = sshllo.u32 0, %s772
    %s774 = sshrl.u32 %s772, 1
    %v775 = vld [vmem:[#allocation2] sm:%s773]
    %v776 = vpack.c.bf16 0.0, %v775
    %s777 = sshllo.u32 0, %s774
    %778 = vst [vmem:[#allocation3] sm:%s777] %v776
    %s779 = scalar_lea.vmem [#allocation2], 8
    %v780 = vld [vmem:[%s779] sm:%s773]
    %v781 = vpack.c.bf16 0.0, %v780
    %s782 = sshllo.u32 0, %s774
    %s783 = scalar_lea.vmem [#allocation3], 1
    %784 = vst [vmem:[%s783] sm:%s782] %v781
    %s785 = scalar_lea.vmem [#allocation2], 16
    %v786 = vld [vmem:[%s785] sm:%s773]
    %v787 = vpack.c.bf16 0.0, %v786
    %s788 = sshllo.u32 0, %s774
    %s789 = smul.addr 1, 2
    %s790 = scalar_lea.vmem [#allocation3], %s789
    %791 = vst [vmem:[%s790] sm:%s788] %v787
    %s792 = scalar_lea.vmem [#allocation2], 24
    %v793 = vld [vmem:[%s792] sm:%s773]
    %v794 = vpack.c.bf16 0.0, %v793
    %s795 = sshllo.u32 0, %s774
    %s796 = smul.addr 1, 3
    %s797 = scalar_lea.vmem [#allocation3], %s796
    %798 = vst [vmem:[%s797] sm:%s795] %v794
    %s799 = scalar_lea.vmem [#allocation2], 32
    %v800 = vld [vmem:[%s799] sm:%s773]
    %v801 = vpack.c.bf16 0.0, %v800
    %s802 = sshllo.u32 0, %s774
    %s803 = smul.addr 1, 4
    %s804 = scalar_lea.vmem [#allocation3], %s803
    %805 = vst [vmem:[%s804] sm:%s802] %v801
    %s806 = scalar_lea.vmem [#allocation2], 40
    %v807 = vld [vmem:[%s806] sm:%s773]
    %v808 = vpack.c.bf16 0.0, %v807
    %s809 = sshllo.u32 0, %s774
    %s810 = smul.addr 1, 5
    %s811 = scalar_lea.vmem [#allocation3], %s810
    %812 = vst [vmem:[%s811] sm:%s809] %v808
    %s813 = scalar_lea.vmem [#allocation2], 48
    %v814 = vld [vmem:[%s813] sm:%s773]
    %v815 = vpack.c.bf16 0.0, %v814
    %s816 = sshllo.u32 0, %s774
    %s817 = smul.addr 1, 6
    %s818 = scalar_lea.vmem [#allocation3], %s817
    %819 = vst [vmem:[%s818] sm:%s816] %v815
    %s820 = scalar_lea.vmem [#allocation2], 56
    %v821 = vld [vmem:[%s820] sm:%s773]
    %v822 = vpack.c.bf16 0.0, %v821
    %s823 = sshllo.u32 0, %s774
    %s824 = smul.addr 1, 7
    %s825 = scalar_lea.vmem [#allocation3], %s824
    %826 = vst [vmem:[%s825] sm:%s823] %v822
    %s827 = scalar_lea.vmem [#allocation2], 64
    %v828 = vld [vmem:[%s827] sm:%s773]
    %v829 = vpack.c.bf16 0.0, %v828
    %s830 = sshllo.u32 0, %s774
    %s831 = smul.addr 1, 8
    %s832 = scalar_lea.vmem [#allocation3], %s831
    %833 = vst [vmem:[%s832] sm:%s830] %v829
    %s834 = scalar_lea.vmem [#allocation2], 72
    %v835 = vld [vmem:[%s834] sm:%s773]
    %v836 = vpack.c.bf16 0.0, %v835
    %s837 = sshllo.u32 0, %s774
    %s838 = smul.addr 1, 9
    %s839 = scalar_lea.vmem [#allocation3], %s838
    %840 = vst [vmem:[%s839] sm:%s837] %v836
    %s841 = scalar_lea.vmem [#allocation2], 80
    %v842 = vld [vmem:[%s841] sm:%s773]
    %v843 = vpack.c.bf16 0.0, %v842
    %s844 = sshllo.u32 0, %s774
    %s845 = smul.addr 1, 10
    %s846 = scalar_lea.vmem [#allocation3], %s845
    %847 = vst [vmem:[%s846] sm:%s844] %v843
    %s848 = scalar_lea.vmem [#allocation2], 88
    %v849 = vld [vmem:[%s848] sm:%s773]
    %v850 = vpack.c.bf16 0.0, %v849
    %s851 = sshllo.u32 0, %s774
    %s852 = smul.addr 1, 11
    %s853 = scalar_lea.vmem [#allocation3], %s852
    %854 = vst [vmem:[%s853] sm:%s851] %v850
    %s855 = scalar_lea.vmem [#allocation2], 96
    %v856 = vld [vmem:[%s855] sm:%s773]
    %v857 = vpack.c.bf16 0.0, %v856
    %s858 = sshllo.u32 0, %s774
    %s859 = smul.addr 1, 12
    %s860 = scalar_lea.vmem [#allocation3], %s859
    %861 = vst [vmem:[%s860] sm:%s858] %v857
    %s862 = scalar_lea.vmem [#allocation2], 104
    %v863 = vld [vmem:[%s862] sm:%s773]
    %v864 = vpack.c.bf16 0.0, %v863
    %s865 = sshllo.u32 0, %s774
    %s866 = smul.addr 1, 13
    %s867 = scalar_lea.vmem [#allocation3], %s866
    %868 = vst [vmem:[%s867] sm:%s865] %v864
    %s869 = scalar_lea.vmem [#allocation2], 112
    %v870 = vld [vmem:[%s869] sm:%s773]
    %v871 = vpack.c.bf16 0.0, %v870
    %s872 = sshllo.u32 0, %s774
    %s873 = smul.addr 1, 14
    %s874 = scalar_lea.vmem [#allocation3], %s873
    %875 = vst [vmem:[%s874] sm:%s872] %v871
    %s876 = scalar_lea.vmem [#allocation2], 120
    %v877 = vld [vmem:[%s876] sm:%s773]
    %v878 = vpack.c.bf16 0.0, %v877
    %s879 = sshllo.u32 0, %s774
    %s880 = smul.addr 1, 15
    %s881 = scalar_lea.vmem [#allocation3], %s880
    %882 = vst [vmem:[%s881] sm:%s879] %v878
    %s883 = scalar_lea.vmem [#allocation2], 128
    %v884 = vld [vmem:[%s883] sm:%s773]
    %v885 = vpack.c.bf16 0.0, %v884
    %s886 = sshllo.u32 0, %s774
    %s887 = smul.addr 1, 16
    %s888 = scalar_lea.vmem [#allocation3], %s887
    %889 = vst [vmem:[%s888] sm:%s886] %v885
    %s890 = scalar_lea.vmem [#allocation2], 136
    %v891 = vld [vmem:[%s890] sm:%s773]
    %v892 = vpack.c.bf16 0.0, %v891
    %s893 = sshllo.u32 0, %s774
    %s894 = smul.addr 1, 17
    %s895 = scalar_lea.vmem [#allocation3], %s894
    %896 = vst [vmem:[%s895] sm:%s893] %v892
    %s897 = scalar_lea.vmem [#allocation2], 144
    %v898 = vld [vmem:[%s897] sm:%s773]
    %v899 = vpack.c.bf16 0.0, %v898
    %s900 = sshllo.u32 0, %s774
    %s901 = smul.addr 1, 18
    %s902 = scalar_lea.vmem [#allocation3], %s901
    %903 = vst [vmem:[%s902] sm:%s900] %v899
    %s904 = scalar_lea.vmem [#allocation2], 152
    %v905 = vld [vmem:[%s904] sm:%s773]
    %v906 = vpack.c.bf16 0.0, %v905
    %s907 = sshllo.u32 0, %s774
    %s908 = smul.addr 1, 19
    %s909 = scalar_lea.vmem [#allocation3], %s908
    %910 = vst [vmem:[%s909] sm:%s907] %v906
    %s911 = scalar_lea.vmem [#allocation2], 160
    %v912 = vld [vmem:[%s911] sm:%s773]
    %v913 = vpack.c.bf16 0.0, %v912
    %s914 = sshllo.u32 0, %s774
    %s915 = smul.addr 1, 20
    %s916 = scalar_lea.vmem [#allocation3], %s915
    %917 = vst [vmem:[%s916] sm:%s914] %v913
    %s918 = scalar_lea.vmem [#allocation2], 168
    %v919 = vld [vmem:[%s918] sm:%s773]
    %v920 = vpack.c.bf16 0.0, %v919
    %s921 = sshllo.u32 0, %s774
    %s922 = smul.addr 1, 21
    %s923 = scalar_lea.vmem [#allocation3], %s922
    %924 = vst [vmem:[%s923] sm:%s921] %v920
    %s925 = scalar_lea.vmem [#allocation2], 176
    %v926 = vld [vmem:[%s925] sm:%s773]
    %v927 = vpack.c.bf16 0.0, %v926
    %s928 = sshllo.u32 0, %s774
    %s929 = smul.addr 1, 22
    %s930 = scalar_lea.vmem [#allocation3], %s929
    %931 = vst [vmem:[%s930] sm:%s928] %v927
    %s932 = scalar_lea.vmem [#allocation2], 184
    %v933 = vld [vmem:[%s932] sm:%s773]
    %v934 = vpack.c.bf16 0.0, %v933
    %s935 = sshllo.u32 0, %s774
    %s936 = smul.addr 1, 23
    %s937 = scalar_lea.vmem [#allocation3], %s936
    %938 = vst [vmem:[%s937] sm:%s935] %v934
    %s939 = scalar_lea.vmem [#allocation2], 192
    %v940 = vld [vmem:[%s939] sm:%s773]
    %v941 = vpack.c.bf16 0.0, %v940
    %s942 = sshllo.u32 0, %s774
    %s943 = smul.addr 1, 24
    %s944 = scalar_lea.vmem [#allocation3], %s943
    %945 = vst [vmem:[%s944] sm:%s942] %v941
    %s946 = scalar_lea.vmem [#allocation2], 200
    %v947 = vld [vmem:[%s946] sm:%s773]
    %v948 = vpack.c.bf16 0.0, %v947
    %s949 = sshllo.u32 0, %s774
    %s950 = smul.addr 1, 25
    %s951 = scalar_lea.vmem [#allocation3], %s950
    %952 = vst [vmem:[%s951] sm:%s949] %v948
    %s953 = scalar_lea.vmem [#allocation2], 208
    %v954 = vld [vmem:[%s953] sm:%s773]
    %v955 = vpack.c.bf16 0.0, %v954
    %s956 = sshllo.u32 0, %s774
    %s957 = smul.addr 1, 26
    %s958 = scalar_lea.vmem [#allocation3], %s957
    %959 = vst [vmem:[%s958] sm:%s956] %v955
    %s960 = scalar_lea.vmem [#allocation2], 216
    %v961 = vld [vmem:[%s960] sm:%s773]
    %v962 = vpack.c.bf16 0.0, %v961
    %s963 = sshllo.u32 0, %s774
    %s964 = smul.addr 1, 27
    %s965 = scalar_lea.vmem [#allocation3], %s964
    %966 = vst [vmem:[%s965] sm:%s963] %v962
    %s967 = scalar_lea.vmem [#allocation2], 224
    %v968 = vld [vmem:[%s967] sm:%s773]
    %v969 = vpack.c.bf16 0.0, %v968
    %s970 = sshllo.u32 0, %s774
    %s971 = smul.addr 1, 28
    %s972 = scalar_lea.vmem [#allocation3], %s971
    %973 = vst [vmem:[%s972] sm:%s970] %v969
    %s974 = scalar_lea.vmem [#allocation2], 232
    %v975 = vld [vmem:[%s974] sm:%s773]
    %v976 = vpack.c.bf16 0.0, %v975
    %s977 = sshllo.u32 0, %s774
    %s978 = smul.addr 1, 29
    %s979 = scalar_lea.vmem [#allocation3], %s978
    %980 = vst [vmem:[%s979] sm:%s977] %v976
    %s981 = scalar_lea.vmem [#allocation2], 240
    %v982 = vld [vmem:[%s981] sm:%s773]
    %v983 = vpack.c.bf16 0.0, %v982
    %s984 = sshllo.u32 0, %s774
    %s985 = smul.addr 1, 30
    %s986 = scalar_lea.vmem [#allocation3], %s985
    %987 = vst [vmem:[%s986] sm:%s984] %v983
    %s988 = scalar_lea.vmem [#allocation2], 248
    %v989 = vld [vmem:[%s988] sm:%s773]
    %v990 = vpack.c.bf16 0.0, %v989
    %s991 = sshllo.u32 0, %s774
    %s992 = smul.addr 1, 31
    %s993 = scalar_lea.vmem [#allocation3], %s992
    %994 = vst [vmem:[%s993] sm:%s991] %v990
    %s995 = scalar_lea.vmem [#allocation2], 256
    %v996 = vld [vmem:[%s995] sm:%s773]
    %v997 = vpack.c.bf16 0.0, %v996
    %s998 = sshllo.u32 0, %s774
    %s999 = smul.addr 1, 32
    %s1000 = scalar_lea.vmem [#allocation3], %s999
    %1001 = vst [vmem:[%s1000] sm:%s998] %v997
    %s1002 = scalar_lea.vmem [#allocation2], 264
    %v1003 = vld [vmem:[%s1002] sm:%s773]
    %v1004 = vpack.c.bf16 0.0, %v1003
    %s1005 = sshllo.u32 0, %s774
    %s1006 = smul.addr 1, 33
    %s1007 = scalar_lea.vmem [#allocation3], %s1006
    %1008 = vst [vmem:[%s1007] sm:%s1005] %v1004
    %s1009 = scalar_lea.vmem [#allocation2], 272
    %v1010 = vld [vmem:[%s1009] sm:%s773]
    %v1011 = vpack.c.bf16 0.0, %v1010
    %s1012 = sshllo.u32 0, %s774
    %s1013 = smul.addr 1, 34
    %s1014 = scalar_lea.vmem [#allocation3], %s1013
    %1015 = vst [vmem:[%s1014] sm:%s1012] %v1011
    %s1016 = scalar_lea.vmem [#allocation2], 280
    %v1017 = vld [vmem:[%s1016] sm:%s773]
    %v1018 = vpack.c.bf16 0.0, %v1017
    %s1019 = sshllo.u32 0, %s774
    %s1020 = smul.addr 1, 35
    %s1021 = scalar_lea.vmem [#allocation3], %s1020
    %1022 = vst [vmem:[%s1021] sm:%s1019] %v1018
    %s1023 = scalar_lea.vmem [#allocation2], 288
    %v1024 = vld [vmem:[%s1023] sm:%s773]
    %v1025 = vpack.c.bf16 0.0, %v1024
    %s1026 = sshllo.u32 0, %s774
    %s1027 = smul.addr 1, 36
    %s1028 = scalar_lea.vmem [#allocation3], %s1027
    %1029 = vst [vmem:[%s1028] sm:%s1026] %v1025
    %s1030 = scalar_lea.vmem [#allocation2], 296
    %v1031 = vld [vmem:[%s1030] sm:%s773]
    %v1032 = vpack.c.bf16 0.0, %v1031
    %s1033 = sshllo.u32 0, %s774
    %s1034 = smul.addr 1, 37
    %s1035 = scalar_lea.vmem [#allocation3], %s1034
    %1036 = vst [vmem:[%s1035] sm:%s1033] %v1032
    %s1037 = scalar_lea.vmem [#allocation2], 304
    %v1038 = vld [vmem:[%s1037] sm:%s773]
    %v1039 = vpack.c.bf16 0.0, %v1038
    %s1040 = sshllo.u32 0, %s774
    %s1041 = smul.addr 1, 38
    %s1042 = scalar_lea.vmem [#allocation3], %s1041
    %1043 = vst [vmem:[%s1042] sm:%s1040] %v1039
    %s1044 = scalar_lea.vmem [#allocation2], 312
    %v1045 = vld [vmem:[%s1044] sm:%s773]
    %v1046 = vpack.c.bf16 0.0, %v1045
    %s1047 = sshllo.u32 0, %s774
    %s1048 = smul.addr 1, 39
    %s1049 = scalar_lea.vmem [#allocation3], %s1048
    %1050 = vst [vmem:[%s1049] sm:%s1047] %v1046
    %s1051 = scalar_lea.vmem [#allocation2], 320
    %v1052 = vld [vmem:[%s1051] sm:%s773]
    %v1053 = vpack.c.bf16 0.0, %v1052
    %s1054 = sshllo.u32 0, %s774
    %s1055 = smul.addr 1, 40
    %s1056 = scalar_lea.vmem [#allocation3], %s1055
    %1057 = vst [vmem:[%s1056] sm:%s1054] %v1053
    %s1058 = scalar_lea.vmem [#allocation2], 328
    %v1059 = vld [vmem:[%s1058] sm:%s773]
    %v1060 = vpack.c.bf16 0.0, %v1059
    %s1061 = sshllo.u32 0, %s774
    %s1062 = smul.addr 1, 41
    %s1063 = scalar_lea.vmem [#allocation3], %s1062
    %1064 = vst [vmem:[%s1063] sm:%s1061] %v1060
    %s1065 = scalar_lea.vmem [#allocation2], 336
    %v1066 = vld [vmem:[%s1065] sm:%s773]
    %v1067 = vpack.c.bf16 0.0, %v1066
    %s1068 = sshllo.u32 0, %s774
    %s1069 = smul.addr 1, 42
    %s1070 = scalar_lea.vmem [#allocation3], %s1069
    %1071 = vst [vmem:[%s1070] sm:%s1068] %v1067
    %s1072 = scalar_lea.vmem [#allocation2], 344
    %v1073 = vld [vmem:[%s1072] sm:%s773]
    %v1074 = vpack.c.bf16 0.0, %v1073
    %s1075 = sshllo.u32 0, %s774
    %s1076 = smul.addr 1, 43
    %s1077 = scalar_lea.vmem [#allocation3], %s1076
    %1078 = vst [vmem:[%s1077] sm:%s1075] %v1074
    %s1079 = scalar_lea.vmem [#allocation2], 352
    %v1080 = vld [vmem:[%s1079] sm:%s773]
    %v1081 = vpack.c.bf16 0.0, %v1080
    %s1082 = sshllo.u32 0, %s774
    %s1083 = smul.addr 1, 44
    %s1084 = scalar_lea.vmem [#allocation3], %s1083
    %1085 = vst [vmem:[%s1084] sm:%s1082] %v1081
    %s1086 = scalar_lea.vmem [#allocation2], 360
    %v1087 = vld [vmem:[%s1086] sm:%s773]
    %v1088 = vpack.c.bf16 0.0, %v1087
    %s1089 = sshllo.u32 0, %s774
    %s1090 = smul.addr 1, 45
    %s1091 = scalar_lea.vmem [#allocation3], %s1090
    %1092 = vst [vmem:[%s1091] sm:%s1089] %v1088
    %s1093 = scalar_lea.vmem [#allocation2], 368
    %v1094 = vld [vmem:[%s1093] sm:%s773]
    %v1095 = vpack.c.bf16 0.0, %v1094
    %s1096 = sshllo.u32 0, %s774
    %s1097 = smul.addr 1, 46
    %s1098 = scalar_lea.vmem [#allocation3], %s1097
    %1099 = vst [vmem:[%s1098] sm:%s1096] %v1095
    %s1100 = scalar_lea.vmem [#allocation2], 376
    %v1101 = vld [vmem:[%s1100] sm:%s773]
    %v1102 = vpack.c.bf16 0.0, %v1101
    %s1103 = sshllo.u32 0, %s774
    %s1104 = smul.addr 1, 47
    %s1105 = scalar_lea.vmem [#allocation3], %s1104
    %1106 = vst [vmem:[%s1105] sm:%s1103] %v1102
    %s1107 = scalar_lea.vmem [#allocation2], 384
    %v1108 = vld [vmem:[%s1107] sm:%s773]
    %v1109 = vpack.c.bf16 0.0, %v1108
    %s1110 = sshllo.u32 0, %s774
    %s1111 = smul.addr 1, 48
    %s1112 = scalar_lea.vmem [#allocation3], %s1111
    %1113 = vst [vmem:[%s1112] sm:%s1110] %v1109
    // Predicated region
    $region39: #{reverse} parent=1 // pred_check
      _
    $region40: #{reverse} parent=1 // pred_check_branch
      %1115 = sbr.rel (0) target = $region42
    $region41: #{reverse} parent=1 // pred_region
      // Predicated region
      $region43: #{reverse} parent=41 // pred_check
        _
      $region44: #{reverse} parent=41 // pred_check_branch
        %1117 = sbr.rel (0) target = $region46
      $region45: #{reverse} parent=41 // pred_region
        %s1118 = scalar_lea.vmem [#allocation3], 48
        %s1119 = scalar_lea.vmem %s1, 48
        loop: start=0, step=1, limit=1
        $region47: #{reverse} parent=45 // loop_pre_header
          _
        $region48: #{reverse} parent=45 // loop_header
          %s1121 = sphi 0, %s1125
          %p1122 = scmp.ge.s32.totalorder %s1121, 1
          %s1126 = sphi [#allocation3], [#allocation3]
          %s1127 = sphi %s1, %s1
        $region49: #{reverse} parent=45 // loop_header_branch
          %1124 = sbr.rel (%p1122) target = $region53
        $region50: #{reverse} parent=45 // loop_body
          %v1128 = vld [vmem:[%s1126] sm:$0xff]
          %1129 = vst [vmem:[%s1127] sm:$0xff] %v1128
          %v1130 = vld [vmem:[%s1126 + $0x8] sm:$0xff]
          %1131 = vst [vmem:[%s1127 + $0x8] sm:$0xff] %v1130
          %v1132 = vld [vmem:[%s1126 + $0x10] sm:$0xff]
          %1133 = vst [vmem:[%s1127 + $0x10] sm:$0xff] %v1132
          %v1134 = vld [vmem:[%s1126 + $0x18] sm:$0xff]
          %1135 = vst [vmem:[%s1127 + $0x18] sm:$0xff] %v1134
          %v1136 = vld [vmem:[%s1126 + $0x20] sm:$0xff]
          %1137 = vst [vmem:[%s1127 + $0x20] sm:$0xff] %v1136
          %v1138 = vld [vmem:[%s1126 + $0x28] sm:$0xff]
          %1139 = vst [vmem:[%s1127 + $0x28] sm:$0xff] %v1138
        $region51: #{reverse} parent=45 // loop_footer
          %s1125 = sadd.s32 1, %s1121
        $region52: #{reverse} parent=45 // loop_footer_branch
          %1120 = sbr.rel target = $region48
        $region53: #{reverse} parent=45 // loop_exit
          _
        loop: start=0, step=1, limit=1
        $region54: #{reverse} parent=45 // loop_pre_header
          _
        $region55: #{reverse} parent=45 // loop_header
          %s1142 = sphi 0, %s1146
          %p1143 = scmp.ge.s32.totalorder %s1142, 1
          %s1147 = sphi %s1118, %s1118
          %s1148 = sphi %s1119, %s1119
        $region56: #{reverse} parent=45 // loop_header_branch
          %1145 = sbr.rel (%p1143) target = $region60
        $region57: #{reverse} parent=45 // loop_body
          %v1149 = vld [vmem:[%s1147] sm:$0x1]
          %1150 = vst [vmem:[%s1148] sm:$0x1] %v1149
        $region58: #{reverse} parent=45 // loop_footer
          %s1146 = sadd.s32 1, %s1142
        $region59: #{reverse} parent=45 // loop_footer_branch
          %1141 = sbr.rel target = $region55
        $region60: #{reverse} parent=45 // loop_exit
          _
      $region46: #{reverse} parent=41 // pred_fallthru
        _
    $region42: #{reverse} parent=1 // pred_fallthru
      _
    %1151 = vnop

// kernel: searchable_attention_block.1
$region0: #{searchable_attention_block.1}
  #allocation0 [shape = 'u32[]', space=smem, size = 0x4, offset = 0x4, fixed_abs, tag = 'smem constant byte address 0x4 - core index']
  #allocation1 [shape = 'u32[144,128]{1,0:T(1,128)}', space=vmem, size = 0x12000, scoped, tag = 'internal scratch']
  #allocation2 [shape = 'f32[1,1]{1,0:T(1,128)S(1)}', space=vmem, size = 0x200, scoped, tag = 'scoped memory for searchable_attention_block.1']
  %s0 = inlined_call_operand.vmem [shape: f32[4], index: 0, kind: input, shape index: {}]
  %s1 = inlined_call_operand.vmem [shape: f32[2,16,256], index: 1, kind: input, shape index: {}]
  %s2 = inlined_call_operand.vmem [shape: f32[2,1,256], index: 2, kind: input, shape index: {}]
  %s3 = inlined_call_operand.vmem [shape: f32[48,16], index: 3, kind: input, shape index: {}]
  %s4 = inlined_call_operand.vmem [shape: f32[48,1], index: 4, kind: input, shape index: {}]
  %s5 = inlined_call_operand.vmem [shape: f32[16,16], index: 5, kind: input, shape index: {}]
  %s6 = inlined_call_operand.vmem [shape: f32[16,1], index: 6, kind: input, shape index: {}]
  %s7 = inlined_call_operand.vmem [shape: f32[1,16], index: 7, kind: input, shape index: {}]
  %s8 = inlined_call_operand.<no memory space> [shape: f32[1,1], index: 8, kind: input, shape index: {}]
  %s9 = inlined_call_operand.vmem [shape: f32[16,1], index: 9, kind: input, shape index: {}]
  %s10 = inlined_call_operand.vmem [shape: f32[16,1], index: 10, kind: input, shape index: {}]
  %s11 = inlined_call_operand.vmem [shape: f32[2,16,256], index: 11, kind: output, shape index: {}]
  %s12 = sld [smem:[#allocation0]]
  $region81: #{searchable_attention_block.1} parent=0
    _
  %s14 = ssub.s32 1, %s12
  %s15 = scalar_select 0, %s14, %s12
  %v16 = vstv %s8
  %17 = vst [vmem:[#allocation2] sm:$0x1] %v16
  $region1: #{searchable_attention_block.1} parent=0
    #allocation3 [shape = 'u8[512]{0}', space=smem, size = 0x200, scoped, tag = 'input window, operand 0, single buffered']
    #allocation4 [shape = 's32[2]{0}', space=sflag, size = 0x8, scoped, tag = 'scoped memory for searchable_attention_block.1']
    %18 = vsyncpa [#allocation4], 0
    loop: start=0, step=1, limit=4
    $region2: #{searchable_attention_block.1} parent=1 // loop_pre_header
      _
    $region3: #{searchable_attention_block.1} parent=1 // loop_header
      %s20 = sphi 0, %s24
      %p21 = scmp.ge.s32.totalorder %s20, 4
      %s28 = sphi 0, %s28
      %s30 = sphi 0, %s28
      %s31 = sphi 0, %s30
      %s45 = sphi 0, %s31
      %s51 = sphi 0, %s53
      %s54 = sphi 0, %s51
      %s55 = sphi 0, %s54
      %s71 = sphi 0, %s55
      %s77 = sphi 0, %s79
      %s80 = sphi 0, %s77
      %s81 = sphi 0, %s80
      %s97 = sphi 0, %s81
      %s101 = sphi 0, %s101
      %s103 = sphi 0, %s101
      %s104 = sphi 0, %s103
      %s118 = sphi 0, %s104
      %s122 = sphi 0, %s122
      %s124 = sphi 0, %s122
      %s125 = sphi 0, %s124
      %s139 = sphi 0, %s125
      %s143 = sphi 0, %s143
      %s145 = sphi 0, %s143
      %s146 = sphi 0, %s145
      %s160 = sphi 0, %s146
      %s164 = sphi 0, %s164
      %s166 = sphi 0, %s164
      %s167 = sphi 0, %s166
      %s181 = sphi 0, %s167
      %s185 = sphi 0, %s185
      %s187 = sphi 0, %s185
      %s188 = sphi 0, %s187
      %s202 = sphi 0, %s188
      %s206 = sphi 0, %s206
      %s208 = sphi 0, %s206
      %s209 = sphi 0, %s208
      %s223 = sphi 0, %s209
      %s227 = sphi 0, %s227
      %s229 = sphi 0, %s227
      %s230 = sphi 0, %s229
      %s244 = sphi 0, %s230
      %s248 = sphi 0, %s248
      %s250 = sphi 0, %s248
      %s251 = sphi 0, %s250
      %s265 = sphi 0, %s251
      %s271 = sphi 0, %s273
      %s274 = sphi 0, %s271
      %s275 = sphi 0, %s274
      %s291 = sphi 0, %s275
    $region4: #{searchable_attention_block.1} parent=1 // loop_header_branch
      %23 = sbr.rel (%p21) target = $region8
    $region5: #{searchable_attention_block.1} parent=1 // loop_body
      %s25 = ssub.s32 %s20, 1
      %s26 = ssub.s32 %s20, 2
      %s27 = sadd.s32 %s20, 1
      %s29 = sadd.s32 %s28, 1
      %p32 = scmp.eq.s32.totalorder %s20, 1
      %p33 = scmp.ne.s32.totalorder %s28, %s30
      %p34 = scmp.eq.s32.totalorder %s20, 0
      %p35 = por %p33, %p34
      %p36 = scmp.ne.s32.totalorder %s28, %s30
      %p37 = scmp.eq.s32.totalorder %s25, 1
      %p38 = por %p36, %p37
      %p39 = scmp.ne.s32.totalorder %s30, %s31
      %p40 = scmp.eq.s32.totalorder %s25, 0
      %p41 = por %p39, %p40
      %p42 = scmp.ne.s32.totalorder %s30, %s31
      %p43 = scmp.eq.s32.totalorder %s26, 1
      %p44 = por %p42, %p43
      %p46 = scmp.ne.s32.totalorder %s31, %s45
      %p47 = scmp.eq.s32.totalorder %s26, 0
      %p48 = por %p46, %p47
      %s49 = ssub.s32 %s20, %s27
      %p50 = scmp.eq.s32.totalorder %s49, 0
      %s52 = sadd.s32 %s51, 1
      %s53 = scalar_select %p50, %s51, %s52
      %p56 = pneg %p50
      %p57 = scmp.eq.s32.totalorder %s20, 1
      %p58 = por %p56, %p57
      %p59 = scmp.ne.s32.totalorder %s51, %s54
      %p60 = scmp.eq.s32.totalorder %s20, 0
      %p61 = por %p59, %p60
      %p62 = scmp.ne.s32.totalorder %s51, %s54
      %p63 = scmp.eq.s32.totalorder %s25, 1
      %p64 = por %p62, %p63
      %p65 = scmp.ne.s32.totalorder %s54, %s55
      %p66 = scmp.eq.s32.totalorder %s25, 0
      %p67 = por %p65, %p66
      %p68 = scmp.ne.s32.totalorder %s54, %s55
      %p69 = scmp.eq.s32.totalorder %s26, 1
      %p70 = por %p68, %p69
      %p72 = scmp.ne.s32.totalorder %s55, %s71
      %p73 = scmp.eq.s32.totalorder %s26, 0
      %p74 = por %p72, %p73
      %s75 = ssub.s32 %s20, %s27
      %p76 = scmp.eq.s32.totalorder %s75, 0
      %s78 = sadd.s32 %s77, 1
      %s79 = scalar_select %p76, %s77, %s78
      %p82 = pneg %p76
      %p83 = scmp.eq.s32.totalorder %s20, 1
      %p84 = por %p82, %p83
      %p85 = scmp.ne.s32.totalorder %s77, %s80
      %p86 = scmp.eq.s32.totalorder %s20, 0
      %p87 = por %p85, %p86
      %p88 = scmp.ne.s32.totalorder %s77, %s80
      %p89 = scmp.eq.s32.totalorder %s25, 1
      %p90 = por %p88, %p89
      %p91 = scmp.ne.s32.totalorder %s80, %s81
      %p92 = scmp.eq.s32.totalorder %s25, 0
      %p93 = por %p91, %p92
      %p94 = scmp.ne.s32.totalorder %s80, %s81
      %p95 = scmp.eq.s32.totalorder %s26, 1
      %p96 = por %p94, %p95
      %p98 = scmp.ne.s32.totalorder %s81, %s97
      %p99 = scmp.eq.s32.totalorder %s26, 0
      %p100 = por %p98, %p99
      %s102 = sadd.s32 %s101, 1
      %p105 = scmp.eq.s32.totalorder %s20, 1
      %p106 = scmp.ne.s32.totalorder %s101, %s103
      %p107 = scmp.eq.s32.totalorder %s20, 0
      %p108 = por %p106, %p107
      %p109 = scmp.ne.s32.totalorder %s101, %s103
      %p110 = scmp.eq.s32.totalorder %s25, 1
      %p111 = por %p109, %p110
      %p112 = scmp.ne.s32.totalorder %s103, %s104
      %p113 = scmp.eq.s32.totalorder %s25, 0
      %p114 = por %p112, %p113
      %p115 = scmp.ne.s32.totalorder %s103, %s104
      %p116 = scmp.eq.s32.totalorder %s26, 1
      %p117 = por %p115, %p116
      %p119 = scmp.ne.s32.totalorder %s104, %s118
      %p120 = scmp.eq.s32.totalorder %s26, 0
      %p121 = por %p119, %p120
      %s123 = sadd.s32 %s122, 1
      %p126 = scmp.eq.s32.totalorder %s20, 1
      %p127 = scmp.ne.s32.totalorder %s122, %s124
      %p128 = scmp.eq.s32.totalorder %s20, 0
      %p129 = por %p127, %p128
      %p130 = scmp.ne.s32.totalorder %s122, %s124
      %p131 = scmp.eq.s32.totalorder %s25, 1
      %p132 = por %p130, %p131
      %p133 = scmp.ne.s32.totalorder %s124, %s125
      %p134 = scmp.eq.s32.totalorder %s25, 0
      %p135 = por %p133, %p134
      %p136 = scmp.ne.s32.totalorder %s124, %s125
      %p137 = scmp.eq.s32.totalorder %s26, 1
      %p138 = por %p136, %p137
      %p140 = scmp.ne.s32.totalorder %s125, %s139
      %p141 = scmp.eq.s32.totalorder %s26, 0
      %p142 = por %p140, %p141
      %s144 = sadd.s32 %s143, 1
      %p147 = scmp.eq.s32.totalorder %s20, 1
      %p148 = scmp.ne.s32.totalorder %s143, %s145
      %p149 = scmp.eq.s32.totalorder %s20, 0
      %p150 = por %p148, %p149
      %p151 = scmp.ne.s32.totalorder %s143, %s145
      %p152 = scmp.eq.s32.totalorder %s25, 1
      %p153 = por %p151, %p152
      %p154 = scmp.ne.s32.totalorder %s145, %s146
      %p155 = scmp.eq.s32.totalorder %s25, 0
      %p156 = por %p154, %p155
      %p157 = scmp.ne.s32.totalorder %s145, %s146
      %p158 = scmp.eq.s32.totalorder %s26, 1
      %p159 = por %p157, %p158
      %p161 = scmp.ne.s32.totalorder %s146, %s160
      %p162 = scmp.eq.s32.totalorder %s26, 0
      %p163 = por %p161, %p162
      %s165 = sadd.s32 %s164, 1
      %p168 = scmp.eq.s32.totalorder %s20, 1
      %p169 = scmp.ne.s32.totalorder %s164, %s166
      %p170 = scmp.eq.s32.totalorder %s20, 0
      %p171 = por %p169, %p170
      %p172 = scmp.ne.s32.totalorder %s164, %s166
      %p173 = scmp.eq.s32.totalorder %s25, 1
      %p174 = por %p172, %p173
      %p175 = scmp.ne.s32.totalorder %s166, %s167
      %p176 = scmp.eq.s32.totalorder %s25, 0
      %p177 = por %p175, %p176
      %p178 = scmp.ne.s32.totalorder %s166, %s167
      %p179 = scmp.eq.s32.totalorder %s26, 1
      %p180 = por %p178, %p179
      %p182 = scmp.ne.s32.totalorder %s167, %s181
      %p183 = scmp.eq.s32.totalorder %s26, 0
      %p184 = por %p182, %p183
      %s186 = sadd.s32 %s185, 1
      %p189 = scmp.eq.s32.totalorder %s20, 1
      %p190 = scmp.ne.s32.totalorder %s185, %s187
      %p191 = scmp.eq.s32.totalorder %s20, 0
      %p192 = por %p190, %p191
      %p193 = scmp.ne.s32.totalorder %s185, %s187
      %p194 = scmp.eq.s32.totalorder %s25, 1
      %p195 = por %p193, %p194
      %p196 = scmp.ne.s32.totalorder %s187, %s188
      %p197 = scmp.eq.s32.totalorder %s25, 0
      %p198 = por %p196, %p197
      %p199 = scmp.ne.s32.totalorder %s187, %s188
      %p200 = scmp.eq.s32.totalorder %s26, 1
      %p201 = por %p199, %p200
      %p203 = scmp.ne.s32.totalorder %s188, %s202
      %p204 = scmp.eq.s32.totalorder %s26, 0
      %p205 = por %p203, %p204
      %s207 = sadd.s32 %s206, 1
      %p210 = scmp.eq.s32.totalorder %s20, 1
      %p211 = scmp.ne.s32.totalorder %s206, %s208
      %p212 = scmp.eq.s32.totalorder %s20, 0
      %p213 = por %p211, %p212
      %p214 = scmp.ne.s32.totalorder %s206, %s208
      %p215 = scmp.eq.s32.totalorder %s25, 1
      %p216 = por %p214, %p215
      %p217 = scmp.ne.s32.totalorder %s208, %s209
      %p218 = scmp.eq.s32.totalorder %s25, 0
      %p219 = por %p217, %p218
      %p220 = scmp.ne.s32.totalorder %s208, %s209
      %p221 = scmp.eq.s32.totalorder %s26, 1
      %p222 = por %p220, %p221
      %p224 = scmp.ne.s32.totalorder %s209, %s223
      %p225 = scmp.eq.s32.totalorder %s26, 0
      %p226 = por %p224, %p225
      %s228 = sadd.s32 %s227, 1
      %p231 = scmp.eq.s32.totalorder %s20, 1
      %p232 = scmp.ne.s32.totalorder %s227, %s229
      %p233 = scmp.eq.s32.totalorder %s20, 0
      %p234 = por %p232, %p233
      %p235 = scmp.ne.s32.totalorder %s227, %s229
      %p236 = scmp.eq.s32.totalorder %s25, 1
      %p237 = por %p235, %p236
      %p238 = scmp.ne.s32.totalorder %s229, %s230
      %p239 = scmp.eq.s32.totalorder %s25, 0
      %p240 = por %p238, %p239
      %p241 = scmp.ne.s32.totalorder %s229, %s230
      %p242 = scmp.eq.s32.totalorder %s26, 1
      %p243 = por %p241, %p242
      %p245 = scmp.ne.s32.totalorder %s230, %s244
      %p246 = scmp.eq.s32.totalorder %s26, 0
      %p247 = por %p245, %p246
      %s249 = sadd.s32 %s248, 1
      %p252 = scmp.eq.s32.totalorder %s20, 1
      %p253 = scmp.ne.s32.totalorder %s248, %s250
      %p254 = scmp.eq.s32.totalorder %s20, 0
      %p255 = por %p253, %p254
      %p256 = scmp.ne.s32.totalorder %s248, %s250
      %p257 = scmp.eq.s32.totalorder %s25, 1
      %p258 = por %p256, %p257
      %p259 = scmp.ne.s32.totalorder %s250, %s251
      %p260 = scmp.eq.s32.totalorder %s25, 0
      %p261 = por %p259, %p260
      %p262 = scmp.ne.s32.totalorder %s250, %s251
      %p263 = scmp.eq.s32.totalorder %s26, 1
      %p264 = por %p262, %p263
      %p266 = scmp.ne.s32.totalorder %s251, %s265
      %p267 = scmp.eq.s32.totalorder %s26, 0
      %p268 = por %p266, %p267
      %s269 = ssub.s32 %s20, %s27
      %p270 = scmp.eq.s32.totalorder %s269, 0
      %s272 = sadd.s32 %s271, 1
      %s273 = scalar_select %p270, %s271, %s272
      %p276 = pneg %p270
      %p277 = scmp.eq.s32.totalorder %s20, 1
      %p278 = por %p276, %p277
      %p279 = scmp.ne.s32.totalorder %s271, %s274
      %p280 = scmp.eq.s32.totalorder %s20, 0
      %p281 = por %p279, %p280
      %p282 = scmp.ne.s32.totalorder %s271, %s274
      %p283 = scmp.eq.s32.totalorder %s25, 1
      %p284 = por %p282, %p283
      %p285 = scmp.ne.s32.totalorder %s274, %s275
      %p286 = scmp.eq.s32.totalorder %s25, 0
      %p287 = por %p285, %p286
      %p288 = scmp.ne.s32.totalorder %s274, %s275
      %p289 = scmp.eq.s32.totalorder %s26, 1
      %p290 = por %p288, %p289
      %p292 = scmp.ne.s32.totalorder %s275, %s291
      %p293 = scmp.eq.s32.totalorder %s26, 0
      %p294 = por %p292, %p293
      %p295 = scmp.le.s32.totalorder 1, %s20
      %p296 = scmp.lt.s32.totalorder %s20, 3
      %p297 = pnand %p295, %p296
      %p298 = pneg %p297
      // Predicated region
      $region9: #{searchable_attention_block.1} parent=5 // pred_check
        _
      $region10: #{searchable_attention_block.1} parent=5 // pred_check_branch
        %300 = sbr.rel (%p297) target = $region12
      $region11: #{searchable_attention_block.1} parent=5 // pred_region
        %s301 = ssub.s32 %s20, 1
        // Predicated region
        $region13: #{searchable_attention_block.1} parent=11 // pred_check
          %p302 = pneg %p41
        $region14: #{searchable_attention_block.1} parent=11 // pred_check_branch
          %304 = sbr.rel (%p302) target = $region16
        $region15: #{searchable_attention_block.1} parent=11 // pred_region
          %s306 = ssub.s32 16, 16
          %307 = vsyncadd [#allocation4], %s306
          %s309 = sshll.u32 %s0, 4
          %s310 = int_to_ptr.vmem [resolvable:$true] %s309
          %312 = dma.vmem_to_smem %s310, 16, [#allocation3], [#allocation4]
        $region16: #{searchable_attention_block.1} parent=11 // pred_fallthru
          _
        // Predicated region
        $region17: #{searchable_attention_block.1} parent=11 // pred_check
          %p313 = pneg %p114
        $region18: #{searchable_attention_block.1} parent=11 // pred_check_branch
          %315 = sbr.rel (%p313) target = $region20
        $region19: #{searchable_attention_block.1} parent=11 // pred_region
          _
        $region20: #{searchable_attention_block.1} parent=11 // pred_fallthru
          _
        // Predicated region
        $region21: #{searchable_attention_block.1} parent=11 // pred_check
          %p316 = pneg %p135
        $region22: #{searchable_attention_block.1} parent=11 // pred_check_branch
          %318 = sbr.rel (%p316) target = $region24
        $region23: #{searchable_attention_block.1} parent=11 // pred_region
          _
        $region24: #{searchable_attention_block.1} parent=11 // pred_fallthru
          _
        // Predicated region
        $region25: #{searchable_attention_block.1} parent=11 // pred_check
          %p319 = pneg %p156
        $region26: #{searchable_attention_block.1} parent=11 // pred_check_branch
          %321 = sbr.rel (%p319) target = $region28
        $region27: #{searchable_attention_block.1} parent=11 // pred_region
          _
        $region28: #{searchable_attention_block.1} parent=11 // pred_fallthru
          _
        // Predicated region
        $region29: #{searchable_attention_block.1} parent=11 // pred_check
          %p322 = pneg %p177
        $region30: #{searchable_attention_block.1} parent=11 // pred_check_branch
          %324 = sbr.rel (%p322) target = $region32
        $region31: #{searchable_attention_block.1} parent=11 // pred_region
          _
        $region32: #{searchable_attention_block.1} parent=11 // pred_fallthru
          _
        // Predicated region
        $region33: #{searchable_attention_block.1} parent=11 // pred_check
          %p325 = pneg %p198
        $region34: #{searchable_attention_block.1} parent=11 // pred_check_branch
          %327 = sbr.rel (%p325) target = $region36
        $region35: #{searchable_attention_block.1} parent=11 // pred_region
          _
        $region36: #{searchable_attention_block.1} parent=11 // pred_fallthru
          _
        // Predicated region
        $region37: #{searchable_attention_block.1} parent=11 // pred_check
          %p328 = pneg %p219
        $region38: #{searchable_attention_block.1} parent=11 // pred_check_branch
          %330 = sbr.rel (%p328) target = $region40
        $region39: #{searchable_attention_block.1} parent=11 // pred_region
          _
        $region40: #{searchable_attention_block.1} parent=11 // pred_fallthru
          _
        // Predicated region
        $region41: #{searchable_attention_block.1} parent=11 // pred_check
          %p331 = pneg %p240
        $region42: #{searchable_attention_block.1} parent=11 // pred_check_branch
          %333 = sbr.rel (%p331) target = $region44
        $region43: #{searchable_attention_block.1} parent=11 // pred_region
          _
        $region44: #{searchable_attention_block.1} parent=11 // pred_fallthru
          _
        // Predicated region
        $region45: #{searchable_attention_block.1} parent=11 // pred_check
          %p334 = pneg %p261
        $region46: #{searchable_attention_block.1} parent=11 // pred_check_branch
          %336 = sbr.rel (%p334) target = $region48
        $region47: #{searchable_attention_block.1} parent=11 // pred_region
          _
        $region48: #{searchable_attention_block.1} parent=11 // pred_fallthru
          _
      $region12: #{searchable_attention_block.1} parent=5 // pred_fallthru
        _
      %p337 = scmp.lt.s32.totalorder %s20, 2
      // Predicated region
      $region49: #{searchable_attention_block.1} parent=5 // pred_check
        %p338 = pneg %p337
      $region50: #{searchable_attention_block.1} parent=5 // pred_check_branch
        %340 = sbr.rel (%p338) target = $region52
      $region51: #{searchable_attention_block.1} parent=5 // pred_region
        // Predicated region
        $region53: #{searchable_attention_block.1} parent=51 // pred_check
          %p341 = pneg %p61
        $region54: #{searchable_attention_block.1} parent=51 // pred_check_branch
          %343 = sbr.rel (%p341) target = $region56
        $region55: #{searchable_attention_block.1} parent=51 // pred_region
          %p344 = scmp.lt.s32.totalorder %s20, 1
          %s345 = scalar_select %p344, %s20, 1
          %s346 = smul.addr %s345, 4
          %s347 = smul.addr %s346, 8
          %s348 = scalar_lea.vmem %s1, %s347
        $region56: #{searchable_attention_block.1} parent=51 // pred_fallthru
          _
        // Predicated region
        $region57: #{searchable_attention_block.1} parent=51 // pred_check
          %p349 = pneg %p87
        $region58: #{searchable_attention_block.1} parent=51 // pred_check_branch
          %351 = sbr.rel (%p349) target = $region60
        $region59: #{searchable_attention_block.1} parent=51 // pred_region
          %p352 = scmp.lt.s32.totalorder %s20, 1
          %s353 = scalar_select %p352, %s20, 1
          %s354 = smul.addr %s353, 2
          %s355 = scalar_lea.vmem %s2, %s354
        $region60: #{searchable_attention_block.1} parent=51 // pred_fallthru
          _
      $region52: #{searchable_attention_block.1} parent=5 // pred_fallthru
        _
      %p356 = scmp.le.s32.totalorder 1, %s20
      %p357 = scmp.lt.s32.totalorder %s20, 3
      %p358 = pnand %p356, %p357
      %p359 = pneg %p358
      // Predicated region
      $region61: #{searchable_attention_block.1} parent=5 // pred_check
        _
      $region62: #{searchable_attention_block.1} parent=5 // pred_check_branch
        %361 = sbr.rel (%p358) target = $region64
      $region63: #{searchable_attention_block.1} parent=5 // pred_region
        %s362 = ssub.s32 %s20, 1
        // Predicated region
        $region65: #{searchable_attention_block.1} parent=63 // pred_check
          %p363 = pneg %p41
        $region66: #{searchable_attention_block.1} parent=63 // pred_check_branch
          %365 = sbr.rel (%p363) target = $region68
        $region67: #{searchable_attention_block.1} parent=63 // pred_region
          %366 = dma.done [#allocation4], 16
        $region68: #{searchable_attention_block.1} parent=63 // pred_fallthru
          _
        %367 = sfence
        %p368 = pneg %p41
        %p369 = pneg %p38
        %p370 = scmp.lt.s32.totalorder %s25, 1
        %s371 = scalar_select %p370, %s25, 1
        %s372 = smul.addr %s371, 4
        %s373 = smul.addr %s372, 8
        %s374 = scalar_lea.vmem %s1, %s373
        %p375 = pneg %p67
        %p376 = pneg %p64
        %p377 = scmp.lt.s32.totalorder %s25, 1
        %s378 = scalar_select %p377, %s25, 1
        %s379 = smul.addr %s378, 2
        %s380 = scalar_lea.vmem %s2, %s379
        %p381 = pneg %p93
        %p382 = pneg %p90
        %p383 = pneg %p114
        %p384 = pneg %p111
        %p385 = pneg %p135
        %p386 = pneg %p132
        %p387 = pneg %p156
        %p388 = pneg %p153
        %p389 = pneg %p177
        %p390 = pneg %p174
        %p391 = pneg %p198
        %p392 = pneg %p195
        %p393 = pneg %p219
        %p394 = pneg %p216
        %p395 = pneg %p240
        %p396 = pneg %p237
        %p397 = pneg %p261
        %p398 = pneg %p258
        %p399 = pneg %p287
        %p400 = pneg %p284
        %p401 = scmp.lt.s32.totalorder %s25, 1
        %s402 = scalar_select %p401, %s25, 1
        %s403 = smul.addr %s402, 4
        %s404 = smul.addr %s403, 8
        %s405 = scalar_lea.vmem %s11, %s404
        %p406 = scmp.lt.s32.totalorder %s25, 1
        %s407 = scalar_select %p406, %s25, 1
        %s408 = smul.addr %s407, 4
        %s409 = smul.addr %s408, 8
        %s410 = scalar_lea.vmem %s1, %s409
        %p411 = scmp.lt.s32.totalorder %s25, 1
        %s412 = scalar_select %p411, %s25, 1
        %s413 = smul.addr %s412, 2
        %s414 = scalar_lea.vmem %s2, %s413
        %p415 = scmp.lt.s32.totalorder %s25, 1
        %s416 = scalar_select %p415, %s25, 1
        %s417 = smul.addr %s416, 4
        %s418 = smul.addr %s417, 8
        %s419 = scalar_lea.vmem %s11, %s418
        %v420 = vld [vmem:[%s410] sm:$0xff]
        %v421 = vld [vmem:[%s410 + $0x8] sm:$0xff]
        %v422 = vld [vmem:[%s410 + $0x10] sm:$0xff]
        %v423 = vld [vmem:[%s410 + $0x18] sm:$0xff]
        %v424 = vadd.f32 %v420, %v421
        %425 = vadd.xlane.f32.xlu0 %v424
        %v426 = vpop.xlane.xlu0 %425
        %v427 = vadd.f32 %v422, %v423
        %428 = vadd.xlane.f32.xlu0 %v427
        %v429 = vpop.xlane.xlu0 %428
        %v430 = vrcp.pop 256.0
        %v431 = vmul.f32 %v426, %v430
        %v432 = vmul.f32 %v429, %v430
        %v433 = vld [vmem:[%s7] sm:$0x1]
        %v434 = vld [vmem:[#allocation2] sm:$0x1]
        %vm435 = vcmask 130048
        %v437 = vsel %vm435, %v433, 0
        %439 = vmatprep.subr.mxu0 0.0
        %440 = vmatpush1.msra.mxu0 %v431
        %441 = vmatprep.subr.mxu0 0.0
        %442 = vmatpush1.msra.mxu0 %v432
        %443 = vmatprep.subr.mxu0 0.0
        %444 = vmatpush1.msra.mxu0 0.0
        %445 = vmatprep.subr.mxu0 0.0
        %446 = vmatpush1.msra.mxu0 0.0
        %447 = vmatprep.subr.mxu0 0.0
        %448 = vmatpush1.msra.mxu0 0.0
        %449 = vmatprep.subr.mxu0 0.0
        %450 = vmatpush1.msra.mxu0 0.0
        %451 = vmatprep.subr.mxu0 0.0
        %452 = vmatpush1.msra.mxu0 0.0
        %453 = vmatprep.subr.mxu0 0.0
        %454 = vmatpush1.msra.mxu0 0.0
        %455 = vmatprep.subr.mxu0 0.0
        %456 = vmatpush1.msra.mxu0 0.0
        %457 = vmatprep.subr.mxu0 0.0
        %458 = vmatpush1.msra.mxu0 0.0
        %459 = vmatprep.subr.mxu0 0.0
        %460 = vmatpush1.msra.mxu0 0.0
        %461 = vmatprep.subr.mxu0 0.0
        %462 = vmatpush1.msra.mxu0 0.0
        %463 = vmatprep.subr.mxu0 0.0
        %464 = vmatpush1.msra.mxu0 0.0
        %465 = vmatprep.subr.mxu0 0.0
        %466 = vmatpush1.msra.mxu0 0.0
        %467 = vmatprep.subr.mxu0 0.0
        %468 = vmatpush1.msra.mxu0 0.0
        %469 = vmatprep.subr.mxu0 0.0
        %470 = vmatpush1.msra.mxu0 0.0
        %471 = vmatprep.subr.mxu0 0.0
        %472 = vmatpush1.msra.mxu0 0.0
        %473 = vmatprep.subr.mxu0 0.0
        %474 = vmatpush1.msra.mxu0 0.0
        %475 = vmatprep.subr.mxu0 0.0
        %476 = vmatpush1.msra.mxu0 0.0
        %477 = vmatprep.subr.mxu0 0.0
        %478 = vmatpush1.msra.mxu0 0.0
        %479 = vmatprep.subr.mxu0 0.0
        %480 = vmatpush1.msra.mxu0 0.0
        %481 = vmatprep.subr.mxu0 0.0
        %482 = vmatpush1.msra.mxu0 0.0
        %483 = vmatprep.subr.mxu0 0.0
        %484 = vmatpush1.msra.mxu0 0.0
        %485 = vmatprep.subr.mxu0 0.0
        %486 = vmatpush1.msra.mxu0 0.0
        %487 = vmatprep.subr.mxu0 0.0
        %488 = vmatpush1.msra.mxu0 0.0
        %489 = vmatprep.subr.mxu0 0.0
        %490 = vmatpush1.msra.mxu0 0.0
        %491 = vmatprep.subr.mxu0 0.0
        %492 = vmatpush1.msra.mxu0 0.0
        %493 = vmatprep.subr.mxu0 0.0
        %494 = vmatpush1.msra.mxu0 0.0
        %495 = vmatprep.subr.mxu0 0.0
        %496 = vmatpush1.msra.mxu0 0.0
        %497 = vmatprep.subr.mxu0 0.0
        %498 = vmatpush1.msra.mxu0 0.0
        %499 = vmatprep.subr.mxu0 0.0
        %500 = vmatpush1.msra.mxu0 0.0
        %501 = vmatprep.subr.mxu0 0.0
        %502 = vmatpush1.msra.mxu0 0.0
        %503 = vmatprep.mubr.f32.mxu0 0.0
        %504 = vmatmul.mubr.f32.gmra.mrb[0].mxu0 %v437
        %v505 = vpop.f32.mrb[0].mxu0
        %v506 = vadd.f32 %v434, %v505
        %v507 = vpop.f32.mrb[0].mxu0
        %508 = vdwg.mxu0
        %v509 = vmax.f32 %v506, 0.0
        %v510 = vld [vmem:[%s9] sm:$0xff]
        %v511 = vld [vmem:[%s9 + $0x8] sm:$0xff]
        %v512 = vld [vmem:[%s10] sm:$0xff]
        %v513 = vld [vmem:[%s10 + $0x8] sm:$0xff]
        %vm514 = vcmask 7168
        %v516 = vsel %vm514, %v510, 0
        %v519 = vsel %vm514, %v511, 0
        %vm521 = vcmask 1040384
        %v523 = vsel %vm521, %v509, 0
        %525 = vmatprep.subr.mxu0 0.0
        %526 = vmatpush1.msra.mxu0 %v523
        %527 = vmatprep.subr.mxu0 0.0
        %528 = vmatpush1.msra.mxu0 0.0
        %529 = vmatprep.subr.mxu0 0.0
        %530 = vmatpush1.msra.mxu0 0.0
        %531 = vmatprep.subr.mxu0 0.0
        %532 = vmatpush1.msra.mxu0 0.0
        %533 = vmatprep.subr.mxu0 0.0
        %534 = vmatpush1.msra.mxu0 0.0
        %535 = vmatprep.subr.mxu0 0.0
        %536 = vmatpush1.msra.mxu0 0.0
        %537 = vmatprep.subr.mxu0 0.0
        %538 = vmatpush1.msra.mxu0 0.0
        %539 = vmatprep.subr.mxu0 0.0
        %540 = vmatpush1.msra.mxu0 0.0
        %541 = vmatprep.subr.mxu0 0.0
        %542 = vmatpush1.msra.mxu0 0.0
        %543 = vmatprep.subr.mxu0 0.0
        %544 = vmatpush1.msra.mxu0 0.0
        %545 = vmatprep.subr.mxu0 0.0
        %546 = vmatpush1.msra.mxu0 0.0
        %547 = vmatprep.subr.mxu0 0.0
        %548 = vmatpush1.msra.mxu0 0.0
        %549 = vmatprep.subr.mxu0 0.0
        %550 = vmatpush1.msra.mxu0 0.0
        %551 = vmatprep.subr.mxu0 0.0
        %552 = vmatpush1.msra.mxu0 0.0
        %553 = vmatprep.subr.mxu0 0.0
        %554 = vmatpush1.msra.mxu0 0.0
        %555 = vmatprep.subr.mxu0 0.0
        %556 = vmatpush1.msra.mxu0 0.0
        %557 = vmatprep.subr.mxu0 0.0
        %558 = vmatpush1.msra.mxu0 0.0
        %559 = vmatprep.subr.mxu0 0.0
        %560 = vmatpush1.msra.mxu0 0.0
        %561 = vmatprep.subr.mxu0 0.0
        %562 = vmatpush1.msra.mxu0 0.0
        %563 = vmatprep.subr.mxu0 0.0
        %564 = vmatpush1.msra.mxu0 0.0
        %565 = vmatprep.subr.mxu0 0.0
        %566 = vmatpush1.msra.mxu0 0.0
        %567 = vmatprep.subr.mxu0 0.0
        %568 = vmatpush1.msra.mxu0 0.0
        %569 = vmatprep.subr.mxu0 0.0
        %570 = vmatpush1.msra.mxu0 0.0
        %571 = vmatprep.subr.mxu0 0.0
        %572 = vmatpush1.msra.mxu0 0.0
        %573 = vmatprep.subr.mxu0 0.0
        %574 = vmatpush1.msra.mxu0 0.0
        %575 = vmatprep.subr.mxu0 0.0
        %576 = vmatpush1.msra.mxu0 0.0
        %577 = vmatprep.subr.mxu0 0.0
        %578 = vmatpush1.msra.mxu0 0.0
        %579 = vmatprep.subr.mxu0 0.0
        %580 = vmatpush1.msra.mxu0 0.0
        %581 = vmatprep.subr.mxu0 0.0
        %582 = vmatpush1.msra.mxu0 0.0
        %583 = vmatprep.subr.mxu0 0.0
        %584 = vmatpush1.msra.mxu0 0.0
        %585 = vmatprep.subr.mxu0 0.0
        %586 = vmatpush1.msra.mxu0 0.0
        %587 = vmatprep.subr.mxu0 0.0
        %588 = vmatpush1.msra.mxu0 0.0
        %589 = vmatprep.mubr.f32.mxu0 0.0
        %590 = vmatmul.mubr.f32.gmra.mrb[0].mxu0 %v516
        %v591 = vpop.f32.mrb[0].mxu0
        %v592 = vadd.f32 %v512, %v591
        %v593 = vpop.f32.mrb[0].mxu0
        %594 = vmatprep.mubr.f32.mxu0 0.0
        %595 = vmatmul.mubr.f32.gmra.mrb[0].mxu0 %v519
        %v596 = vpop.f32.mrb[0].mxu0
        %v597 = vadd.f32 %v513, %v596
        %v598 = vpop.f32.mrb[0].mxu0
        %599 = vdwg.mxu0
        %v600 = vxor.u32 %v592, 2147483648
        %v601 = vxor.u32 %v597, 2147483648
        %v602 = vmul.f32 %v600, 1.442695
        %v603 = vpow.pop %v602
        %v604 = vmul.f32 %v601, 1.442695
        %v605 = vpow.pop %v604
        %v606 = vadd.f32 %v603, 1.0
        %v607 = vadd.f32 %v605, 1.0
        %v608 = vrcp.pop %v606
        %v609 = vmul.f32 1.0, %v608
        %v610 = vrcp.pop %v607
        %v611 = vmul.f32 1.0, %v610
        %v612 = vld [vmem:[%s414] sm:$0x3]
        %v613 = vxor.u32 %v612, 2147483648
        %v614 = vmul.f32 %v613, 1.442695
        %v615 = vpow.pop %v614
        %v616 = vadd.f32 %v615, 1.0
        %v617 = vrcp.pop %v616
        %v618 = vmul.f32 1.0, %v617
        %v619 = vld [vmem:[%s3] sm:$0xff]
        %v620 = vld [vmem:[%s3 + $0x8] sm:$0xff]
        %v621 = vld [vmem:[%s3 + $0x10] sm:$0xff]
        %v622 = vld [vmem:[%s3 + $0x18] sm:$0xff]
        %v623 = vld [vmem:[%s3 + $0x20] sm:$0xff]
        %v624 = vld [vmem:[%s3 + $0x28] sm:$0xff]
        %v625 = vld [vmem:[%s4] sm:$0xff]
        %v626 = vld [vmem:[%s4 + $0x8] sm:$0xff]
        %v627 = vld [vmem:[%s4 + $0x10] sm:$0xff]
        %v628 = vld [vmem:[%s4 + $0x18] sm:$0xff]
        %v629 = vld [vmem:[%s4 + $0x20] sm:$0xff]
        %v630 = vld [vmem:[%s4 + $0x28] sm:$0xff]
        %632 = vset.pattern.permute.xlu0 0
        %633 = vperm.xlu0 %632, %v625
        %v634 = vpop.permute.xlu0 %633
        %637 = vset.pattern.permute.xlu0 0
        %638 = vperm.xlu0 %637, %v626
        %v639 = vpop.permute.xlu0 %638
        %642 = vset.pattern.permute.xlu0 0
        %643 = vperm.xlu0 %642, %v627
        %v644 = vpop.permute.xlu0 %643
        %647 = vset.pattern.permute.xlu0 0
        %648 = vperm.xlu0 %647, %v628
        %v649 = vpop.permute.xlu0 %648
        %652 = vset.pattern.permute.xlu0 0
        %653 = vperm.xlu0 %652, %v629
        %v654 = vpop.permute.xlu0 %653
        %657 = vset.pattern.permute.xlu0 0
        %658 = vperm.xlu0 %657, %v630
        %v659 = vpop.permute.xlu0 %658
        %v662 = vsel %vm435, %v619, 0
        %v665 = vsel %vm435, %v620, 0
        %v668 = vsel %vm435, %v621, 0
        %v671 = vsel %vm435, %v622, 0
        %v674 = vsel %vm435, %v623, 0
        %v677 = vsel %vm435, %v624, 0
        %679 = vmatprep.subr.mxu0 %v421
        %680 = vmatpush1.msra.mxu0 %v420
        %681 = vmatprep.subr.mxu0 %v423
        %682 = vmatpush1.msra.mxu0 %v422
        %683 = vmatprep.subr.mxu0 0.0
        %684 = vmatpush1.msra.mxu0 0.0
        %685 = vmatprep.subr.mxu0 0.0
        %686 = vmatpush1.msra.mxu0 0.0
        %687 = vmatprep.subr.mxu0 0.0
        %688 = vmatpush1.msra.mxu0 0.0
        %689 = vmatprep.subr.mxu0 0.0
        %690 = vmatpush1.msra.mxu0 0.0
        %691 = vmatprep.subr.mxu0 0.0
        %692 = vmatpush1.msra.mxu0 0.0
        %693 = vmatprep.subr.mxu0 0.0
        %694 = vmatpush1.msra.mxu0 0.0
        %695 = vmatprep.subr.mxu0 0.0
        %696 = vmatpush1.msra.mxu0 0.0
        %697 = vmatprep.subr.mxu0 0.0
        %698 = vmatpush1.msra.mxu0 0.0
        %699 = vmatprep.subr.mxu0 0.0
        %700 = vmatpush1.msra.mxu0 0.0
        %701 = vmatprep.subr.mxu0 0.0
        %702 = vmatpush1.msra.mxu0 0.0
        %703 = vmatprep.subr.mxu0 0.0
        %704 = vmatpush1.msra.mxu0 0.0
        %705 = vmatprep.subr.mxu0 0.0
        %706 = vmatpush1.msra.mxu0 0.0
        %707 = vmatprep.subr.mxu0 0.0
        %708 = vmatpush1.msra.mxu0 0.0
        %709 = vmatprep.subr.mxu0 0.0
        %710 = vmatpush1.msra.mxu0 0.0
        %711 = vmatprep.subr.mxu0 0.0
        %712 = vmatpush1.msra.mxu0 0.0
        %713 = vmatprep.subr.mxu0 0.0
        %714 = vmatpush1.msra.mxu0 0.0
        %715 = vmatprep.subr.mxu0 0.0
        %716 = vmatpush1.msra.mxu0 0.0
        %717 = vmatprep.subr.mxu0 0.0
        %718 = vmatpush1.msra.mxu0 0.0
        %719 = vmatprep.subr.mxu0 0.0
        %720 = vmatpush1.msra.mxu0 0.0
        %721 = vmatprep.subr.mxu0 0.0
        %722 = vmatpush1.msra.mxu0 0.0
        %723 = vmatprep.subr.mxu0 0.0
        %724 = vmatpush1.msra.mxu0 0.0
        %725 = vmatprep.subr.mxu0 0.0
        %726 = vmatpush1.msra.mxu0 0.0
        %727 = vmatprep.subr.mxu0 0.0
        %728 = vmatpush1.msra.mxu0 0.0
        %729 = vmatprep.subr.mxu0 0.0
        %730 = vmatpush1.msra.mxu0 0.0
        %731 = vmatprep.subr.mxu0 0.0
        %732 = vmatpush1.msra.mxu0 0.0
        %733 = vmatprep.subr.mxu0 0.0
        %734 = vmatpush1.msra.mxu0 0.0
        %735 = vmatprep.subr.mxu0 0.0
        %736 = vmatpush1.msra.mxu0 0.0
        %737 = vmatprep.subr.mxu0 0.0
        %738 = vmatpush1.msra.mxu0 0.0
        %739 = vmatprep.subr.mxu0 0.0
        %740 = vmatpush1.msra.mxu0 0.0
        %741 = vmatprep.subr.mxu0 0.0
        %742 = vmatpush1.msra.mxu0 0.0
        %743 = vmatprep.mubr.f32.mxu0 0.0
        %744 = vmatmul.mubr.f32.gmra.mrb[0].mxu0 %v662
        %v745 = vpop.f32.mrb[0].mxu0
        %v746 = vadd.f32 %v634, %v745
        %v747 = vpop.f32.mrb[0].mxu0
        %v748 = vadd.f32 %v634, %v747
        %749 = vmatprep.mubr.f32.mxu0 0.0
        %750 = vmatmul.mubr.f32.gmra.mrb[0].mxu0 %v665
        %v751 = vpop.f32.mrb[0].mxu0
        %v752 = vadd.f32 %v639, %v751
        %v753 = vpop.f32.mrb[0].mxu0
        %v754 = vadd.f32 %v639, %v753
        %755 = vmatprep.mubr.f32.mxu0 0.0
        %756 = vmatmul.mubr.f32.gmra.mrb[0].mxu0 %v668
        %v757 = vpop.f32.mrb[0].mxu0
        %v758 = vadd.f32 %v644, %v757
        %v759 = vpop.f32.mrb[0].mxu0
        %v760 = vadd.f32 %v644, %v759
        %761 = vmatprep.mubr.f32.mxu0 0.0
        %762 = vmatmul.mubr.f32.gmra.mrb[0].mxu0 %v671
        %v763 = vpop.f32.mrb[0].mxu0
        %v764 = vadd.f32 %v649, %v763
        %v765 = vpop.f32.mrb[0].mxu0
        %v766 = vadd.f32 %v649, %v765
        %767 = vmatprep.mubr.f32.mxu0 0.0
        %768 = vmatmul.mubr.f32.gmra.mrb[0].mxu0 %v674
        %v769 = vpop.f32.mrb[0].mxu0
        %v770 = vadd.f32 %v654, %v769
        %v771 = vpop.f32.mrb[0].mxu0
        %v772 = vadd.f32 %v654, %v771
        %773 = vmatprep.mubr.f32.mxu0 0.0
        %774 = vmatmul.mubr.f32.gmra.mrb[0].mxu0 %v677
        %v775 = vpop.f32.mrb[0].mxu0
        %v776 = vadd.f32 %v659, %v775
        %v777 = vpop.f32.mrb[0].mxu0
        %v778 = vadd.f32 %v659, %v777
        %779 = vdwg.mxu0
        %v784 = vcombine.low %v746, %v748
        %v785 = vcombine.high %v746, %v748
        %v787 = vunpack.c.l.s4 1983009808
        %v788 = vunpack.c.0.s8 %v787
        %v789 = vlaneseq
        %v790 = vshrl.u32 %v789, 7
        %v791 = vsub.s32 %v788, %v790
        %v792 = vrot.slane %v784, %v791
        %v794 = vunpack.c.l.s4 1983009808
        %v795 = vunpack.c.0.s8 %v794
        %v796 = vlaneseq
        %v797 = vshrl.u32 %v796, 7
        %v798 = vsub.s32 %v795, %v797
        %v799 = vrot.slane %v785, %v798
        %v800 = vcombine.high %v792, %v792
        %v801 = vcombine.high %v799, %v799
        %v802 = vcombine.low %v752, %v754
        %v803 = vcombine.high %v752, %v754
        %v805 = vunpack.c.l.s4 1983009808
        %v806 = vunpack.c.0.s8 %v805
        %v807 = vlaneseq
        %v808 = vshrl.u32 %v807, 7
        %v809 = vsub.s32 %v806, %v808
        %v810 = vrot.slane %v802, %v809
        %v812 = vunpack.c.l.s4 1983009808
        %v813 = vunpack.c.0.s8 %v812
        %v814 = vlaneseq
        %v815 = vshrl.u32 %v814, 7
        %v816 = vsub.s32 %v813, %v815
        %v817 = vrot.slane %v803, %v816
        %v818 = vcombine.high %v810, %v810
        %v819 = vcombine.high %v817, %v817
        %v824 = vcombine.low %v758, %v760
        %v825 = vcombine.high %v758, %v760
        %v827 = vunpack.c.l.s4 1983009808
        %v828 = vunpack.c.0.s8 %v827
        %v829 = vlaneseq
        %v830 = vshrl.u32 %v829, 7
        %v831 = vsub.s32 %v828, %v830
        %v832 = vrot.slane %v824, %v831
        %v834 = vunpack.c.l.s4 1983009808
        %v835 = vunpack.c.0.s8 %v834
        %v836 = vlaneseq
        %v837 = vshrl.u32 %v836, 7
        %v838 = vsub.s32 %v835, %v837
        %v839 = vrot.slane %v825, %v838
        %v840 = vcombine.high %v832, %v832
        %v841 = vcombine.high %v839, %v839
        %v842 = vcombine.low %v764, %v766
        %v843 = vcombine.high %v764, %v766
        %v845 = vunpack.c.l.s4 1983009808
        %v846 = vunpack.c.0.s8 %v845
        %v847 = vlaneseq
        %v848 = vshrl.u32 %v847, 7
        %v849 = vsub.s32 %v846, %v848
        %v850 = vrot.slane %v842, %v849
        %v852 = vunpack.c.l.s4 1983009808
        %v853 = vunpack.c.0.s8 %v852
        %v854 = vlaneseq
        %v855 = vshrl.u32 %v854, 7
        %v856 = vsub.s32 %v853, %v855
        %v857 = vrot.slane %v843, %v856
        %v858 = vcombine.high %v850, %v850
        %v859 = vcombine.high %v857, %v857
        %v864 = vcombine.low %v770, %v772
        %v865 = vcombine.high %v770, %v772
        %v867 = vunpack.c.l.s4 1983009808
        %v868 = vunpack.c.0.s8 %v867
        %v869 = vlaneseq
        %v870 = vshrl.u32 %v869, 7
        %v871 = vsub.s32 %v868, %v870
        %v872 = vrot.slane %v864, %v871
        %v874 = vunpack.c.l.s4 1983009808
        %v875 = vunpack.c.0.s8 %v874
        %v876 = vlaneseq
        %v877 = vshrl.u32 %v876, 7
        %v878 = vsub.s32 %v875, %v877
        %v879 = vrot.slane %v865, %v878
        %v880 = vcombine.high %v872, %v872
        %v881 = vcombine.high %v879, %v879
        %v882 = vcombine.low %v776, %v778
        %v883 = vcombine.high %v776, %v778
        %v885 = vunpack.c.l.s4 1983009808
        %v886 = vunpack.c.0.s8 %v885
        %v887 = vlaneseq
        %v888 = vshrl.u32 %v887, 7
        %v889 = vsub.s32 %v886, %v888
        %v890 = vrot.slane %v882, %v889
        %v892 = vunpack.c.l.s4 1983009808
        %v893 = vunpack.c.0.s8 %v892
        %v894 = vlaneseq
        %v895 = vshrl.u32 %v894, 7
        %v896 = vsub.s32 %v893, %v895
        %v897 = vrot.slane %v883, %v896
        %v898 = vcombine.high %v890, %v890
        %v899 = vcombine.high %v897, %v897
        %v901 = vunpack.c.l.s4 1983009808
        %v902 = vunpack.c.0.s8 %v901
        %v903 = vlaneseq
        %v904 = vshrl.u32 %v903, 7
        %v905 = vsub.s32 %v902, %v904
        %v906 = vrot.slane %v792, %v905
        %v907 = vcombine.high %v906, %v906
        %v909 = vunpack.c.l.s4 1983009808
        %v910 = vunpack.c.0.s8 %v909
        %v911 = vlaneseq
        %v912 = vshrl.u32 %v911, 7
        %v913 = vsub.s32 %v910, %v912
        %v914 = vrot.slane %v800, %v913
        %v915 = vcombine.high %v914, %v914
        %v917 = vunpack.c.l.s4 1983009808
        %v918 = vunpack.c.0.s8 %v917
        %v919 = vlaneseq
        %v920 = vshrl.u32 %v919, 7
        %v921 = vsub.s32 %v918, %v920
        %v922 = vrot.slane %v799, %v921
        %v923 = vcombine.high %v922, %v922
        %v925 = vunpack.c.l.s4 1983009808
        %v926 = vunpack.c.0.s8 %v925
        %v927 = vlaneseq
        %v928 = vshrl.u32 %v927, 7
        %v929 = vsub.s32 %v926, %v928
        %v930 = vrot.slane %v801, %v929
        %v931 = vcombine.high %v930, %v930
        %v933 = vunpack.c.l.s4 1983009808
        %v934 = vunpack.c.0.s8 %v933
        %v935 = vlaneseq
        %v936 = vshrl.u32 %v935, 7
        %v937 = vsub.s32 %v934, %v936
        %v938 = vrot.slane %v810, %v937
        %v939 = vcombine.high %v938, %v938
        %v941 = vunpack.c.l.s4 1983009808
        %v942 = vunpack.c.0.s8 %v941
        %v943 = vlaneseq
        %v944 = vshrl.u32 %v943, 7
        %v945 = vsub.s32 %v942, %v944
        %v946 = vrot.slane %v818, %v945
        %v947 = vcombine.high %v946, %v946
        %v949 = vunpack.c.l.s4 1983009808
        %v950 = vunpack.c.0.s8 %v949
        %v951 = vlaneseq
        %v952 = vshrl.u32 %v951, 7
        %v953 = vsub.s32 %v950, %v952
        %v954 = vrot.slane %v817, %v953
        %v955 = vcombine.high %v954, %v954
        %v957 = vunpack.c.l.s4 1983009808
        %v958 = vunpack.c.0.s8 %v957
        %v959 = vlaneseq
        %v960 = vshrl.u32 %v959, 7
        %v961 = vsub.s32 %v958, %v960
        %v962 = vrot.slane %v819, %v961
        %v963 = vcombine.high %v962, %v962
        %980 = vxpose.xlu0.b32.start [1/16] %v906, 128
        %981 = vxpose.xlu0.b32.cont [2/16] 0.0, 128
        %982 = vxpose.xlu0.b32.cont [3/16] 0.0, 128
        %983 = vxpose.xlu0.b32.cont [4/16] 0.0, 128
        %984 = vxpose.xlu0.b32.cont [5/16] 0.0, 128
        %985 = vxpose.xlu0.b32.cont [6/16] 0.0, 128
        %986 = vxpose.xlu0.b32.cont [7/16] 0.0, 128
        %987 = vxpose.xlu0.b32.cont [8/16] 0.0, 128
        %988 = vxpose.xlu0.b32.cont [9/16] 0.0, 128
        %989 = vxpose.xlu0.b32.cont [10/16] 0.0, 128
        %990 = vxpose.xlu0.b32.cont [11/16] 0.0, 128
        %991 = vxpose.xlu0.b32.cont [12/16] 0.0, 128
        %992 = vxpose.xlu0.b32.cont [13/16] 0.0, 128
        %993 = vxpose.xlu0.b32.cont [14/16] 0.0, 128
        %994 = vxpose.xlu0.b32.cont [15/16] 0.0, 128
        %995 = vxpose.xlu0.b32.end [16/16] 0.0, 128
        %v996 = vpop.trf.xlu0
        %v997 = vpop.trf.xlu0
        %v998 = vpop.trf.xlu0
        %v999 = vpop.trf.xlu0
        %v1000 = vpop.trf.xlu0
        %v1001 = vpop.trf.xlu0
        %v1002 = vpop.trf.xlu0
        %v1003 = vpop.trf.xlu0
        %v1004 = vpop.trf.xlu0
        %v1005 = vpop.trf.xlu0
        %v1006 = vpop.trf.xlu0
        %v1007 = vpop.trf.xlu0
        %v1008 = vpop.trf.xlu0
        %v1009 = vpop.trf.xlu0
        %v1010 = vpop.trf.xlu0
        %v1011 = vpop.trf.xlu0
        %1012 = vxpose.xlu0.b32.start [1/16] %v907, 128
        %1013 = vxpose.xlu0.b32.cont [2/16] 0.0, 128
        %1014 = vxpose.xlu0.b32.cont [3/16] 0.0, 128
        %1015 = vxpose.xlu0.b32.cont [4/16] 0.0, 128
        %1016 = vxpose.xlu0.b32.cont [5/16] 0.0, 128
        %1017 = vxpose.xlu0.b32.cont [6/16] 0.0, 128
        %1018 = vxpose.xlu0.b32.cont [7/16] 0.0, 128
        %1019 = vxpose.xlu0.b32.cont [8/16] 0.0, 128
        %1020 = vxpose.xlu0.b32.cont [9/16] 0.0, 128
        %1021 = vxpose.xlu0.b32.cont [10/16] 0.0, 128
        %1022 = vxpose.xlu0.b32.cont [11/16] 0.0, 128
        %1023 = vxpose.xlu0.b32.cont [12/16] 0.0, 128
        %1024 = vxpose.xlu0.b32.cont [13/16] 0.0, 128
        %1025 = vxpose.xlu0.b32.cont [14/16] 0.0, 128
        %1026 = vxpose.xlu0.b32.cont [15/16] 0.0, 128
        %1027 = vxpose.xlu0.b32.end [16/16] 0.0, 128
        %v1028 = vpop.trf.xlu0
        %v1029 = vpop.trf.xlu0
        %v1030 = vpop.trf.xlu0
        %v1031 = vpop.trf.xlu0
        %v1032 = vpop.trf.xlu0
        %v1033 = vpop.trf.xlu0
        %v1034 = vpop.trf.xlu0
        %v1035 = vpop.trf.xlu0
        %v1036 = vpop.trf.xlu0
        %v1037 = vpop.trf.xlu0
        %v1038 = vpop.trf.xlu0
        %v1039 = vpop.trf.xlu0
        %v1040 = vpop.trf.xlu0
        %v1041 = vpop.trf.xlu0
        %v1042 = vpop.trf.xlu0
        %v1043 = vpop.trf.xlu0
        %1044 = vxpose.xlu0.b32.start [1/16] %v914, 128
        %1045 = vxpose.xlu0.b32.cont [2/16] 0.0, 128
        %1046 = vxpose.xlu0.b32.cont [3/16] 0.0, 128
        %1047 = vxpose.xlu0.b32.cont [4/16] 0.0, 128
        %1048 = vxpose.xlu0.b32.cont [5/16] 0.0, 128
        %1049 = vxpose.xlu0.b32.cont [6/16] 0.0, 128
        %1050 = vxpose.xlu0.b32.cont [7/16] 0.0, 128
        %1051 = vxpose.xlu0.b32.cont [8/16] 0.0, 128
        %1052 = vxpose.xlu0.b32.cont [9/16] 0.0, 128
        %1053 = vxpose.xlu0.b32.cont [10/16] 0.0, 128
        %1054 = vxpose.xlu0.b32.cont [11/16] 0.0, 128
        %1055 = vxpose.xlu0.b32.cont [12/16] 0.0, 128
        %1056 = vxpose.xlu0.b32.cont [13/16] 0.0, 128
        %1057 = vxpose.xlu0.b32.cont [14/16] 0.0, 128
        %1058 = vxpose.xlu0.b32.cont [15/16] 0.0, 128
        %1059 = vxpose.xlu0.b32.end [16/16] 0.0, 128
        %v1060 = vpop.trf.xlu0
        %v1061 = vpop.trf.xlu0
        %v1062 = vpop.trf.xlu0
        %v1063 = vpop.trf.xlu0
        %v1064 = vpop.trf.xlu0
        %v1065 = vpop.trf.xlu0
        %v1066 = vpop.trf.xlu0
        %v1067 = vpop.trf.xlu0
        %v1068 = vpop.trf.xlu0
        %v1069 = vpop.trf.xlu0
        %v1070 = vpop.trf.xlu0
        %v1071 = vpop.trf.xlu0
        %v1072 = vpop.trf.xlu0
        %v1073 = vpop.trf.xlu0
        %v1074 = vpop.trf.xlu0
        %v1075 = vpop.trf.xlu0
        %1076 = vxpose.xlu0.b32.start [1/16] %v915, 128
        %1077 = vxpose.xlu0.b32.cont [2/16] 0.0, 128
        %1078 = vxpose.xlu0.b32.cont [3/16] 0.0, 128
        %1079 = vxpose.xlu0.b32.cont [4/16] 0.0, 128
        %1080 = vxpose.xlu0.b32.cont [5/16] 0.0, 128
        %1081 = vxpose.xlu0.b32.cont [6/16] 0.0, 128
        %1082 = vxpose.xlu0.b32.cont [7/16] 0.0, 128
        %1083 = vxpose.xlu0.b32.cont [8/16] 0.0, 128
        %1084 = vxpose.xlu0.b32.cont [9/16] 0.0, 128
        %1085 = vxpose.xlu0.b32.cont [10/16] 0.0, 128
        %1086 = vxpose.xlu0.b32.cont [11/16] 0.0, 128
        %1087 = vxpose.xlu0.b32.cont [12/16] 0.0, 128
        %1088 = vxpose.xlu0.b32.cont [13/16] 0.0, 128
        %1089 = vxpose.xlu0.b32.cont [14/16] 0.0, 128
        %1090 = vxpose.xlu0.b32.cont [15/16] 0.0, 128
        %1091 = vxpose.xlu0.b32.end [16/16] 0.0, 128
        %v1092 = vpop.trf.xlu0
        %v1093 = vpop.trf.xlu0
        %v1094 = vpop.trf.xlu0
        %v1095 = vpop.trf.xlu0
        %v1096 = vpop.trf.xlu0
        %v1097 = vpop.trf.xlu0
        %v1098 = vpop.trf.xlu0
        %v1099 = vpop.trf.xlu0
        %v1100 = vpop.trf.xlu0
        %v1101 = vpop.trf.xlu0
        %v1102 = vpop.trf.xlu0
        %v1103 = vpop.trf.xlu0
        %v1104 = vpop.trf.xlu0
        %v1105 = vpop.trf.xlu0
        %v1106 = vpop.trf.xlu0
        %v1107 = vpop.trf.xlu0
        %1108 = vxpose.xlu0.b32.start [1/16] %v922, 128
        %1109 = vxpose.xlu0.b32.cont [2/16] 0.0, 128
        %1110 = vxpose.xlu0.b32.cont [3/16] 0.0, 128
        %1111 = vxpose.xlu0.b32.cont [4/16] 0.0, 128
        %1112 = vxpose.xlu0.b32.cont [5/16] 0.0, 128
        %1113 = vxpose.xlu0.b32.cont [6/16] 0.0, 128
        %1114 = vxpose.xlu0.b32.cont [7/16] 0.0, 128
        %1115 = vxpose.xlu0.b32.cont [8/16] 0.0, 128
        %1116 = vxpose.xlu0.b32.cont [9/16] 0.0, 128
        %1117 = vxpose.xlu0.b32.cont [10/16] 0.0, 128
        %1118 = vxpose.xlu0.b32.cont [11/16] 0.0, 128
        %1119 = vxpose.xlu0.b32.cont [12/16] 0.0, 128
        %1120 = vxpose.xlu0.b32.cont [13/16] 0.0, 128
        %1121 = vxpose.xlu0.b32.cont [14/16] 0.0, 128
        %1122 = vxpose.xlu0.b32.cont [15/16] 0.0, 128
        %1123 = vxpose.xlu0.b32.end [16/16] 0.0, 128
        %v1124 = vpop.trf.xlu0
        %v1125 = vpop.trf.xlu0
        %v1126 = vpop.trf.xlu0
        %v1127 = vpop.trf.xlu0
        %v1128 = vpop.trf.xlu0
        %v1129 = vpop.trf.xlu0
        %v1130 = vpop.trf.xlu0
        %v1131 = vpop.trf.xlu0
        %v1132 = vpop.trf.xlu0
        %v1133 = vpop.trf.xlu0
        %v1134 = vpop.trf.xlu0
        %v1135 = vpop.trf.xlu0
        %v1136 = vpop.trf.xlu0
        %v1137 = vpop.trf.xlu0
        %v1138 = vpop.trf.xlu0
        %v1139 = vpop.trf.xlu0
        %1140 = vxpose.xlu0.b32.start [1/16] %v923, 128
        %1141 = vxpose.xlu0.b32.cont [2/16] 0.0, 128
        %1142 = vxpose.xlu0.b32.cont [3/16] 0.0, 128
        %1143 = vxpose.xlu0.b32.cont [4/16] 0.0, 128
        %1144 = vxpose.xlu0.b32.cont [5/16] 0.0, 128
        %1145 = vxpose.xlu0.b32.cont [6/16] 0.0, 128
        %1146 = vxpose.xlu0.b32.cont [7/16] 0.0, 128
        %1147 = vxpose.xlu0.b32.cont [8/16] 0.0, 128
        %1148 = vxpose.xlu0.b32.cont [9/16] 0.0, 128
        %1149 = vxpose.xlu0.b32.cont [10/16] 0.0, 128
        %1150 = vxpose.xlu0.b32.cont [11/16] 0.0, 128
        %1151 = vxpose.xlu0.b32.cont [12/16] 0.0, 128
        %1152 = vxpose.xlu0.b32.cont [13/16] 0.0, 128
        %1153 = vxpose.xlu0.b32.cont [14/16] 0.0, 128
        %1154 = vxpose.xlu0.b32.cont [15/16] 0.0, 128
        %1155 = vxpose.xlu0.b32.end [16/16] 0.0, 128
        %v1156 = vpop.trf.xlu0
        %v1157 = vpop.trf.xlu0
        %v1158 = vpop.trf.xlu0
        %v1159 = vpop.trf.xlu0
        %v1160 = vpop.trf.xlu0
        %v1161 = vpop.trf.xlu0
        %v1162 = vpop.trf.xlu0
        %v1163 = vpop.trf.xlu0
        %v1164 = vpop.trf.xlu0
        %v1165 = vpop.trf.xlu0
        %v1166 = vpop.trf.xlu0
        %v1167 = vpop.trf.xlu0
        %v1168 = vpop.trf.xlu0
        %v1169 = vpop.trf.xlu0
        %v1170 = vpop.trf.xlu0
        %v1171 = vpop.trf.xlu0
        %1172 = vxpose.xlu0.b32.start [1/16] %v930, 128
        %1173 = vxpose.xlu0.b32.cont [2/16] 0.0, 128
        %1174 = vxpose.xlu0.b32.cont [3/16] 0.0, 128
        %1175 = vxpose.xlu0.b32.cont [4/16] 0.0, 128
        %1176 = vxpose.xlu0.b32.cont [5/16] 0.0, 128
        %1177 = vxpose.xlu0.b32.cont [6/16] 0.0, 128
        %1178 = vxpose.xlu0.b32.cont [7/16] 0.0, 128
        %1179 = vxpose.xlu0.b32.cont [8/16] 0.0, 128
        %1180 = vxpose.xlu0.b32.cont [9/16] 0.0, 128
        %1181 = vxpose.xlu0.b32.cont [10/16] 0.0, 128
        %1182 = vxpose.xlu0.b32.cont [11/16] 0.0, 128
        %1183 = vxpose.xlu0.b32.cont [12/16] 0.0, 128
        %1184 = vxpose.xlu0.b32.cont [13/16] 0.0, 128
        %1185 = vxpose.xlu0.b32.cont [14/16] 0.0, 128
        %1186 = vxpose.xlu0.b32.cont [15/16] 0.0, 128
        %1187 = vxpose.xlu0.b32.end [16/16] 0.0, 128
        %v1188 = vpop.trf.xlu0
        %v1189 = vpop.trf.xlu0
        %v1190 = vpop.trf.xlu0
        %v1191 = vpop.trf.xlu0
        %v1192 = vpop.trf.xlu0
        %v1193 = vpop.trf.xlu0
        %v1194 = vpop.trf.xlu0
        %v1195 = vpop.trf.xlu0
        %v1196 = vpop.trf.xlu0
        %v1197 = vpop.trf.xlu0
        %v1198 = vpop.trf.xlu0
        %v1199 = vpop.trf.xlu0
        %v1200 = vpop.trf.xlu0
        %v1201 = vpop.trf.xlu0
        %v1202 = vpop.trf.xlu0
        %v1203 = vpop.trf.xlu0
        %1204 = vxpose.xlu0.b32.start [1/16] %v931, 128
        %1205 = vxpose.xlu0.b32.cont [2/16] 0.0, 128
        %1206 = vxpose.xlu0.b32.cont [3/16] 0.0, 128
        %1207 = vxpose.xlu0.b32.cont [4/16] 0.0, 128
        %1208 = vxpose.xlu0.b32.cont [5/16] 0.0, 128
        %1209 = vxpose.xlu0.b32.cont [6/16] 0.0, 128
        %1210 = vxpose.xlu0.b32.cont [7/16] 0.0, 128
        %1211 = vxpose.xlu0.b32.cont [8/16] 0.0, 128
        %1212 = vxpose.xlu0.b32.cont [9/16] 0.0, 128
        %1213 = vxpose.xlu0.b32.cont [10/16] 0.0, 128
        %1214 = vxpose.xlu0.b32.cont [11/16] 0.0, 128
        %1215 = vxpose.xlu0.b32.cont [12/16] 0.0, 128
        %1216 = vxpose.xlu0.b32.cont [13/16] 0.0, 128
        %1217 = vxpose.xlu0.b32.cont [14/16] 0.0, 128
        %1218 = vxpose.xlu0.b32.cont [15/16] 0.0, 128
        %1219 = vxpose.xlu0.b32.end [16/16] 0.0, 128
        %v1220 = vpop.trf.xlu0
        %v1221 = vpop.trf.xlu0
        %v1222 = vpop.trf.xlu0
        %v1223 = vpop.trf.xlu0
        %v1224 = vpop.trf.xlu0
        %v1225 = vpop.trf.xlu0
        %v1226 = vpop.trf.xlu0
        %v1227 = vpop.trf.xlu0
        %v1228 = vpop.trf.xlu0
        %v1229 = vpop.trf.xlu0
        %v1230 = vpop.trf.xlu0
        %v1231 = vpop.trf.xlu0
        %v1232 = vpop.trf.xlu0
        %v1233 = vpop.trf.xlu0
        %v1234 = vpop.trf.xlu0
        %v1235 = vpop.trf.xlu0
        %1236 = vxpose.xlu0.b32.start [1/16] %v938, 128
        %1237 = vxpose.xlu0.b32.cont [2/16] 0.0, 128
        %1238 = vxpose.xlu0.b32.cont [3/16] 0.0, 128
        %1239 = vxpose.xlu0.b32.cont [4/16] 0.0, 128
        %1240 = vxpose.xlu0.b32.cont [5/16] 0.0, 128
        %1241 = vxpose.xlu0.b32.cont [6/16] 0.0, 128
        %1242 = vxpose.xlu0.b32.cont [7/16] 0.0, 128
        %1243 = vxpose.xlu0.b32.cont [8/16] 0.0, 128
        %1244 = vxpose.xlu0.b32.cont [9/16] 0.0, 128
        %1245 = vxpose.xlu0.b32.cont [10/16] 0.0, 128
        %1246 = vxpose.xlu0.b32.cont [11/16] 0.0, 128
        %1247 = vxpose.xlu0.b32.cont [12/16] 0.0, 128
        %1248 = vxpose.xlu0.b32.cont [13/16] 0.0, 128
        %1249 = vxpose.xlu0.b32.cont [14/16] 0.0, 128
        %1250 = vxpose.xlu0.b32.cont [15/16] 0.0, 128
        %1251 = vxpose.xlu0.b32.end [16/16] 0.0, 128
        %v1252 = vpop.trf.xlu0
        %v1253 = vpop.trf.xlu0
        %v1254 = vpop.trf.xlu0
        %v1255 = vpop.trf.xlu0
        %v1256 = vpop.trf.xlu0
        %v1257 = vpop.trf.xlu0
        %v1258 = vpop.trf.xlu0
        %v1259 = vpop.trf.xlu0
        %v1260 = vpop.trf.xlu0
        %v1261 = vpop.trf.xlu0
        %v1262 = vpop.trf.xlu0
        %v1263 = vpop.trf.xlu0
        %v1264 = vpop.trf.xlu0
        %v1265 = vpop.trf.xlu0
        %v1266 = vpop.trf.xlu0
        %v1267 = vpop.trf.xlu0
        %1268 = vxpose.xlu0.b32.start [1/16] %v939, 128
        %1269 = vxpose.xlu0.b32.cont [2/16] 0.0, 128
        %1270 = vxpose.xlu0.b32.cont [3/16] 0.0, 128
        %1271 = vxpose.xlu0.b32.cont [4/16] 0.0, 128
        %1272 = vxpose.xlu0.b32.cont [5/16] 0.0, 128
        %1273 = vxpose.xlu0.b32.cont [6/16] 0.0, 128
        %1274 = vxpose.xlu0.b32.cont [7/16] 0.0, 128
        %1275 = vxpose.xlu0.b32.cont [8/16] 0.0, 128
        %1276 = vxpose.xlu0.b32.cont [9/16] 0.0, 128
        %1277 = vxpose.xlu0.b32.cont [10/16] 0.0, 128
        %1278 = vxpose.xlu0.b32.cont [11/16] 0.0, 128
        %1279 = vxpose.xlu0.b32.cont [12/16] 0.0, 128
        %1280 = vxpose.xlu0.b32.cont [13/16] 0.0, 128
        %1281 = vxpose.xlu0.b32.cont [14/16] 0.0, 128
        %1282 = vxpose.xlu0.b32.cont [15/16] 0.0, 128
        %1283 = vxpose.xlu0.b32.end [16/16] 0.0, 128
        %v1284 = vpop.trf.xlu0
        %v1285 = vpop.trf.xlu0
        %v1286 = vpop.trf.xlu0
        %v1287 = vpop.trf.xlu0
        %v1288 = vpop.trf.xlu0
        %v1289 = vpop.trf.xlu0
        %v1290 = vpop.trf.xlu0
        %v1291 = vpop.trf.xlu0
        %v1292 = vpop.trf.xlu0
        %v1293 = vpop.trf.xlu0
        %v1294 = vpop.trf.xlu0
        %v1295 = vpop.trf.xlu0
        %v1296 = vpop.trf.xlu0
        %v1297 = vpop.trf.xlu0
        %v1298 = vpop.trf.xlu0
        %v1299 = vpop.trf.xlu0
        %1300 = vxpose.xlu0.b32.start [1/16] %v946, 128
        %1301 = vxpose.xlu0.b32.cont [2/16] 0.0, 128
        %1302 = vxpose.xlu0.b32.cont [3/16] 0.0, 128
        %1303 = vxpose.xlu0.b32.cont [4/16] 0.0, 128
        %1304 = vxpose.xlu0.b32.cont [5/16] 0.0, 128
        %1305 = vxpose.xlu0.b32.cont [6/16] 0.0, 128
        %1306 = vxpose.xlu0.b32.cont [7/16] 0.0, 128
        %1307 = vxpose.xlu0.b32.cont [8/16] 0.0, 128
        %1308 = vxpose.xlu0.b32.cont [9/16] 0.0, 128
        %1309 = vxpose.xlu0.b32.cont [10/16] 0.0, 128
        %1310 = vxpose.xlu0.b32.cont [11/16] 0.0, 128
        %1311 = vxpose.xlu0.b32.cont [12/16] 0.0, 128
        %1312 = vxpose.xlu0.b32.cont [13/16] 0.0, 128
        %1313 = vxpose.xlu0.b32.cont [14/16] 0.0, 128
        %1314 = vxpose.xlu0.b32.cont [15/16] 0.0, 128
        %1315 = vxpose.xlu0.b32.end [16/16] 0.0, 128
        %v1316 = vpop.trf.xlu0
        %v1317 = vpop.trf.xlu0
        %v1318 = vpop.trf.xlu0
        %v1319 = vpop.trf.xlu0
        %v1320 = vpop.trf.xlu0
        %v1321 = vpop.trf.xlu0
        %v1322 = vpop.trf.xlu0
        %v1323 = vpop.trf.xlu0
        %v1324 = vpop.trf.xlu0
        %v1325 = vpop.trf.xlu0
        %v1326 = vpop.trf.xlu0
        %v1327 = vpop.trf.xlu0
        %v1328 = vpop.trf.xlu0
        %v1329 = vpop.trf.xlu0
        %v1330 = vpop.trf.xlu0
        %v1331 = vpop.trf.xlu0
        %1332 = vxpose.xlu0.b32.start [1/16] %v947, 128
        %1333 = vxpose.xlu0.b32.cont [2/16] 0.0, 128
        %1334 = vxpose.xlu0.b32.cont [3/16] 0.0, 128
        %1335 = vxpose.xlu0.b32.cont [4/16] 0.0, 128
        %1336 = vxpose.xlu0.b32.cont [5/16] 0.0, 128
        %1337 = vxpose.xlu0.b32.cont [6/16] 0.0, 128
        %1338 = vxpose.xlu0.b32.cont [7/16] 0.0, 128
        %1339 = vxpose.xlu0.b32.cont [8/16] 0.0, 128
        %1340 = vxpose.xlu0.b32.cont [9/16] 0.0, 128
        %1341 = vxpose.xlu0.b32.cont [10/16] 0.0, 128
        %1342 = vxpose.xlu0.b32.cont [11/16] 0.0, 128
        %1343 = vxpose.xlu0.b32.cont [12/16] 0.0, 128
        %1344 = vxpose.xlu0.b32.cont [13/16] 0.0, 128
        %1345 = vxpose.xlu0.b32.cont [14/16] 0.0, 128
        %1346 = vxpose.xlu0.b32.cont [15/16] 0.0, 128
        %1347 = vxpose.xlu0.b32.end [16/16] 0.0, 128
        %v1348 = vpop.trf.xlu0
        %v1349 = vpop.trf.xlu0
        %v1350 = vpop.trf.xlu0
        %v1351 = vpop.trf.xlu0
        %v1352 = vpop.trf.xlu0
        %v1353 = vpop.trf.xlu0
        %v1354 = vpop.trf.xlu0
        %v1355 = vpop.trf.xlu0
        %v1356 = vpop.trf.xlu0
        %v1357 = vpop.trf.xlu0
        %v1358 = vpop.trf.xlu0
        %v1359 = vpop.trf.xlu0
        %v1360 = vpop.trf.xlu0
        %v1361 = vpop.trf.xlu0
        %v1362 = vpop.trf.xlu0
        %v1363 = vpop.trf.xlu0
        %1364 = vxpose.xlu0.b32.start [1/16] %v954, 128
        %1365 = vxpose.xlu0.b32.cont [2/16] 0.0, 128
        %1366 = vxpose.xlu0.b32.cont [3/16] 0.0, 128
        %1367 = vxpose.xlu0.b32.cont [4/16] 0.0, 128
        %1368 = vxpose.xlu0.b32.cont [5/16] 0.0, 128
        %1369 = vxpose.xlu0.b32.cont [6/16] 0.0, 128
        %1370 = vxpose.xlu0.b32.cont [7/16] 0.0, 128
        %1371 = vxpose.xlu0.b32.cont [8/16] 0.0, 128
        %1372 = vxpose.xlu0.b32.cont [9/16] 0.0, 128
        %1373 = vxpose.xlu0.b32.cont [10/16] 0.0, 128
        %1374 = vxpose.xlu0.b32.cont [11/16] 0.0, 128
        %1375 = vxpose.xlu0.b32.cont [12/16] 0.0, 128
        %1376 = vxpose.xlu0.b32.cont [13/16] 0.0, 128
        %1377 = vxpose.xlu0.b32.cont [14/16] 0.0, 128
        %1378 = vxpose.xlu0.b32.cont [15/16] 0.0, 128
        %1379 = vxpose.xlu0.b32.end [16/16] 0.0, 128
        %v1380 = vpop.trf.xlu0
        %v1381 = vpop.trf.xlu0
        %v1382 = vpop.trf.xlu0
        %v1383 = vpop.trf.xlu0
        %v1384 = vpop.trf.xlu0
        %v1385 = vpop.trf.xlu0
        %v1386 = vpop.trf.xlu0
        %v1387 = vpop.trf.xlu0
        %v1388 = vpop.trf.xlu0
        %v1389 = vpop.trf.xlu0
        %v1390 = vpop.trf.xlu0
        %v1391 = vpop.trf.xlu0
        %v1392 = vpop.trf.xlu0
        %v1393 = vpop.trf.xlu0
        %v1394 = vpop.trf.xlu0
        %v1395 = vpop.trf.xlu0
        %1396 = vxpose.xlu0.b32.start [1/16] %v955, 128
        %1397 = vxpose.xlu0.b32.cont [2/16] 0.0, 128
        %1398 = vxpose.xlu0.b32.cont [3/16] 0.0, 128
        %1399 = vxpose.xlu0.b32.cont [4/16] 0.0, 128
        %1400 = vxpose.xlu0.b32.cont [5/16] 0.0, 128
        %1401 = vxpose.xlu0.b32.cont [6/16] 0.0, 128
        %1402 = vxpose.xlu0.b32.cont [7/16] 0.0, 128
        %1403 = vxpose.xlu0.b32.cont [8/16] 0.0, 128
        %1404 = vxpose.xlu0.b32.cont [9/16] 0.0, 128
        %1405 = vxpose.xlu0.b32.cont [10/16] 0.0, 128
        %1406 = vxpose.xlu0.b32.cont [11/16] 0.0, 128
        %1407 = vxpose.xlu0.b32.cont [12/16] 0.0, 128
        %1408 = vxpose.xlu0.b32.cont [13/16] 0.0, 128
        %1409 = vxpose.xlu0.b32.cont [14/16] 0.0, 128
        %1410 = vxpose.xlu0.b32.cont [15/16] 0.0, 128
        %1411 = vxpose.xlu0.b32.end [16/16] 0.0, 128
        %v1412 = vpop.trf.xlu0
        %v1413 = vpop.trf.xlu0
        %v1414 = vpop.trf.xlu0
        %v1415 = vpop.trf.xlu0
        %v1416 = vpop.trf.xlu0
        %v1417 = vpop.trf.xlu0
        %v1418 = vpop.trf.xlu0
        %v1419 = vpop.trf.xlu0
        %v1420 = vpop.trf.xlu0
        %v1421 = vpop.trf.xlu0
        %v1422 = vpop.trf.xlu0
        %v1423 = vpop.trf.xlu0
        %v1424 = vpop.trf.xlu0
        %v1425 = vpop.trf.xlu0
        %v1426 = vpop.trf.xlu0
        %v1427 = vpop.trf.xlu0
        %1428 = vxpose.xlu0.b32.start [1/16] %v962, 128
        %1429 = vxpose.xlu0.b32.cont [2/16] 0.0, 128
        %1430 = vxpose.xlu0.b32.cont [3/16] 0.0, 128
        %1431 = vxpose.xlu0.b32.cont [4/16] 0.0, 128
        %1432 = vxpose.xlu0.b32.cont [5/16] 0.0, 128
        %1433 = vxpose.xlu0.b32.cont [6/16] 0.0, 128
        %1434 = vxpose.xlu0.b32.cont [7/16] 0.0, 128
        %1435 = vxpose.xlu0.b32.cont [8/16] 0.0, 128
        %1436 = vxpose.xlu0.b32.cont [9/16] 0.0, 128
        %1437 = vxpose.xlu0.b32.cont [10/16] 0.0, 128
        %1438 = vxpose.xlu0.b32.cont [11/16] 0.0, 128
        %1439 = vxpose.xlu0.b32.cont [12/16] 0.0, 128
        %1440 = vxpose.xlu0.b32.cont [13/16] 0.0, 128
        %1441 = vxpose.xlu0.b32.cont [14/16] 0.0, 128
        %1442 = vxpose.xlu0.b32.cont [15/16] 0.0, 128
        %1443 = vxpose.xlu0.b32.end [16/16] 0.0, 128
        %v1444 = vpop.trf.xlu0
        %v1445 = vpop.trf.xlu0
        %v1446 = vpop.trf.xlu0
        %v1447 = vpop.trf.xlu0
        %v1448 = vpop.trf.xlu0
        %v1449 = vpop.trf.xlu0
        %v1450 = vpop.trf.xlu0
        %v1451 = vpop.trf.xlu0
        %v1452 = vpop.trf.xlu0
        %v1453 = vpop.trf.xlu0
        %v1454 = vpop.trf.xlu0
        %v1455 = vpop.trf.xlu0
        %v1456 = vpop.trf.xlu0
        %v1457 = vpop.trf.xlu0
        %v1458 = vpop.trf.xlu0
        %v1459 = vpop.trf.xlu0
        %1460 = vxpose.xlu0.b32.start [1/16] %v963, 128
        %1461 = vxpose.xlu0.b32.cont [2/16] 0.0, 128
        %1462 = vxpose.xlu0.b32.cont [3/16] 0.0, 128
        %1463 = vxpose.xlu0.b32.cont [4/16] 0.0, 128
        %1464 = vxpose.xlu0.b32.cont [5/16] 0.0, 128
        %1465 = vxpose.xlu0.b32.cont [6/16] 0.0, 128
        %1466 = vxpose.xlu0.b32.cont [7/16] 0.0, 128
        %1467 = vxpose.xlu0.b32.cont [8/16] 0.0, 128
        %1468 = vxpose.xlu0.b32.cont [9/16] 0.0, 128
        %1469 = vxpose.xlu0.b32.cont [10/16] 0.0, 128
        %1470 = vxpose.xlu0.b32.cont [11/16] 0.0, 128
        %1471 = vxpose.xlu0.b32.cont [12/16] 0.0, 128
        %1472 = vxpose.xlu0.b32.cont [13/16] 0.0, 128
        %1473 = vxpose.xlu0.b32.cont [14/16] 0.0, 128
        %1474 = vxpose.xlu0.b32.cont [15/16] 0.0, 128
        %1475 = vxpose.xlu0.b32.end [16/16] 0.0, 128
        %v1476 = vpop.trf.xlu0
        %v1477 = vpop.trf.xlu0
        %v1478 = vpop.trf.xlu0
        %v1479 = vpop.trf.xlu0
        %v1480 = vpop.trf.xlu0
        %v1481 = vpop.trf.xlu0
        %v1482 = vpop.trf.xlu0
        %v1483 = vpop.trf.xlu0
        %v1484 = vpop.trf.xlu0
        %v1485 = vpop.trf.xlu0
        %v1486 = vpop.trf.xlu0
        %v1487 = vpop.trf.xlu0
        %v1488 = vpop.trf.xlu0
        %v1489 = vpop.trf.xlu0
        %v1490 = vpop.trf.xlu0
        %v1491 = vpop.trf.xlu0
        %v1493 = vunpack.c.l.s4 1983009808
        %v1494 = vunpack.c.0.s8 %v1493
        %v1495 = vlaneseq
        %v1496 = vshrl.u32 %v1495, 7
        %v1497 = vsub.s32 %v1494, %v1496
        %v1498 = vrot.slane %v832, %v1497
        %v1499 = vcombine.high %v1498, %v1498
        %vm1500 = vcmask 15360
        %v1502 = vsel %vm1500, %v996, 0
        %v1505 = vsel %vm1500, %v997, 0
        %v1508 = vsel %vm1500, %v998, 0
        %v1511 = vsel %vm1500, %v999, 0
        %v1514 = vsel %vm1500, %v1000, 0
        %v1517 = vsel %vm1500, %v1001, 0
        %v1520 = vsel %vm1500, %v1002, 0
        %v1523 = vsel %vm1500, %v1003, 0
        %v1526 = vsel %vm1500, %v1004, 0
        %v1529 = vsel %vm1500, %v1005, 0
        %v1532 = vsel %vm1500, %v1006, 0
        %v1535 = vsel %vm1500, %v1007, 0
        %v1538 = vsel %vm1500, %v1008, 0
        %v1541 = vsel %vm1500, %v1009, 0
        %v1544 = vsel %vm1500, %v1010, 0
        %v1547 = vsel %vm1500, %v1011, 0
        %v1550 = vsel %vm1500, %v1028, 0
        %v1553 = vsel %vm1500, %v1029, 0
        %v1556 = vsel %vm1500, %v1030, 0
        %v1559 = vsel %vm1500, %v1031, 0
        %v1562 = vsel %vm1500, %v1032, 0
        %v1565 = vsel %vm1500, %v1033, 0
        %v1568 = vsel %vm1500, %v1034, 0
        %v1571 = vsel %vm1500, %v1035, 0
        %v1574 = vsel %vm1500, %v1036, 0
        %v1577 = vsel %vm1500, %v1037, 0
        %v1580 = vsel %vm1500, %v1038, 0
        %v1583 = vsel %vm1500, %v1039, 0
        %v1586 = vsel %vm1500, %v1040, 0
        %v1589 = vsel %vm1500, %v1041, 0
        %v1592 = vsel %vm1500, %v1042, 0
        %v1595 = vsel %vm1500, %v1043, 0
        %vm1597 = vcmask 1041408
        %v1598 = vsel %vm1597, %v1498, 0
        %v1600 = vsel %vm1597, %v1499, 0
        %1602 = vmatprep.subr.mxu0 %v1600
        %1603 = vmatpush1.msra.mxu0 %v1598
        %1604 = vmatprep.subr.mxu0 0.0
        %1605 = vmatpush1.msra.mxu0 0.0
        %1606 = vmatprep.subr.mxu0 0.0
        %1607 = vmatpush1.msra.mxu0 0.0
        %1608 = vmatprep.subr.mxu0 0.0
        %1609 = vmatpush1.msra.mxu0 0.0
        %1610 = vmatprep.subr.mxu0 0.0
        %1611 = vmatpush1.msra.mxu0 0.0
        %1612 = vmatprep.subr.mxu0 0.0
        %1613 = vmatpush1.msra.mxu0 0.0
        %1614 = vmatprep.subr.mxu0 0.0
        %1615 = vmatpush1.msra.mxu0 0.0
        %1616 = vmatprep.subr.mxu0 0.0
        %1617 = vmatpush1.msra.mxu0 0.0
        %1618 = vmatprep.subr.mxu0 0.0
        %1619 = vmatpush1.msra.mxu0 0.0
        %1620 = vmatprep.subr.mxu0 0.0
        %1621 = vmatpush1.msra.mxu0 0.0
        %1622 = vmatprep.subr.mxu0 0.0
        %1623 = vmatpush1.msra.mxu0 0.0
        %1624 = vmatprep.subr.mxu0 0.0
        %1625 = vmatpush1.msra.mxu0 0.0
        %1626 = vmatprep.subr.mxu0 0.0
        %1627 = vmatpush1.msra.mxu0 0.0
        %1628 = vmatprep.subr.mxu0 0.0
        %1629 = vmatpush1.msra.mxu0 0.0
        %1630 = vmatprep.subr.mxu0 0.0
        %1631 = vmatpush1.msra.mxu0 0.0
        %1632 = vmatprep.subr.mxu0 0.0
        %1633 = vmatpush1.msra.mxu0 0.0
        %1634 = vmatprep.subr.mxu0 0.0
        %1635 = vmatpush1.msra.mxu0 0.0
        %1636 = vmatprep.subr.mxu0 0.0
        %1637 = vmatpush1.msra.mxu0 0.0
        %1638 = vmatprep.subr.mxu0 0.0
        %1639 = vmatpush1.msra.mxu0 0.0
        %1640 = vmatprep.subr.mxu0 0.0
        %1641 = vmatpush1.msra.mxu0 0.0
        %1642 = vmatprep.subr.mxu0 0.0
        %1643 = vmatpush1.msra.mxu0 0.0
        %1644 = vmatprep.subr.mxu0 0.0
        %1645 = vmatpush1.msra.mxu0 0.0
        %1646 = vmatprep.subr.mxu0 0.0
        %1647 = vmatpush1.msra.mxu0 0.0
        %1648 = vmatprep.subr.mxu0 0.0
        %1649 = vmatpush1.msra.mxu0 0.0
        %1650 = vmatprep.subr.mxu0 0.0
        %1651 = vmatpush1.msra.mxu0 0.0
        %1652 = vmatprep.subr.mxu0 0.0
        %1653 = vmatpush1.msra.mxu0 0.0
        %1654 = vmatprep.subr.mxu0 0.0
        %1655 = vmatpush1.msra.mxu0 0.0
        %1656 = vmatprep.subr.mxu0 0.0
        %1657 = vmatpush1.msra.mxu0 0.0
        %1658 = vmatprep.subr.mxu0 0.0
        %1659 = vmatpush1.msra.mxu0 0.0
        %1660 = vmatprep.subr.mxu0 0.0
        %1661 = vmatpush1.msra.mxu0 0.0
        %1662 = vmatprep.subr.mxu0 0.0
        %1663 = vmatpush1.msra.mxu0 0.0
        %1664 = vmatprep.subr.mxu0 0.0
        %1665 = vmatpush1.msra.mxu0 0.0
        %1666 = vmatprep.mubr.f32.mxu0 0.0
        %1667 = vmatmul.mubr.f32.gmra.mrb[0].mxu0 %v1502
        %v1668 = vpop.f32.mrb[0].mxu0
        %v1669 = vadd.f32 0.0, %v1668
        %v1670 = vpop.f32.mrb[0].mxu0
        %v1671 = vadd.f32 0.0, %v1670
        %1672 = vmatprep.mubr.f32.mxu0 0.0
        %1673 = vmatmul.mubr.f32.gmra.mrb[0].mxu0 %v1505
        %v1674 = vpop.f32.mrb[0].mxu0
        %v1675 = vadd.f32 0.0, %v1674
        %v1676 = vpop.f32.mrb[0].mxu0
        %v1677 = vadd.f32 0.0, %v1676
        %1678 = vmatprep.mubr.f32.mxu0 0.0
        %1679 = vmatmul.mubr.f32.gmra.mrb[0].mxu0 %v1508
        %v1680 = vpop.f32.mrb[0].mxu0
        %v1681 = vadd.f32 0.0, %v1680
        %v1682 = vpop.f32.mrb[0].mxu0
        %v1683 = vadd.f32 0.0, %v1682
        %1684 = vmatprep.mubr.f32.mxu0 0.0
        %1685 = vmatmul.mubr.f32.gmra.mrb[0].mxu0 %v1511
        %v1686 = vpop.f32.mrb[0].mxu0
        %v1687 = vadd.f32 0.0, %v1686
        %v1688 = vpop.f32.mrb[0].mxu0
        %v1689 = vadd.f32 0.0, %v1688
        %1690 = vmatprep.mubr.f32.mxu0 0.0
        %1691 = vmatmul.mubr.f32.gmra.mrb[0].mxu0 %v1514
        %v1692 = vpop.f32.mrb[0].mxu0
        %v1693 = vadd.f32 0.0, %v1692
        %v1694 = vpop.f32.mrb[0].mxu0
        %v1695 = vadd.f32 0.0, %v1694
        %1696 = vmatprep.mubr.f32.mxu0 0.0
        %1697 = vmatmul.mubr.f32.gmra.mrb[0].mxu0 %v1517
        %v1698 = vpop.f32.mrb[0].mxu0
        %v1699 = vadd.f32 0.0, %v1698
        %v1700 = vpop.f32.mrb[0].mxu0
        %v1701 = vadd.f32 0.0, %v1700
        %1702 = vmatprep.mubr.f32.mxu0 0.0
        %1703 = vmatmul.mubr.f32.gmra.mrb[0].mxu0 %v1520
        %v1704 = vpop.f32.mrb[0].mxu0
        %v1705 = vadd.f32 0.0, %v1704
        %v1706 = vpop.f32.mrb[0].mxu0
        %v1707 = vadd.f32 0.0, %v1706
        %1708 = vmatprep.mubr.f32.mxu0 0.0
        %1709 = vmatmul.mubr.f32.gmra.mrb[0].mxu0 %v1523
        %v1710 = vpop.f32.mrb[0].mxu0
        %v1711 = vadd.f32 0.0, %v1710
        %v1712 = vpop.f32.mrb[0].mxu0
        %v1713 = vadd.f32 0.0, %v1712
        %1714 = vmatprep.mubr.f32.mxu0 0.0
        %1715 = vmatmul.mubr.f32.gmra.mrb[0].mxu0 %v1526
        %v1716 = vpop.f32.mrb[0].mxu0
        %v1717 = vadd.f32 0.0, %v1716
        %v1718 = vpop.f32.mrb[0].mxu0
        %v1719 = vadd.f32 0.0, %v1718
        %1720 = vmatprep.mubr.f32.mxu0 0.0
        %1721 = vmatmul.mubr.f32.gmra.mrb[0].mxu0 %v1529
        %v1722 = vpop.f32.mrb[0].mxu0
        %v1723 = vadd.f32 0.0, %v1722
        %v1724 = vpop.f32.mrb[0].mxu0
        %v1725 = vadd.f32 0.0, %v1724
        %1726 = vmatprep.mubr.f32.mxu0 0.0
        %1727 = vmatmul.mubr.f32.gmra.mrb[0].mxu0 %v1532
        %v1728 = vpop.f32.mrb[0].mxu0
        %v1729 = vadd.f32 0.0, %v1728
        %v1730 = vpop.f32.mrb[0].mxu0
        %v1731 = vadd.f32 0.0, %v1730
        %1732 = vmatprep.mubr.f32.mxu0 0.0
        %1733 = vmatmul.mubr.f32.gmra.mrb[0].mxu0 %v1535
        %v1734 = vpop.f32.mrb[0].mxu0
        %v1735 = vadd.f32 0.0, %v1734
        %v1736 = vpop.f32.mrb[0].mxu0
        %v1737 = vadd.f32 0.0, %v1736
        %1738 = vmatprep.mubr.f32.mxu0 0.0
        %1739 = vmatmul.mubr.f32.gmra.mrb[0].mxu0 %v1538
        %v1740 = vpop.f32.mrb[0].mxu0
        %v1741 = vadd.f32 0.0, %v1740
        %v1742 = vpop.f32.mrb[0].mxu0
        %v1743 = vadd.f32 0.0, %v1742
        %1744 = vmatprep.mubr.f32.mxu0 0.0
        %1745 = vmatmul.mubr.f32.gmra.mrb[0].mxu0 %v1541
        %v1746 = vpop.f32.mrb[0].mxu0
        %v1747 = vadd.f32 0.0, %v1746
        %v1748 = vpop.f32.mrb[0].mxu0
        %v1749 = vadd.f32 0.0, %v1748
        %1750 = vmatprep.mubr.f32.mxu0 0.0
        %1751 = vmatmul.mubr.f32.gmra.mrb[0].mxu0 %v1544
        %v1752 = vpop.f32.mrb[0].mxu0
        %v1753 = vadd.f32 0.0, %v1752
        %v1754 = vpop.f32.mrb[0].mxu0
        %v1755 = vadd.f32 0.0, %v1754
        %1756 = vmatprep.mubr.f32.mxu0 0.0
        %1757 = vmatmul.mubr.f32.gmra.mrb[0].mxu0 %v1547
        %v1758 = vpop.f32.mrb[0].mxu0
        %v1759 = vadd.f32 0.0, %v1758
        %v1760 = vpop.f32.mrb[0].mxu0
        %v1761 = vadd.f32 0.0, %v1760
        %1762 = vmatprep.mubr.f32.mxu0 0.0
        %1763 = vmatmul.mubr.f32.gmra.mrb[0].mxu0 %v1550
        %v1764 = vpop.f32.mrb[0].mxu0
        %v1765 = vadd.f32 0.0, %v1764
        %v1766 = vpop.f32.mrb[0].mxu0
        %v1767 = vadd.f32 0.0, %v1766
        %1768 = vmatprep.mubr.f32.mxu0 0.0
        %1769 = vmatmul.mubr.f32.gmra.mrb[0].mxu0 %v1553
        %v1770 = vpop.f32.mrb[0].mxu0
        %v1771 = vadd.f32 0.0, %v1770
        %v1772 = vpop.f32.mrb[0].mxu0
        %v1773 = vadd.f32 0.0, %v1772
        %1774 = vmatprep.mubr.f32.mxu0 0.0
        %1775 = vmatmul.mubr.f32.gmra.mrb[0].mxu0 %v1556
        %v1776 = vpop.f32.mrb[0].mxu0
        %v1777 = vadd.f32 0.0, %v1776
        %v1778 = vpop.f32.mrb[0].mxu0
        %v1779 = vadd.f32 0.0, %v1778
        %1780 = vmatprep.mubr.f32.mxu0 0.0
        %1781 = vmatmul.mubr.f32.gmra.mrb[0].mxu0 %v1559
        %v1782 = vpop.f32.mrb[0].mxu0
        %v1783 = vadd.f32 0.0, %v1782
        %v1784 = vpop.f32.mrb[0].mxu0
        %v1785 = vadd.f32 0.0, %v1784
        %1786 = vmatprep.mubr.f32.mxu0 0.0
        %1787 = vmatmul.mubr.f32.gmra.mrb[0].mxu0 %v1562
        %v1788 = vpop.f32.mrb[0].mxu0
        %v1789 = vadd.f32 0.0, %v1788
        %v1790 = vpop.f32.mrb[0].mxu0
        %v1791 = vadd.f32 0.0, %v1790
        %1792 = vmatprep.mubr.f32.mxu0 0.0
        %1793 = vmatmul.mubr.f32.gmra.mrb[0].mxu0 %v1565
        %v1794 = vpop.f32.mrb[0].mxu0
        %v1795 = vadd.f32 0.0, %v1794
        %v1796 = vpop.f32.mrb[0].mxu0
        %v1797 = vadd.f32 0.0, %v1796
        %1798 = vmatprep.mubr.f32.mxu0 0.0
        %1799 = vmatmul.mubr.f32.gmra.mrb[0].mxu0 %v1568
        %v1800 = vpop.f32.mrb[0].mxu0
        %v1801 = vadd.f32 0.0, %v1800
        %v1802 = vpop.f32.mrb[0].mxu0
        %v1803 = vadd.f32 0.0, %v1802
        %1804 = vmatprep.mubr.f32.mxu0 0.0
        %1805 = vmatmul.mubr.f32.gmra.mrb[0].mxu0 %v1571
        %v1806 = vpop.f32.mrb[0].mxu0
        %v1807 = vadd.f32 0.0, %v1806
        %v1808 = vpop.f32.mrb[0].mxu0
        %v1809 = vadd.f32 0.0, %v1808
        %1810 = vmatprep.mubr.f32.mxu0 0.0
        %1811 = vmatmul.mubr.f32.gmra.mrb[0].mxu0 %v1574
        %v1812 = vpop.f32.mrb[0].mxu0
        %v1813 = vadd.f32 0.0, %v1812
        %v1814 = vpop.f32.mrb[0].mxu0
        %v1815 = vadd.f32 0.0, %v1814
        %1816 = vmatprep.mubr.f32.mxu0 0.0
        %1817 = vmatmul.mubr.f32.gmra.mrb[0].mxu0 %v1577
        %v1818 = vpop.f32.mrb[0].mxu0
        %v1819 = vadd.f32 0.0, %v1818
        %v1820 = vpop.f32.mrb[0].mxu0
        %v1821 = vadd.f32 0.0, %v1820
        %1822 = vmatprep.mubr.f32.mxu0 0.0
        %1823 = vmatmul.mubr.f32.gmra.mrb[0].mxu0 %v1580
        %v1824 = vpop.f32.mrb[0].mxu0
        %v1825 = vadd.f32 0.0, %v1824
        %v1826 = vpop.f32.mrb[0].mxu0
        %v1827 = vadd.f32 0.0, %v1826
        %1828 = vmatprep.mubr.f32.mxu0 0.0
        %1829 = vmatmul.mubr.f32.gmra.mrb[0].mxu0 %v1583
        %v1830 = vpop.f32.mrb[0].mxu0
        %v1831 = vadd.f32 0.0, %v1830
        %v1832 = vpop.f32.mrb[0].mxu0
        %v1833 = vadd.f32 0.0, %v1832
        %1834 = vmatprep.mubr.f32.mxu0 0.0
        %1835 = vmatmul.mubr.f32.gmra.mrb[0].mxu0 %v1586
        %v1836 = vpop.f32.mrb[0].mxu0
        %v1837 = vadd.f32 0.0, %v1836
        %v1838 = vpop.f32.mrb[0].mxu0
        %v1839 = vadd.f32 0.0, %v1838
        %1840 = vmatprep.mubr.f32.mxu0 0.0
        %1841 = vmatmul.mubr.f32.gmra.mrb[0].mxu0 %v1589
        %v1842 = vpop.f32.mrb[0].mxu0
        %v1843 = vadd.f32 0.0, %v1842
        %v1844 = vpop.f32.mrb[0].mxu0
        %v1845 = vadd.f32 0.0, %v1844
        %1846 = vmatprep.mubr.f32.mxu0 0.0
        %1847 = vmatmul.mubr.f32.gmra.mrb[0].mxu0 %v1592
        %v1848 = vpop.f32.mrb[0].mxu0
        %v1849 = vadd.f32 0.0, %v1848
        %v1850 = vpop.f32.mrb[0].mxu0
        %v1851 = vadd.f32 0.0, %v1850
        %1852 = vmatprep.mubr.f32.mxu0 0.0
        %1853 = vmatmul.mubr.f32.gmra.mrb[0].mxu0 %v1595
        %v1854 = vpop.f32.mrb[0].mxu0
        %v1855 = vadd.f32 0.0, %v1854
        %v1856 = vpop.f32.mrb[0].mxu0
        %v1857 = vadd.f32 0.0, %v1856
        %1858 = vdwg.mxu0
        %v1860 = vunpack.c.l.s4 1983009808
        %v1861 = vunpack.c.0.s8 %v1860
        %v1862 = vlaneseq
        %v1863 = vshrl.u32 %v1862, 7
        %v1864 = vsub.s32 %v1861, %v1863
        %v1865 = vrot.slane %v840, %v1864
        %v1866 = vcombine.high %v1865, %v1865
        %v1868 = vsel %vm1500, %v1060, 0
        %v1871 = vsel %vm1500, %v1061, 0
        %v1874 = vsel %vm1500, %v1062, 0
        %v1877 = vsel %vm1500, %v1063, 0
        %v1880 = vsel %vm1500, %v1064, 0
        %v1883 = vsel %vm1500, %v1065, 0
        %v1886 = vsel %vm1500, %v1066, 0
        %v1889 = vsel %vm1500, %v1067, 0
        %v1892 = vsel %vm1500, %v1068, 0
        %v1895 = vsel %vm1500, %v1069, 0
        %v1898 = vsel %vm1500, %v1070, 0
        %v1901 = vsel %vm1500, %v1071, 0
        %v1904 = vsel %vm1500, %v1072, 0
        %v1907 = vsel %vm1500, %v1073, 0
        %v1910 = vsel %vm1500, %v1074, 0
        %v1913 = vsel %vm1500, %v1075, 0
        %v1916 = vsel %vm1500, %v1092, 0
        %v1919 = vsel %vm1500, %v1093, 0
        %v1922 = vsel %vm1500, %v1094, 0
        %v1925 = vsel %vm1500, %v1095, 0
        %v1928 = vsel %vm1500, %v1096, 0
        %v1931 = vsel %vm1500, %v1097, 0
        %v1934 = vsel %vm1500, %v1098, 0
        %v1937 = vsel %vm1500, %v1099, 0
        %v1940 = vsel %vm1500, %v1100, 0
        %v1943 = vsel %vm1500, %v1101, 0
        %v1946 = vsel %vm1500, %v1102, 0
        %v1949 = vsel %vm1500, %v1103, 0
        %v1952 = vsel %vm1500, %v1104, 0
        %v1955 = vsel %vm1500, %v1105, 0
        %v1958 = vsel %vm1500, %v1106, 0
        %v1961 = vsel %vm1500, %v1107, 0
        %v1963 = vsel %vm1597, %v1865, 0
        %v1965 = vsel %vm1597, %v1866, 0
        %1967 = vmatprep.subr.mxu0 %v1965
        %1968 = vmatpush1.msra.mxu0 %v1963
        %1969 = vmatprep.subr.mxu0 0.0
        %1970 = vmatpush1.msra.mxu0 0.0
        %1971 = vmatprep.subr.mxu0 0.0
        %1972 = vmatpush1.msra.mxu0 0.0
        %1973 = vmatprep.subr.mxu0 0.0
        %1974 = vmatpush1.msra.mxu0 0.0
        %1975 = vmatprep.subr.mxu0 0.0
        %1976 = vmatpush1.msra.mxu0 0.0
        %1977 = vmatprep.subr.mxu0 0.0
        %1978 = vmatpush1.msra.mxu0 0.0
        %1979 = vmatprep.subr.mxu0 0.0
        %1980 = vmatpush1.msra.mxu0 0.0
        %1981 = vmatprep.subr.mxu0 0.0
        %1982 = vmatpush1.msra.mxu0 0.0
        %1983 = vmatprep.subr.mxu0 0.0
        %1984 = vmatpush1.msra.mxu0 0.0
        %1985 = vmatprep.subr.mxu0 0.0
        %1986 = vmatpush1.msra.mxu0 0.0
        %1987 = vmatprep.subr.mxu0 0.0
        %1988 = vmatpush1.msra.mxu0 0.0
        %1989 = vmatprep.subr.mxu0 0.0
        %1990 = vmatpush1.msra.mxu0 0.0
        %1991 = vmatprep.subr.mxu0 0.0
        %1992 = vmatpush1.msra.mxu0 0.0
        %1993 = vmatprep.subr.mxu0 0.0
        %1994 = vmatpush1.msra.mxu0 0.0
        %1995 = vmatprep.subr.mxu0 0.0
        %1996 = vmatpush1.msra.mxu0 0.0
        %1997 = vmatprep.subr.mxu0 0.0
        %1998 = vmatpush1.msra.mxu0 0.0
        %1999 = vmatprep.subr.mxu0 0.0
        %2000 = vmatpush1.msra.mxu0 0.0
        %2001 = vmatprep.subr.mxu0 0.0
        %2002 = vmatpush1.msra.mxu0 0.0
        %2003 = vmatprep.subr.mxu0 0.0
        %2004 = vmatpush1.msra.mxu0 0.0
        %2005 = vmatprep.subr.mxu0 0.0
        %2006 = vmatpush1.msra.mxu0 0.0
        %2007 = vmatprep.subr.mxu0 0.0
        %2008 = vmatpush1.msra.mxu0 0.0
        %2009 = vmatprep.subr.mxu0 0.0
        %2010 = vmatpush1.msra.mxu0 0.0
        %2011 = vmatprep.subr.mxu0 0.0
        %2012 = vmatpush1.msra.mxu0 0.0
        %2013 = vmatprep.subr.mxu0 0.0
        %2014 = vmatpush1.msra.mxu0 0.0
        %2015 = vmatprep.subr.mxu0 0.0
        %2016 = vmatpush1.msra.mxu0 0.0
        %2017 = vmatprep.subr.mxu0 0.0
        %2018 = vmatpush1.msra.mxu0 0.0
        %2019 = vmatprep.subr.mxu0 0.0
        %2020 = vmatpush1.msra.mxu0 0.0
        %2021 = vmatprep.subr.mxu0 0.0
        %2022 = vmatpush1.msra.mxu0 0.0
        %2023 = vmatprep.subr.mxu0 0.0
        %2024 = vmatpush1.msra.mxu0 0.0
        %2025 = vmatprep.subr.mxu0 0.0
        %2026 = vmatpush1.msra.mxu0 0.0
        %2027 = vmatprep.subr.mxu0 0.0
        %2028 = vmatpush1.msra.mxu0 0.0
        %2029 = vmatprep.subr.mxu0 0.0
        %2030 = vmatpush1.msra.mxu0 0.0
        %2031 = vmatprep.mubr.f32.mxu0 0.0
        %2032 = vmatmul.mubr.f32.gmra.mrb[0].mxu0 %v1868
        %v2033 = vpop.f32.mrb[0].mxu0
        %v2034 = vadd.f32 0.0, %v2033
        %v2035 = vpop.f32.mrb[0].mxu0
        %v2036 = vadd.f32 0.0, %v2035
        %2037 = vmatprep.mubr.f32.mxu0 0.0
        %2038 = vmatmul.mubr.f32.gmra.mrb[0].mxu0 %v1871
        %v2039 = vpop.f32.mrb[0].mxu0
        %v2040 = vadd.f32 0.0, %v2039
        %v2041 = vpop.f32.mrb[0].mxu0
        %v2042 = vadd.f32 0.0, %v2041
        %2043 = vmatprep.mubr.f32.mxu0 0.0
        %2044 = vmatmul.mubr.f32.gmra.mrb[0].mxu0 %v1874
        %v2045 = vpop.f32.mrb[0].mxu0
        %v2046 = vadd.f32 0.0, %v2045
        %v2047 = vpop.f32.mrb[0].mxu0
        %v2048 = vadd.f32 0.0, %v2047
        %2049 = vmatprep.mubr.f32.mxu0 0.0
        %2050 = vmatmul.mubr.f32.gmra.mrb[0].mxu0 %v1877
        %v2051 = vpop.f32.mrb[0].mxu0
        %v2052 = vadd.f32 0.0, %v2051
        %v2053 = vpop.f32.mrb[0].mxu0
        %v2054 = vadd.f32 0.0, %v2053
        %2055 = vmatprep.mubr.f32.mxu0 0.0
        %2056 = vmatmul.mubr.f32.gmra.mrb[0].mxu0 %v1880
        %v2057 = vpop.f32.mrb[0].mxu0
        %v2058 = vadd.f32 0.0, %v2057
        %v2059 = vpop.f32.mrb[0].mxu0
        %v2060 = vadd.f32 0.0, %v2059
        %2061 = vmatprep.mubr.f32.mxu0 0.0
        %2062 = vmatmul.mubr.f32.gmra.mrb[0].mxu0 %v1883
        %v2063 = vpop.f32.mrb[0].mxu0
        %v2064 = vadd.f32 0.0, %v2063
        %v2065 = vpop.f32.mrb[0].mxu0
        %v2066 = vadd.f32 0.0, %v2065
        %2067 = vmatprep.mubr.f32.mxu0 0.0
        %2068 = vmatmul.mubr.f32.gmra.mrb[0].mxu0 %v1886
        %v2069 = vpop.f32.mrb[0].mxu0
        %v2070 = vadd.f32 0.0, %v2069
        %v2071 = vpop.f32.mrb[0].mxu0
        %v2072 = vadd.f32 0.0, %v2071
        %2073 = vmatprep.mubr.f32.mxu0 0.0
        %2074 = vmatmul.mubr.f32.gmra.mrb[0].mxu0 %v1889
        %v2075 = vpop.f32.mrb[0].mxu0
        %v2076 = vadd.f32 0.0, %v2075
        %v2077 = vpop.f32.mrb[0].mxu0
        %v2078 = vadd.f32 0.0, %v2077
        %2079 = vmatprep.mubr.f32.mxu0 0.0
        %2080 = vmatmul.mubr.f32.gmra.mrb[0].mxu0 %v1892
        %v2081 = vpop.f32.mrb[0].mxu0
        %v2082 = vadd.f32 0.0, %v2081
        %v2083 = vpop.f32.mrb[0].mxu0
        %v2084 = vadd.f32 0.0, %v2083
        %2085 = vmatprep.mubr.f32.mxu0 0.0
        %2086 = vmatmul.mubr.f32.gmra.mrb[0].mxu0 %v1895
        %v2087 = vpop.f32.mrb[0].mxu0
        %v2088 = vadd.f32 0.0, %v2087
        %v2089 = vpop.f32.mrb[0].mxu0
        %v2090 = vadd.f32 0.0, %v2089
        %2091 = vmatprep.mubr.f32.mxu0 0.0
        %2092 = vmatmul.mubr.f32.gmra.mrb[0].mxu0 %v1898
        %v2093 = vpop.f32.mrb[0].mxu0
        %v2094 = vadd.f32 0.0, %v2093
        %v2095 = vpop.f32.mrb[0].mxu0
        %v2096 = vadd.f32 0.0, %v2095
        %2097 = vmatprep.mubr.f32.mxu0 0.0
        %2098 = vmatmul.mubr.f32.gmra.mrb[0].mxu0 %v1901
        %v2099 = vpop.f32.mrb[0].mxu0
        %v2100 = vadd.f32 0.0, %v2099
        %v2101 = vpop.f32.mrb[0].mxu0
        %v2102 = vadd.f32 0.0, %v2101
        %2103 = vmatprep.mubr.f32.mxu0 0.0
        %2104 = vmatmul.mubr.f32.gmra.mrb[0].mxu0 %v1904
        %v2105 = vpop.f32.mrb[0].mxu0
        %v2106 = vadd.f32 0.0, %v2105
        %v2107 = vpop.f32.mrb[0].mxu0
        %v2108 = vadd.f32 0.0, %v2107
        %2109 = vmatprep.mubr.f32.mxu0 0.0
        %2110 = vmatmul.mubr.f32.gmra.mrb[0].mxu0 %v1907
        %v2111 = vpop.f32.mrb[0].mxu0
        %v2112 = vadd.f32 0.0, %v2111
        %v2113 = vpop.f32.mrb[0].mxu0
        %v2114 = vadd.f32 0.0, %v2113
        %2115 = vmatprep.mubr.f32.mxu0 0.0
        %2116 = vmatmul.mubr.f32.gmra.mrb[0].mxu0 %v1910
        %v2117 = vpop.f32.mrb[0].mxu0
        %v2118 = vadd.f32 0.0, %v2117
        %v2119 = vpop.f32.mrb[0].mxu0
        %v2120 = vadd.f32 0.0, %v2119
        %2121 = vmatprep.mubr.f32.mxu0 0.0
        %2122 = vmatmul.mubr.f32.gmra.mrb[0].mxu0 %v1913
        %v2123 = vpop.f32.mrb[0].mxu0
        %v2124 = vadd.f32 0.0, %v2123
        %v2125 = vpop.f32.mrb[0].mxu0
        %v2126 = vadd.f32 0.0, %v2125
        %2127 = vmatprep.mubr.f32.mxu0 0.0
        %2128 = vmatmul.mubr.f32.gmra.mrb[0].mxu0 %v1916
        %v2129 = vpop.f32.mrb[0].mxu0
        %v2130 = vadd.f32 0.0, %v2129
        %v2131 = vpop.f32.mrb[0].mxu0
        %v2132 = vadd.f32 0.0, %v2131
        %2133 = vmatprep.mubr.f32.mxu0 0.0
        %2134 = vmatmul.mubr.f32.gmra.mrb[0].mxu0 %v1919
        %v2135 = vpop.f32.mrb[0].mxu0
        %v2136 = vadd.f32 0.0, %v2135
        %v2137 = vpop.f32.mrb[0].mxu0
        %v2138 = vadd.f32 0.0, %v2137
        %2139 = vmatprep.mubr.f32.mxu0 0.0
        %2140 = vmatmul.mubr.f32.gmra.mrb[0].mxu0 %v1922
        %v2141 = vpop.f32.mrb[0].mxu0
        %v2142 = vadd.f32 0.0, %v2141
        %v2143 = vpop.f32.mrb[0].mxu0
        %v2144 = vadd.f32 0.0, %v2143
        %2145 = vmatprep.mubr.f32.mxu0 0.0
        %2146 = vmatmul.mubr.f32.gmra.mrb[0].mxu0 %v1925
        %v2147 = vpop.f32.mrb[0].mxu0
        %v2148 = vadd.f32 0.0, %v2147
        %v2149 = vpop.f32.mrb[0].mxu0
        %v2150 = vadd.f32 0.0, %v2149
        %2151 = vmatprep.mubr.f32.mxu0 0.0
        %2152 = vmatmul.mubr.f32.gmra.mrb[0].mxu0 %v1928
        %v2153 = vpop.f32.mrb[0].mxu0
        %v2154 = vadd.f32 0.0, %v2153
        %v2155 = vpop.f32.mrb[0].mxu0
        %v2156 = vadd.f32 0.0, %v2155
        %2157 = vmatprep.mubr.f32.mxu0 0.0
        %2158 = vmatmul.mubr.f32.gmra.mrb[0].mxu0 %v1931
        %v2159 = vpop.f32.mrb[0].mxu0
        %v2160 = vadd.f32 0.0, %v2159
        %v2161 = vpop.f32.mrb[0].mxu0
        %v2162 = vadd.f32 0.0, %v2161
        %2163 = vmatprep.mubr.f32.mxu0 0.0
        %2164 = vmatmul.mubr.f32.gmra.mrb[0].mxu0 %v1934
        %v2165 = vpop.f32.mrb[0].mxu0
        %v2166 = vadd.f32 0.0, %v2165
        %v2167 = vpop.f32.mrb[0].mxu0
        %v2168 = vadd.f32 0.0, %v2167
        %2169 = vmatprep.mubr.f32.mxu0 0.0
        %2170 = vmatmul.mubr.f32.gmra.mrb[0].mxu0 %v1937
        %v2171 = vpop.f32.mrb[0].mxu0
        %v2172 = vadd.f32 0.0, %v2171
        %v2173 = vpop.f32.mrb[0].mxu0
        %v2174 = vadd.f32 0.0, %v2173
        %2175 = vmatprep.mubr.f32.mxu0 0.0
        %2176 = vmatmul.mubr.f32.gmra.mrb[0].mxu0 %v1940
        %v2177 = vpop.f32.mrb[0].mxu0
        %v2178 = vadd.f32 0.0, %v2177
        %v2179 = vpop.f32.mrb[0].mxu0
        %v2180 = vadd.f32 0.0, %v2179
        %2181 = vmatprep.mubr.f32.mxu0 0.0
        %2182 = vmatmul.mubr.f32.gmra.mrb[0].mxu0 %v1943
        %v2183 = vpop.f32.mrb[0].mxu0
        %v2184 = vadd.f32 0.0, %v2183
        %v2185 = vpop.f32.mrb[0].mxu0
        %v2186 = vadd.f32 0.0, %v2185
        %2187 = vmatprep.mubr.f32.mxu0 0.0
        %2188 = vmatmul.mubr.f32.gmra.mrb[0].mxu0 %v1946
        %v2189 = vpop.f32.mrb[0].mxu0
        %v2190 = vadd.f32 0.0, %v2189
        %v2191 = vpop.f32.mrb[0].mxu0
        %v2192 = vadd.f32 0.0, %v2191
        %2193 = vmatprep.mubr.f32.mxu0 0.0
        %2194 = vmatmul.mubr.f32.gmra.mrb[0].mxu0 %v1949
        %v2195 = vpop.f32.mrb[0].mxu0
        %v2196 = vadd.f32 0.0, %v2195
        %v2197 = vpop.f32.mrb[0].mxu0
        %v2198 = vadd.f32 0.0, %v2197
        %2199 = vmatprep.mubr.f32.mxu0 0.0
        %2200 = vmatmul.mubr.f32.gmra.mrb[0].mxu0 %v1952
        %v2201 = vpop.f32.mrb[0].mxu0
        %v2202 = vadd.f32 0.0, %v2201
        %v2203 = vpop.f32.mrb[0].mxu0
        %v2204 = vadd.f32 0.0, %v2203
        %2205 = vmatprep.mubr.f32.mxu0 0.0
        %2206 = vmatmul.mubr.f32.gmra.mrb[0].mxu0 %v1955
        %v2207 = vpop.f32.mrb[0].mxu0
        %v2208 = vadd.f32 0.0, %v2207
        %v2209 = vpop.f32.mrb[0].mxu0
        %v2210 = vadd.f32 0.0, %v2209
        %2211 = vmatprep.mubr.f32.mxu0 0.0
        %2212 = vmatmul.mubr.f32.gmra.mrb[0].mxu0 %v1958
        %v2213 = vpop.f32.mrb[0].mxu0
        %v2214 = vadd.f32 0.0, %v2213
        %v2215 = vpop.f32.mrb[0].mxu0
        %v2216 = vadd.f32 0.0, %v2215
        %2217 = vmatprep.mubr.f32.mxu0 0.0
        %2218 = vmatmul.mubr.f32.gmra.mrb[0].mxu0 %v1961
        %v2219 = vpop.f32.mrb[0].mxu0
        %v2220 = vadd.f32 0.0, %v2219
        %v2221 = vpop.f32.mrb[0].mxu0
        %v2222 = vadd.f32 0.0, %v2221
        %2223 = vdwg.mxu0
        %v2225 = vunpack.c.l.s4 1983009808
        %v2226 = vunpack.c.0.s8 %v2225
        %v2227 = vlaneseq
        %v2228 = vshrl.u32 %v2227, 7
        %v2229 = vsub.s32 %v2226, %v2228
        %v2230 = vrot.slane %v839, %v2229
        %v2231 = vcombine.high %v2230, %v2230
        %v2233 = vsel %vm1500, %v1124, 0
        %v2236 = vsel %vm1500, %v1125, 0
        %v2239 = vsel %vm1500, %v1126, 0
        %v2242 = vsel %vm1500, %v1127, 0
        %v2245 = vsel %vm1500, %v1128, 0
        %v2248 = vsel %vm1500, %v1129, 0
        %v2251 = vsel %vm1500, %v1130, 0
        %v2254 = vsel %vm1500, %v1131, 0
        %v2257 = vsel %vm1500, %v1132, 0
        %v2260 = vsel %vm1500, %v1133, 0
        %v2263 = vsel %vm1500, %v1134, 0
        %v2266 = vsel %vm1500, %v1135, 0
        %v2269 = vsel %vm1500, %v1136, 0
        %v2272 = vsel %vm1500, %v1137, 0
        %v2275 = vsel %vm1500, %v1138, 0
        %v2278 = vsel %vm1500, %v1139, 0
        %v2281 = vsel %vm1500, %v1156, 0
        %v2284 = vsel %vm1500, %v1157, 0
        %v2287 = vsel %vm1500, %v1158, 0
        %v2290 = vsel %vm1500, %v1159, 0
        %v2293 = vsel %vm1500, %v1160, 0
        %v2296 = vsel %vm1500, %v1161, 0
        %v2299 = vsel %vm1500, %v1162, 0
        %v2302 = vsel %vm1500, %v1163, 0
        %v2305 = vsel %vm1500, %v1164, 0
        %v2308 = vsel %vm1500, %v1165, 0
        %v2311 = vsel %vm1500, %v1166, 0
        %v2314 = vsel %vm1500, %v1167, 0
        %v2317 = vsel %vm1500, %v1168, 0
        %v2320 = vsel %vm1500, %v1169, 0
        %v2323 = vsel %vm1500, %v1170, 0
        %v2326 = vsel %vm1500, %v1171, 0
        %v2328 = vsel %vm1597, %v2230, 0
        %v2330 = vsel %vm1597, %v2231, 0
        %2332 = vmatprep.subr.mxu0 %v2330
        %2333 = vmatpush1.msra.mxu0 %v2328
        %2334 = vmatprep.subr.mxu0 0.0
        %2335 = vmatpush1.msra.mxu0 0.0
        %2336 = vmatprep.subr.mxu0 0.0
        %2337 = vmatpush1.msra.mxu0 0.0
        %2338 = vmatprep.subr.mxu0 0.0
        %2339 = vmatpush1.msra.mxu0 0.0
        %2340 = vmatprep.subr.mxu0 0.0
        %2341 = vmatpush1.msra.mxu0 0.0
        %2342 = vmatprep.subr.mxu0 0.0
        %2343 = vmatpush1.msra.mxu0 0.0
        %2344 = vmatprep.subr.mxu0 0.0
        %2345 = vmatpush1.msra.mxu0 0.0
        %2346 = vmatprep.subr.mxu0 0.0
        %2347 = vmatpush1.msra.mxu0 0.0
        %2348 = vmatprep.subr.mxu0 0.0
        %2349 = vmatpush1.msra.mxu0 0.0
        %2350 = vmatprep.subr.mxu0 0.0
        %2351 = vmatpush1.msra.mxu0 0.0
        %2352 = vmatprep.subr.mxu0 0.0
        %2353 = vmatpush1.msra.mxu0 0.0
        %2354 = vmatprep.subr.mxu0 0.0
        %2355 = vmatpush1.msra.mxu0 0.0
        %2356 = vmatprep.subr.mxu0 0.0
        %2357 = vmatpush1.msra.mxu0 0.0
        %2358 = vmatprep.subr.mxu0 0.0
        %2359 = vmatpush1.msra.mxu0 0.0
        %2360 = vmatprep.subr.mxu0 0.0
        %2361 = vmatpush1.msra.mxu0 0.0
        %2362 = vmatprep.subr.mxu0 0.0
        %2363 = vmatpush1.msra.mxu0 0.0
        %2364 = vmatprep.subr.mxu0 0.0
        %2365 = vmatpush1.msra.mxu0 0.0
        %2366 = vmatprep.subr.mxu0 0.0
        %2367 = vmatpush1.msra.mxu0 0.0
        %2368 = vmatprep.subr.mxu0 0.0
        %2369 = vmatpush1.msra.mxu0 0.0
        %2370 = vmatprep.subr.mxu0 0.0
        %2371 = vmatpush1.msra.mxu0 0.0
        %2372 = vmatprep.subr.mxu0 0.0
        %2373 = vmatpush1.msra.mxu0 0.0
        %2374 = vmatprep.subr.mxu0 0.0
        %2375 = vmatpush1.msra.mxu0 0.0
        %2376 = vmatprep.subr.mxu0 0.0
        %2377 = vmatpush1.msra.mxu0 0.0
        %2378 = vmatprep.subr.mxu0 0.0
        %2379 = vmatpush1.msra.mxu0 0.0
        %2380 = vmatprep.subr.mxu0 0.0
        %2381 = vmatpush1.msra.mxu0 0.0
        %2382 = vmatprep.subr.mxu0 0.0
        %2383 = vmatpush1.msra.mxu0 0.0
        %2384 = vmatprep.subr.mxu0 0.0
        %2385 = vmatpush1.msra.mxu0 0.0
        %2386 = vmatprep.subr.mxu0 0.0
        %2387 = vmatpush1.msra.mxu0 0.0
        %2388 = vmatprep.subr.mxu0 0.0
        %2389 = vmatpush1.msra.mxu0 0.0
        %2390 = vmatprep.subr.mxu0 0.0
        %2391 = vmatpush1.msra.mxu0 0.0
        %2392 = vmatprep.subr.mxu0 0.0
        %2393 = vmatpush1.msra.mxu0 0.0
        %2394 = vmatprep.subr.mxu0 0.0
        %2395 = vmatpush1.msra.mxu0 0.0
        %2396 = vmatprep.mubr.f32.mxu0 0.0
        %2397 = vmatmul.mubr.f32.gmra.mrb[0].mxu0 %v2233
        %v2398 = vpop.f32.mrb[0].mxu0
        %v2399 = vadd.f32 0.0, %v2398
        %v2400 = vpop.f32.mrb[0].mxu0
        %v2401 = vadd.f32 0.0, %v2400
        %2402 = vmatprep.mubr.f32.mxu0 0.0
        %2403 = vmatmul.mubr.f32.gmra.mrb[0].mxu0 %v2236
        %v2404 = vpop.f32.mrb[0].mxu0
        %v2405 = vadd.f32 0.0, %v2404
        %v2406 = vpop.f32.mrb[0].mxu0
        %v2407 = vadd.f32 0.0, %v2406
        %2408 = vmatprep.mubr.f32.mxu0 0.0
        %2409 = vmatmul.mubr.f32.gmra.mrb[0].mxu0 %v2239
        %v2410 = vpop.f32.mrb[0].mxu0
        %v2411 = vadd.f32 0.0, %v2410
        %v2412 = vpop.f32.mrb[0].mxu0
        %v2413 = vadd.f32 0.0, %v2412
        %2414 = vmatprep.mubr.f32.mxu0 0.0
        %2415 = vmatmul.mubr.f32.gmra.mrb[0].mxu0 %v2242
        %v2416 = vpop.f32.mrb[0].mxu0
        %v2417 = vadd.f32 0.0, %v2416
        %v2418 = vpop.f32.mrb[0].mxu0
        %v2419 = vadd.f32 0.0, %v2418
        %2420 = vmatprep.mubr.f32.mxu0 0.0
        %2421 = vmatmul.mubr.f32.gmra.mrb[0].mxu0 %v2245
        %v2422 = vpop.f32.mrb[0].mxu0
        %v2423 = vadd.f32 0.0, %v2422
        %v2424 = vpop.f32.mrb[0].mxu0
        %v2425 = vadd.f32 0.0, %v2424
        %2426 = vmatprep.mubr.f32.mxu0 0.0
        %2427 = vmatmul.mubr.f32.gmra.mrb[0].mxu0 %v2248
        %v2428 = vpop.f32.mrb[0].mxu0
        %v2429 = vadd.f32 0.0, %v2428
        %v2430 = vpop.f32.mrb[0].mxu0
        %v2431 = vadd.f32 0.0, %v2430
        %2432 = vmatprep.mubr.f32.mxu0 0.0
        %2433 = vmatmul.mubr.f32.gmra.mrb[0].mxu0 %v2251
        %v2434 = vpop.f32.mrb[0].mxu0
        %v2435 = vadd.f32 0.0, %v2434
        %v2436 = vpop.f32.mrb[0].mxu0
        %v2437 = vadd.f32 0.0, %v2436
        %2438 = vmatprep.mubr.f32.mxu0 0.0
        %2439 = vmatmul.mubr.f32.gmra.mrb[0].mxu0 %v2254
        %v2440 = vpop.f32.mrb[0].mxu0
        %v2441 = vadd.f32 0.0, %v2440
        %v2442 = vpop.f32.mrb[0].mxu0
        %v2443 = vadd.f32 0.0, %v2442
        %2444 = vmatprep.mubr.f32.mxu0 0.0
        %2445 = vmatmul.mubr.f32.gmra.mrb[0].mxu0 %v2257
        %v2446 = vpop.f32.mrb[0].mxu0
        %v2447 = vadd.f32 0.0, %v2446
        %v2448 = vpop.f32.mrb[0].mxu0
        %v2449 = vadd.f32 0.0, %v2448
        %2450 = vmatprep.mubr.f32.mxu0 0.0
        %2451 = vmatmul.mubr.f32.gmra.mrb[0].mxu0 %v2260
        %v2452 = vpop.f32.mrb[0].mxu0
        %v2453 = vadd.f32 0.0, %v2452
        %v2454 = vpop.f32.mrb[0].mxu0
        %v2455 = vadd.f32 0.0, %v2454
        %2456 = vmatprep.mubr.f32.mxu0 0.0
        %2457 = vmatmul.mubr.f32.gmra.mrb[0].mxu0 %v2263
        %v2458 = vpop.f32.mrb[0].mxu0
        %v2459 = vadd.f32 0.0, %v2458
        %v2460 = vpop.f32.mrb[0].mxu0
        %v2461 = vadd.f32 0.0, %v2460
        %2462 = vmatprep.mubr.f32.mxu0 0.0
        %2463 = vmatmul.mubr.f32.gmra.mrb[0].mxu0 %v2266
        %v2464 = vpop.f32.mrb[0].mxu0
        %v2465 = vadd.f32 0.0, %v2464
        %v2466 = vpop.f32.mrb[0].mxu0
        %v2467 = vadd.f32 0.0, %v2466
        %2468 = vmatprep.mubr.f32.mxu0 0.0
        %2469 = vmatmul.mubr.f32.gmra.mrb[0].mxu0 %v2269
        %v2470 = vpop.f32.mrb[0].mxu0
        %v2471 = vadd.f32 0.0, %v2470
        %v2472 = vpop.f32.mrb[0].mxu0
        %v2473 = vadd.f32 0.0, %v2472
        %2474 = vmatprep.mubr.f32.mxu0 0.0
        %2475 = vmatmul.mubr.f32.gmra.mrb[0].mxu0 %v2272
        %v2476 = vpop.f32.mrb[0].mxu0
        %v2477 = vadd.f32 0.0, %v2476
        %v2478 = vpop.f32.mrb[0].mxu0
        %v2479 = vadd.f32 0.0, %v2478
        %2480 = vmatprep.mubr.f32.mxu0 0.0
        %2481 = vmatmul.mubr.f32.gmra.mrb[0].mxu0 %v2275
        %v2482 = vpop.f32.mrb[0].mxu0
        %v2483 = vadd.f32 0.0, %v2482
        %v2484 = vpop.f32.mrb[0].mxu0
        %v2485 = vadd.f32 0.0, %v2484
        %2486 = vmatprep.mubr.f32.mxu0 0.0
        %2487 = vmatmul.mubr.f32.gmra.mrb[0].mxu0 %v2278
        %v2488 = vpop.f32.mrb[0].mxu0
        %v2489 = vadd.f32 0.0, %v2488
        %v2490 = vpop.f32.mrb[0].mxu0
        %v2491 = vadd.f32 0.0, %v2490
        %2492 = vmatprep.mubr.f32.mxu0 0.0
        %2493 = vmatmul.mubr.f32.gmra.mrb[0].mxu0 %v2281
        %v2494 = vpop.f32.mrb[0].mxu0
        %v2495 = vadd.f32 0.0, %v2494
        %v2496 = vpop.f32.mrb[0].mxu0
        %v2497 = vadd.f32 0.0, %v2496
        %2498 = vmatprep.mubr.f32.mxu0 0.0
        %2499 = vmatmul.mubr.f32.gmra.mrb[0].mxu0 %v2284
        %v2500 = vpop.f32.mrb[0].mxu0
        %v2501 = vadd.f32 0.0, %v2500
        %v2502 = vpop.f32.mrb[0].mxu0
        %v2503 = vadd.f32 0.0, %v2502
        %2504 = vmatprep.mubr.f32.mxu0 0.0
        %2505 = vmatmul.mubr.f32.gmra.mrb[0].mxu0 %v2287
        %v2506 = vpop.f32.mrb[0].mxu0
        %v2507 = vadd.f32 0.0, %v2506
        %v2508 = vpop.f32.mrb[0].mxu0
        %v2509 = vadd.f32 0.0, %v2508
        %2510 = vmatprep.mubr.f32.mxu0 0.0
        %2511 = vmatmul.mubr.f32.gmra.mrb[0].mxu0 %v2290
        %v2512 = vpop.f32.mrb[0].mxu0
        %v2513 = vadd.f32 0.0, %v2512
        %v2514 = vpop.f32.mrb[0].mxu0
        %v2515 = vadd.f32 0.0, %v2514
        %2516 = vmatprep.mubr.f32.mxu0 0.0
        %2517 = vmatmul.mubr.f32.gmra.mrb[0].mxu0 %v2293
        %v2518 = vpop.f32.mrb[0].mxu0
        %v2519 = vadd.f32 0.0, %v2518
        %v2520 = vpop.f32.mrb[0].mxu0
        %v2521 = vadd.f32 0.0, %v2520
        %2522 = vmatprep.mubr.f32.mxu0 0.0
        %2523 = vmatmul.mubr.f32.gmra.mrb[0].mxu0 %v2296
        %v2524 = vpop.f32.mrb[0].mxu0
        %v2525 = vadd.f32 0.0, %v2524
        %v2526 = vpop.f32.mrb[0].mxu0
        %v2527 = vadd.f32 0.0, %v2526
        %2528 = vmatprep.mubr.f32.mxu0 0.0
        %2529 = vmatmul.mubr.f32.gmra.mrb[0].mxu0 %v2299
        %v2530 = vpop.f32.mrb[0].mxu0
        %v2531 = vadd.f32 0.0, %v2530
        %v2532 = vpop.f32.mrb[0].mxu0
        %v2533 = vadd.f32 0.0, %v2532
        %2534 = vmatprep.mubr.f32.mxu0 0.0
        %2535 = vmatmul.mubr.f32.gmra.mrb[0].mxu0 %v2302
        %v2536 = vpop.f32.mrb[0].mxu0
        %v2537 = vadd.f32 0.0, %v2536
        %v2538 = vpop.f32.mrb[0].mxu0
        %v2539 = vadd.f32 0.0, %v2538
        %2540 = vmatprep.mubr.f32.mxu0 0.0
        %2541 = vmatmul.mubr.f32.gmra.mrb[0].mxu0 %v2305
        %v2542 = vpop.f32.mrb[0].mxu0
        %v2543 = vadd.f32 0.0, %v2542
        %v2544 = vpop.f32.mrb[0].mxu0
        %v2545 = vadd.f32 0.0, %v2544
        %2546 = vmatprep.mubr.f32.mxu0 0.0
        %2547 = vmatmul.mubr.f32.gmra.mrb[0].mxu0 %v2308
        %v2548 = vpop.f32.mrb[0].mxu0
        %v2549 = vadd.f32 0.0, %v2548
        %v2550 = vpop.f32.mrb[0].mxu0
        %v2551 = vadd.f32 0.0, %v2550
        %2552 = vmatprep.mubr.f32.mxu0 0.0
        %2553 = vmatmul.mubr.f32.gmra.mrb[0].mxu0 %v2311
        %v2554 = vpop.f32.mrb[0].mxu0
        %v2555 = vadd.f32 0.0, %v2554
        %v2556 = vpop.f32.mrb[0].mxu0
        %v2557 = vadd.f32 0.0, %v2556
        %2558 = vmatprep.mubr.f32.mxu0 0.0
        %2559 = vmatmul.mubr.f32.gmra.mrb[0].mxu0 %v2314
        %v2560 = vpop.f32.mrb[0].mxu0
        %v2561 = vadd.f32 0.0, %v2560
        %v2562 = vpop.f32.mrb[0].mxu0
        %v2563 = vadd.f32 0.0, %v2562
        %2564 = vmatprep.mubr.f32.mxu0 0.0
        %2565 = vmatmul.mubr.f32.gmra.mrb[0].mxu0 %v2317
        %v2566 = vpop.f32.mrb[0].mxu0
        %v2567 = vadd.f32 0.0, %v2566
        %v2568 = vpop.f32.mrb[0].mxu0
        %v2569 = vadd.f32 0.0, %v2568
        %2570 = vmatprep.mubr.f32.mxu0 0.0
        %2571 = vmatmul.mubr.f32.gmra.mrb[0].mxu0 %v2320
        %v2572 = vpop.f32.mrb[0].mxu0
        %v2573 = vadd.f32 0.0, %v2572
        %v2574 = vpop.f32.mrb[0].mxu0
        %v2575 = vadd.f32 0.0, %v2574
        %2576 = vmatprep.mubr.f32.mxu0 0.0
        %2577 = vmatmul.mubr.f32.gmra.mrb[0].mxu0 %v2323
        %v2578 = vpop.f32.mrb[0].mxu0
        %v2579 = vadd.f32 0.0, %v2578
        %v2580 = vpop.f32.mrb[0].mxu0
        %v2581 = vadd.f32 0.0, %v2580
        %2582 = vmatprep.mubr.f32.mxu0 0.0
        %2583 = vmatmul.mubr.f32.gmra.mrb[0].mxu0 %v2326
        %v2584 = vpop.f32.mrb[0].mxu0
        %v2585 = vadd.f32 0.0, %v2584
        %v2586 = vpop.f32.mrb[0].mxu0
        %v2587 = vadd.f32 0.0, %v2586
        %2588 = vdwg.mxu0
        %v2590 = vunpack.c.l.s4 1983009808
        %v2591 = vunpack.c.0.s8 %v2590
        %v2592 = vlaneseq
        %v2593 = vshrl.u32 %v2592, 7
        %v2594 = vsub.s32 %v2591, %v2593
        %v2595 = vrot.slane %v841, %v2594
        %v2596 = vcombine.high %v2595, %v2595
        %v2598 = vsel %vm1500, %v1188, 0
        %v2601 = vsel %vm1500, %v1189, 0
        %v2604 = vsel %vm1500, %v1190, 0
        %v2607 = vsel %vm1500, %v1191, 0
        %v2610 = vsel %vm1500, %v1192, 0
        %v2613 = vsel %vm1500, %v1193, 0
        %v2616 = vsel %vm1500, %v1194, 0
        %v2619 = vsel %vm1500, %v1195, 0
        %v2622 = vsel %vm1500, %v1196, 0
        %v2625 = vsel %vm1500, %v1197, 0
        %v2628 = vsel %vm1500, %v1198, 0
        %v2631 = vsel %vm1500, %v1199, 0
        %v2634 = vsel %vm1500, %v1200, 0
        %v2637 = vsel %vm1500, %v1201, 0
        %v2640 = vsel %vm1500, %v1202, 0
        %v2643 = vsel %vm1500, %v1203, 0
        %v2646 = vsel %vm1500, %v1220, 0
        %v2649 = vsel %vm1500, %v1221, 0
        %v2652 = vsel %vm1500, %v1222, 0
        %v2655 = vsel %vm1500, %v1223, 0
        %v2658 = vsel %vm1500, %v1224, 0
        %v2661 = vsel %vm1500, %v1225, 0
        %v2664 = vsel %vm1500, %v1226, 0
        %v2667 = vsel %vm1500, %v1227, 0
        %v2670 = vsel %vm1500, %v1228, 0
        %v2673 = vsel %vm1500, %v1229, 0
        %v2676 = vsel %vm1500, %v1230, 0
        %v2679 = vsel %vm1500, %v1231, 0
        %v2682 = vsel %vm1500, %v1232, 0
        %v2685 = vsel %vm1500, %v1233, 0
        %v2688 = vsel %vm1500, %v1234, 0
        %v2691 = vsel %vm1500, %v1235, 0
        %v2693 = vsel %vm1597, %v2595, 0
        %v2695 = vsel %vm1597, %v2596, 0
        %2697 = vmatprep.subr.mxu0 %v2695
        %2698 = vmatpush1.msra.mxu0 %v2693
        %2699 = vmatprep.subr.mxu0 0.0
        %2700 = vmatpush1.msra.mxu0 0.0
        %2701 = vmatprep.subr.mxu0 0.0
        %2702 = vmatpush1.msra.mxu0 0.0
        %2703 = vmatprep.subr.mxu0 0.0
        %2704 = vmatpush1.msra.mxu0 0.0
        %2705 = vmatprep.subr.mxu0 0.0
        %2706 = vmatpush1.msra.mxu0 0.0
        %2707 = vmatprep.subr.mxu0 0.0
        %2708 = vmatpush1.msra.mxu0 0.0
        %2709 = vmatprep.subr.mxu0 0.0
        %2710 = vmatpush1.msra.mxu0 0.0
        %2711 = vmatprep.subr.mxu0 0.0
        %2712 = vmatpush1.msra.mxu0 0.0
        %2713 = vmatprep.subr.mxu0 0.0
        %2714 = vmatpush1.msra.mxu0 0.0
        %2715 = vmatprep.subr.mxu0 0.0
        %2716 = vmatpush1.msra.mxu0 0.0
        %2717 = vmatprep.subr.mxu0 0.0
        %2718 = vmatpush1.msra.mxu0 0.0
        %2719 = vmatprep.subr.mxu0 0.0
        %2720 = vmatpush1.msra.mxu0 0.0
        %2721 = vmatprep.subr.mxu0 0.0
        %2722 = vmatpush1.msra.mxu0 0.0
        %2723 = vmatprep.subr.mxu0 0.0
        %2724 = vmatpush1.msra.mxu0 0.0
        %2725 = vmatprep.subr.mxu0 0.0
        %2726 = vmatpush1.msra.mxu0 0.0
        %2727 = vmatprep.subr.mxu0 0.0
        %2728 = vmatpush1.msra.mxu0 0.0
        %2729 = vmatprep.subr.mxu0 0.0
        %2730 = vmatpush1.msra.mxu0 0.0
        %2731 = vmatprep.subr.mxu0 0.0
        %2732 = vmatpush1.msra.mxu0 0.0
        %2733 = vmatprep.subr.mxu0 0.0
        %2734 = vmatpush1.msra.mxu0 0.0
        %2735 = vmatprep.subr.mxu0 0.0
        %2736 = vmatpush1.msra.mxu0 0.0
        %2737 = vmatprep.subr.mxu0 0.0
        %2738 = vmatpush1.msra.mxu0 0.0
        %2739 = vmatprep.subr.mxu0 0.0
        %2740 = vmatpush1.msra.mxu0 0.0
        %2741 = vmatprep.subr.mxu0 0.0
        %2742 = vmatpush1.msra.mxu0 0.0
        %2743 = vmatprep.subr.mxu0 0.0
        %2744 = vmatpush1.msra.mxu0 0.0
        %2745 = vmatprep.subr.mxu0 0.0
        %2746 = vmatpush1.msra.mxu0 0.0
        %2747 = vmatprep.subr.mxu0 0.0
        %2748 = vmatpush1.msra.mxu0 0.0
        %2749 = vmatprep.subr.mxu0 0.0
        %2750 = vmatpush1.msra.mxu0 0.0
        %2751 = vmatprep.subr.mxu0 0.0
        %2752 = vmatpush1.msra.mxu0 0.0
        %2753 = vmatprep.subr.mxu0 0.0
        %2754 = vmatpush1.msra.mxu0 0.0
        %2755 = vmatprep.subr.mxu0 0.0
        %2756 = vmatpush1.msra.mxu0 0.0
        %2757 = vmatprep.subr.mxu0 0.0
        %2758 = vmatpush1.msra.mxu0 0.0
        %2759 = vmatprep.subr.mxu0 0.0
        %2760 = vmatpush1.msra.mxu0 0.0
        %2761 = vmatprep.mubr.f32.mxu0 0.0
        %2762 = vmatmul.mubr.f32.gmra.mrb[0].mxu0 %v2598
        %v2763 = vpop.f32.mrb[0].mxu0
        %v2764 = vadd.f32 0.0, %v2763
        %v2765 = vpop.f32.mrb[0].mxu0
        %v2766 = vadd.f32 0.0, %v2765
        %2767 = vmatprep.mubr.f32.mxu0 0.0
        %2768 = vmatmul.mubr.f32.gmra.mrb[0].mxu0 %v2601
        %v2769 = vpop.f32.mrb[0].mxu0
        %v2770 = vadd.f32 0.0, %v2769
        %v2771 = vpop.f32.mrb[0].mxu0
        %v2772 = vadd.f32 0.0, %v2771
        %2773 = vmatprep.mubr.f32.mxu0 0.0
        %2774 = vmatmul.mubr.f32.gmra.mrb[0].mxu0 %v2604
        %v2775 = vpop.f32.mrb[0].mxu0
        %v2776 = vadd.f32 0.0, %v2775
        %v2777 = vpop.f32.mrb[0].mxu0
        %v2778 = vadd.f32 0.0, %v2777
        %2779 = vmatprep.mubr.f32.mxu0 0.0
        %2780 = vmatmul.mubr.f32.gmra.mrb[0].mxu0 %v2607
        %v2781 = vpop.f32.mrb[0].mxu0
        %v2782 = vadd.f32 0.0, %v2781
        %v2783 = vpop.f32.mrb[0].mxu0
        %v2784 = vadd.f32 0.0, %v2783
        %2785 = vmatprep.mubr.f32.mxu0 0.0
        %2786 = vmatmul.mubr.f32.gmra.mrb[0].mxu0 %v2610
        %v2787 = vpop.f32.mrb[0].mxu0
        %v2788 = vadd.f32 0.0, %v2787
        %v2789 = vpop.f32.mrb[0].mxu0
        %v2790 = vadd.f32 0.0, %v2789
        %2791 = vmatprep.mubr.f32.mxu0 0.0
        %2792 = vmatmul.mubr.f32.gmra.mrb[0].mxu0 %v2613
        %v2793 = vpop.f32.mrb[0].mxu0
        %v2794 = vadd.f32 0.0, %v2793
        %v2795 = vpop.f32.mrb[0].mxu0
        %v2796 = vadd.f32 0.0, %v2795
        %2797 = vmatprep.mubr.f32.mxu0 0.0
        %2798 = vmatmul.mubr.f32.gmra.mrb[0].mxu0 %v2616
        %v2799 = vpop.f32.mrb[0].mxu0
        %v2800 = vadd.f32 0.0, %v2799
        %v2801 = vpop.f32.mrb[0].mxu0
        %v2802 = vadd.f32 0.0, %v2801
        %2803 = vmatprep.mubr.f32.mxu0 0.0
        %2804 = vmatmul.mubr.f32.gmra.mrb[0].mxu0 %v2619
        %v2805 = vpop.f32.mrb[0].mxu0
        %v2806 = vadd.f32 0.0, %v2805
        %v2807 = vpop.f32.mrb[0].mxu0
        %v2808 = vadd.f32 0.0, %v2807
        %2809 = vmatprep.mubr.f32.mxu0 0.0
        %2810 = vmatmul.mubr.f32.gmra.mrb[0].mxu0 %v2622
        %v2811 = vpop.f32.mrb[0].mxu0
        %v2812 = vadd.f32 0.0, %v2811
        %v2813 = vpop.f32.mrb[0].mxu0
        %v2814 = vadd.f32 0.0, %v2813
        %2815 = vmatprep.mubr.f32.mxu0 0.0
        %2816 = vmatmul.mubr.f32.gmra.mrb[0].mxu0 %v2625
        %v2817 = vpop.f32.mrb[0].mxu0
        %v2818 = vadd.f32 0.0, %v2817
        %v2819 = vpop.f32.mrb[0].mxu0
        %v2820 = vadd.f32 0.0, %v2819
        %2821 = vmatprep.mubr.f32.mxu0 0.0
        %2822 = vmatmul.mubr.f32.gmra.mrb[0].mxu0 %v2628
        %v2823 = vpop.f32.mrb[0].mxu0
        %v2824 = vadd.f32 0.0, %v2823
        %v2825 = vpop.f32.mrb[0].mxu0
        %v2826 = vadd.f32 0.0, %v2825
        %2827 = vmatprep.mubr.f32.mxu0 0.0
        %2828 = vmatmul.mubr.f32.gmra.mrb[0].mxu0 %v2631
        %v2829 = vpop.f32.mrb[0].mxu0
        %v2830 = vadd.f32 0.0, %v2829
        %v2831 = vpop.f32.mrb[0].mxu0
        %v2832 = vadd.f32 0.0, %v2831
        %2833 = vmatprep.mubr.f32.mxu0 0.0
        %2834 = vmatmul.mubr.f32.gmra.mrb[0].mxu0 %v2634
        %v2835 = vpop.f32.mrb[0].mxu0
        %v2836 = vadd.f32 0.0, %v2835
        %v2837 = vpop.f32.mrb[0].mxu0
        %v2838 = vadd.f32 0.0, %v2837
        %2839 = vmatprep.mubr.f32.mxu0 0.0
        %2840 = vmatmul.mubr.f32.gmra.mrb[0].mxu0 %v2637
        %v2841 = vpop.f32.mrb[0].mxu0
        %v2842 = vadd.f32 0.0, %v2841
        %v2843 = vpop.f32.mrb[0].mxu0
        %v2844 = vadd.f32 0.0, %v2843
        %2845 = vmatprep.mubr.f32.mxu0 0.0
        %2846 = vmatmul.mubr.f32.gmra.mrb[0].mxu0 %v2640
        %v2847 = vpop.f32.mrb[0].mxu0
        %v2848 = vadd.f32 0.0, %v2847
        %v2849 = vpop.f32.mrb[0].mxu0
        %v2850 = vadd.f32 0.0, %v2849
        %2851 = vmatprep.mubr.f32.mxu0 0.0
        %2852 = vmatmul.mubr.f32.gmra.mrb[0].mxu0 %v2643
        %v2853 = vpop.f32.mrb[0].mxu0
        %v2854 = vadd.f32 0.0, %v2853
        %v2855 = vpop.f32.mrb[0].mxu0
        %v2856 = vadd.f32 0.0, %v2855
        %2857 = vmatprep.mubr.f32.mxu0 0.0
        %2858 = vmatmul.mubr.f32.gmra.mrb[0].mxu0 %v2646
        %v2859 = vpop.f32.mrb[0].mxu0
        %v2860 = vadd.f32 0.0, %v2859
        %v2861 = vpop.f32.mrb[0].mxu0
        %v2862 = vadd.f32 0.0, %v2861
        %2863 = vmatprep.mubr.f32.mxu0 0.0
        %2864 = vmatmul.mubr.f32.gmra.mrb[0].mxu0 %v2649
        %v2865 = vpop.f32.mrb[0].mxu0
        %v2866 = vadd.f32 0.0, %v2865
        %v2867 = vpop.f32.mrb[0].mxu0
        %v2868 = vadd.f32 0.0, %v2867
        %2869 = vmatprep.mubr.f32.mxu0 0.0
        %2870 = vmatmul.mubr.f32.gmra.mrb[0].mxu0 %v2652
        %v2871 = vpop.f32.mrb[0].mxu0
        %v2872 = vadd.f32 0.0, %v2871
        %v2873 = vpop.f32.mrb[0].mxu0
        %v2874 = vadd.f32 0.0, %v2873
        %2875 = vmatprep.mubr.f32.mxu0 0.0
        %2876 = vmatmul.mubr.f32.gmra.mrb[0].mxu0 %v2655
        %v2877 = vpop.f32.mrb[0].mxu0
        %v2878 = vadd.f32 0.0, %v2877
        %v2879 = vpop.f32.mrb[0].mxu0
        %v2880 = vadd.f32 0.0, %v2879
        %2881 = vmatprep.mubr.f32.mxu0 0.0
        %2882 = vmatmul.mubr.f32.gmra.mrb[0].mxu0 %v2658
        %v2883 = vpop.f32.mrb[0].mxu0
        %v2884 = vadd.f32 0.0, %v2883
        %v2885 = vpop.f32.mrb[0].mxu0
        %v2886 = vadd.f32 0.0, %v2885
        %2887 = vmatprep.mubr.f32.mxu0 0.0
        %2888 = vmatmul.mubr.f32.gmra.mrb[0].mxu0 %v2661
        %v2889 = vpop.f32.mrb[0].mxu0
        %v2890 = vadd.f32 0.0, %v2889
        %v2891 = vpop.f32.mrb[0].mxu0
        %v2892 = vadd.f32 0.0, %v2891
        %2893 = vmatprep.mubr.f32.mxu0 0.0
        %2894 = vmatmul.mubr.f32.gmra.mrb[0].mxu0 %v2664
        %v2895 = vpop.f32.mrb[0].mxu0
        %v2896 = vadd.f32 0.0, %v2895
        %v2897 = vpop.f32.mrb[0].mxu0
        %v2898 = vadd.f32 0.0, %v2897
        %2899 = vmatprep.mubr.f32.mxu0 0.0
        %2900 = vmatmul.mubr.f32.gmra.mrb[0].mxu0 %v2667
        %v2901 = vpop.f32.mrb[0].mxu0
        %v2902 = vadd.f32 0.0, %v2901
        %v2903 = vpop.f32.mrb[0].mxu0
        %v2904 = vadd.f32 0.0, %v2903
        %2905 = vmatprep.mubr.f32.mxu0 0.0
        %2906 = vmatmul.mubr.f32.gmra.mrb[0].mxu0 %v2670
        %v2907 = vpop.f32.mrb[0].mxu0
        %v2908 = vadd.f32 0.0, %v2907
        %v2909 = vpop.f32.mrb[0].mxu0
        %v2910 = vadd.f32 0.0, %v2909
        %2911 = vmatprep.mubr.f32.mxu0 0.0
        %2912 = vmatmul.mubr.f32.gmra.mrb[0].mxu0 %v2673
        %v2913 = vpop.f32.mrb[0].mxu0
        %v2914 = vadd.f32 0.0, %v2913
        %v2915 = vpop.f32.mrb[0].mxu0
        %v2916 = vadd.f32 0.0, %v2915
        %2917 = vmatprep.mubr.f32.mxu0 0.0
        %2918 = vmatmul.mubr.f32.gmra.mrb[0].mxu0 %v2676
        %v2919 = vpop.f32.mrb[0].mxu0
        %v2920 = vadd.f32 0.0, %v2919
        %v2921 = vpop.f32.mrb[0].mxu0
        %v2922 = vadd.f32 0.0, %v2921
        %2923 = vmatprep.mubr.f32.mxu0 0.0
        %2924 = vmatmul.mubr.f32.gmra.mrb[0].mxu0 %v2679
        %v2925 = vpop.f32.mrb[0].mxu0
        %v2926 = vadd.f32 0.0, %v2925
        %v2927 = vpop.f32.mrb[0].mxu0
        %v2928 = vadd.f32 0.0, %v2927
        %2929 = vmatprep.mubr.f32.mxu0 0.0
        %2930 = vmatmul.mubr.f32.gmra.mrb[0].mxu0 %v2682
        %v2931 = vpop.f32.mrb[0].mxu0
        %v2932 = vadd.f32 0.0, %v2931
        %v2933 = vpop.f32.mrb[0].mxu0
        %v2934 = vadd.f32 0.0, %v2933
        %2935 = vmatprep.mubr.f32.mxu0 0.0
        %2936 = vmatmul.mubr.f32.gmra.mrb[0].mxu0 %v2685
        %v2937 = vpop.f32.mrb[0].mxu0
        %v2938 = vadd.f32 0.0, %v2937
        %v2939 = vpop.f32.mrb[0].mxu0
        %v2940 = vadd.f32 0.0, %v2939
        %2941 = vmatprep.mubr.f32.mxu0 0.0
        %2942 = vmatmul.mubr.f32.gmra.mrb[0].mxu0 %v2688
        %v2943 = vpop.f32.mrb[0].mxu0
        %v2944 = vadd.f32 0.0, %v2943
        %v2945 = vpop.f32.mrb[0].mxu0
        %v2946 = vadd.f32 0.0, %v2945
        %2947 = vmatprep.mubr.f32.mxu0 0.0
        %2948 = vmatmul.mubr.f32.gmra.mrb[0].mxu0 %v2691
        %v2949 = vpop.f32.mrb[0].mxu0
        %v2950 = vadd.f32 0.0, %v2949
        %v2951 = vpop.f32.mrb[0].mxu0
        %v2952 = vadd.f32 0.0, %v2951
        %2953 = vdwg.mxu0
        %v2955 = vunpack.c.l.s4 1983009808
        %v2956 = vunpack.c.0.s8 %v2955
        %v2957 = vlaneseq
        %v2958 = vshrl.u32 %v2957, 7
        %v2959 = vsub.s32 %v2956, %v2958
        %v2960 = vrot.slane %v850, %v2959
        %v2961 = vcombine.high %v2960, %v2960
        %v2963 = vsel %vm1500, %v1252, 0
        %v2966 = vsel %vm1500, %v1253, 0
        %v2969 = vsel %vm1500, %v1254, 0
        %v2972 = vsel %vm1500, %v1255, 0
        %v2975 = vsel %vm1500, %v1256, 0
        %v2978 = vsel %vm1500, %v1257, 0
        %v2981 = vsel %vm1500, %v1258, 0
        %v2984 = vsel %vm1500, %v1259, 0
        %v2987 = vsel %vm1500, %v1260, 0
        %v2990 = vsel %vm1500, %v1261, 0
        %v2993 = vsel %vm1500, %v1262, 0
        %v2996 = vsel %vm1500, %v1263, 0
        %v2999 = vsel %vm1500, %v1264, 0
        %v3002 = vsel %vm1500, %v1265, 0
        %v3005 = vsel %vm1500, %v1266, 0
        %v3008 = vsel %vm1500, %v1267, 0
        %v3011 = vsel %vm1500, %v1284, 0
        %v3014 = vsel %vm1500, %v1285, 0
        %v3017 = vsel %vm1500, %v1286, 0
        %v3020 = vsel %vm1500, %v1287, 0
        %v3023 = vsel %vm1500, %v1288, 0
        %v3026 = vsel %vm1500, %v1289, 0
        %v3029 = vsel %vm1500, %v1290, 0
        %v3032 = vsel %vm1500, %v1291, 0
        %v3035 = vsel %vm1500, %v1292, 0
        %v3038 = vsel %vm1500, %v1293, 0
        %v3041 = vsel %vm1500, %v1294, 0
        %v3044 = vsel %vm1500, %v1295, 0
        %v3047 = vsel %vm1500, %v1296, 0
        %v3050 = vsel %vm1500, %v1297, 0
        %v3053 = vsel %vm1500, %v1298, 0
        %v3056 = vsel %vm1500, %v1299, 0
        %v3058 = vsel %vm1597, %v2960, 0
        %v3060 = vsel %vm1597, %v2961, 0
        %3062 = vmatprep.subr.mxu0 %v3060
        %3063 = vmatpush1.msra.mxu0 %v3058
        %3064 = vmatprep.subr.mxu0 0.0
        %3065 = vmatpush1.msra.mxu0 0.0
        %3066 = vmatprep.subr.mxu0 0.0
        %3067 = vmatpush1.msra.mxu0 0.0
        %3068 = vmatprep.subr.mxu0 0.0
        %3069 = vmatpush1.msra.mxu0 0.0
        %3070 = vmatprep.subr.mxu0 0.0
        %3071 = vmatpush1.msra.mxu0 0.0
        %3072 = vmatprep.subr.mxu0 0.0
        %3073 = vmatpush1.msra.mxu0 0.0
        %3074 = vmatprep.subr.mxu0 0.0
        %3075 = vmatpush1.msra.mxu0 0.0
        %3076 = vmatprep.subr.mxu0 0.0
        %3077 = vmatpush1.msra.mxu0 0.0
        %3078 = vmatprep.subr.mxu0 0.0
        %3079 = vmatpush1.msra.mxu0 0.0
        %3080 = vmatprep.subr.mxu0 0.0
        %3081 = vmatpush1.msra.mxu0 0.0
        %3082 = vmatprep.subr.mxu0 0.0
        %3083 = vmatpush1.msra.mxu0 0.0
        %3084 = vmatprep.subr.mxu0 0.0
        %3085 = vmatpush1.msra.mxu0 0.0
        %3086 = vmatprep.subr.mxu0 0.0
        %3087 = vmatpush1.msra.mxu0 0.0
        %3088 = vmatprep.subr.mxu0 0.0
        %3089 = vmatpush1.msra.mxu0 0.0
        %3090 = vmatprep.subr.mxu0 0.0
        %3091 = vmatpush1.msra.mxu0 0.0
        %3092 = vmatprep.subr.mxu0 0.0
        %3093 = vmatpush1.msra.mxu0 0.0
        %3094 = vmatprep.subr.mxu0 0.0
        %3095 = vmatpush1.msra.mxu0 0.0
        %3096 = vmatprep.subr.mxu0 0.0
        %3097 = vmatpush1.msra.mxu0 0.0
        %3098 = vmatprep.subr.mxu0 0.0
        %3099 = vmatpush1.msra.mxu0 0.0
        %3100 = vmatprep.subr.mxu0 0.0
        %3101 = vmatpush1.msra.mxu0 0.0
        %3102 = vmatprep.subr.mxu0 0.0
        %3103 = vmatpush1.msra.mxu0 0.0
        %3104 = vmatprep.subr.mxu0 0.0
        %3105 = vmatpush1.msra.mxu0 0.0
        %3106 = vmatprep.subr.mxu0 0.0
        %3107 = vmatpush1.msra.mxu0 0.0
        %3108 = vmatprep.subr.mxu0 0.0
        %3109 = vmatpush1.msra.mxu0 0.0
        %3110 = vmatprep.subr.mxu0 0.0
        %3111 = vmatpush1.msra.mxu0 0.0
        %3112 = vmatprep.subr.mxu0 0.0
        %3113 = vmatpush1.msra.mxu0 0.0
        %3114 = vmatprep.subr.mxu0 0.0
        %3115 = vmatpush1.msra.mxu0 0.0
        %3116 = vmatprep.subr.mxu0 0.0
        %3117 = vmatpush1.msra.mxu0 0.0
        %3118 = vmatprep.subr.mxu0 0.0
        %3119 = vmatpush1.msra.mxu0 0.0
        %3120 = vmatprep.subr.mxu0 0.0
        %3121 = vmatpush1.msra.mxu0 0.0
        %3122 = vmatprep.subr.mxu0 0.0
        %3123 = vmatpush1.msra.mxu0 0.0
        %3124 = vmatprep.subr.mxu0 0.0
        %3125 = vmatpush1.msra.mxu0 0.0
        %3126 = vmatprep.mubr.f32.mxu0 0.0
        %3127 = vmatmul.mubr.f32.gmra.mrb[0].mxu0 %v2963
        %v3128 = vpop.f32.mrb[0].mxu0
        %v3129 = vadd.f32 0.0, %v3128
        %v3130 = vpop.f32.mrb[0].mxu0
        %v3131 = vadd.f32 0.0, %v3130
        %3132 = vmatprep.mubr.f32.mxu0 0.0
        %3133 = vmatmul.mubr.f32.gmra.mrb[0].mxu0 %v2966
        %v3134 = vpop.f32.mrb[0].mxu0
        %v3135 = vadd.f32 0.0, %v3134
        %v3136 = vpop.f32.mrb[0].mxu0
        %v3137 = vadd.f32 0.0, %v3136
        %3138 = vmatprep.mubr.f32.mxu0 0.0
        %3139 = vmatmul.mubr.f32.gmra.mrb[0].mxu0 %v2969
        %v3140 = vpop.f32.mrb[0].mxu0
        %v3141 = vadd.f32 0.0, %v3140
        %v3142 = vpop.f32.mrb[0].mxu0
        %v3143 = vadd.f32 0.0, %v3142
        %3144 = vmatprep.mubr.f32.mxu0 0.0
        %3145 = vmatmul.mubr.f32.gmra.mrb[0].mxu0 %v2972
        %v3146 = vpop.f32.mrb[0].mxu0
        %v3147 = vadd.f32 0.0, %v3146
        %v3148 = vpop.f32.mrb[0].mxu0
        %v3149 = vadd.f32 0.0, %v3148
        %3150 = vmatprep.mubr.f32.mxu0 0.0
        %3151 = vmatmul.mubr.f32.gmra.mrb[0].mxu0 %v2975
        %v3152 = vpop.f32.mrb[0].mxu0
        %v3153 = vadd.f32 0.0, %v3152
        %v3154 = vpop.f32.mrb[0].mxu0
        %v3155 = vadd.f32 0.0, %v3154
        %3156 = vmatprep.mubr.f32.mxu0 0.0
        %3157 = vmatmul.mubr.f32.gmra.mrb[0].mxu0 %v2978
        %v3158 = vpop.f32.mrb[0].mxu0
        %v3159 = vadd.f32 0.0, %v3158
        %v3160 = vpop.f32.mrb[0].mxu0
        %v3161 = vadd.f32 0.0, %v3160
        %3162 = vmatprep.mubr.f32.mxu0 0.0
        %3163 = vmatmul.mubr.f32.gmra.mrb[0].mxu0 %v2981
        %v3164 = vpop.f32.mrb[0].mxu0
        %v3165 = vadd.f32 0.0, %v3164
        %v3166 = vpop.f32.mrb[0].mxu0
        %v3167 = vadd.f32 0.0, %v3166
        %3168 = vmatprep.mubr.f32.mxu0 0.0
        %3169 = vmatmul.mubr.f32.gmra.mrb[0].mxu0 %v2984
        %v3170 = vpop.f32.mrb[0].mxu0
        %v3171 = vadd.f32 0.0, %v3170
        %v3172 = vpop.f32.mrb[0].mxu0
        %v3173 = vadd.f32 0.0, %v3172
        %3174 = vmatprep.mubr.f32.mxu0 0.0
        %3175 = vmatmul.mubr.f32.gmra.mrb[0].mxu0 %v2987
        %v3176 = vpop.f32.mrb[0].mxu0
        %v3177 = vadd.f32 0.0, %v3176
        %v3178 = vpop.f32.mrb[0].mxu0
        %v3179 = vadd.f32 0.0, %v3178
        %3180 = vmatprep.mubr.f32.mxu0 0.0
        %3181 = vmatmul.mubr.f32.gmra.mrb[0].mxu0 %v2990
        %v3182 = vpop.f32.mrb[0].mxu0
        %v3183 = vadd.f32 0.0, %v3182
        %v3184 = vpop.f32.mrb[0].mxu0
        %v3185 = vadd.f32 0.0, %v3184
        %3186 = vmatprep.mubr.f32.mxu0 0.0
        %3187 = vmatmul.mubr.f32.gmra.mrb[0].mxu0 %v2993
        %v3188 = vpop.f32.mrb[0].mxu0
        %v3189 = vadd.f32 0.0, %v3188
        %v3190 = vpop.f32.mrb[0].mxu0
        %v3191 = vadd.f32 0.0, %v3190
        %3192 = vmatprep.mubr.f32.mxu0 0.0
        %3193 = vmatmul.mubr.f32.gmra.mrb[0].mxu0 %v2996
        %v3194 = vpop.f32.mrb[0].mxu0
        %v3195 = vadd.f32 0.0, %v3194
        %v3196 = vpop.f32.mrb[0].mxu0
        %v3197 = vadd.f32 0.0, %v3196
        %3198 = vmatprep.mubr.f32.mxu0 0.0
        %3199 = vmatmul.mubr.f32.gmra.mrb[0].mxu0 %v2999
        %v3200 = vpop.f32.mrb[0].mxu0
        %v3201 = vadd.f32 0.0, %v3200
        %v3202 = vpop.f32.mrb[0].mxu0
        %v3203 = vadd.f32 0.0, %v3202
        %3204 = vmatprep.mubr.f32.mxu0 0.0
        %3205 = vmatmul.mubr.f32.gmra.mrb[0].mxu0 %v3002
        %v3206 = vpop.f32.mrb[0].mxu0
        %v3207 = vadd.f32 0.0, %v3206
        %v3208 = vpop.f32.mrb[0].mxu0
        %v3209 = vadd.f32 0.0, %v3208
        %3210 = vmatprep.mubr.f32.mxu0 0.0
        %3211 = vmatmul.mubr.f32.gmra.mrb[0].mxu0 %v3005
        %v3212 = vpop.f32.mrb[0].mxu0
        %v3213 = vadd.f32 0.0, %v3212
        %v3214 = vpop.f32.mrb[0].mxu0
        %v3215 = vadd.f32 0.0, %v3214
        %3216 = vmatprep.mubr.f32.mxu0 0.0
        %3217 = vmatmul.mubr.f32.gmra.mrb[0].mxu0 %v3008
        %v3218 = vpop.f32.mrb[0].mxu0
        %v3219 = vadd.f32 0.0, %v3218
        %v3220 = vpop.f32.mrb[0].mxu0
        %v3221 = vadd.f32 0.0, %v3220
        %3222 = vmatprep.mubr.f32.mxu0 0.0
        %3223 = vmatmul.mubr.f32.gmra.mrb[0].mxu0 %v3011
        %v3224 = vpop.f32.mrb[0].mxu0
        %v3225 = vadd.f32 0.0, %v3224
        %v3226 = vpop.f32.mrb[0].mxu0
        %v3227 = vadd.f32 0.0, %v3226
        %3228 = vmatprep.mubr.f32.mxu0 0.0
        %3229 = vmatmul.mubr.f32.gmra.mrb[0].mxu0 %v3014
        %v3230 = vpop.f32.mrb[0].mxu0
        %v3231 = vadd.f32 0.0, %v3230
        %v3232 = vpop.f32.mrb[0].mxu0
        %v3233 = vadd.f32 0.0, %v3232
        %3234 = vmatprep.mubr.f32.mxu0 0.0
        %3235 = vmatmul.mubr.f32.gmra.mrb[0].mxu0 %v3017
        %v3236 = vpop.f32.mrb[0].mxu0
        %v3237 = vadd.f32 0.0, %v3236
        %v3238 = vpop.f32.mrb[0].mxu0
        %v3239 = vadd.f32 0.0, %v3238
        %3240 = vmatprep.mubr.f32.mxu0 0.0
        %3241 = vmatmul.mubr.f32.gmra.mrb[0].mxu0 %v3020
        %v3242 = vpop.f32.mrb[0].mxu0
        %v3243 = vadd.f32 0.0, %v3242
        %v3244 = vpop.f32.mrb[0].mxu0
        %v3245 = vadd.f32 0.0, %v3244
        %3246 = vmatprep.mubr.f32.mxu0 0.0
        %3247 = vmatmul.mubr.f32.gmra.mrb[0].mxu0 %v3023
        %v3248 = vpop.f32.mrb[0].mxu0
        %v3249 = vadd.f32 0.0, %v3248
        %v3250 = vpop.f32.mrb[0].mxu0
        %v3251 = vadd.f32 0.0, %v3250
        %3252 = vmatprep.mubr.f32.mxu0 0.0
        %3253 = vmatmul.mubr.f32.gmra.mrb[0].mxu0 %v3026
        %v3254 = vpop.f32.mrb[0].mxu0
        %v3255 = vadd.f32 0.0, %v3254
        %v3256 = vpop.f32.mrb[0].mxu0
        %v3257 = vadd.f32 0.0, %v3256
        %3258 = vmatprep.mubr.f32.mxu0 0.0
        %3259 = vmatmul.mubr.f32.gmra.mrb[0].mxu0 %v3029
        %v3260 = vpop.f32.mrb[0].mxu0
        %v3261 = vadd.f32 0.0, %v3260
        %v3262 = vpop.f32.mrb[0].mxu0
        %v3263 = vadd.f32 0.0, %v3262
        %3264 = vmatprep.mubr.f32.mxu0 0.0
        %3265 = vmatmul.mubr.f32.gmra.mrb[0].mxu0 %v3032
        %v3266 = vpop.f32.mrb[0].mxu0
        %v3267 = vadd.f32 0.0, %v3266
        %v3268 = vpop.f32.mrb[0].mxu0
        %v3269 = vadd.f32 0.0, %v3268
        %3270 = vmatprep.mubr.f32.mxu0 0.0
        %3271 = vmatmul.mubr.f32.gmra.mrb[0].mxu0 %v3035
        %v3272 = vpop.f32.mrb[0].mxu0
        %v3273 = vadd.f32 0.0, %v3272
        %v3274 = vpop.f32.mrb[0].mxu0
        %v3275 = vadd.f32 0.0, %v3274
        %3276 = vmatprep.mubr.f32.mxu0 0.0
        %3277 = vmatmul.mubr.f32.gmra.mrb[0].mxu0 %v3038
        %v3278 = vpop.f32.mrb[0].mxu0
        %v3279 = vadd.f32 0.0, %v3278
        %v3280 = vpop.f32.mrb[0].mxu0
        %v3281 = vadd.f32 0.0, %v3280
        %3282 = vmatprep.mubr.f32.mxu0 0.0
        %3283 = vmatmul.mubr.f32.gmra.mrb[0].mxu0 %v3041
        %v3284 = vpop.f32.mrb[0].mxu0
        %v3285 = vadd.f32 0.0, %v3284
        %v3286 = vpop.f32.mrb[0].mxu0
        %v3287 = vadd.f32 0.0, %v3286
        %3288 = vmatprep.mubr.f32.mxu0 0.0
        %3289 = vmatmul.mubr.f32.gmra.mrb[0].mxu0 %v3044
        %v3290 = vpop.f32.mrb[0].mxu0
        %v3291 = vadd.f32 0.0, %v3290
        %v3292 = vpop.f32.mrb[0].mxu0
        %v3293 = vadd.f32 0.0, %v3292
        %3294 = vmatprep.mubr.f32.mxu0 0.0
        %3295 = vmatmul.mubr.f32.gmra.mrb[0].mxu0 %v3047
        %v3296 = vpop.f32.mrb[0].mxu0
        %v3297 = vadd.f32 0.0, %v3296
        %v3298 = vpop.f32.mrb[0].mxu0
        %v3299 = vadd.f32 0.0, %v3298
        %3300 = vmatprep.mubr.f32.mxu0 0.0
        %3301 = vmatmul.mubr.f32.gmra.mrb[0].mxu0 %v3050
        %v3302 = vpop.f32.mrb[0].mxu0
        %v3303 = vadd.f32 0.0, %v3302
        %v3304 = vpop.f32.mrb[0].mxu0
        %v3305 = vadd.f32 0.0, %v3304
        %3306 = vmatprep.mubr.f32.mxu0 0.0
        %3307 = vmatmul.mubr.f32.gmra.mrb[0].mxu0 %v3053
        %v3308 = vpop.f32.mrb[0].mxu0
        %v3309 = vadd.f32 0.0, %v3308
        %v3310 = vpop.f32.mrb[0].mxu0
        %v3311 = vadd.f32 0.0, %v3310
        %3312 = vmatprep.mubr.f32.mxu0 0.0
        %3313 = vmatmul.mubr.f32.gmra.mrb[0].mxu0 %v3056
        %v3314 = vpop.f32.mrb[0].mxu0
        %v3315 = vadd.f32 0.0, %v3314
        %v3316 = vpop.f32.mrb[0].mxu0
        %v3317 = vadd.f32 0.0, %v3316
        %3318 = vdwg.mxu0
        %v3320 = vunpack.c.l.s4 1983009808
        %v3321 = vunpack.c.0.s8 %v3320
        %v3322 = vlaneseq
        %v3323 = vshrl.u32 %v3322, 7
        %v3324 = vsub.s32 %v3321, %v3323
        %v3325 = vrot.slane %v858, %v3324
        %v3326 = vcombine.high %v3325, %v3325
        %v3328 = vsel %vm1500, %v1316, 0
        %v3331 = vsel %vm1500, %v1317, 0
        %v3334 = vsel %vm1500, %v1318, 0
        %v3337 = vsel %vm1500, %v1319, 0
        %v3340 = vsel %vm1500, %v1320, 0
        %v3343 = vsel %vm1500, %v1321, 0
        %v3346 = vsel %vm1500, %v1322, 0
        %v3349 = vsel %vm1500, %v1323, 0
        %v3352 = vsel %vm1500, %v1324, 0
        %v3355 = vsel %vm1500, %v1325, 0
        %v3358 = vsel %vm1500, %v1326, 0
        %v3361 = vsel %vm1500, %v1327, 0
        %v3364 = vsel %vm1500, %v1328, 0
        %v3367 = vsel %vm1500, %v1329, 0
        %v3370 = vsel %vm1500, %v1330, 0
        %v3373 = vsel %vm1500, %v1331, 0
        %v3376 = vsel %vm1500, %v1348, 0
        %v3379 = vsel %vm1500, %v1349, 0
        %v3382 = vsel %vm1500, %v1350, 0
        %v3385 = vsel %vm1500, %v1351, 0
        %v3388 = vsel %vm1500, %v1352, 0
        %v3391 = vsel %vm1500, %v1353, 0
        %v3394 = vsel %vm1500, %v1354, 0
        %v3397 = vsel %vm1500, %v1355, 0
        %v3400 = vsel %vm1500, %v1356, 0
        %v3403 = vsel %vm1500, %v1357, 0
        %v3406 = vsel %vm1500, %v1358, 0
        %v3409 = vsel %vm1500, %v1359, 0
        %v3412 = vsel %vm1500, %v1360, 0
        %v3415 = vsel %vm1500, %v1361, 0
        %v3418 = vsel %vm1500, %v1362, 0
        %v3421 = vsel %vm1500, %v1363, 0
        %v3423 = vsel %vm1597, %v3325, 0
        %v3425 = vsel %vm1597, %v3326, 0
        %3427 = vmatprep.subr.mxu0 %v3425
        %3428 = vmatpush1.msra.mxu0 %v3423
        %3429 = vmatprep.subr.mxu0 0.0
        %3430 = vmatpush1.msra.mxu0 0.0
        %3431 = vmatprep.subr.mxu0 0.0
        %3432 = vmatpush1.msra.mxu0 0.0
        %3433 = vmatprep.subr.mxu0 0.0
        %3434 = vmatpush1.msra.mxu0 0.0
        %3435 = vmatprep.subr.mxu0 0.0
        %3436 = vmatpush1.msra.mxu0 0.0
        %3437 = vmatprep.subr.mxu0 0.0
        %3438 = vmatpush1.msra.mxu0 0.0
        %3439 = vmatprep.subr.mxu0 0.0
        %3440 = vmatpush1.msra.mxu0 0.0
        %3441 = vmatprep.subr.mxu0 0.0
        %3442 = vmatpush1.msra.mxu0 0.0
        %3443 = vmatprep.subr.mxu0 0.0
        %3444 = vmatpush1.msra.mxu0 0.0
        %3445 = vmatprep.subr.mxu0 0.0
        %3446 = vmatpush1.msra.mxu0 0.0
        %3447 = vmatprep.subr.mxu0 0.0
        %3448 = vmatpush1.msra.mxu0 0.0
        %3449 = vmatprep.subr.mxu0 0.0
        %3450 = vmatpush1.msra.mxu0 0.0
        %3451 = vmatprep.subr.mxu0 0.0
        %3452 = vmatpush1.msra.mxu0 0.0
        %3453 = vmatprep.subr.mxu0 0.0
        %3454 = vmatpush1.msra.mxu0 0.0
        %3455 = vmatprep.subr.mxu0 0.0
        %3456 = vmatpush1.msra.mxu0 0.0
        %3457 = vmatprep.subr.mxu0 0.0
        %3458 = vmatpush1.msra.mxu0 0.0
        %3459 = vmatprep.subr.mxu0 0.0
        %3460 = vmatpush1.msra.mxu0 0.0
        %3461 = vmatprep.subr.mxu0 0.0
        %3462 = vmatpush1.msra.mxu0 0.0
        %3463 = vmatprep.subr.mxu0 0.0
        %3464 = vmatpush1.msra.mxu0 0.0
        %3465 = vmatprep.subr.mxu0 0.0
        %3466 = vmatpush1.msra.mxu0 0.0
        %3467 = vmatprep.subr.mxu0 0.0
        %3468 = vmatpush1.msra.mxu0 0.0
        %3469 = vmatprep.subr.mxu0 0.0
        %3470 = vmatpush1.msra.mxu0 0.0
        %3471 = vmatprep.subr.mxu0 0.0
        %3472 = vmatpush1.msra.mxu0 0.0
        %3473 = vmatprep.subr.mxu0 0.0
        %3474 = vmatpush1.msra.mxu0 0.0
        %3475 = vmatprep.subr.mxu0 0.0
        %3476 = vmatpush1.msra.mxu0 0.0
        %3477 = vmatprep.subr.mxu0 0.0
        %3478 = vmatpush1.msra.mxu0 0.0
        %3479 = vmatprep.subr.mxu0 0.0
        %3480 = vmatpush1.msra.mxu0 0.0
        %3481 = vmatprep.subr.mxu0 0.0
        %3482 = vmatpush1.msra.mxu0 0.0
        %3483 = vmatprep.subr.mxu0 0.0
        %3484 = vmatpush1.msra.mxu0 0.0
        %3485 = vmatprep.subr.mxu0 0.0
        %3486 = vmatpush1.msra.mxu0 0.0
        %3487 = vmatprep.subr.mxu0 0.0
        %3488 = vmatpush1.msra.mxu0 0.0
        %3489 = vmatprep.subr.mxu0 0.0
        %3490 = vmatpush1.msra.mxu0 0.0
        %3491 = vmatprep.mubr.f32.mxu0 0.0
        %3492 = vmatmul.mubr.f32.gmra.mrb[0].mxu0 %v3328
        %v3493 = vpop.f32.mrb[0].mxu0
        %v3494 = vadd.f32 0.0, %v3493
        %v3495 = vpop.f32.mrb[0].mxu0
        %v3496 = vadd.f32 0.0, %v3495
        %3497 = vmatprep.mubr.f32.mxu0 0.0
        %3498 = vmatmul.mubr.f32.gmra.mrb[0].mxu0 %v3331
        %v3499 = vpop.f32.mrb[0].mxu0
        %v3500 = vadd.f32 0.0, %v3499
        %v3501 = vpop.f32.mrb[0].mxu0
        %v3502 = vadd.f32 0.0, %v3501
        %3503 = vmatprep.mubr.f32.mxu0 0.0
        %3504 = vmatmul.mubr.f32.gmra.mrb[0].mxu0 %v3334
        %v3505 = vpop.f32.mrb[0].mxu0
        %v3506 = vadd.f32 0.0, %v3505
        %v3507 = vpop.f32.mrb[0].mxu0
        %v3508 = vadd.f32 0.0, %v3507
        %3509 = vmatprep.mubr.f32.mxu0 0.0
        %3510 = vmatmul.mubr.f32.gmra.mrb[0].mxu0 %v3337
        %v3511 = vpop.f32.mrb[0].mxu0
        %v3512 = vadd.f32 0.0, %v3511
        %v3513 = vpop.f32.mrb[0].mxu0
        %v3514 = vadd.f32 0.0, %v3513
        %3515 = vmatprep.mubr.f32.mxu0 0.0
        %3516 = vmatmul.mubr.f32.gmra.mrb[0].mxu0 %v3340
        %v3517 = vpop.f32.mrb[0].mxu0
        %v3518 = vadd.f32 0.0, %v3517
        %v3519 = vpop.f32.mrb[0].mxu0
        %v3520 = vadd.f32 0.0, %v3519
        %3521 = vmatprep.mubr.f32.mxu0 0.0
        %3522 = vmatmul.mubr.f32.gmra.mrb[0].mxu0 %v3343
        %v3523 = vpop.f32.mrb[0].mxu0
        %v3524 = vadd.f32 0.0, %v3523
        %v3525 = vpop.f32.mrb[0].mxu0
        %v3526 = vadd.f32 0.0, %v3525
        %3527 = vmatprep.mubr.f32.mxu0 0.0
        %3528 = vmatmul.mubr.f32.gmra.mrb[0].mxu0 %v3346
        %v3529 = vpop.f32.mrb[0].mxu0
        %v3530 = vadd.f32 0.0, %v3529
        %v3531 = vpop.f32.mrb[0].mxu0
        %v3532 = vadd.f32 0.0, %v3531
        %3533 = vmatprep.mubr.f32.mxu0 0.0
        %3534 = vmatmul.mubr.f32.gmra.mrb[0].mxu0 %v3349
        %v3535 = vpop.f32.mrb[0].mxu0
        %v3536 = vadd.f32 0.0, %v3535
        %v3537 = vpop.f32.mrb[0].mxu0
        %v3538 = vadd.f32 0.0, %v3537
        %3539 = vmatprep.mubr.f32.mxu0 0.0
        %3540 = vmatmul.mubr.f32.gmra.mrb[0].mxu0 %v3352
        %v3541 = vpop.f32.mrb[0].mxu0
        %v3542 = vadd.f32 0.0, %v3541
        %v3543 = vpop.f32.mrb[0].mxu0
        %v3544 = vadd.f32 0.0, %v3543
        %3545 = vmatprep.mubr.f32.mxu0 0.0
        %3546 = vmatmul.mubr.f32.gmra.mrb[0].mxu0 %v3355
        %v3547 = vpop.f32.mrb[0].mxu0
        %v3548 = vadd.f32 0.0, %v3547
        %v3549 = vpop.f32.mrb[0].mxu0
        %v3550 = vadd.f32 0.0, %v3549
        %3551 = vmatprep.mubr.f32.mxu0 0.0
        %3552 = vmatmul.mubr.f32.gmra.mrb[0].mxu0 %v3358
        %v3553 = vpop.f32.mrb[0].mxu0
        %v3554 = vadd.f32 0.0, %v3553
        %v3555 = vpop.f32.mrb[0].mxu0
        %v3556 = vadd.f32 0.0, %v3555
        %3557 = vmatprep.mubr.f32.mxu0 0.0
        %3558 = vmatmul.mubr.f32.gmra.mrb[0].mxu0 %v3361
        %v3559 = vpop.f32.mrb[0].mxu0
        %v3560 = vadd.f32 0.0, %v3559
        %v3561 = vpop.f32.mrb[0].mxu0
        %v3562 = vadd.f32 0.0, %v3561
        %3563 = vmatprep.mubr.f32.mxu0 0.0
        %3564 = vmatmul.mubr.f32.gmra.mrb[0].mxu0 %v3364
        %v3565 = vpop.f32.mrb[0].mxu0
        %v3566 = vadd.f32 0.0, %v3565
        %v3567 = vpop.f32.mrb[0].mxu0
        %v3568 = vadd.f32 0.0, %v3567
        %3569 = vmatprep.mubr.f32.mxu0 0.0
        %3570 = vmatmul.mubr.f32.gmra.mrb[0].mxu0 %v3367
        %v3571 = vpop.f32.mrb[0].mxu0
        %v3572 = vadd.f32 0.0, %v3571
        %v3573 = vpop.f32.mrb[0].mxu0
        %v3574 = vadd.f32 0.0, %v3573
        %3575 = vmatprep.mubr.f32.mxu0 0.0
        %3576 = vmatmul.mubr.f32.gmra.mrb[0].mxu0 %v3370
        %v3577 = vpop.f32.mrb[0].mxu0
        %v3578 = vadd.f32 0.0, %v3577
        %v3579 = vpop.f32.mrb[0].mxu0
        %v3580 = vadd.f32 0.0, %v3579
        %3581 = vmatprep.mubr.f32.mxu0 0.0
        %3582 = vmatmul.mubr.f32.gmra.mrb[0].mxu0 %v3373
        %v3583 = vpop.f32.mrb[0].mxu0
        %v3584 = vadd.f32 0.0, %v3583
        %v3585 = vpop.f32.mrb[0].mxu0
        %v3586 = vadd.f32 0.0, %v3585
        %3587 = vmatprep.mubr.f32.mxu0 0.0
        %3588 = vmatmul.mubr.f32.gmra.mrb[0].mxu0 %v3376
        %v3589 = vpop.f32.mrb[0].mxu0
        %v3590 = vadd.f32 0.0, %v3589
        %v3591 = vpop.f32.mrb[0].mxu0
        %v3592 = vadd.f32 0.0, %v3591
        %3593 = vmatprep.mubr.f32.mxu0 0.0
        %3594 = vmatmul.mubr.f32.gmra.mrb[0].mxu0 %v3379
        %v3595 = vpop.f32.mrb[0].mxu0
        %v3596 = vadd.f32 0.0, %v3595
        %v3597 = vpop.f32.mrb[0].mxu0
        %v3598 = vadd.f32 0.0, %v3597
        %3599 = vmatprep.mubr.f32.mxu0 0.0
        %3600 = vmatmul.mubr.f32.gmra.mrb[0].mxu0 %v3382
        %v3601 = vpop.f32.mrb[0].mxu0
        %v3602 = vadd.f32 0.0, %v3601
        %v3603 = vpop.f32.mrb[0].mxu0
        %v3604 = vadd.f32 0.0, %v3603
        %3605 = vmatprep.mubr.f32.mxu0 0.0
        %3606 = vmatmul.mubr.f32.gmra.mrb[0].mxu0 %v3385
        %v3607 = vpop.f32.mrb[0].mxu0
        %v3608 = vadd.f32 0.0, %v3607
        %v3609 = vpop.f32.mrb[0].mxu0
        %v3610 = vadd.f32 0.0, %v3609
        %3611 = vmatprep.mubr.f32.mxu0 0.0
        %3612 = vmatmul.mubr.f32.gmra.mrb[0].mxu0 %v3388
        %v3613 = vpop.f32.mrb[0].mxu0
        %v3614 = vadd.f32 0.0, %v3613
        %v3615 = vpop.f32.mrb[0].mxu0
        %v3616 = vadd.f32 0.0, %v3615
        %3617 = vmatprep.mubr.f32.mxu0 0.0
        %3618 = vmatmul.mubr.f32.gmra.mrb[0].mxu0 %v3391
        %v3619 = vpop.f32.mrb[0].mxu0
        %v3620 = vadd.f32 0.0, %v3619
        %v3621 = vpop.f32.mrb[0].mxu0
        %v3622 = vadd.f32 0.0, %v3621
        %3623 = vmatprep.mubr.f32.mxu0 0.0
        %3624 = vmatmul.mubr.f32.gmra.mrb[0].mxu0 %v3394
        %v3625 = vpop.f32.mrb[0].mxu0
        %v3626 = vadd.f32 0.0, %v3625
        %v3627 = vpop.f32.mrb[0].mxu0
        %v3628 = vadd.f32 0.0, %v3627
        %3629 = vmatprep.mubr.f32.mxu0 0.0
        %3630 = vmatmul.mubr.f32.gmra.mrb[0].mxu0 %v3397
        %v3631 = vpop.f32.mrb[0].mxu0
        %v3632 = vadd.f32 0.0, %v3631
        %v3633 = vpop.f32.mrb[0].mxu0
        %v3634 = vadd.f32 0.0, %v3633
        %3635 = vmatprep.mubr.f32.mxu0 0.0
        %3636 = vmatmul.mubr.f32.gmra.mrb[0].mxu0 %v3400
        %v3637 = vpop.f32.mrb[0].mxu0
        %v3638 = vadd.f32 0.0, %v3637
        %v3639 = vpop.f32.mrb[0].mxu0
        %v3640 = vadd.f32 0.0, %v3639
        %3641 = vmatprep.mubr.f32.mxu0 0.0
        %3642 = vmatmul.mubr.f32.gmra.mrb[0].mxu0 %v3403
        %v3643 = vpop.f32.mrb[0].mxu0
        %v3644 = vadd.f32 0.0, %v3643
        %v3645 = vpop.f32.mrb[0].mxu0
        %v3646 = vadd.f32 0.0, %v3645
        %3647 = vmatprep.mubr.f32.mxu0 0.0
        %3648 = vmatmul.mubr.f32.gmra.mrb[0].mxu0 %v3406
        %v3649 = vpop.f32.mrb[0].mxu0
        %v3650 = vadd.f32 0.0, %v3649
        %v3651 = vpop.f32.mrb[0].mxu0
        %v3652 = vadd.f32 0.0, %v3651
        %3653 = vmatprep.mubr.f32.mxu0 0.0
        %3654 = vmatmul.mubr.f32.gmra.mrb[0].mxu0 %v3409
        %v3655 = vpop.f32.mrb[0].mxu0
        %v3656 = vadd.f32 0.0, %v3655
        %v3657 = vpop.f32.mrb[0].mxu0
        %v3658 = vadd.f32 0.0, %v3657
        %3659 = vmatprep.mubr.f32.mxu0 0.0
        %3660 = vmatmul.mubr.f32.gmra.mrb[0].mxu0 %v3412
        %v3661 = vpop.f32.mrb[0].mxu0
        %v3662 = vadd.f32 0.0, %v3661
        %v3663 = vpop.f32.mrb[0].mxu0
        %v3664 = vadd.f32 0.0, %v3663
        %3665 = vmatprep.mubr.f32.mxu0 0.0
        %3666 = vmatmul.mubr.f32.gmra.mrb[0].mxu0 %v3415
        %v3667 = vpop.f32.mrb[0].mxu0
        %v3668 = vadd.f32 0.0, %v3667
        %v3669 = vpop.f32.mrb[0].mxu0
        %v3670 = vadd.f32 0.0, %v3669
        %3671 = vmatprep.mubr.f32.mxu0 0.0
        %3672 = vmatmul.mubr.f32.gmra.mrb[0].mxu0 %v3418
        %v3673 = vpop.f32.mrb[0].mxu0
        %v3674 = vadd.f32 0.0, %v3673
        %v3675 = vpop.f32.mrb[0].mxu0
        %v3676 = vadd.f32 0.0, %v3675
        %3677 = vmatprep.mubr.f32.mxu0 0.0
        %3678 = vmatmul.mubr.f32.gmra.mrb[0].mxu0 %v3421
        %v3679 = vpop.f32.mrb[0].mxu0
        %v3680 = vadd.f32 0.0, %v3679
        %v3681 = vpop.f32.mrb[0].mxu0
        %v3682 = vadd.f32 0.0, %v3681
        %3683 = vdwg.mxu0
        %v3685 = vunpack.c.l.s4 1983009808
        %v3686 = vunpack.c.0.s8 %v3685
        %v3687 = vlaneseq
        %v3688 = vshrl.u32 %v3687, 7
        %v3689 = vsub.s32 %v3686, %v3688
        %v3690 = vrot.slane %v857, %v3689
        %v3691 = vcombine.high %v3690, %v3690
        %v3693 = vsel %vm1500, %v1380, 0
        %v3696 = vsel %vm1500, %v1381, 0
        %v3699 = vsel %vm1500, %v1382, 0
        %v3702 = vsel %vm1500, %v1383, 0
        %v3705 = vsel %vm1500, %v1384, 0
        %v3708 = vsel %vm1500, %v1385, 0
        %v3711 = vsel %vm1500, %v1386, 0
        %v3714 = vsel %vm1500, %v1387, 0
        %v3717 = vsel %vm1500, %v1388, 0
        %v3720 = vsel %vm1500, %v1389, 0
        %v3723 = vsel %vm1500, %v1390, 0
        %v3726 = vsel %vm1500, %v1391, 0
        %v3729 = vsel %vm1500, %v1392, 0
        %v3732 = vsel %vm1500, %v1393, 0
        %v3735 = vsel %vm1500, %v1394, 0
        %v3738 = vsel %vm1500, %v1395, 0
        %v3741 = vsel %vm1500, %v1412, 0
        %v3744 = vsel %vm1500, %v1413, 0
        %v3747 = vsel %vm1500, %v1414, 0
        %v3750 = vsel %vm1500, %v1415, 0
        %v3753 = vsel %vm1500, %v1416, 0
        %v3756 = vsel %vm1500, %v1417, 0
        %v3759 = vsel %vm1500, %v1418, 0
        %v3762 = vsel %vm1500, %v1419, 0
        %v3765 = vsel %vm1500, %v1420, 0
        %v3768 = vsel %vm1500, %v1421, 0
        %v3771 = vsel %vm1500, %v1422, 0
        %v3774 = vsel %vm1500, %v1423, 0
        %v3777 = vsel %vm1500, %v1424, 0
        %v3780 = vsel %vm1500, %v1425, 0
        %v3783 = vsel %vm1500, %v1426, 0
        %v3786 = vsel %vm1500, %v1427, 0
        %v3788 = vsel %vm1597, %v3690, 0
        %v3790 = vsel %vm1597, %v3691, 0
        %3792 = vmatprep.subr.mxu0 %v3790
        %3793 = vmatpush1.msra.mxu0 %v3788
        %3794 = vmatprep.subr.mxu0 0.0
        %3795 = vmatpush1.msra.mxu0 0.0
        %3796 = vmatprep.subr.mxu0 0.0
        %3797 = vmatpush1.msra.mxu0 0.0
        %3798 = vmatprep.subr.mxu0 0.0
        %3799 = vmatpush1.msra.mxu0 0.0
        %3800 = vmatprep.subr.mxu0 0.0
        %3801 = vmatpush1.msra.mxu0 0.0
        %3802 = vmatprep.subr.mxu0 0.0
        %3803 = vmatpush1.msra.mxu0 0.0
        %3804 = vmatprep.subr.mxu0 0.0
        %3805 = vmatpush1.msra.mxu0 0.0
        %3806 = vmatprep.subr.mxu0 0.0
        %3807 = vmatpush1.msra.mxu0 0.0
        %3808 = vmatprep.subr.mxu0 0.0
        %3809 = vmatpush1.msra.mxu0 0.0
        %3810 = vmatprep.subr.mxu0 0.0
        %3811 = vmatpush1.msra.mxu0 0.0
        %3812 = vmatprep.subr.mxu0 0.0
        %3813 = vmatpush1.msra.mxu0 0.0
        %3814 = vmatprep.subr.mxu0 0.0
        %3815 = vmatpush1.msra.mxu0 0.0
        %3816 = vmatprep.subr.mxu0 0.0
        %3817 = vmatpush1.msra.mxu0 0.0
        %3818 = vmatprep.subr.mxu0 0.0
        %3819 = vmatpush1.msra.mxu0 0.0
        %3820 = vmatprep.subr.mxu0 0.0
        %3821 = vmatpush1.msra.mxu0 0.0
        %3822 = vmatprep.subr.mxu0 0.0
        %3823 = vmatpush1.msra.mxu0 0.0
        %3824 = vmatprep.subr.mxu0 0.0
        %3825 = vmatpush1.msra.mxu0 0.0
        %3826 = vmatprep.subr.mxu0 0.0
        %3827 = vmatpush1.msra.mxu0 0.0
        %3828 = vmatprep.subr.mxu0 0.0
        %3829 = vmatpush1.msra.mxu0 0.0
        %3830 = vmatprep.subr.mxu0 0.0
        %3831 = vmatpush1.msra.mxu0 0.0
        %3832 = vmatprep.subr.mxu0 0.0
        %3833 = vmatpush1.msra.mxu0 0.0
        %3834 = vmatprep.subr.mxu0 0.0
        %3835 = vmatpush1.msra.mxu0 0.0
        %3836 = vmatprep.subr.mxu0 0.0
        %3837 = vmatpush1.msra.mxu0 0.0
        %3838 = vmatprep.subr.mxu0 0.0
        %3839 = vmatpush1.msra.mxu0 0.0
        %3840 = vmatprep.subr.mxu0 0.0
        %3841 = vmatpush1.msra.mxu0 0.0
        %3842 = vmatprep.subr.mxu0 0.0
        %3843 = vmatpush1.msra.mxu0 0.0
        %3844 = vmatprep.subr.mxu0 0.0
        %3845 = vmatpush1.msra.mxu0 0.0
        %3846 = vmatprep.subr.mxu0 0.0
        %3847 = vmatpush1.msra.mxu0 0.0
        %3848 = vmatprep.subr.mxu0 0.0
        %3849 = vmatpush1.msra.mxu0 0.0
        %3850 = vmatprep.subr.mxu0 0.0
        %3851 = vmatpush1.msra.mxu0 0.0
        %3852 = vmatprep.subr.mxu0 0.0
        %3853 = vmatpush1.msra.mxu0 0.0
        %3854 = vmatprep.subr.mxu0 0.0
        %3855 = vmatpush1.msra.mxu0 0.0
        %3856 = vmatprep.mubr.f32.mxu0 0.0
        %3857 = vmatmul.mubr.f32.gmra.mrb[0].mxu0 %v3693
        %v3858 = vpop.f32.mrb[0].mxu0
        %v3859 = vadd.f32 0.0, %v3858
        %v3860 = vpop.f32.mrb[0].mxu0
        %v3861 = vadd.f32 0.0, %v3860
        %3862 = vmatprep.mubr.f32.mxu0 0.0
        %3863 = vmatmul.mubr.f32.gmra.mrb[0].mxu0 %v3696
        %v3864 = vpop.f32.mrb[0].mxu0
        %v3865 = vadd.f32 0.0, %v3864
        %v3866 = vpop.f32.mrb[0].mxu0
        %v3867 = vadd.f32 0.0, %v3866
        %3868 = vmatprep.mubr.f32.mxu0 0.0
        %3869 = vmatmul.mubr.f32.gmra.mrb[0].mxu0 %v3699
        %v3870 = vpop.f32.mrb[0].mxu0
        %v3871 = vadd.f32 0.0, %v3870
        %v3872 = vpop.f32.mrb[0].mxu0
        %v3873 = vadd.f32 0.0, %v3872
        %3874 = vmatprep.mubr.f32.mxu0 0.0
        %3875 = vmatmul.mubr.f32.gmra.mrb[0].mxu0 %v3702
        %v3876 = vpop.f32.mrb[0].mxu0
        %v3877 = vadd.f32 0.0, %v3876
        %v3878 = vpop.f32.mrb[0].mxu0
        %v3879 = vadd.f32 0.0, %v3878
        %3880 = vmatprep.mubr.f32.mxu0 0.0
        %3881 = vmatmul.mubr.f32.gmra.mrb[0].mxu0 %v3705
        %v3882 = vpop.f32.mrb[0].mxu0
        %v3883 = vadd.f32 0.0, %v3882
        %v3884 = vpop.f32.mrb[0].mxu0
        %v3885 = vadd.f32 0.0, %v3884
        %3886 = vmatprep.mubr.f32.mxu0 0.0
        %3887 = vmatmul.mubr.f32.gmra.mrb[0].mxu0 %v3708
        %v3888 = vpop.f32.mrb[0].mxu0
        %v3889 = vadd.f32 0.0, %v3888
        %v3890 = vpop.f32.mrb[0].mxu0
        %v3891 = vadd.f32 0.0, %v3890
        %3892 = vmatprep.mubr.f32.mxu0 0.0
        %3893 = vmatmul.mubr.f32.gmra.mrb[0].mxu0 %v3711
        %v3894 = vpop.f32.mrb[0].mxu0
        %v3895 = vadd.f32 0.0, %v3894
        %v3896 = vpop.f32.mrb[0].mxu0
        %v3897 = vadd.f32 0.0, %v3896
        %3898 = vmatprep.mubr.f32.mxu0 0.0
        %3899 = vmatmul.mubr.f32.gmra.mrb[0].mxu0 %v3714
        %v3900 = vpop.f32.mrb[0].mxu0
        %v3901 = vadd.f32 0.0, %v3900
        %v3902 = vpop.f32.mrb[0].mxu0
        %v3903 = vadd.f32 0.0, %v3902
        %3904 = vmatprep.mubr.f32.mxu0 0.0
        %3905 = vmatmul.mubr.f32.gmra.mrb[0].mxu0 %v3717
        %v3906 = vpop.f32.mrb[0].mxu0
        %v3907 = vadd.f32 0.0, %v3906
        %v3908 = vpop.f32.mrb[0].mxu0
        %v3909 = vadd.f32 0.0, %v3908
        %3910 = vmatprep.mubr.f32.mxu0 0.0
        %3911 = vmatmul.mubr.f32.gmra.mrb[0].mxu0 %v3720
        %v3912 = vpop.f32.mrb[0].mxu0
        %v3913 = vadd.f32 0.0, %v3912
        %v3914 = vpop.f32.mrb[0].mxu0
        %v3915 = vadd.f32 0.0, %v3914
        %3916 = vmatprep.mubr.f32.mxu0 0.0
        %3917 = vmatmul.mubr.f32.gmra.mrb[0].mxu0 %v3723
        %v3918 = vpop.f32.mrb[0].mxu0
        %v3919 = vadd.f32 0.0, %v3918
        %v3920 = vpop.f32.mrb[0].mxu0
        %v3921 = vadd.f32 0.0, %v3920
        %3922 = vmatprep.mubr.f32.mxu0 0.0
        %3923 = vmatmul.mubr.f32.gmra.mrb[0].mxu0 %v3726
        %v3924 = vpop.f32.mrb[0].mxu0
        %v3925 = vadd.f32 0.0, %v3924
        %v3926 = vpop.f32.mrb[0].mxu0
        %v3927 = vadd.f32 0.0, %v3926
        %3928 = vmatprep.mubr.f32.mxu0 0.0
        %3929 = vmatmul.mubr.f32.gmra.mrb[0].mxu0 %v3729
        %v3930 = vpop.f32.mrb[0].mxu0
        %v3931 = vadd.f32 0.0, %v3930
        %v3932 = vpop.f32.mrb[0].mxu0
        %v3933 = vadd.f32 0.0, %v3932
        %3934 = vmatprep.mubr.f32.mxu0 0.0
        %3935 = vmatmul.mubr.f32.gmra.mrb[0].mxu0 %v3732
        %v3936 = vpop.f32.mrb[0].mxu0
        %v3937 = vadd.f32 0.0, %v3936
        %v3938 = vpop.f32.mrb[0].mxu0
        %v3939 = vadd.f32 0.0, %v3938
        %3940 = vmatprep.mubr.f32.mxu0 0.0
        %3941 = vmatmul.mubr.f32.gmra.mrb[0].mxu0 %v3735
        %v3942 = vpop.f32.mrb[0].mxu0
        %v3943 = vadd.f32 0.0, %v3942
        %v3944 = vpop.f32.mrb[0].mxu0
        %v3945 = vadd.f32 0.0, %v3944
        %3946 = vmatprep.mubr.f32.mxu0 0.0
        %3947 = vmatmul.mubr.f32.gmra.mrb[0].mxu0 %v3738
        %v3948 = vpop.f32.mrb[0].mxu0
        %v3949 = vadd.f32 0.0, %v3948
        %v3950 = vpop.f32.mrb[0].mxu0
        %v3951 = vadd.f32 0.0, %v3950
        %3952 = vmatprep.mubr.f32.mxu0 0.0
        %3953 = vmatmul.mubr.f32.gmra.mrb[0].mxu0 %v3741
        %v3954 = vpop.f32.mrb[0].mxu0
        %v3955 = vadd.f32 0.0, %v3954
        %v3956 = vpop.f32.mrb[0].mxu0
        %v3957 = vadd.f32 0.0, %v3956
        %3958 = vmatprep.mubr.f32.mxu0 0.0
        %3959 = vmatmul.mubr.f32.gmra.mrb[0].mxu0 %v3744
        %v3960 = vpop.f32.mrb[0].mxu0
        %v3961 = vadd.f32 0.0, %v3960
        %v3962 = vpop.f32.mrb[0].mxu0
        %v3963 = vadd.f32 0.0, %v3962
        %3964 = vmatprep.mubr.f32.mxu0 0.0
        %3965 = vmatmul.mubr.f32.gmra.mrb[0].mxu0 %v3747
        %v3966 = vpop.f32.mrb[0].mxu0
        %v3967 = vadd.f32 0.0, %v3966
        %v3968 = vpop.f32.mrb[0].mxu0
        %v3969 = vadd.f32 0.0, %v3968
        %3970 = vmatprep.mubr.f32.mxu0 0.0
        %3971 = vmatmul.mubr.f32.gmra.mrb[0].mxu0 %v3750
        %v3972 = vpop.f32.mrb[0].mxu0
        %v3973 = vadd.f32 0.0, %v3972
        %v3974 = vpop.f32.mrb[0].mxu0
        %v3975 = vadd.f32 0.0, %v3974
        %3976 = vmatprep.mubr.f32.mxu0 0.0
        %3977 = vmatmul.mubr.f32.gmra.mrb[0].mxu0 %v3753
        %v3978 = vpop.f32.mrb[0].mxu0
        %v3979 = vadd.f32 0.0, %v3978
        %v3980 = vpop.f32.mrb[0].mxu0
        %v3981 = vadd.f32 0.0, %v3980
        %3982 = vmatprep.mubr.f32.mxu0 0.0
        %3983 = vmatmul.mubr.f32.gmra.mrb[0].mxu0 %v3756
        %v3984 = vpop.f32.mrb[0].mxu0
        %v3985 = vadd.f32 0.0, %v3984
        %v3986 = vpop.f32.mrb[0].mxu0
        %v3987 = vadd.f32 0.0, %v3986
        %3988 = vmatprep.mubr.f32.mxu0 0.0
        %3989 = vmatmul.mubr.f32.gmra.mrb[0].mxu0 %v3759
        %v3990 = vpop.f32.mrb[0].mxu0
        %v3991 = vadd.f32 0.0, %v3990
        %v3992 = vpop.f32.mrb[0].mxu0
        %v3993 = vadd.f32 0.0, %v3992
        %3994 = vmatprep.mubr.f32.mxu0 0.0
        %3995 = vmatmul.mubr.f32.gmra.mrb[0].mxu0 %v3762
        %v3996 = vpop.f32.mrb[0].mxu0
        %v3997 = vadd.f32 0.0, %v3996
        %v3998 = vpop.f32.mrb[0].mxu0
        %v3999 = vadd.f32 0.0, %v3998
        %4000 = vmatprep.mubr.f32.mxu0 0.0
        %4001 = vmatmul.mubr.f32.gmra.mrb[0].mxu0 %v3765
        %v4002 = vpop.f32.mrb[0].mxu0
        %v4003 = vadd.f32 0.0, %v4002
        %v4004 = vpop.f32.mrb[0].mxu0
        %v4005 = vadd.f32 0.0, %v4004
        %4006 = vmatprep.mubr.f32.mxu0 0.0
        %4007 = vmatmul.mubr.f32.gmra.mrb[0].mxu0 %v3768
        %v4008 = vpop.f32.mrb[0].mxu0
        %v4009 = vadd.f32 0.0, %v4008
        %v4010 = vpop.f32.mrb[0].mxu0
        %v4011 = vadd.f32 0.0, %v4010
        %4012 = vmatprep.mubr.f32.mxu0 0.0
        %4013 = vmatmul.mubr.f32.gmra.mrb[0].mxu0 %v3771
        %v4014 = vpop.f32.mrb[0].mxu0
        %v4015 = vadd.f32 0.0, %v4014
        %v4016 = vpop.f32.mrb[0].mxu0
        %v4017 = vadd.f32 0.0, %v4016
        %4018 = vmatprep.mubr.f32.mxu0 0.0
        %4019 = vmatmul.mubr.f32.gmra.mrb[0].mxu0 %v3774
        %v4020 = vpop.f32.mrb[0].mxu0
        %v4021 = vadd.f32 0.0, %v4020
        %v4022 = vpop.f32.mrb[0].mxu0
        %v4023 = vadd.f32 0.0, %v4022
        %4024 = vmatprep.mubr.f32.mxu0 0.0
        %4025 = vmatmul.mubr.f32.gmra.mrb[0].mxu0 %v3777
        %v4026 = vpop.f32.mrb[0].mxu0
        %v4027 = vadd.f32 0.0, %v4026
        %v4028 = vpop.f32.mrb[0].mxu0
        %v4029 = vadd.f32 0.0, %v4028
        %4030 = vmatprep.mubr.f32.mxu0 0.0
        %4031 = vmatmul.mubr.f32.gmra.mrb[0].mxu0 %v3780
        %v4032 = vpop.f32.mrb[0].mxu0
        %v4033 = vadd.f32 0.0, %v4032
        %v4034 = vpop.f32.mrb[0].mxu0
        %v4035 = vadd.f32 0.0, %v4034
        %4036 = vmatprep.mubr.f32.mxu0 0.0
        %4037 = vmatmul.mubr.f32.gmra.mrb[0].mxu0 %v3783
        %v4038 = vpop.f32.mrb[0].mxu0
        %v4039 = vadd.f32 0.0, %v4038
        %v4040 = vpop.f32.mrb[0].mxu0
        %v4041 = vadd.f32 0.0, %v4040
        %4042 = vmatprep.mubr.f32.mxu0 0.0
        %4043 = vmatmul.mubr.f32.gmra.mrb[0].mxu0 %v3786
        %v4044 = vpop.f32.mrb[0].mxu0
        %v4045 = vadd.f32 0.0, %v4044
        %v4046 = vpop.f32.mrb[0].mxu0
        %v4047 = vadd.f32 0.0, %v4046
        %4048 = vdwg.mxu0
        %v4050 = vunpack.c.l.s4 1983009808
        %v4051 = vunpack.c.0.s8 %v4050
        %v4052 = vlaneseq
        %v4053 = vshrl.u32 %v4052, 7
        %v4054 = vsub.s32 %v4051, %v4053
        %v4055 = vrot.slane %v859, %v4054
        %v4056 = vcombine.high %v4055, %v4055
        %v4058 = vsel %vm1500, %v1444, 0
        %v4061 = vsel %vm1500, %v1445, 0
        %v4064 = vsel %vm1500, %v1446, 0
        %v4067 = vsel %vm1500, %v1447, 0
        %v4070 = vsel %vm1500, %v1448, 0
        %v4073 = vsel %vm1500, %v1449, 0
        %v4076 = vsel %vm1500, %v1450, 0
        %v4079 = vsel %vm1500, %v1451, 0
        %v4082 = vsel %vm1500, %v1452, 0
        %v4085 = vsel %vm1500, %v1453, 0
        %v4088 = vsel %vm1500, %v1454, 0
        %v4091 = vsel %vm1500, %v1455, 0
        %v4094 = vsel %vm1500, %v1456, 0
        %v4097 = vsel %vm1500, %v1457, 0
        %v4100 = vsel %vm1500, %v1458, 0
        %v4103 = vsel %vm1500, %v1459, 0
        %v4106 = vsel %vm1500, %v1476, 0
        %v4109 = vsel %vm1500, %v1477, 0
        %v4112 = vsel %vm1500, %v1478, 0
        %v4115 = vsel %vm1500, %v1479, 0
        %v4118 = vsel %vm1500, %v1480, 0
        %v4121 = vsel %vm1500, %v1481, 0
        %v4124 = vsel %vm1500, %v1482, 0
        %v4127 = vsel %vm1500, %v1483, 0
        %v4130 = vsel %vm1500, %v1484, 0
        %v4133 = vsel %vm1500, %v1485, 0
        %v4136 = vsel %vm1500, %v1486, 0
        %v4139 = vsel %vm1500, %v1487, 0
        %v4142 = vsel %vm1500, %v1488, 0
        %v4145 = vsel %vm1500, %v1489, 0
        %v4148 = vsel %vm1500, %v1490, 0
        %v4151 = vsel %vm1500, %v1491, 0
        %v4153 = vsel %vm1597, %v4055, 0
        %v4155 = vsel %vm1597, %v4056, 0
        %4157 = vmatprep.subr.mxu0 %v4155
        %4158 = vmatpush1.msra.mxu0 %v4153
        %4159 = vmatprep.subr.mxu0 0.0
        %4160 = vmatpush1.msra.mxu0 0.0
        %4161 = vmatprep.subr.mxu0 0.0
        %4162 = vmatpush1.msra.mxu0 0.0
        %4163 = vmatprep.subr.mxu0 0.0
        %4164 = vmatpush1.msra.mxu0 0.0
        %4165 = vmatprep.subr.mxu0 0.0
        %4166 = vmatpush1.msra.mxu0 0.0
        %4167 = vmatprep.subr.mxu0 0.0
        %4168 = vmatpush1.msra.mxu0 0.0
        %4169 = vmatprep.subr.mxu0 0.0
        %4170 = vmatpush1.msra.mxu0 0.0
        %4171 = vmatprep.subr.mxu0 0.0
        %4172 = vmatpush1.msra.mxu0 0.0
        %4173 = vmatprep.subr.mxu0 0.0
        %4174 = vmatpush1.msra.mxu0 0.0
        %4175 = vmatprep.subr.mxu0 0.0
        %4176 = vmatpush1.msra.mxu0 0.0
        %4177 = vmatprep.subr.mxu0 0.0
        %4178 = vmatpush1.msra.mxu0 0.0
        %4179 = vmatprep.subr.mxu0 0.0
        %4180 = vmatpush1.msra.mxu0 0.0
        %4181 = vmatprep.subr.mxu0 0.0
        %4182 = vmatpush1.msra.mxu0 0.0
        %4183 = vmatprep.subr.mxu0 0.0
        %4184 = vmatpush1.msra.mxu0 0.0
        %4185 = vmatprep.subr.mxu0 0.0
        %4186 = vmatpush1.msra.mxu0 0.0
        %4187 = vmatprep.subr.mxu0 0.0
        %4188 = vmatpush1.msra.mxu0 0.0
        %4189 = vmatprep.subr.mxu0 0.0
        %4190 = vmatpush1.msra.mxu0 0.0
        %4191 = vmatprep.subr.mxu0 0.0
        %4192 = vmatpush1.msra.mxu0 0.0
        %4193 = vmatprep.subr.mxu0 0.0
        %4194 = vmatpush1.msra.mxu0 0.0
        %4195 = vmatprep.subr.mxu0 0.0
        %4196 = vmatpush1.msra.mxu0 0.0
        %4197 = vmatprep.subr.mxu0 0.0
        %4198 = vmatpush1.msra.mxu0 0.0
        %4199 = vmatprep.subr.mxu0 0.0
        %4200 = vmatpush1.msra.mxu0 0.0
        %4201 = vmatprep.subr.mxu0 0.0
        %4202 = vmatpush1.msra.mxu0 0.0
        %4203 = vmatprep.subr.mxu0 0.0
        %4204 = vmatpush1.msra.mxu0 0.0
        %4205 = vmatprep.subr.mxu0 0.0
        %4206 = vmatpush1.msra.mxu0 0.0
        %4207 = vmatprep.subr.mxu0 0.0
        %4208 = vmatpush1.msra.mxu0 0.0
        %4209 = vmatprep.subr.mxu0 0.0
        %4210 = vmatpush1.msra.mxu0 0.0
        %4211 = vmatprep.subr.mxu0 0.0
        %4212 = vmatpush1.msra.mxu0 0.0
        %4213 = vmatprep.subr.mxu0 0.0
        %4214 = vmatpush1.msra.mxu0 0.0
        %4215 = vmatprep.subr.mxu0 0.0
        %4216 = vmatpush1.msra.mxu0 0.0
        %4217 = vmatprep.subr.mxu0 0.0
        %4218 = vmatpush1.msra.mxu0 0.0
        %4219 = vmatprep.subr.mxu0 0.0
        %4220 = vmatpush1.msra.mxu0 0.0
        %4221 = vmatprep.mubr.f32.mxu0 0.0
        %4222 = vmatmul.mubr.f32.gmra.mrb[0].mxu0 %v4058
        %v4223 = vpop.f32.mrb[0].mxu0
        %v4224 = vadd.f32 0.0, %v4223
        %v4225 = vpop.f32.mrb[0].mxu0
        %v4226 = vadd.f32 0.0, %v4225
        %4227 = vmatprep.mubr.f32.mxu0 0.0
        %4228 = vmatmul.mubr.f32.gmra.mrb[0].mxu0 %v4061
        %v4229 = vpop.f32.mrb[0].mxu0
        %v4230 = vadd.f32 0.0, %v4229
        %v4231 = vpop.f32.mrb[0].mxu0
        %v4232 = vadd.f32 0.0, %v4231
        %4233 = vmatprep.mubr.f32.mxu0 0.0
        %4234 = vmatmul.mubr.f32.gmra.mrb[0].mxu0 %v4064
        %v4235 = vpop.f32.mrb[0].mxu0
        %v4236 = vadd.f32 0.0, %v4235
        %v4237 = vpop.f32.mrb[0].mxu0
        %v4238 = vadd.f32 0.0, %v4237
        %4239 = vmatprep.mubr.f32.mxu0 0.0
        %4240 = vmatmul.mubr.f32.gmra.mrb[0].mxu0 %v4067
        %v4241 = vpop.f32.mrb[0].mxu0
        %v4242 = vadd.f32 0.0, %v4241
        %v4243 = vpop.f32.mrb[0].mxu0
        %v4244 = vadd.f32 0.0, %v4243
        %4245 = vmatprep.mubr.f32.mxu0 0.0
        %4246 = vmatmul.mubr.f32.gmra.mrb[0].mxu0 %v4070
        %v4247 = vpop.f32.mrb[0].mxu0
        %v4248 = vadd.f32 0.0, %v4247
        %v4249 = vpop.f32.mrb[0].mxu0
        %v4250 = vadd.f32 0.0, %v4249
        %4251 = vmatprep.mubr.f32.mxu0 0.0
        %4252 = vmatmul.mubr.f32.gmra.mrb[0].mxu0 %v4073
        %v4253 = vpop.f32.mrb[0].mxu0
        %v4254 = vadd.f32 0.0, %v4253
        %v4255 = vpop.f32.mrb[0].mxu0
        %v4256 = vadd.f32 0.0, %v4255
        %4257 = vmatprep.mubr.f32.mxu0 0.0
        %4258 = vmatmul.mubr.f32.gmra.mrb[0].mxu0 %v4076
        %v4259 = vpop.f32.mrb[0].mxu0
        %v4260 = vadd.f32 0.0, %v4259
        %v4261 = vpop.f32.mrb[0].mxu0
        %v4262 = vadd.f32 0.0, %v4261
        %4263 = vmatprep.mubr.f32.mxu0 0.0
        %4264 = vmatmul.mubr.f32.gmra.mrb[0].mxu0 %v4079
        %v4265 = vpop.f32.mrb[0].mxu0
        %v4266 = vadd.f32 0.0, %v4265
        %v4267 = vpop.f32.mrb[0].mxu0
        %v4268 = vadd.f32 0.0, %v4267
        %4269 = vmatprep.mubr.f32.mxu0 0.0
        %4270 = vmatmul.mubr.f32.gmra.mrb[0].mxu0 %v4082
        %v4271 = vpop.f32.mrb[0].mxu0
        %v4272 = vadd.f32 0.0, %v4271
        %v4273 = vpop.f32.mrb[0].mxu0
        %v4274 = vadd.f32 0.0, %v4273
        %4275 = vmatprep.mubr.f32.mxu0 0.0
        %4276 = vmatmul.mubr.f32.gmra.mrb[0].mxu0 %v4085
        %v4277 = vpop.f32.mrb[0].mxu0
        %v4278 = vadd.f32 0.0, %v4277
        %v4279 = vpop.f32.mrb[0].mxu0
        %v4280 = vadd.f32 0.0, %v4279
        %4281 = vmatprep.mubr.f32.mxu0 0.0
        %4282 = vmatmul.mubr.f32.gmra.mrb[0].mxu0 %v4088
        %v4283 = vpop.f32.mrb[0].mxu0
        %v4284 = vadd.f32 0.0, %v4283
        %v4285 = vpop.f32.mrb[0].mxu0
        %v4286 = vadd.f32 0.0, %v4285
        %4287 = vmatprep.mubr.f32.mxu0 0.0
        %4288 = vmatmul.mubr.f32.gmra.mrb[0].mxu0 %v4091
        %v4289 = vpop.f32.mrb[0].mxu0
        %v4290 = vadd.f32 0.0, %v4289
        %v4291 = vpop.f32.mrb[0].mxu0
        %v4292 = vadd.f32 0.0, %v4291
        %4293 = vmatprep.mubr.f32.mxu0 0.0
        %4294 = vmatmul.mubr.f32.gmra.mrb[0].mxu0 %v4094
        %v4295 = vpop.f32.mrb[0].mxu0
        %v4296 = vadd.f32 0.0, %v4295
        %v4297 = vpop.f32.mrb[0].mxu0
        %v4298 = vadd.f32 0.0, %v4297
        %4299 = vmatprep.mubr.f32.mxu0 0.0
        %4300 = vmatmul.mubr.f32.gmra.mrb[0].mxu0 %v4097
        %v4301 = vpop.f32.mrb[0].mxu0
        %v4302 = vadd.f32 0.0, %v4301
        %v4303 = vpop.f32.mrb[0].mxu0
        %v4304 = vadd.f32 0.0, %v4303
        %4305 = vmatprep.mubr.f32.mxu0 0.0
        %4306 = vmatmul.mubr.f32.gmra.mrb[0].mxu0 %v4100
        %v4307 = vpop.f32.mrb[0].mxu0
        %v4308 = vadd.f32 0.0, %v4307
        %v4309 = vpop.f32.mrb[0].mxu0
        %v4310 = vadd.f32 0.0, %v4309
        %4311 = vmatprep.mubr.f32.mxu0 0.0
        %4312 = vmatmul.mubr.f32.gmra.mrb[0].mxu0 %v4103
        %v4313 = vpop.f32.mrb[0].mxu0
        %v4314 = vadd.f32 0.0, %v4313
        %v4315 = vpop.f32.mrb[0].mxu0
        %v4316 = vadd.f32 0.0, %v4315
        %4317 = vmatprep.mubr.f32.mxu0 0.0
        %4318 = vmatmul.mubr.f32.gmra.mrb[0].mxu0 %v4106
        %v4319 = vpop.f32.mrb[0].mxu0
        %v4320 = vadd.f32 0.0, %v4319
        %v4321 = vpop.f32.mrb[0].mxu0
        %v4322 = vadd.f32 0.0, %v4321
        %4323 = vmatprep.mubr.f32.mxu0 0.0
        %4324 = vmatmul.mubr.f32.gmra.mrb[0].mxu0 %v4109
        %v4325 = vpop.f32.mrb[0].mxu0
        %v4326 = vadd.f32 0.0, %v4325
        %v4327 = vpop.f32.mrb[0].mxu0
        %v4328 = vadd.f32 0.0, %v4327
        %4329 = vmatprep.mubr.f32.mxu0 0.0
        %4330 = vmatmul.mubr.f32.gmra.mrb[0].mxu0 %v4112
        %v4331 = vpop.f32.mrb[0].mxu0
        %v4332 = vadd.f32 0.0, %v4331
        %v4333 = vpop.f32.mrb[0].mxu0
        %v4334 = vadd.f32 0.0, %v4333
        %4335 = vmatprep.mubr.f32.mxu0 0.0
        %4336 = vmatmul.mubr.f32.gmra.mrb[0].mxu0 %v4115
        %v4337 = vpop.f32.mrb[0].mxu0
        %v4338 = vadd.f32 0.0, %v4337
        %v4339 = vpop.f32.mrb[0].mxu0
        %v4340 = vadd.f32 0.0, %v4339
        %4341 = vmatprep.mubr.f32.mxu0 0.0
        %4342 = vmatmul.mubr.f32.gmra.mrb[0].mxu0 %v4118
        %v4343 = vpop.f32.mrb[0].mxu0
        %v4344 = vadd.f32 0.0, %v4343
        %v4345 = vpop.f32.mrb[0].mxu0
        %v4346 = vadd.f32 0.0, %v4345
        %4347 = vmatprep.mubr.f32.mxu0 0.0
        %4348 = vmatmul.mubr.f32.gmra.mrb[0].mxu0 %v4121
        %v4349 = vpop.f32.mrb[0].mxu0
        %v4350 = vadd.f32 0.0, %v4349
        %v4351 = vpop.f32.mrb[0].mxu0
        %v4352 = vadd.f32 0.0, %v4351
        %4353 = vmatprep.mubr.f32.mxu0 0.0
        %4354 = vmatmul.mubr.f32.gmra.mrb[0].mxu0 %v4124
        %v4355 = vpop.f32.mrb[0].mxu0
        %v4356 = vadd.f32 0.0, %v4355
        %v4357 = vpop.f32.mrb[0].mxu0
        %v4358 = vadd.f32 0.0, %v4357
        %4359 = vmatprep.mubr.f32.mxu0 0.0
        %4360 = vmatmul.mubr.f32.gmra.mrb[0].mxu0 %v4127
        %v4361 = vpop.f32.mrb[0].mxu0
        %v4362 = vadd.f32 0.0, %v4361
        %v4363 = vpop.f32.mrb[0].mxu0
        %v4364 = vadd.f32 0.0, %v4363
        %4365 = vmatprep.mubr.f32.mxu0 0.0
        %4366 = vmatmul.mubr.f32.gmra.mrb[0].mxu0 %v4130
        %v4367 = vpop.f32.mrb[0].mxu0
        %v4368 = vadd.f32 0.0, %v4367
        %v4369 = vpop.f32.mrb[0].mxu0
        %v4370 = vadd.f32 0.0, %v4369
        %4371 = vmatprep.mubr.f32.mxu0 0.0
        %4372 = vmatmul.mubr.f32.gmra.mrb[0].mxu0 %v4133
        %v4373 = vpop.f32.mrb[0].mxu0
        %v4374 = vadd.f32 0.0, %v4373
        %v4375 = vpop.f32.mrb[0].mxu0
        %v4376 = vadd.f32 0.0, %v4375
        %4377 = vmatprep.mubr.f32.mxu0 0.0
        %4378 = vmatmul.mubr.f32.gmra.mrb[0].mxu0 %v4136
        %v4379 = vpop.f32.mrb[0].mxu0
        %v4380 = vadd.f32 0.0, %v4379
        %v4381 = vpop.f32.mrb[0].mxu0
        %v4382 = vadd.f32 0.0, %v4381
        %4383 = vmatprep.mubr.f32.mxu0 0.0
        %4384 = vmatmul.mubr.f32.gmra.mrb[0].mxu0 %v4139
        %v4385 = vpop.f32.mrb[0].mxu0
        %v4386 = vadd.f32 0.0, %v4385
        %v4387 = vpop.f32.mrb[0].mxu0
        %v4388 = vadd.f32 0.0, %v4387
        %4389 = vmatprep.mubr.f32.mxu0 0.0
        %4390 = vmatmul.mubr.f32.gmra.mrb[0].mxu0 %v4142
        %v4391 = vpop.f32.mrb[0].mxu0
        %v4392 = vadd.f32 0.0, %v4391
        %v4393 = vpop.f32.mrb[0].mxu0
        %v4394 = vadd.f32 0.0, %v4393
        %4395 = vmatprep.mubr.f32.mxu0 0.0
        %4396 = vmatmul.mubr.f32.gmra.mrb[0].mxu0 %v4145
        %v4397 = vpop.f32.mrb[0].mxu0
        %v4398 = vadd.f32 0.0, %v4397
        %v4399 = vpop.f32.mrb[0].mxu0
        %v4400 = vadd.f32 0.0, %v4399
        %4401 = vmatprep.mubr.f32.mxu0 0.0
        %4402 = vmatmul.mubr.f32.gmra.mrb[0].mxu0 %v4148
        %v4403 = vpop.f32.mrb[0].mxu0
        %v4404 = vadd.f32 0.0, %v4403
        %v4405 = vpop.f32.mrb[0].mxu0
        %v4406 = vadd.f32 0.0, %v4405
        %4407 = vmatprep.mubr.f32.mxu0 0.0
        %4408 = vmatmul.mubr.f32.gmra.mrb[0].mxu0 %v4151
        %v4409 = vpop.f32.mrb[0].mxu0
        %v4410 = vadd.f32 0.0, %v4409
        %v4411 = vpop.f32.mrb[0].mxu0
        %v4412 = vadd.f32 0.0, %v4411
        %4413 = vdwg.mxu0
        %v4414 = vmax.f32 %v1669, %v1671
        %4415 = vmax.xlane.f32.xlu0 %v4414
        %v4416 = vpop.xlane.xlu0 %4415
        %v4417 = vmax.f32 %v1675, %v1677
        %4418 = vmax.xlane.f32.xlu0 %v4417
        %v4419 = vpop.xlane.xlu0 %4418
        %v4420 = vmax.f32 %v1681, %v1683
        %4421 = vmax.xlane.f32.xlu0 %v4420
        %v4422 = vpop.xlane.xlu0 %4421
        %v4423 = vmax.f32 %v1687, %v1689
        %4424 = vmax.xlane.f32.xlu0 %v4423
        %v4425 = vpop.xlane.xlu0 %4424
        %v4426 = vmax.f32 %v1693, %v1695
        %4427 = vmax.xlane.f32.xlu0 %v4426
        %v4428 = vpop.xlane.xlu0 %4427
        %v4429 = vmax.f32 %v1699, %v1701
        %4430 = vmax.xlane.f32.xlu0 %v4429
        %v4431 = vpop.xlane.xlu0 %4430
        %v4432 = vmax.f32 %v1705, %v1707
        %4433 = vmax.xlane.f32.xlu0 %v4432
        %v4434 = vpop.xlane.xlu0 %4433
        %v4435 = vmax.f32 %v1711, %v1713
        %4436 = vmax.xlane.f32.xlu0 %v4435
        %v4437 = vpop.xlane.xlu0 %4436
        %v4438 = vmax.f32 %v1717, %v1719
        %4439 = vmax.xlane.f32.xlu0 %v4438
        %v4440 = vpop.xlane.xlu0 %4439
        %v4441 = vmax.f32 %v1723, %v1725
        %4442 = vmax.xlane.f32.xlu0 %v4441
        %v4443 = vpop.xlane.xlu0 %4442
        %v4444 = vmax.f32 %v1729, %v1731
        %4445 = vmax.xlane.f32.xlu0 %v4444
        %v4446 = vpop.xlane.xlu0 %4445
        %v4447 = vmax.f32 %v1735, %v1737
        %4448 = vmax.xlane.f32.xlu0 %v4447
        %v4449 = vpop.xlane.xlu0 %4448
        %v4450 = vmax.f32 %v1741, %v1743
        %4451 = vmax.xlane.f32.xlu0 %v4450
        %v4452 = vpop.xlane.xlu0 %4451
        %v4453 = vmax.f32 %v1747, %v1749
        %4454 = vmax.xlane.f32.xlu0 %v4453
        %v4455 = vpop.xlane.xlu0 %4454
        %v4456 = vmax.f32 %v1753, %v1755
        %4457 = vmax.xlane.f32.xlu0 %v4456
        %v4458 = vpop.xlane.xlu0 %4457
        %v4459 = vmax.f32 %v1759, %v1761
        %4460 = vmax.xlane.f32.xlu0 %v4459
        %v4461 = vpop.xlane.xlu0 %4460
        %v4462 = vmax.f32 %v1765, %v1767
        %4463 = vmax.xlane.f32.xlu0 %v4462
        %v4464 = vpop.xlane.xlu0 %4463
        %v4465 = vmax.f32 %v1771, %v1773
        %4466 = vmax.xlane.f32.xlu0 %v4465
        %v4467 = vpop.xlane.xlu0 %4466
        %v4468 = vmax.f32 %v1777, %v1779
        %4469 = vmax.xlane.f32.xlu0 %v4468
        %v4470 = vpop.xlane.xlu0 %4469
        %v4471 = vmax.f32 %v1783, %v1785
        %4472 = vmax.xlane.f32.xlu0 %v4471
        %v4473 = vpop.xlane.xlu0 %4472
        %v4474 = vmax.f32 %v1789, %v1791
        %4475 = vmax.xlane.f32.xlu0 %v4474
        %v4476 = vpop.xlane.xlu0 %4475
        %v4477 = vmax.f32 %v1795, %v1797
        %4478 = vmax.xlane.f32.xlu0 %v4477
        %v4479 = vpop.xlane.xlu0 %4478
        %v4480 = vmax.f32 %v1801, %v1803
        %4481 = vmax.xlane.f32.xlu0 %v4480
        %v4482 = vpop.xlane.xlu0 %4481
        %v4483 = vmax.f32 %v1807, %v1809
        %4484 = vmax.xlane.f32.xlu0 %v4483
        %v4485 = vpop.xlane.xlu0 %4484
        %v4486 = vmax.f32 %v1813, %v1815
        %4487 = vmax.xlane.f32.xlu0 %v4486
        %v4488 = vpop.xlane.xlu0 %4487
        %v4489 = vmax.f32 %v1819, %v1821
        %4490 = vmax.xlane.f32.xlu0 %v4489
        %v4491 = vpop.xlane.xlu0 %4490
        %v4492 = vmax.f32 %v1825, %v1827
        %4493 = vmax.xlane.f32.xlu0 %v4492
        %v4494 = vpop.xlane.xlu0 %4493
        %v4495 = vmax.f32 %v1831, %v1833
        %4496 = vmax.xlane.f32.xlu0 %v4495
        %v4497 = vpop.xlane.xlu0 %4496
        %v4498 = vmax.f32 %v1837, %v1839
        %4499 = vmax.xlane.f32.xlu0 %v4498
        %v4500 = vpop.xlane.xlu0 %4499
        %v4501 = vmax.f32 %v1843, %v1845
        %4502 = vmax.xlane.f32.xlu0 %v4501
        %v4503 = vpop.xlane.xlu0 %4502
        %v4504 = vmax.f32 %v1849, %v1851
        %4505 = vmax.xlane.f32.xlu0 %v4504
        %v4506 = vpop.xlane.xlu0 %4505
        %v4507 = vmax.f32 %v1855, %v1857
        %4508 = vmax.xlane.f32.xlu0 %v4507
        %v4509 = vpop.xlane.xlu0 %4508
        %v4510 = vmax.f32 %v2034, %v2036
        %4511 = vmax.xlane.f32.xlu0 %v4510
        %v4512 = vpop.xlane.xlu0 %4511
        %v4513 = vmax.f32 %v2040, %v2042
        %4514 = vmax.xlane.f32.xlu0 %v4513
        %v4515 = vpop.xlane.xlu0 %4514
        %v4516 = vmax.f32 %v2046, %v2048
        %4517 = vmax.xlane.f32.xlu0 %v4516
        %v4518 = vpop.xlane.xlu0 %4517
        %v4519 = vmax.f32 %v2052, %v2054
        %4520 = vmax.xlane.f32.xlu0 %v4519
        %v4521 = vpop.xlane.xlu0 %4520
        %v4522 = vmax.f32 %v2058, %v2060
        %4523 = vmax.xlane.f32.xlu0 %v4522
        %v4524 = vpop.xlane.xlu0 %4523
        %v4525 = vmax.f32 %v2064, %v2066
        %4526 = vmax.xlane.f32.xlu0 %v4525
        %v4527 = vpop.xlane.xlu0 %4526
        %v4528 = vmax.f32 %v2070, %v2072
        %4529 = vmax.xlane.f32.xlu0 %v4528
        %v4530 = vpop.xlane.xlu0 %4529
        %v4531 = vmax.f32 %v2076, %v2078
        %4532 = vmax.xlane.f32.xlu0 %v4531
        %v4533 = vpop.xlane.xlu0 %4532
        %v4534 = vmax.f32 %v2082, %v2084
        %4535 = vmax.xlane.f32.xlu0 %v4534
        %v4536 = vpop.xlane.xlu0 %4535
        %v4537 = vmax.f32 %v2088, %v2090
        %4538 = vmax.xlane.f32.xlu0 %v4537
        %v4539 = vpop.xlane.xlu0 %4538
        %v4540 = vmax.f32 %v2094, %v2096
        %4541 = vmax.xlane.f32.xlu0 %v4540
        %v4542 = vpop.xlane.xlu0 %4541
        %v4543 = vmax.f32 %v2100, %v2102
        %4544 = vmax.xlane.f32.xlu0 %v4543
        %v4545 = vpop.xlane.xlu0 %4544
        %v4546 = vmax.f32 %v2106, %v2108
        %4547 = vmax.xlane.f32.xlu0 %v4546
        %v4548 = vpop.xlane.xlu0 %4547
        %v4549 = vmax.f32 %v2112, %v2114
        %4550 = vmax.xlane.f32.xlu0 %v4549
        %v4551 = vpop.xlane.xlu0 %4550
        %v4552 = vmax.f32 %v2118, %v2120
        %4553 = vmax.xlane.f32.xlu0 %v4552
        %v4554 = vpop.xlane.xlu0 %4553
        %v4555 = vmax.f32 %v2124, %v2126
        %4556 = vmax.xlane.f32.xlu0 %v4555
        %v4557 = vpop.xlane.xlu0 %4556
        %v4558 = vmax.f32 %v2130, %v2132
        %4559 = vmax.xlane.f32.xlu0 %v4558
        %v4560 = vpop.xlane.xlu0 %4559
        %v4561 = vmax.f32 %v2136, %v2138
        %4562 = vmax.xlane.f32.xlu0 %v4561
        %v4563 = vpop.xlane.xlu0 %4562
        %v4564 = vmax.f32 %v2142, %v2144
        %4565 = vmax.xlane.f32.xlu0 %v4564
        %v4566 = vpop.xlane.xlu0 %4565
        %v4567 = vmax.f32 %v2148, %v2150
        %4568 = vmax.xlane.f32.xlu0 %v4567
        %v4569 = vpop.xlane.xlu0 %4568
        %v4570 = vmax.f32 %v2154, %v2156
        %4571 = vmax.xlane.f32.xlu0 %v4570
        %v4572 = vpop.xlane.xlu0 %4571
        %v4573 = vmax.f32 %v2160, %v2162
        %4574 = vmax.xlane.f32.xlu0 %v4573
        %v4575 = vpop.xlane.xlu0 %4574
        %v4576 = vmax.f32 %v2166, %v2168
        %4577 = vmax.xlane.f32.xlu0 %v4576
        %v4578 = vpop.xlane.xlu0 %4577
        %v4579 = vmax.f32 %v2172, %v2174
        %4580 = vmax.xlane.f32.xlu0 %v4579
        %v4581 = vpop.xlane.xlu0 %4580
        %v4582 = vmax.f32 %v2178, %v2180
        %4583 = vmax.xlane.f32.xlu0 %v4582
        %v4584 = vpop.xlane.xlu0 %4583
        %v4585 = vmax.f32 %v2184, %v2186
        %4586 = vmax.xlane.f32.xlu0 %v4585
        %v4587 = vpop.xlane.xlu0 %4586
        %v4588 = vmax.f32 %v2190, %v2192
        %4589 = vmax.xlane.f32.xlu0 %v4588
        %v4590 = vpop.xlane.xlu0 %4589
        %v4591 = vmax.f32 %v2196, %v2198
        %4592 = vmax.xlane.f32.xlu0 %v4591
        %v4593 = vpop.xlane.xlu0 %4592
        %v4594 = vmax.f32 %v2202, %v2204
        %4595 = vmax.xlane.f32.xlu0 %v4594
        %v4596 = vpop.xlane.xlu0 %4595
        %v4597 = vmax.f32 %v2208, %v2210
        %4598 = vmax.xlane.f32.xlu0 %v4597
        %v4599 = vpop.xlane.xlu0 %4598
        %v4600 = vmax.f32 %v2214, %v2216
        %4601 = vmax.xlane.f32.xlu0 %v4600
        %v4602 = vpop.xlane.xlu0 %4601
        %v4603 = vmax.f32 %v2220, %v2222
        %4604 = vmax.xlane.f32.xlu0 %v4603
        %v4605 = vpop.xlane.xlu0 %4604
        %v4606 = vmax.f32 %v2399, %v2401
        %4607 = vmax.xlane.f32.xlu0 %v4606
        %v4608 = vpop.xlane.xlu0 %4607
        %v4609 = vmax.f32 %v2405, %v2407
        %4610 = vmax.xlane.f32.xlu0 %v4609
        %v4611 = vpop.xlane.xlu0 %4610
        %v4612 = vmax.f32 %v2411, %v2413
        %4613 = vmax.xlane.f32.xlu0 %v4612
        %v4614 = vpop.xlane.xlu0 %4613
        %v4615 = vmax.f32 %v2417, %v2419
        %4616 = vmax.xlane.f32.xlu0 %v4615
        %v4617 = vpop.xlane.xlu0 %4616
        %v4618 = vmax.f32 %v2423, %v2425
        %4619 = vmax.xlane.f32.xlu0 %v4618
        %v4620 = vpop.xlane.xlu0 %4619
        %v4621 = vmax.f32 %v2429, %v2431
        %4622 = vmax.xlane.f32.xlu0 %v4621
        %v4623 = vpop.xlane.xlu0 %4622
        %v4624 = vmax.f32 %v2435, %v2437
        %4625 = vmax.xlane.f32.xlu0 %v4624
        %v4626 = vpop.xlane.xlu0 %4625
        %v4627 = vmax.f32 %v2441, %v2443
        %4628 = vmax.xlane.f32.xlu0 %v4627
        %v4629 = vpop.xlane.xlu0 %4628
        %v4630 = vmax.f32 %v2447, %v2449
        %4631 = vmax.xlane.f32.xlu0 %v4630
        %v4632 = vpop.xlane.xlu0 %4631
        %v4633 = vmax.f32 %v2453, %v2455
        %4634 = vmax.xlane.f32.xlu0 %v4633
        %v4635 = vpop.xlane.xlu0 %4634
        %v4636 = vmax.f32 %v2459, %v2461
        %4637 = vmax.xlane.f32.xlu0 %v4636
        %v4638 = vpop.xlane.xlu0 %4637
        %v4639 = vmax.f32 %v2465, %v2467
        %4640 = vmax.xlane.f32.xlu0 %v4639
        %v4641 = vpop.xlane.xlu0 %4640
        %v4642 = vmax.f32 %v2471, %v2473
        %4643 = vmax.xlane.f32.xlu0 %v4642
        %v4644 = vpop.xlane.xlu0 %4643
        %v4645 = vmax.f32 %v2477, %v2479
        %4646 = vmax.xlane.f32.xlu0 %v4645
        %v4647 = vpop.xlane.xlu0 %4646
        %v4648 = vmax.f32 %v2483, %v2485
        %4649 = vmax.xlane.f32.xlu0 %v4648
        %v4650 = vpop.xlane.xlu0 %4649
        %v4651 = vmax.f32 %v2489, %v2491
        %4652 = vmax.xlane.f32.xlu0 %v4651
        %v4653 = vpop.xlane.xlu0 %4652
        %v4654 = vmax.f32 %v2495, %v2497
        %4655 = vmax.xlane.f32.xlu0 %v4654
        %v4656 = vpop.xlane.xlu0 %4655
        %v4657 = vmax.f32 %v2501, %v2503
        %4658 = vmax.xlane.f32.xlu0 %v4657
        %v4659 = vpop.xlane.xlu0 %4658
        %v4660 = vmax.f32 %v2507, %v2509
        %4661 = vmax.xlane.f32.xlu0 %v4660
        %v4662 = vpop.xlane.xlu0 %4661
        %v4663 = vmax.f32 %v2513, %v2515
        %4664 = vmax.xlane.f32.xlu0 %v4663
        %v4665 = vpop.xlane.xlu0 %4664
        %v4666 = vmax.f32 %v2519, %v2521
        %4667 = vmax.xlane.f32.xlu0 %v4666
        %v4668 = vpop.xlane.xlu0 %4667
        %v4669 = vmax.f32 %v2525, %v2527
        %4670 = vmax.xlane.f32.xlu0 %v4669
        %v4671 = vpop.xlane.xlu0 %4670
        %v4672 = vmax.f32 %v2531, %v2533
        %4673 = vmax.xlane.f32.xlu0 %v4672
        %v4674 = vpop.xlane.xlu0 %4673
        %v4675 = vmax.f32 %v2537, %v2539
        %4676 = vmax.xlane.f32.xlu0 %v4675
        %v4677 = vpop.xlane.xlu0 %4676
        %v4678 = vmax.f32 %v2543, %v2545
        %4679 = vmax.xlane.f32.xlu0 %v4678
        %v4680 = vpop.xlane.xlu0 %4679
        %v4681 = vmax.f32 %v2549, %v2551
        %4682 = vmax.xlane.f32.xlu0 %v4681
        %v4683 = vpop.xlane.xlu0 %4682
        %v4684 = vmax.f32 %v2555, %v2557
        %4685 = vmax.xlane.f32.xlu0 %v4684
        %v4686 = vpop.xlane.xlu0 %4685
        %v4687 = vmax.f32 %v2561, %v2563
        %4688 = vmax.xlane.f32.xlu0 %v4687
        %v4689 = vpop.xlane.xlu0 %4688
        %v4690 = vmax.f32 %v2567, %v2569
        %4691 = vmax.xlane.f32.xlu0 %v4690
        %v4692 = vpop.xlane.xlu0 %4691
        %v4693 = vmax.f32 %v2573, %v2575
        %4694 = vmax.xlane.f32.xlu0 %v4693
        %v4695 = vpop.xlane.xlu0 %4694
        %v4696 = vmax.f32 %v2579, %v2581
        %4697 = vmax.xlane.f32.xlu0 %v4696
        %v4698 = vpop.xlane.xlu0 %4697
        %v4699 = vmax.f32 %v2585, %v2587
        %4700 = vmax.xlane.f32.xlu0 %v4699
        %v4701 = vpop.xlane.xlu0 %4700
        %v4702 = vmax.f32 %v2764, %v2766
        %4703 = vmax.xlane.f32.xlu0 %v4702
        %v4704 = vpop.xlane.xlu0 %4703
        %v4705 = vmax.f32 %v2770, %v2772
        %4706 = vmax.xlane.f32.xlu0 %v4705
        %v4707 = vpop.xlane.xlu0 %4706
        %v4708 = vmax.f32 %v2776, %v2778
        %4709 = vmax.xlane.f32.xlu0 %v4708
        %v4710 = vpop.xlane.xlu0 %4709
        %v4711 = vmax.f32 %v2782, %v2784
        %4712 = vmax.xlane.f32.xlu0 %v4711
        %v4713 = vpop.xlane.xlu0 %4712
        %v4714 = vmax.f32 %v2788, %v2790
        %4715 = vmax.xlane.f32.xlu0 %v4714
        %v4716 = vpop.xlane.xlu0 %4715
        %v4717 = vmax.f32 %v2794, %v2796
        %4718 = vmax.xlane.f32.xlu0 %v4717
        %v4719 = vpop.xlane.xlu0 %4718
        %v4720 = vmax.f32 %v2800, %v2802
        %4721 = vmax.xlane.f32.xlu0 %v4720
        %v4722 = vpop.xlane.xlu0 %4721
        %v4723 = vmax.f32 %v2806, %v2808
        %4724 = vmax.xlane.f32.xlu0 %v4723
        %v4725 = vpop.xlane.xlu0 %4724
        %v4726 = vmax.f32 %v2812, %v2814
        %4727 = vmax.xlane.f32.xlu0 %v4726
        %v4728 = vpop.xlane.xlu0 %4727
        %v4729 = vmax.f32 %v2818, %v2820
        %4730 = vmax.xlane.f32.xlu0 %v4729
        %v4731 = vpop.xlane.xlu0 %4730
        %v4732 = vmax.f32 %v2824, %v2826
        %4733 = vmax.xlane.f32.xlu0 %v4732
        %v4734 = vpop.xlane.xlu0 %4733
        %v4735 = vmax.f32 %v2830, %v2832
        %4736 = vmax.xlane.f32.xlu0 %v4735
        %v4737 = vpop.xlane.xlu0 %4736
        %v4738 = vmax.f32 %v2836, %v2838
        %4739 = vmax.xlane.f32.xlu0 %v4738
        %v4740 = vpop.xlane.xlu0 %4739
        %v4741 = vmax.f32 %v2842, %v2844
        %4742 = vmax.xlane.f32.xlu0 %v4741
        %v4743 = vpop.xlane.xlu0 %4742
        %v4744 = vmax.f32 %v2848, %v2850
        %4745 = vmax.xlane.f32.xlu0 %v4744
        %v4746 = vpop.xlane.xlu0 %4745
        %v4747 = vmax.f32 %v2854, %v2856
        %4748 = vmax.xlane.f32.xlu0 %v4747
        %v4749 = vpop.xlane.xlu0 %4748
        %v4750 = vmax.f32 %v2860, %v2862
        %4751 = vmax.xlane.f32.xlu0 %v4750
        %v4752 = vpop.xlane.xlu0 %4751
        %v4753 = vmax.f32 %v2866, %v2868
        %4754 = vmax.xlane.f32.xlu0 %v4753
        %v4755 = vpop.xlane.xlu0 %4754
        %v4756 = vmax.f32 %v2872, %v2874
        %4757 = vmax.xlane.f32.xlu0 %v4756
        %v4758 = vpop.xlane.xlu0 %4757
        %v4759 = vmax.f32 %v2878, %v2880
        %4760 = vmax.xlane.f32.xlu0 %v4759
        %v4761 = vpop.xlane.xlu0 %4760
        %v4762 = vmax.f32 %v2884, %v2886
        %4763 = vmax.xlane.f32.xlu0 %v4762
        %v4764 = vpop.xlane.xlu0 %4763
        %v4765 = vmax.f32 %v2890, %v2892
        %4766 = vmax.xlane.f32.xlu0 %v4765
        %v4767 = vpop.xlane.xlu0 %4766
        %v4768 = vmax.f32 %v2896, %v2898
        %4769 = vmax.xlane.f32.xlu0 %v4768
        %v4770 = vpop.xlane.xlu0 %4769
        %v4771 = vmax.f32 %v2902, %v2904
        %4772 = vmax.xlane.f32.xlu0 %v4771
        %v4773 = vpop.xlane.xlu0 %4772
        %v4774 = vmax.f32 %v2908, %v2910
        %4775 = vmax.xlane.f32.xlu0 %v4774
        %v4776 = vpop.xlane.xlu0 %4775
        %v4777 = vmax.f32 %v2914, %v2916
        %4778 = vmax.xlane.f32.xlu0 %v4777
        %v4779 = vpop.xlane.xlu0 %4778
        %v4780 = vmax.f32 %v2920, %v2922
        %4781 = vmax.xlane.f32.xlu0 %v4780
        %v4782 = vpop.xlane.xlu0 %4781
        %v4783 = vmax.f32 %v2926, %v2928
        %4784 = vmax.xlane.f32.xlu0 %v4783
        %v4785 = vpop.xlane.xlu0 %4784
        %v4786 = vmax.f32 %v2932, %v2934
        %4787 = vmax.xlane.f32.xlu0 %v4786
        %v4788 = vpop.xlane.xlu0 %4787
        %v4789 = vmax.f32 %v2938, %v2940
        %4790 = vmax.xlane.f32.xlu0 %v4789
        %v4791 = vpop.xlane.xlu0 %4790
        %v4792 = vmax.f32 %v2944, %v2946
        %4793 = vmax.xlane.f32.xlu0 %v4792
        %v4794 = vpop.xlane.xlu0 %4793
        %v4795 = vmax.f32 %v2950, %v2952
        %4796 = vmax.xlane.f32.xlu0 %v4795
        %v4797 = vpop.xlane.xlu0 %4796
        %v4798 = vmax.f32 %v3129, %v3131
        %4799 = vmax.xlane.f32.xlu0 %v4798
        %v4800 = vpop.xlane.xlu0 %4799
        %v4801 = vmax.f32 %v3135, %v3137
        %4802 = vmax.xlane.f32.xlu0 %v4801
        %v4803 = vpop.xlane.xlu0 %4802
        %v4804 = vmax.f32 %v3141, %v3143
        %4805 = vmax.xlane.f32.xlu0 %v4804
        %v4806 = vpop.xlane.xlu0 %4805
        %v4807 = vmax.f32 %v3147, %v3149
        %4808 = vmax.xlane.f32.xlu0 %v4807
        %v4809 = vpop.xlane.xlu0 %4808
        %v4810 = vmax.f32 %v3153, %v3155
        %4811 = vmax.xlane.f32.xlu0 %v4810
        %v4812 = vpop.xlane.xlu0 %4811
        %v4813 = vmax.f32 %v3159, %v3161
        %4814 = vmax.xlane.f32.xlu0 %v4813
        %v4815 = vpop.xlane.xlu0 %4814
        %v4816 = vmax.f32 %v3165, %v3167
        %4817 = vmax.xlane.f32.xlu0 %v4816
        %v4818 = vpop.xlane.xlu0 %4817
        %v4819 = vmax.f32 %v3171, %v3173
        %4820 = vmax.xlane.f32.xlu0 %v4819
        %v4821 = vpop.xlane.xlu0 %4820
        %v4822 = vmax.f32 %v3177, %v3179
        %4823 = vmax.xlane.f32.xlu0 %v4822
        %v4824 = vpop.xlane.xlu0 %4823
        %v4825 = vmax.f32 %v3183, %v3185
        %4826 = vmax.xlane.f32.xlu0 %v4825
        %v4827 = vpop.xlane.xlu0 %4826
        %v4828 = vmax.f32 %v3189, %v3191
        %4829 = vmax.xlane.f32.xlu0 %v4828
        %v4830 = vpop.xlane.xlu0 %4829
        %v4831 = vmax.f32 %v3195, %v3197
        %4832 = vmax.xlane.f32.xlu0 %v4831
        %v4833 = vpop.xlane.xlu0 %4832
        %v4834 = vmax.f32 %v3201, %v3203
        %4835 = vmax.xlane.f32.xlu0 %v4834
        %v4836 = vpop.xlane.xlu0 %4835
        %v4837 = vmax.f32 %v3207, %v3209
        %4838 = vmax.xlane.f32.xlu0 %v4837
        %v4839 = vpop.xlane.xlu0 %4838
        %v4840 = vmax.f32 %v3213, %v3215
        %4841 = vmax.xlane.f32.xlu0 %v4840
        %v4842 = vpop.xlane.xlu0 %4841
        %v4843 = vmax.f32 %v3219, %v3221
        %4844 = vmax.xlane.f32.xlu0 %v4843
        %v4845 = vpop.xlane.xlu0 %4844
        %v4846 = vmax.f32 %v3225, %v3227
        %4847 = vmax.xlane.f32.xlu0 %v4846
        %v4848 = vpop.xlane.xlu0 %4847
        %v4849 = vmax.f32 %v3231, %v3233
        %4850 = vmax.xlane.f32.xlu0 %v4849
        %v4851 = vpop.xlane.xlu0 %4850
        %v4852 = vmax.f32 %v3237, %v3239
        %4853 = vmax.xlane.f32.xlu0 %v4852
        %v4854 = vpop.xlane.xlu0 %4853
        %v4855 = vmax.f32 %v3243, %v3245
        %4856 = vmax.xlane.f32.xlu0 %v4855
        %v4857 = vpop.xlane.xlu0 %4856
        %v4858 = vmax.f32 %v3249, %v3251
        %4859 = vmax.xlane.f32.xlu0 %v4858
        %v4860 = vpop.xlane.xlu0 %4859
        %v4861 = vmax.f32 %v3255, %v3257
        %4862 = vmax.xlane.f32.xlu0 %v4861
        %v4863 = vpop.xlane.xlu0 %4862
        %v4864 = vmax.f32 %v3261, %v3263
        %4865 = vmax.xlane.f32.xlu0 %v4864
        %v4866 = vpop.xlane.xlu0 %4865
        %v4867 = vmax.f32 %v3267, %v3269
        %4868 = vmax.xlane.f32.xlu0 %v4867
        %v4869 = vpop.xlane.xlu0 %4868
        %v4870 = vmax.f32 %v3273, %v3275
        %4871 = vmax.xlane.f32.xlu0 %v4870
        %v4872 = vpop.xlane.xlu0 %4871
        %v4873 = vmax.f32 %v3279, %v3281
        %4874 = vmax.xlane.f32.xlu0 %v4873
        %v4875 = vpop.xlane.xlu0 %4874
        %v4876 = vmax.f32 %v3285, %v3287
        %4877 = vmax.xlane.f32.xlu0 %v4876
        %v4878 = vpop.xlane.xlu0 %4877
        %v4879 = vmax.f32 %v3291, %v3293
        %4880 = vmax.xlane.f32.xlu0 %v4879
        %v4881 = vpop.xlane.xlu0 %4880
        %v4882 = vmax.f32 %v3297, %v3299
        %4883 = vmax.xlane.f32.xlu0 %v4882
        %v4884 = vpop.xlane.xlu0 %4883
        %v4885 = vmax.f32 %v3303, %v3305
        %4886 = vmax.xlane.f32.xlu0 %v4885
        %v4887 = vpop.xlane.xlu0 %4886
        %v4888 = vmax.f32 %v3309, %v3311
        %4889 = vmax.xlane.f32.xlu0 %v4888
        %v4890 = vpop.xlane.xlu0 %4889
        %v4891 = vmax.f32 %v3315, %v3317
        %4892 = vmax.xlane.f32.xlu0 %v4891
        %v4893 = vpop.xlane.xlu0 %4892
        %v4894 = vmax.f32 %v3494, %v3496
        %4895 = vmax.xlane.f32.xlu0 %v4894
        %v4896 = vpop.xlane.xlu0 %4895
        %v4897 = vmax.f32 %v3500, %v3502
        %4898 = vmax.xlane.f32.xlu0 %v4897
        %v4899 = vpop.xlane.xlu0 %4898
        %v4900 = vmax.f32 %v3506, %v3508
        %4901 = vmax.xlane.f32.xlu0 %v4900
        %v4902 = vpop.xlane.xlu0 %4901
        %v4903 = vmax.f32 %v3512, %v3514
        %4904 = vmax.xlane.f32.xlu0 %v4903
        %v4905 = vpop.xlane.xlu0 %4904
        %v4906 = vmax.f32 %v3518, %v3520
        %4907 = vmax.xlane.f32.xlu0 %v4906
        %v4908 = vpop.xlane.xlu0 %4907
        %v4909 = vmax.f32 %v3524, %v3526
        %4910 = vmax.xlane.f32.xlu0 %v4909
        %v4911 = vpop.xlane.xlu0 %4910
        %v4912 = vmax.f32 %v3530, %v3532
        %4913 = vmax.xlane.f32.xlu0 %v4912
        %v4914 = vpop.xlane.xlu0 %4913
        %v4915 = vmax.f32 %v3536, %v3538
        %4916 = vmax.xlane.f32.xlu0 %v4915
        %v4917 = vpop.xlane.xlu0 %4916
        %v4918 = vmax.f32 %v3542, %v3544
        %4919 = vmax.xlane.f32.xlu0 %v4918
        %v4920 = vpop.xlane.xlu0 %4919
        %v4921 = vmax.f32 %v3548, %v3550
        %4922 = vmax.xlane.f32.xlu0 %v4921
        %v4923 = vpop.xlane.xlu0 %4922
        %v4924 = vmax.f32 %v3554, %v3556
        %4925 = vmax.xlane.f32.xlu0 %v4924
        %v4926 = vpop.xlane.xlu0 %4925
        %v4927 = vmax.f32 %v3560, %v3562
        %4928 = vmax.xlane.f32.xlu0 %v4927
        %v4929 = vpop.xlane.xlu0 %4928
        %v4930 = vmax.f32 %v3566, %v3568
        %4931 = vmax.xlane.f32.xlu0 %v4930
        %v4932 = vpop.xlane.xlu0 %4931
        %v4933 = vmax.f32 %v3572, %v3574
        %4934 = vmax.xlane.f32.xlu0 %v4933
        %v4935 = vpop.xlane.xlu0 %4934
        %v4936 = vmax.f32 %v3578, %v3580
        %4937 = vmax.xlane.f32.xlu0 %v4936
        %v4938 = vpop.xlane.xlu0 %4937
        %v4939 = vmax.f32 %v3584, %v3586
        %4940 = vmax.xlane.f32.xlu0 %v4939
        %v4941 = vpop.xlane.xlu0 %4940
        %v4942 = vmax.f32 %v3590, %v3592
        %4943 = vmax.xlane.f32.xlu0 %v4942
        %v4944 = vpop.xlane.xlu0 %4943
        %v4945 = vmax.f32 %v3596, %v3598
        %4946 = vmax.xlane.f32.xlu0 %v4945
        %v4947 = vpop.xlane.xlu0 %4946
        %v4948 = vmax.f32 %v3602, %v3604
        %4949 = vmax.xlane.f32.xlu0 %v4948
        %v4950 = vpop.xlane.xlu0 %4949
        %v4951 = vmax.f32 %v3608, %v3610
        %4952 = vmax.xlane.f32.xlu0 %v4951
        %v4953 = vpop.xlane.xlu0 %4952
        %v4954 = vmax.f32 %v3614, %v3616
        %4955 = vmax.xlane.f32.xlu0 %v4954
        %v4956 = vpop.xlane.xlu0 %4955
        %v4957 = vmax.f32 %v3620, %v3622
        %4958 = vmax.xlane.f32.xlu0 %v4957
        %v4959 = vpop.xlane.xlu0 %4958
        %v4960 = vmax.f32 %v3626, %v3628
        %4961 = vmax.xlane.f32.xlu0 %v4960
        %v4962 = vpop.xlane.xlu0 %4961
        %v4963 = vmax.f32 %v3632, %v3634
        %4964 = vmax.xlane.f32.xlu0 %v4963
        %v4965 = vpop.xlane.xlu0 %4964
        %v4966 = vmax.f32 %v3638, %v3640
        %4967 = vmax.xlane.f32.xlu0 %v4966
        %v4968 = vpop.xlane.xlu0 %4967
        %v4969 = vmax.f32 %v3644, %v3646
        %4970 = vmax.xlane.f32.xlu0 %v4969
        %v4971 = vpop.xlane.xlu0 %4970
        %v4972 = vmax.f32 %v3650, %v3652
        %4973 = vmax.xlane.f32.xlu0 %v4972
        %v4974 = vpop.xlane.xlu0 %4973
        %v4975 = vmax.f32 %v3656, %v3658
        %4976 = vmax.xlane.f32.xlu0 %v4975
        %v4977 = vpop.xlane.xlu0 %4976
        %v4978 = vmax.f32 %v3662, %v3664
        %4979 = vmax.xlane.f32.xlu0 %v4978
        %v4980 = vpop.xlane.xlu0 %4979
        %v4981 = vmax.f32 %v3668, %v3670
        %4982 = vmax.xlane.f32.xlu0 %v4981
        %v4983 = vpop.xlane.xlu0 %4982
        %v4984 = vmax.f32 %v3674, %v3676
        %4985 = vmax.xlane.f32.xlu0 %v4984
        %v4986 = vpop.xlane.xlu0 %4985
        %v4987 = vmax.f32 %v3680, %v3682
        %4988 = vmax.xlane.f32.xlu0 %v4987
        %v4989 = vpop.xlane.xlu0 %4988
        %v4990 = vmax.f32 %v3859, %v3861
        %4991 = vmax.xlane.f32.xlu0 %v4990
        %v4992 = vpop.xlane.xlu0 %4991
        %v4993 = vmax.f32 %v3865, %v3867
        %4994 = vmax.xlane.f32.xlu0 %v4993
        %v4995 = vpop.xlane.xlu0 %4994
        %v4996 = vmax.f32 %v3871, %v3873
        %4997 = vmax.xlane.f32.xlu0 %v4996
        %v4998 = vpop.xlane.xlu0 %4997
        %v4999 = vmax.f32 %v3877, %v3879
        %5000 = vmax.xlane.f32.xlu0 %v4999
        %v5001 = vpop.xlane.xlu0 %5000
        %v5002 = vmax.f32 %v3883, %v3885
        %5003 = vmax.xlane.f32.xlu0 %v5002
        %v5004 = vpop.xlane.xlu0 %5003
        %v5005 = vmax.f32 %v3889, %v3891
        %5006 = vmax.xlane.f32.xlu0 %v5005
        %v5007 = vpop.xlane.xlu0 %5006
        %v5008 = vmax.f32 %v3895, %v3897
        %5009 = vmax.xlane.f32.xlu0 %v5008
        %v5010 = vpop.xlane.xlu0 %5009
        %v5011 = vmax.f32 %v3901, %v3903
        %5012 = vmax.xlane.f32.xlu0 %v5011
        %v5013 = vpop.xlane.xlu0 %5012
        %v5014 = vmax.f32 %v3907, %v3909
        %5015 = vmax.xlane.f32.xlu0 %v5014
        %v5016 = vpop.xlane.xlu0 %5015
        %v5017 = vmax.f32 %v3913, %v3915
        %5018 = vmax.xlane.f32.xlu0 %v5017
        %v5019 = vpop.xlane.xlu0 %5018
        %v5020 = vmax.f32 %v3919, %v3921
        %5021 = vmax.xlane.f32.xlu0 %v5020
        %v5022 = vpop.xlane.xlu0 %5021
        %v5023 = vmax.f32 %v3925, %v3927
        %5024 = vmax.xlane.f32.xlu0 %v5023
        %v5025 = vpop.xlane.xlu0 %5024
        %v5026 = vmax.f32 %v3931, %v3933
        %5027 = vmax.xlane.f32.xlu0 %v5026
        %v5028 = vpop.xlane.xlu0 %5027
        %v5029 = vmax.f32 %v3937, %v3939
        %5030 = vmax.xlane.f32.xlu0 %v5029
        %v5031 = vpop.xlane.xlu0 %5030
        %v5032 = vmax.f32 %v3943, %v3945
        %5033 = vmax.xlane.f32.xlu0 %v5032
        %v5034 = vpop.xlane.xlu0 %5033
        %v5035 = vmax.f32 %v3949, %v3951
        %5036 = vmax.xlane.f32.xlu0 %v5035
        %v5037 = vpop.xlane.xlu0 %5036
        %v5038 = vmax.f32 %v3955, %v3957
        %5039 = vmax.xlane.f32.xlu0 %v5038
        %v5040 = vpop.xlane.xlu0 %5039
        %v5041 = vmax.f32 %v3961, %v3963
        %5042 = vmax.xlane.f32.xlu0 %v5041
        %v5043 = vpop.xlane.xlu0 %5042
        %v5044 = vmax.f32 %v3967, %v3969
        %5045 = vmax.xlane.f32.xlu0 %v5044
        %v5046 = vpop.xlane.xlu0 %5045
        %v5047 = vmax.f32 %v3973, %v3975
        %5048 = vmax.xlane.f32.xlu0 %v5047
        %v5049 = vpop.xlane.xlu0 %5048
        %v5050 = vmax.f32 %v3979, %v3981
        %5051 = vmax.xlane.f32.xlu0 %v5050
        %v5052 = vpop.xlane.xlu0 %5051
        %v5053 = vmax.f32 %v3985, %v3987
        %5054 = vmax.xlane.f32.xlu0 %v5053
        %v5055 = vpop.xlane.xlu0 %5054
        %v5056 = vmax.f32 %v3991, %v3993
        %5057 = vmax.xlane.f32.xlu0 %v5056
        %v5058 = vpop.xlane.xlu0 %5057
        %v5059 = vmax.f32 %v3997, %v3999
        %5060 = vmax.xlane.f32.xlu0 %v5059
        %v5061 = vpop.xlane.xlu0 %5060
        %v5062 = vmax.f32 %v4003, %v4005
        %5063 = vmax.xlane.f32.xlu0 %v5062
        %v5064 = vpop.xlane.xlu0 %5063
        %v5065 = vmax.f32 %v4009, %v4011
        %5066 = vmax.xlane.f32.xlu0 %v5065
        %v5067 = vpop.xlane.xlu0 %5066
        %v5068 = vmax.f32 %v4015, %v4017
        %5069 = vmax.xlane.f32.xlu0 %v5068
        %v5070 = vpop.xlane.xlu0 %5069
        %v5071 = vmax.f32 %v4021, %v4023
        %5072 = vmax.xlane.f32.xlu0 %v5071
        %v5073 = vpop.xlane.xlu0 %5072
        %v5074 = vmax.f32 %v4027, %v4029
        %5075 = vmax.xlane.f32.xlu0 %v5074
        %v5076 = vpop.xlane.xlu0 %5075
        %v5077 = vmax.f32 %v4033, %v4035
        %5078 = vmax.xlane.f32.xlu0 %v5077
        %v5079 = vpop.xlane.xlu0 %5078
        %v5080 = vmax.f32 %v4039, %v4041
        %5081 = vmax.xlane.f32.xlu0 %v5080
        %v5082 = vpop.xlane.xlu0 %5081
        %v5083 = vmax.f32 %v4045, %v4047
        %5084 = vmax.xlane.f32.xlu0 %v5083
        %v5085 = vpop.xlane.xlu0 %5084
        %v5086 = vmax.f32 %v4224, %v4226
        %5087 = vmax.xlane.f32.xlu0 %v5086
        %v5088 = vpop.xlane.xlu0 %5087
        %v5089 = vmax.f32 %v4230, %v4232
        %5090 = vmax.xlane.f32.xlu0 %v5089
        %v5091 = vpop.xlane.xlu0 %5090
        %v5092 = vmax.f32 %v4236, %v4238
        %5093 = vmax.xlane.f32.xlu0 %v5092
        %v5094 = vpop.xlane.xlu0 %5093
        %v5095 = vmax.f32 %v4242, %v4244
        %5096 = vmax.xlane.f32.xlu0 %v5095
        %v5097 = vpop.xlane.xlu0 %5096
        %v5098 = vmax.f32 %v4248, %v4250
        %5099 = vmax.xlane.f32.xlu0 %v5098
        %v5100 = vpop.xlane.xlu0 %5099
        %v5101 = vmax.f32 %v4254, %v4256
        %5102 = vmax.xlane.f32.xlu0 %v5101
        %v5103 = vpop.xlane.xlu0 %5102
        %v5104 = vmax.f32 %v4260, %v4262
        %5105 = vmax.xlane.f32.xlu0 %v5104
        %v5106 = vpop.xlane.xlu0 %5105
        %v5107 = vmax.f32 %v4266, %v4268
        %5108 = vmax.xlane.f32.xlu0 %v5107
        %v5109 = vpop.xlane.xlu0 %5108
        %v5110 = vmax.f32 %v4272, %v4274
        %5111 = vmax.xlane.f32.xlu0 %v5110
        %v5112 = vpop.xlane.xlu0 %5111
        %v5113 = vmax.f32 %v4278, %v4280
        %5114 = vmax.xlane.f32.xlu0 %v5113
        %v5115 = vpop.xlane.xlu0 %5114
        %v5116 = vmax.f32 %v4284, %v4286
        %5117 = vmax.xlane.f32.xlu0 %v5116
        %v5118 = vpop.xlane.xlu0 %5117
        %v5119 = vmax.f32 %v4290, %v4292
        %5120 = vmax.xlane.f32.xlu0 %v5119
        %v5121 = vpop.xlane.xlu0 %5120
        %v5122 = vmax.f32 %v4296, %v4298
        %5123 = vmax.xlane.f32.xlu0 %v5122
        %v5124 = vpop.xlane.xlu0 %5123
        %v5125 = vmax.f32 %v4302, %v4304
        %5126 = vmax.xlane.f32.xlu0 %v5125
        %v5127 = vpop.xlane.xlu0 %5126
        %v5128 = vmax.f32 %v4308, %v4310
        %5129 = vmax.xlane.f32.xlu0 %v5128
        %v5130 = vpop.xlane.xlu0 %5129
        %v5131 = vmax.f32 %v4314, %v4316
        %5132 = vmax.xlane.f32.xlu0 %v5131
        %v5133 = vpop.xlane.xlu0 %5132
        %v5134 = vmax.f32 %v4320, %v4322
        %5135 = vmax.xlane.f32.xlu0 %v5134
        %v5136 = vpop.xlane.xlu0 %5135
        %v5137 = vmax.f32 %v4326, %v4328
        %5138 = vmax.xlane.f32.xlu0 %v5137
        %v5139 = vpop.xlane.xlu0 %5138
        %v5140 = vmax.f32 %v4332, %v4334
        %5141 = vmax.xlane.f32.xlu0 %v5140
        %v5142 = vpop.xlane.xlu0 %5141
        %v5143 = vmax.f32 %v4338, %v4340
        %5144 = vmax.xlane.f32.xlu0 %v5143
        %v5145 = vpop.xlane.xlu0 %5144
        %v5146 = vmax.f32 %v4344, %v4346
        %5147 = vmax.xlane.f32.xlu0 %v5146
        %v5148 = vpop.xlane.xlu0 %5147
        %v5149 = vmax.f32 %v4350, %v4352
        %5150 = vmax.xlane.f32.xlu0 %v5149
        %v5151 = vpop.xlane.xlu0 %5150
        %v5152 = vmax.f32 %v4356, %v4358
        %5153 = vmax.xlane.f32.xlu0 %v5152
        %v5154 = vpop.xlane.xlu0 %5153
        %v5155 = vmax.f32 %v4362, %v4364
        %5156 = vmax.xlane.f32.xlu0 %v5155
        %v5157 = vpop.xlane.xlu0 %5156
        %v5158 = vmax.f32 %v4368, %v4370
        %5159 = vmax.xlane.f32.xlu0 %v5158
        %v5160 = vpop.xlane.xlu0 %5159
        %v5161 = vmax.f32 %v4374, %v4376
        %5162 = vmax.xlane.f32.xlu0 %v5161
        %v5163 = vpop.xlane.xlu0 %5162
        %v5164 = vmax.f32 %v4380, %v4382
        %5165 = vmax.xlane.f32.xlu0 %v5164
        %v5166 = vpop.xlane.xlu0 %5165
        %v5167 = vmax.f32 %v4386, %v4388
        %5168 = vmax.xlane.f32.xlu0 %v5167
        %v5169 = vpop.xlane.xlu0 %5168
        %v5170 = vmax.f32 %v4392, %v4394
        %5171 = vmax.xlane.f32.xlu0 %v5170
        %v5172 = vpop.xlane.xlu0 %5171
        %v5173 = vmax.f32 %v4398, %v4400
        %5174 = vmax.xlane.f32.xlu0 %v5173
        %v5175 = vpop.xlane.xlu0 %5174
        %v5176 = vmax.f32 %v4404, %v4406
        %5177 = vmax.xlane.f32.xlu0 %v5176
        %v5178 = vpop.xlane.xlu0 %5177
        %v5179 = vmax.f32 %v4410, %v4412
        %5180 = vmax.xlane.f32.xlu0 %v5179
        %v5181 = vpop.xlane.xlu0 %5180
        %v5182 = vsub.f32 %v1669, %v4416
        %v5183 = vsub.f32 %v1671, %v4416
        %v5184 = vsub.f32 %v1675, %v4419
        %v5185 = vsub.f32 %v1677, %v4419
        %v5186 = vsub.f32 %v1681, %v4422
        %v5187 = vsub.f32 %v1683, %v4422
        %v5188 = vsub.f32 %v1687, %v4425
        %v5189 = vsub.f32 %v1689, %v4425
        %v5190 = vsub.f32 %v1693, %v4428
        %v5191 = vsub.f32 %v1695, %v4428
        %v5192 = vsub.f32 %v1699, %v4431
        %v5193 = vsub.f32 %v1701, %v4431
        %v5194 = vsub.f32 %v1705, %v4434
        %v5195 = vsub.f32 %v1707, %v4434
        %v5196 = vsub.f32 %v1711, %v4437
        %v5197 = vsub.f32 %v1713, %v4437
        %v5198 = vsub.f32 %v1717, %v4440
        %v5199 = vsub.f32 %v1719, %v4440
        %v5200 = vsub.f32 %v1723, %v4443
        %v5201 = vsub.f32 %v1725, %v4443
        %v5202 = vsub.f32 %v1729, %v4446
        %v5203 = vsub.f32 %v1731, %v4446
        %v5204 = vsub.f32 %v1735, %v4449
        %v5205 = vsub.f32 %v1737, %v4449
        %v5206 = vsub.f32 %v1741, %v4452
        %v5207 = vsub.f32 %v1743, %v4452
        %v5208 = vsub.f32 %v1747, %v4455
        %v5209 = vsub.f32 %v1749, %v4455
        %v5210 = vsub.f32 %v1753, %v4458
        %v5211 = vsub.f32 %v1755, %v4458
        %v5212 = vsub.f32 %v1759, %v4461
        %v5213 = vsub.f32 %v1761, %v4461
        %v5214 = vsub.f32 %v1765, %v4464
        %v5215 = vsub.f32 %v1767, %v4464
        %v5216 = vsub.f32 %v1771, %v4467
        %v5217 = vsub.f32 %v1773, %v4467
        %v5218 = vsub.f32 %v1777, %v4470
        %v5219 = vsub.f32 %v1779, %v4470
        %v5220 = vsub.f32 %v1783, %v4473
        %v5221 = vsub.f32 %v1785, %v4473
        %v5222 = vsub.f32 %v1789, %v4476
        %v5223 = vsub.f32 %v1791, %v4476
        %v5224 = vsub.f32 %v1795, %v4479
        %v5225 = vsub.f32 %v1797, %v4479
        %v5226 = vsub.f32 %v1801, %v4482
        %v5227 = vsub.f32 %v1803, %v4482
        %v5228 = vsub.f32 %v1807, %v4485
        %v5229 = vsub.f32 %v1809, %v4485
        %v5230 = vsub.f32 %v1813, %v4488
        %v5231 = vsub.f32 %v1815, %v4488
        %v5232 = vsub.f32 %v1819, %v4491
        %v5233 = vsub.f32 %v1821, %v4491
        %v5234 = vsub.f32 %v1825, %v4494
        %v5235 = vsub.f32 %v1827, %v4494
        %v5236 = vsub.f32 %v1831, %v4497
        %v5237 = vsub.f32 %v1833, %v4497
        %v5238 = vsub.f32 %v1837, %v4500
        %v5239 = vsub.f32 %v1839, %v4500
        %v5240 = vsub.f32 %v1843, %v4503
        %v5241 = vsub.f32 %v1845, %v4503
        %v5242 = vsub.f32 %v1849, %v4506
        %v5243 = vsub.f32 %v1851, %v4506
        %v5244 = vsub.f32 %v1855, %v4509
        %v5245 = vsub.f32 %v1857, %v4509
        %v5246 = vsub.f32 %v2034, %v4512
        %v5247 = vsub.f32 %v2036, %v4512
        %v5248 = vsub.f32 %v2040, %v4515
        %v5249 = vsub.f32 %v2042, %v4515
        %v5250 = vsub.f32 %v2046, %v4518
        %v5251 = vsub.f32 %v2048, %v4518
        %v5252 = vsub.f32 %v2052, %v4521
        %v5253 = vsub.f32 %v2054, %v4521
        %v5254 = vsub.f32 %v2058, %v4524
        %v5255 = vsub.f32 %v2060, %v4524
        %v5256 = vsub.f32 %v2064, %v4527
        %v5257 = vsub.f32 %v2066, %v4527
        %v5258 = vsub.f32 %v2070, %v4530
        %v5259 = vsub.f32 %v2072, %v4530
        %v5260 = vsub.f32 %v2076, %v4533
        %v5261 = vsub.f32 %v2078, %v4533
        %v5262 = vsub.f32 %v2082, %v4536
        %v5263 = vsub.f32 %v2084, %v4536
        %v5264 = vsub.f32 %v2088, %v4539
        %v5265 = vsub.f32 %v2090, %v4539
        %v5266 = vsub.f32 %v2094, %v4542
        %v5267 = vsub.f32 %v2096, %v4542
        %v5268 = vsub.f32 %v2100, %v4545
        %v5269 = vsub.f32 %v2102, %v4545
        %v5270 = vsub.f32 %v2106, %v4548
        %v5271 = vsub.f32 %v2108, %v4548
        %v5272 = vsub.f32 %v2112, %v4551
        %v5273 = vsub.f32 %v2114, %v4551
        %v5274 = vsub.f32 %v2118, %v4554
        %v5275 = vsub.f32 %v2120, %v4554
        %v5276 = vsub.f32 %v2124, %v4557
        %v5277 = vsub.f32 %v2126, %v4557
        %v5278 = vsub.f32 %v2130, %v4560
        %v5279 = vsub.f32 %v2132, %v4560
        %v5280 = vsub.f32 %v2136, %v4563
        %v5281 = vsub.f32 %v2138, %v4563
        %v5282 = vsub.f32 %v2142, %v4566
        %v5283 = vsub.f32 %v2144, %v4566
        %v5284 = vsub.f32 %v2148, %v4569
        %v5285 = vsub.f32 %v2150, %v4569
        %v5286 = vsub.f32 %v2154, %v4572
        %v5287 = vsub.f32 %v2156, %v4572
        %v5288 = vsub.f32 %v2160, %v4575
        %v5289 = vsub.f32 %v2162, %v4575
        %v5290 = vsub.f32 %v2166, %v4578
        %v5291 = vsub.f32 %v2168, %v4578
        %v5292 = vsub.f32 %v2172, %v4581
        %v5293 = vsub.f32 %v2174, %v4581
        %v5294 = vsub.f32 %v2178, %v4584
        %v5295 = vsub.f32 %v2180, %v4584
        %v5296 = vsub.f32 %v2184, %v4587
        %v5297 = vsub.f32 %v2186, %v4587
        %v5298 = vsub.f32 %v2190, %v4590
        %v5299 = vsub.f32 %v2192, %v4590
        %v5300 = vsub.f32 %v2196, %v4593
        %v5301 = vsub.f32 %v2198, %v4593
        %v5302 = vsub.f32 %v2202, %v4596
        %v5303 = vsub.f32 %v2204, %v4596
        %v5304 = vsub.f32 %v2208, %v4599
        %v5305 = vsub.f32 %v2210, %v4599
        %v5306 = vsub.f32 %v2214, %v4602
        %v5307 = vsub.f32 %v2216, %v4602
        %v5308 = vsub.f32 %v2220, %v4605
        %v5309 = vsub.f32 %v2222, %v4605
        %v5310 = vsub.f32 %v2399, %v4608
        %v5311 = vsub.f32 %v2401, %v4608
        %v5312 = vsub.f32 %v2405, %v4611
        %v5313 = vsub.f32 %v2407, %v4611
        %v5314 = vsub.f32 %v2411, %v4614
        %v5315 = vsub.f32 %v2413, %v4614
        %v5316 = vsub.f32 %v2417, %v4617
        %v5317 = vsub.f32 %v2419, %v4617
        %v5318 = vsub.f32 %v2423, %v4620
        %v5319 = vsub.f32 %v2425, %v4620
        %v5320 = vsub.f32 %v2429, %v4623
        %v5321 = vsub.f32 %v2431, %v4623
        %v5322 = vsub.f32 %v2435, %v4626
        %v5323 = vsub.f32 %v2437, %v4626
        %v5324 = vsub.f32 %v2441, %v4629
        %v5325 = vsub.f32 %v2443, %v4629
        %v5326 = vsub.f32 %v2447, %v4632
        %v5327 = vsub.f32 %v2449, %v4632
        %v5328 = vsub.f32 %v2453, %v4635
        %v5329 = vsub.f32 %v2455, %v4635
        %v5330 = vsub.f32 %v2459, %v4638
        %v5331 = vsub.f32 %v2461, %v4638
        %v5332 = vsub.f32 %v2465, %v4641
        %v5333 = vsub.f32 %v2467, %v4641
        %v5334 = vsub.f32 %v2471, %v4644
        %v5335 = vsub.f32 %v2473, %v4644
        %v5336 = vsub.f32 %v2477, %v4647
        %v5337 = vsub.f32 %v2479, %v4647
        %v5338 = vsub.f32 %v2483, %v4650
        %v5339 = vsub.f32 %v2485, %v4650
        %v5340 = vsub.f32 %v2489, %v4653
        %v5341 = vsub.f32 %v2491, %v4653
        %v5342 = vsub.f32 %v2495, %v4656
        %v5343 = vsub.f32 %v2497, %v4656
        %v5344 = vsub.f32 %v2501, %v4659
        %v5345 = vsub.f32 %v2503, %v4659
        %v5346 = vsub.f32 %v2507, %v4662
        %v5347 = vsub.f32 %v2509, %v4662
        %v5348 = vsub.f32 %v2513, %v4665
        %v5349 = vsub.f32 %v2515, %v4665
        %v5350 = vsub.f32 %v2519, %v4668
        %v5351 = vsub.f32 %v2521, %v4668
        %v5352 = vsub.f32 %v2525, %v4671
        %v5353 = vsub.f32 %v2527, %v4671
        %v5354 = vsub.f32 %v2531, %v4674
        %v5355 = vsub.f32 %v2533, %v4674
        %v5356 = vsub.f32 %v2537, %v4677
        %v5357 = vsub.f32 %v2539, %v4677
        %v5358 = vsub.f32 %v2543, %v4680
        %v5359 = vsub.f32 %v2545, %v4680
        %v5360 = vsub.f32 %v2549, %v4683
        %v5361 = vsub.f32 %v2551, %v4683
        %v5362 = vsub.f32 %v2555, %v4686
        %v5363 = vsub.f32 %v2557, %v4686
        %v5364 = vsub.f32 %v2561, %v4689
        %v5365 = vsub.f32 %v2563, %v4689
        %v5366 = vsub.f32 %v2567, %v4692
        %v5367 = vsub.f32 %v2569, %v4692
        %v5368 = vsub.f32 %v2573, %v4695
        %v5369 = vsub.f32 %v2575, %v4695
        %v5370 = vsub.f32 %v2579, %v4698
        %v5371 = vsub.f32 %v2581, %v4698
        %v5372 = vsub.f32 %v2585, %v4701
        %v5373 = vsub.f32 %v2587, %v4701
        %v5374 = vsub.f32 %v2764, %v4704
        %v5375 = vsub.f32 %v2766, %v4704
        %v5376 = vsub.f32 %v2770, %v4707
        %v5377 = vsub.f32 %v2772, %v4707
        %v5378 = vsub.f32 %v2776, %v4710
        %v5379 = vsub.f32 %v2778, %v4710
        %v5380 = vsub.f32 %v2782, %v4713
        %v5381 = vsub.f32 %v2784, %v4713
        %v5382 = vsub.f32 %v2788, %v4716
        %v5383 = vsub.f32 %v2790, %v4716
        %v5384 = vsub.f32 %v2794, %v4719
        %v5385 = vsub.f32 %v2796, %v4719
        %v5386 = vsub.f32 %v2800, %v4722
        %v5387 = vsub.f32 %v2802, %v4722
        %v5388 = vsub.f32 %v2806, %v4725
        %v5389 = vsub.f32 %v2808, %v4725
        %v5390 = vsub.f32 %v2812, %v4728
        %v5391 = vsub.f32 %v2814, %v4728
        %v5392 = vsub.f32 %v2818, %v4731
        %v5393 = vsub.f32 %v2820, %v4731
        %v5394 = vsub.f32 %v2824, %v4734
        %v5395 = vsub.f32 %v2826, %v4734
        %v5396 = vsub.f32 %v2830, %v4737
        %v5397 = vsub.f32 %v2832, %v4737
        %v5398 = vsub.f32 %v2836, %v4740
        %v5399 = vsub.f32 %v2838, %v4740
        %v5400 = vsub.f32 %v2842, %v4743
        %v5401 = vsub.f32 %v2844, %v4743
        %v5402 = vsub.f32 %v2848, %v4746
        %v5403 = vsub.f32 %v2850, %v4746
        %v5404 = vsub.f32 %v2854, %v4749
        %v5405 = vsub.f32 %v2856, %v4749
        %v5406 = vsub.f32 %v2860, %v4752
        %v5407 = vsub.f32 %v2862, %v4752
        %v5408 = vsub.f32 %v2866, %v4755
        %v5409 = vsub.f32 %v2868, %v4755
        %v5410 = vsub.f32 %v2872, %v4758
        %v5411 = vsub.f32 %v2874, %v4758
        %v5412 = vsub.f32 %v2878, %v4761
        %v5413 = vsub.f32 %v2880, %v4761
        %v5414 = vsub.f32 %v2884, %v4764
        %v5415 = vsub.f32 %v2886, %v4764
        %v5416 = vsub.f32 %v2890, %v4767
        %v5417 = vsub.f32 %v2892, %v4767
        %v5418 = vsub.f32 %v2896, %v4770
        %v5419 = vsub.f32 %v2898, %v4770
        %v5420 = vsub.f32 %v2902, %v4773
        %v5421 = vsub.f32 %v2904, %v4773
        %v5422 = vsub.f32 %v2908, %v4776
        %v5423 = vsub.f32 %v2910, %v4776
        %v5424 = vsub.f32 %v2914, %v4779
        %v5425 = vsub.f32 %v2916, %v4779
        %v5426 = vsub.f32 %v2920, %v4782
        %v5427 = vsub.f32 %v2922, %v4782
        %v5428 = vsub.f32 %v2926, %v4785
        %v5429 = vsub.f32 %v2928, %v4785
        %v5430 = vsub.f32 %v2932, %v4788
        %v5431 = vsub.f32 %v2934, %v4788
        %v5432 = vsub.f32 %v2938, %v4791
        %v5433 = vsub.f32 %v2940, %v4791
        %v5434 = vsub.f32 %v2944, %v4794
        %v5435 = vsub.f32 %v2946, %v4794
        %v5436 = vsub.f32 %v2950, %v4797
        %v5437 = vsub.f32 %v2952, %v4797
        %v5438 = vsub.f32 %v3129, %v4800
        %v5439 = vsub.f32 %v3131, %v4800
        %v5440 = vsub.f32 %v3135, %v4803
        %v5441 = vsub.f32 %v3137, %v4803
        %v5442 = vsub.f32 %v3141, %v4806
        %v5443 = vsub.f32 %v3143, %v4806
        %v5444 = vsub.f32 %v3147, %v4809
        %v5445 = vsub.f32 %v3149, %v4809
        %v5446 = vsub.f32 %v3153, %v4812
        %v5447 = vsub.f32 %v3155, %v4812
        %v5448 = vsub.f32 %v3159, %v4815
        %v5449 = vsub.f32 %v3161, %v4815
        %v5450 = vsub.f32 %v3165, %v4818
        %v5451 = vsub.f32 %v3167, %v4818
        %v5452 = vsub.f32 %v3171, %v4821
        %v5453 = vsub.f32 %v3173, %v4821
        %v5454 = vsub.f32 %v3177, %v4824
        %v5455 = vsub.f32 %v3179, %v4824
        %v5456 = vsub.f32 %v3183, %v4827
        %v5457 = vsub.f32 %v3185, %v4827
        %v5458 = vsub.f32 %v3189, %v4830
        %v5459 = vsub.f32 %v3191, %v4830
        %v5460 = vsub.f32 %v3195, %v4833
        %v5461 = vsub.f32 %v3197, %v4833
        %v5462 = vsub.f32 %v3201, %v4836
        %v5463 = vsub.f32 %v3203, %v4836
        %v5464 = vsub.f32 %v3207, %v4839
        %v5465 = vsub.f32 %v3209, %v4839
        %v5466 = vsub.f32 %v3213, %v4842
        %v5467 = vsub.f32 %v3215, %v4842
        %v5468 = vsub.f32 %v3219, %v4845
        %v5469 = vsub.f32 %v3221, %v4845
        %v5470 = vsub.f32 %v3225, %v4848
        %v5471 = vsub.f32 %v3227, %v4848
        %v5472 = vsub.f32 %v3231, %v4851
        %v5473 = vsub.f32 %v3233, %v4851
        %v5474 = vsub.f32 %v3237, %v4854
        %v5475 = vsub.f32 %v3239, %v4854
        %v5476 = vsub.f32 %v3243, %v4857
        %v5477 = vsub.f32 %v3245, %v4857
        %v5478 = vsub.f32 %v3249, %v4860
        %v5479 = vsub.f32 %v3251, %v4860
        %v5480 = vsub.f32 %v3255, %v4863
        %v5481 = vsub.f32 %v3257, %v4863
        %v5482 = vsub.f32 %v3261, %v4866
        %v5483 = vsub.f32 %v3263, %v4866
        %v5484 = vsub.f32 %v3267, %v4869
        %v5485 = vsub.f32 %v3269, %v4869
        %v5486 = vsub.f32 %v3273, %v4872
        %v5487 = vsub.f32 %v3275, %v4872
        %v5488 = vsub.f32 %v3279, %v4875
        %v5489 = vsub.f32 %v3281, %v4875
        %v5490 = vsub.f32 %v3285, %v4878
        %v5491 = vsub.f32 %v3287, %v4878
        %v5492 = vsub.f32 %v3291, %v4881
        %v5493 = vsub.f32 %v3293, %v4881
        %v5494 = vsub.f32 %v3297, %v4884
        %v5495 = vsub.f32 %v3299, %v4884
        %v5496 = vsub.f32 %v3303, %v4887
        %v5497 = vsub.f32 %v3305, %v4887
        %v5498 = vsub.f32 %v3309, %v4890
        %v5499 = vsub.f32 %v3311, %v4890
        %v5500 = vsub.f32 %v3315, %v4893
        %v5501 = vsub.f32 %v3317, %v4893
        %v5502 = vsub.f32 %v3494, %v4896
        %v5503 = vsub.f32 %v3496, %v4896
        %v5504 = vsub.f32 %v3500, %v4899
        %v5505 = vsub.f32 %v3502, %v4899
        %v5506 = vsub.f32 %v3506, %v4902
        %v5507 = vsub.f32 %v3508, %v4902
        %v5508 = vsub.f32 %v3512, %v4905
        %v5509 = vsub.f32 %v3514, %v4905
        %v5510 = vsub.f32 %v3518, %v4908
        %v5511 = vsub.f32 %v3520, %v4908
        %v5512 = vsub.f32 %v3524, %v4911
        %v5513 = vsub.f32 %v3526, %v4911
        %v5514 = vsub.f32 %v3530, %v4914
        %v5515 = vsub.f32 %v3532, %v4914
        %v5516 = vsub.f32 %v3536, %v4917
        %v5517 = vsub.f32 %v3538, %v4917
        %v5518 = vsub.f32 %v3542, %v4920
        %v5519 = vsub.f32 %v3544, %v4920
        %v5520 = vsub.f32 %v3548, %v4923
        %v5521 = vsub.f32 %v3550, %v4923
        %v5522 = vsub.f32 %v3554, %v4926
        %v5523 = vsub.f32 %v3556, %v4926
        %v5524 = vsub.f32 %v3560, %v4929
        %v5525 = vsub.f32 %v3562, %v4929
        %v5526 = vsub.f32 %v3566, %v4932
        %v5527 = vsub.f32 %v3568, %v4932
        %v5528 = vsub.f32 %v3572, %v4935
        %v5529 = vsub.f32 %v3574, %v4935
        %v5530 = vsub.f32 %v3578, %v4938
        %v5531 = vsub.f32 %v3580, %v4938
        %v5532 = vsub.f32 %v3584, %v4941
        %v5533 = vsub.f32 %v3586, %v4941
        %v5534 = vsub.f32 %v3590, %v4944
        %v5535 = vsub.f32 %v3592, %v4944
        %v5536 = vsub.f32 %v3596, %v4947
        %v5537 = vsub.f32 %v3598, %v4947
        %v5538 = vsub.f32 %v3602, %v4950
        %v5539 = vsub.f32 %v3604, %v4950
        %v5540 = vsub.f32 %v3608, %v4953
        %v5541 = vsub.f32 %v3610, %v4953
        %v5542 = vsub.f32 %v3614, %v4956
        %v5543 = vsub.f32 %v3616, %v4956
        %v5544 = vsub.f32 %v3620, %v4959
        %v5545 = vsub.f32 %v3622, %v4959
        %v5546 = vsub.f32 %v3626, %v4962
        %v5547 = vsub.f32 %v3628, %v4962
        %v5548 = vsub.f32 %v3632, %v4965
        %v5549 = vsub.f32 %v3634, %v4965
        %v5550 = vsub.f32 %v3638, %v4968
        %v5551 = vsub.f32 %v3640, %v4968
        %v5552 = vsub.f32 %v3644, %v4971
        %v5553 = vsub.f32 %v3646, %v4971
        %v5554 = vsub.f32 %v3650, %v4974
        %v5555 = vsub.f32 %v3652, %v4974
        %v5556 = vsub.f32 %v3656, %v4977
        %v5557 = vsub.f32 %v3658, %v4977
        %v5558 = vsub.f32 %v3662, %v4980
        %v5559 = vsub.f32 %v3664, %v4980
        %v5560 = vsub.f32 %v3668, %v4983
        %v5561 = vsub.f32 %v3670, %v4983
        %v5562 = vsub.f32 %v3674, %v4986
        %v5563 = vsub.f32 %v3676, %v4986
        %v5564 = vsub.f32 %v3680, %v4989
        %v5565 = vsub.f32 %v3682, %v4989
        %v5566 = vsub.f32 %v3859, %v4992
        %v5567 = vsub.f32 %v3861, %v4992
        %v5568 = vsub.f32 %v3865, %v4995
        %v5569 = vsub.f32 %v3867, %v4995
        %v5570 = vsub.f32 %v3871, %v4998
        %v5571 = vsub.f32 %v3873, %v4998
        %v5572 = vsub.f32 %v3877, %v5001
        %v5573 = vsub.f32 %v3879, %v5001
        %v5574 = vsub.f32 %v3883, %v5004
        %v5575 = vsub.f32 %v3885, %v5004
        %v5576 = vsub.f32 %v3889, %v5007
        %v5577 = vsub.f32 %v3891, %v5007
        %v5578 = vsub.f32 %v3895, %v5010
        %v5579 = vsub.f32 %v3897, %v5010
        %v5580 = vsub.f32 %v3901, %v5013
        %v5581 = vsub.f32 %v3903, %v5013
        %v5582 = vsub.f32 %v3907, %v5016
        %v5583 = vsub.f32 %v3909, %v5016
        %v5584 = vsub.f32 %v3913, %v5019
        %v5585 = vsub.f32 %v3915, %v5019
        %v5586 = vsub.f32 %v3919, %v5022
        %v5587 = vsub.f32 %v3921, %v5022
        %v5588 = vsub.f32 %v3925, %v5025
        %v5589 = vsub.f32 %v3927, %v5025
        %v5590 = vsub.f32 %v3931, %v5028
        %v5591 = vsub.f32 %v3933, %v5028
        %v5592 = vsub.f32 %v3937, %v5031
        %v5593 = vsub.f32 %v3939, %v5031
        %v5594 = vsub.f32 %v3943, %v5034
        %v5595 = vsub.f32 %v3945, %v5034
        %v5596 = vsub.f32 %v3949, %v5037
        %v5597 = vsub.f32 %v3951, %v5037
        %v5598 = vsub.f32 %v3955, %v5040
        %v5599 = vsub.f32 %v3957, %v5040
        %v5600 = vsub.f32 %v3961, %v5043
        %v5601 = vsub.f32 %v3963, %v5043
        %v5602 = vsub.f32 %v3967, %v5046
        %v5603 = vsub.f32 %v3969, %v5046
        %v5604 = vsub.f32 %v3973, %v5049
        %v5605 = vsub.f32 %v3975, %v5049
        %v5606 = vsub.f32 %v3979, %v5052
        %v5607 = vsub.f32 %v3981, %v5052
        %v5608 = vsub.f32 %v3985, %v5055
        %v5609 = vsub.f32 %v3987, %v5055
        %v5610 = vsub.f32 %v3991, %v5058
        %v5611 = vsub.f32 %v3993, %v5058
        %v5612 = vsub.f32 %v3997, %v5061
        %v5613 = vsub.f32 %v3999, %v5061
        %v5614 = vsub.f32 %v4003, %v5064
        %v5615 = vsub.f32 %v4005, %v5064
        %v5616 = vsub.f32 %v4009, %v5067
        %v5617 = vsub.f32 %v4011, %v5067
        %v5618 = vsub.f32 %v4015, %v5070
        %v5619 = vsub.f32 %v4017, %v5070
        %v5620 = vsub.f32 %v4021, %v5073
        %v5621 = vsub.f32 %v4023, %v5073
        %v5622 = vsub.f32 %v4027, %v5076
        %v5623 = vsub.f32 %v4029, %v5076
        %v5624 = vsub.f32 %v4033, %v5079
        %v5625 = vsub.f32 %v4035, %v5079
        %v5626 = vsub.f32 %v4039, %v5082
        %v5627 = vsub.f32 %v4041, %v5082
        %v5628 = vsub.f32 %v4045, %v5085
        %v5629 = vsub.f32 %v4047, %v5085
        %v5630 = vsub.f32 %v4224, %v5088
        %v5631 = vsub.f32 %v4226, %v5088
        %v5632 = vsub.f32 %v4230, %v5091
        %v5633 = vsub.f32 %v4232, %v5091
        %v5634 = vsub.f32 %v4236, %v5094
        %v5635 = vsub.f32 %v4238, %v5094
        %v5636 = vsub.f32 %v4242, %v5097
        %v5637 = vsub.f32 %v4244, %v5097
        %v5638 = vsub.f32 %v4248, %v5100
        %v5639 = vsub.f32 %v4250, %v5100
        %v5640 = vsub.f32 %v4254, %v5103
        %v5641 = vsub.f32 %v4256, %v5103
        %v5642 = vsub.f32 %v4260, %v5106
        %v5643 = vsub.f32 %v4262, %v5106
        %v5644 = vsub.f32 %v4266, %v5109
        %v5645 = vsub.f32 %v4268, %v5109
        %v5646 = vsub.f32 %v4272, %v5112
        %v5647 = vsub.f32 %v4274, %v5112
        %v5648 = vsub.f32 %v4278, %v5115
        %v5649 = vsub.f32 %v4280, %v5115
        %v5650 = vsub.f32 %v4284, %v5118
        %v5651 = vsub.f32 %v4286, %v5118
        %v5652 = vsub.f32 %v4290, %v5121
        %v5653 = vsub.f32 %v4292, %v5121
        %v5654 = vsub.f32 %v4296, %v5124
        %v5655 = vsub.f32 %v4298, %v5124
        %v5656 = vsub.f32 %v4302, %v5127
        %v5657 = vsub.f32 %v4304, %v5127
        %v5658 = vsub.f32 %v4308, %v5130
        %v5659 = vsub.f32 %v4310, %v5130
        %v5660 = vsub.f32 %v4314, %v5133
        %v5661 = vsub.f32 %v4316, %v5133
        %v5662 = vsub.f32 %v4320, %v5136
        %v5663 = vsub.f32 %v4322, %v5136
        %v5664 = vsub.f32 %v4326, %v5139
        %v5665 = vsub.f32 %v4328, %v5139
        %v5666 = vsub.f32 %v4332, %v5142
        %v5667 = vsub.f32 %v4334, %v5142
        %v5668 = vsub.f32 %v4338, %v5145
        %v5669 = vsub.f32 %v4340, %v5145
        %v5670 = vsub.f32 %v4344, %v5148
        %v5671 = vsub.f32 %v4346, %v5148
        %v5672 = vsub.f32 %v4350, %v5151
        %v5673 = vsub.f32 %v4352, %v5151
        %v5674 = vsub.f32 %v4356, %v5154
        %v5675 = vsub.f32 %v4358, %v5154
        %v5676 = vsub.f32 %v4362, %v5157
        %v5677 = vsub.f32 %v4364, %v5157
        %v5678 = vsub.f32 %v4368, %v5160
        %v5679 = vsub.f32 %v4370, %v5160
        %v5680 = vsub.f32 %v4374, %v5163
        %v5681 = vsub.f32 %v4376, %v5163
        %v5682 = vsub.f32 %v4380, %v5166
        %v5683 = vsub.f32 %v4382, %v5166
        %v5684 = vsub.f32 %v4386, %v5169
        %v5685 = vsub.f32 %v4388, %v5169
        %v5686 = vsub.f32 %v4392, %v5172
        %v5687 = vsub.f32 %v4394, %v5172
        %v5688 = vsub.f32 %v4398, %v5175
        %v5689 = vsub.f32 %v4400, %v5175
        %v5690 = vsub.f32 %v4404, %v5178
        %v5691 = vsub.f32 %v4406, %v5178
        %v5692 = vsub.f32 %v4410, %v5181
        %v5693 = vsub.f32 %v4412, %v5181
        %v5694 = vmul.f32 %v5182, 1.442695
        %v5695 = vpow.pop %v5694
        %v5696 = vmul.f32 %v5183, 1.442695
        %v5697 = vpow.pop %v5696
        %v5698 = vmul.f32 %v5184, 1.442695
        %v5699 = vpow.pop %v5698
        %v5700 = vmul.f32 %v5185, 1.442695
        %v5701 = vpow.pop %v5700
        %v5702 = vmul.f32 %v5186, 1.442695
        %v5703 = vpow.pop %v5702
        %v5704 = vmul.f32 %v5187, 1.442695
        %v5705 = vpow.pop %v5704
        %v5706 = vmul.f32 %v5188, 1.442695
        %v5707 = vpow.pop %v5706
        %v5708 = vmul.f32 %v5189, 1.442695
        %v5709 = vpow.pop %v5708
        %v5710 = vmul.f32 %v5190, 1.442695
        %v5711 = vpow.pop %v5710
        %v5712 = vmul.f32 %v5191, 1.442695
        %v5713 = vpow.pop %v5712
        %v5714 = vmul.f32 %v5192, 1.442695
        %v5715 = vpow.pop %v5714
        %v5716 = vmul.f32 %v5193, 1.442695
        %v5717 = vpow.pop %v5716
        %v5718 = vmul.f32 %v5194, 1.442695
        %v5719 = vpow.pop %v5718
        %v5720 = vmul.f32 %v5195, 1.442695
        %v5721 = vpow.pop %v5720
        %v5722 = vmul.f32 %v5196, 1.442695
        %v5723 = vpow.pop %v5722
        %v5724 = vmul.f32 %v5197, 1.442695
        %v5725 = vpow.pop %v5724
        %v5726 = vmul.f32 %v5198, 1.442695
        %v5727 = vpow.pop %v5726
        %v5728 = vmul.f32 %v5199, 1.442695
        %v5729 = vpow.pop %v5728
        %v5730 = vmul.f32 %v5200, 1.442695
        %v5731 = vpow.pop %v5730
        %v5732 = vmul.f32 %v5201, 1.442695
        %v5733 = vpow.pop %v5732
        %v5734 = vmul.f32 %v5202, 1.442695
        %v5735 = vpow.pop %v5734
        %v5736 = vmul.f32 %v5203, 1.442695
        %v5737 = vpow.pop %v5736
        %v5738 = vmul.f32 %v5204, 1.442695
        %v5739 = vpow.pop %v5738
        %v5740 = vmul.f32 %v5205, 1.442695
        %v5741 = vpow.pop %v5740
        %v5742 = vmul.f32 %v5206, 1.442695
        %v5743 = vpow.pop %v5742
        %v5744 = vmul.f32 %v5207, 1.442695
        %v5745 = vpow.pop %v5744
        %v5746 = vmul.f32 %v5208, 1.442695
        %v5747 = vpow.pop %v5746
        %v5748 = vmul.f32 %v5209, 1.442695
        %v5749 = vpow.pop %v5748
        %v5750 = vmul.f32 %v5210, 1.442695
        %v5751 = vpow.pop %v5750
        %v5752 = vmul.f32 %v5211, 1.442695
        %v5753 = vpow.pop %v5752
        %v5754 = vmul.f32 %v5212, 1.442695
        %v5755 = vpow.pop %v5754
        %v5756 = vmul.f32 %v5213, 1.442695
        %v5757 = vpow.pop %v5756
        %v5758 = vmul.f32 %v5214, 1.442695
        %v5759 = vpow.pop %v5758
        %v5760 = vmul.f32 %v5215, 1.442695
        %v5761 = vpow.pop %v5760
        %v5762 = vmul.f32 %v5216, 1.442695
        %v5763 = vpow.pop %v5762
        %v5764 = vmul.f32 %v5217, 1.442695
        %v5765 = vpow.pop %v5764
        %v5766 = vmul.f32 %v5218, 1.442695
        %v5767 = vpow.pop %v5766
        %v5768 = vmul.f32 %v5219, 1.442695
        %v5769 = vpow.pop %v5768
        %v5770 = vmul.f32 %v5220, 1.442695
        %v5771 = vpow.pop %v5770
        %v5772 = vmul.f32 %v5221, 1.442695
        %v5773 = vpow.pop %v5772
        %v5774 = vmul.f32 %v5222, 1.442695
        %v5775 = vpow.pop %v5774
        %v5776 = vmul.f32 %v5223, 1.442695
        %v5777 = vpow.pop %v5776
        %v5778 = vmul.f32 %v5224, 1.442695
        %v5779 = vpow.pop %v5778
        %v5780 = vmul.f32 %v5225, 1.442695
        %v5781 = vpow.pop %v5780
        %v5782 = vmul.f32 %v5226, 1.442695
        %v5783 = vpow.pop %v5782
        %v5784 = vmul.f32 %v5227, 1.442695
        %v5785 = vpow.pop %v5784
        %v5786 = vmul.f32 %v5228, 1.442695
        %v5787 = vpow.pop %v5786
        %v5788 = vmul.f32 %v5229, 1.442695
        %v5789 = vpow.pop %v5788
        %v5790 = vmul.f32 %v5230, 1.442695
        %v5791 = vpow.pop %v5790
        %v5792 = vmul.f32 %v5231, 1.442695
        %v5793 = vpow.pop %v5792
        %v5794 = vmul.f32 %v5232, 1.442695
        %v5795 = vpow.pop %v5794
        %v5796 = vmul.f32 %v5233, 1.442695
        %v5797 = vpow.pop %v5796
        %v5798 = vmul.f32 %v5234, 1.442695
        %v5799 = vpow.pop %v5798
        %v5800 = vmul.f32 %v5235, 1.442695
        %v5801 = vpow.pop %v5800
        %v5802 = vmul.f32 %v5236, 1.442695
        %v5803 = vpow.pop %v5802
        %v5804 = vmul.f32 %v5237, 1.442695
        %v5805 = vpow.pop %v5804
        %v5806 = vmul.f32 %v5238, 1.442695
        %v5807 = vpow.pop %v5806
        %v5808 = vmul.f32 %v5239, 1.442695
        %v5809 = vpow.pop %v5808
        %v5810 = vmul.f32 %v5240, 1.442695
        %v5811 = vpow.pop %v5810
        %v5812 = vmul.f32 %v5241, 1.442695
        %v5813 = vpow.pop %v5812
        %v5814 = vmul.f32 %v5242, 1.442695
        %v5815 = vpow.pop %v5814
        %v5816 = vmul.f32 %v5243, 1.442695
        %v5817 = vpow.pop %v5816
        %v5818 = vmul.f32 %v5244, 1.442695
        %v5819 = vpow.pop %v5818
        %v5820 = vmul.f32 %v5245, 1.442695
        %v5821 = vpow.pop %v5820
        %v5822 = vmul.f32 %v5246, 1.442695
        %v5823 = vpow.pop %v5822
        %v5824 = vmul.f32 %v5247, 1.442695
        %v5825 = vpow.pop %v5824
        %v5826 = vmul.f32 %v5248, 1.442695
        %v5827 = vpow.pop %v5826
        %v5828 = vmul.f32 %v5249, 1.442695
        %v5829 = vpow.pop %v5828
        %v5830 = vmul.f32 %v5250, 1.442695
        %v5831 = vpow.pop %v5830
        %v5832 = vmul.f32 %v5251, 1.442695
        %v5833 = vpow.pop %v5832
        %v5834 = vmul.f32 %v5252, 1.442695
        %v5835 = vpow.pop %v5834
        %v5836 = vmul.f32 %v5253, 1.442695
        %v5837 = vpow.pop %v5836
        %v5838 = vmul.f32 %v5254, 1.442695
        %v5839 = vpow.pop %v5838
        %v5840 = vmul.f32 %v5255, 1.442695
        %v5841 = vpow.pop %v5840
        %v5842 = vmul.f32 %v5256, 1.442695
        %v5843 = vpow.pop %v5842
        %v5844 = vmul.f32 %v5257, 1.442695
        %v5845 = vpow.pop %v5844
        %v5846 = vmul.f32 %v5258, 1.442695
        %v5847 = vpow.pop %v5846
        %v5848 = vmul.f32 %v5259, 1.442695
        %v5849 = vpow.pop %v5848
        %v5850 = vmul.f32 %v5260, 1.442695
        %v5851 = vpow.pop %v5850
        %v5852 = vmul.f32 %v5261, 1.442695
        %v5853 = vpow.pop %v5852
        %v5854 = vmul.f32 %v5262, 1.442695
        %v5855 = vpow.pop %v5854
        %v5856 = vmul.f32 %v5263, 1.442695
        %v5857 = vpow.pop %v5856
        %v5858 = vmul.f32 %v5264, 1.442695
        %v5859 = vpow.pop %v5858
        %v5860 = vmul.f32 %v5265, 1.442695
        %v5861 = vpow.pop %v5860
        %v5862 = vmul.f32 %v5266, 1.442695
        %v5863 = vpow.pop %v5862
        %v5864 = vmul.f32 %v5267, 1.442695
        %v5865 = vpow.pop %v5864
        %v5866 = vmul.f32 %v5268, 1.442695
        %v5867 = vpow.pop %v5866
        %v5868 = vmul.f32 %v5269, 1.442695
        %v5869 = vpow.pop %v5868
        %v5870 = vmul.f32 %v5270, 1.442695
        %v5871 = vpow.pop %v5870
        %v5872 = vmul.f32 %v5271, 1.442695
        %v5873 = vpow.pop %v5872
        %v5874 = vmul.f32 %v5272, 1.442695
        %v5875 = vpow.pop %v5874
        %v5876 = vmul.f32 %v5273, 1.442695
        %v5877 = vpow.pop %v5876
        %v5878 = vmul.f32 %v5274, 1.442695
        %v5879 = vpow.pop %v5878
        %v5880 = vmul.f32 %v5275, 1.442695
        %v5881 = vpow.pop %v5880
        %v5882 = vmul.f32 %v5276, 1.442695
        %v5883 = vpow.pop %v5882
        %v5884 = vmul.f32 %v5277, 1.442695
        %v5885 = vpow.pop %v5884
        %v5886 = vmul.f32 %v5278, 1.442695
        %v5887 = vpow.pop %v5886
        %v5888 = vmul.f32 %v5279, 1.442695
        %v5889 = vpow.pop %v5888
        %v5890 = vmul.f32 %v5280, 1.442695
        %v5891 = vpow.pop %v5890
        %v5892 = vmul.f32 %v5281, 1.442695
        %v5893 = vpow.pop %v5892
        %v5894 = vmul.f32 %v5282, 1.442695
        %v5895 = vpow.pop %v5894
        %v5896 = vmul.f32 %v5283, 1.442695
        %v5897 = vpow.pop %v5896
        %v5898 = vmul.f32 %v5284, 1.442695
        %v5899 = vpow.pop %v5898
        %v5900 = vmul.f32 %v5285, 1.442695
        %v5901 = vpow.pop %v5900
        %v5902 = vmul.f32 %v5286, 1.442695
        %v5903 = vpow.pop %v5902
        %v5904 = vmul.f32 %v5287, 1.442695
        %v5905 = vpow.pop %v5904
        %v5906 = vmul.f32 %v5288, 1.442695
        %v5907 = vpow.pop %v5906
        %v5908 = vmul.f32 %v5289, 1.442695
        %v5909 = vpow.pop %v5908
        %v5910 = vmul.f32 %v5290, 1.442695
        %v5911 = vpow.pop %v5910
        %v5912 = vmul.f32 %v5291, 1.442695
        %v5913 = vpow.pop %v5912
        %v5914 = vmul.f32 %v5292, 1.442695
        %v5915 = vpow.pop %v5914
        %v5916 = vmul.f32 %v5293, 1.442695
        %v5917 = vpow.pop %v5916
        %v5918 = vmul.f32 %v5294, 1.442695
        %v5919 = vpow.pop %v5918
        %v5920 = vmul.f32 %v5295, 1.442695
        %v5921 = vpow.pop %v5920
        %v5922 = vmul.f32 %v5296, 1.442695
        %v5923 = vpow.pop %v5922
        %v5924 = vmul.f32 %v5297, 1.442695
        %v5925 = vpow.pop %v5924
        %v5926 = vmul.f32 %v5298, 1.442695
        %v5927 = vpow.pop %v5926
        %v5928 = vmul.f32 %v5299, 1.442695
        %v5929 = vpow.pop %v5928
        %v5930 = vmul.f32 %v5300, 1.442695
        %v5931 = vpow.pop %v5930
        %v5932 = vmul.f32 %v5301, 1.442695
        %v5933 = vpow.pop %v5932
        %v5934 = vmul.f32 %v5302, 1.442695
        %v5935 = vpow.pop %v5934
        %v5936 = vmul.f32 %v5303, 1.442695
        %v5937 = vpow.pop %v5936
        %v5938 = vmul.f32 %v5304, 1.442695
        %v5939 = vpow.pop %v5938
        %v5940 = vmul.f32 %v5305, 1.442695
        %v5941 = vpow.pop %v5940
        %v5942 = vmul.f32 %v5306, 1.442695
        %v5943 = vpow.pop %v5942
        %v5944 = vmul.f32 %v5307, 1.442695
        %v5945 = vpow.pop %v5944
        %v5946 = vmul.f32 %v5308, 1.442695
        %v5947 = vpow.pop %v5946
        %v5948 = vmul.f32 %v5309, 1.442695
        %v5949 = vpow.pop %v5948
        %v5950 = vmul.f32 %v5310, 1.442695
        %v5951 = vpow.pop %v5950
        %v5952 = vmul.f32 %v5311, 1.442695
        %v5953 = vpow.pop %v5952
        %v5954 = vmul.f32 %v5312, 1.442695
        %v5955 = vpow.pop %v5954
        %v5956 = vmul.f32 %v5313, 1.442695
        %v5957 = vpow.pop %v5956
        %v5958 = vmul.f32 %v5314, 1.442695
        %v5959 = vpow.pop %v5958
        %v5960 = vmul.f32 %v5315, 1.442695
        %v5961 = vpow.pop %v5960
        %v5962 = vmul.f32 %v5316, 1.442695
        %v5963 = vpow.pop %v5962
        %v5964 = vmul.f32 %v5317, 1.442695
        %v5965 = vpow.pop %v5964
        %v5966 = vmul.f32 %v5318, 1.442695
        %v5967 = vpow.pop %v5966
        %v5968 = vmul.f32 %v5319, 1.442695
        %v5969 = vpow.pop %v5968
        %v5970 = vmul.f32 %v5320, 1.442695
        %v5971 = vpow.pop %v5970
        %v5972 = vmul.f32 %v5321, 1.442695
        %v5973 = vpow.pop %v5972
        %v5974 = vmul.f32 %v5322, 1.442695
        %v5975 = vpow.pop %v5974
        %v5976 = vmul.f32 %v5323, 1.442695
        %v5977 = vpow.pop %v5976
        %v5978 = vmul.f32 %v5324, 1.442695
        %v5979 = vpow.pop %v5978
        %v5980 = vmul.f32 %v5325, 1.442695
        %v5981 = vpow.pop %v5980
        %v5982 = vmul.f32 %v5326, 1.442695
        %v5983 = vpow.pop %v5982
        %v5984 = vmul.f32 %v5327, 1.442695
        %v5985 = vpow.pop %v5984
        %v5986 = vmul.f32 %v5328, 1.442695
        %v5987 = vpow.pop %v5986
        %v5988 = vmul.f32 %v5329, 1.442695
        %v5989 = vpow.pop %v5988
        %v5990 = vmul.f32 %v5330, 1.442695
        %v5991 = vpow.pop %v5990
        %v5992 = vmul.f32 %v5331, 1.442695
        %v5993 = vpow.pop %v5992
        %v5994 = vmul.f32 %v5332, 1.442695
        %v5995 = vpow.pop %v5994
        %v5996 = vmul.f32 %v5333, 1.442695
        %v5997 = vpow.pop %v5996
        %v5998 = vmul.f32 %v5334, 1.442695
        %v5999 = vpow.pop %v5998
        %v6000 = vmul.f32 %v5335, 1.442695
        %v6001 = vpow.pop %v6000
        %v6002 = vmul.f32 %v5336, 1.442695
        %v6003 = vpow.pop %v6002
        %v6004 = vmul.f32 %v5337, 1.442695
        %v6005 = vpow.pop %v6004
        %v6006 = vmul.f32 %v5338, 1.442695
        %v6007 = vpow.pop %v6006
        %v6008 = vmul.f32 %v5339, 1.442695
        %v6009 = vpow.pop %v6008
        %v6010 = vmul.f32 %v5340, 1.442695
        %v6011 = vpow.pop %v6010
        %v6012 = vmul.f32 %v5341, 1.442695
        %v6013 = vpow.pop %v6012
        %v6014 = vmul.f32 %v5342, 1.442695
        %v6015 = vpow.pop %v6014
        %v6016 = vmul.f32 %v5343, 1.442695
        %v6017 = vpow.pop %v6016
        %v6018 = vmul.f32 %v5344, 1.442695
        %v6019 = vpow.pop %v6018
        %v6020 = vmul.f32 %v5345, 1.442695
        %v6021 = vpow.pop %v6020
        %v6022 = vmul.f32 %v5346, 1.442695
        %v6023 = vpow.pop %v6022
        %v6024 = vmul.f32 %v5347, 1.442695
        %v6025 = vpow.pop %v6024
        %v6026 = vmul.f32 %v5348, 1.442695
        %v6027 = vpow.pop %v6026
        %v6028 = vmul.f32 %v5349, 1.442695
        %v6029 = vpow.pop %v6028
        %v6030 = vmul.f32 %v5350, 1.442695
        %v6031 = vpow.pop %v6030
        %v6032 = vmul.f32 %v5351, 1.442695
        %v6033 = vpow.pop %v6032
        %v6034 = vmul.f32 %v5352, 1.442695
        %v6035 = vpow.pop %v6034
        %v6036 = vmul.f32 %v5353, 1.442695
        %v6037 = vpow.pop %v6036
        %v6038 = vmul.f32 %v5354, 1.442695
        %v6039 = vpow.pop %v6038
        %v6040 = vmul.f32 %v5355, 1.442695
        %v6041 = vpow.pop %v6040
        %v6042 = vmul.f32 %v5356, 1.442695
        %v6043 = vpow.pop %v6042
        %v6044 = vmul.f32 %v5357, 1.442695
        %v6045 = vpow.pop %v6044
        %v6046 = vmul.f32 %v5358, 1.442695
        %v6047 = vpow.pop %v6046
        %v6048 = vmul.f32 %v5359, 1.442695
        %v6049 = vpow.pop %v6048
        %v6050 = vmul.f32 %v5360, 1.442695
        %v6051 = vpow.pop %v6050
        %v6052 = vmul.f32 %v5361, 1.442695
        %v6053 = vpow.pop %v6052
        %v6054 = vmul.f32 %v5362, 1.442695
        %v6055 = vpow.pop %v6054
        %v6056 = vmul.f32 %v5363, 1.442695
        %v6057 = vpow.pop %v6056
        %v6058 = vmul.f32 %v5364, 1.442695
        %v6059 = vpow.pop %v6058
        %v6060 = vmul.f32 %v5365, 1.442695
        %v6061 = vpow.pop %v6060
        %v6062 = vmul.f32 %v5366, 1.442695
        %v6063 = vpow.pop %v6062
        %v6064 = vmul.f32 %v5367, 1.442695
        %v6065 = vpow.pop %v6064
        %v6066 = vmul.f32 %v5368, 1.442695
        %v6067 = vpow.pop %v6066
        %v6068 = vmul.f32 %v5369, 1.442695
        %v6069 = vpow.pop %v6068
        %v6070 = vmul.f32 %v5370, 1.442695
        %v6071 = vpow.pop %v6070
        %v6072 = vmul.f32 %v5371, 1.442695
        %v6073 = vpow.pop %v6072
        %v6074 = vmul.f32 %v5372, 1.442695
        %v6075 = vpow.pop %v6074
        %v6076 = vmul.f32 %v5373, 1.442695
        %v6077 = vpow.pop %v6076
        %v6078 = vmul.f32 %v5374, 1.442695
        %v6079 = vpow.pop %v6078
        %v6080 = vmul.f32 %v5375, 1.442695
        %v6081 = vpow.pop %v6080
        %v6082 = vmul.f32 %v5376, 1.442695
        %v6083 = vpow.pop %v6082
        %v6084 = vmul.f32 %v5377, 1.442695
        %v6085 = vpow.pop %v6084
        %v6086 = vmul.f32 %v5378, 1.442695
        %v6087 = vpow.pop %v6086
        %v6088 = vmul.f32 %v5379, 1.442695
        %v6089 = vpow.pop %v6088
        %v6090 = vmul.f32 %v5380, 1.442695
        %v6091 = vpow.pop %v6090
        %v6092 = vmul.f32 %v5381, 1.442695
        %v6093 = vpow.pop %v6092
        %v6094 = vmul.f32 %v5382, 1.442695
        %v6095 = vpow.pop %v6094
        %v6096 = vmul.f32 %v5383, 1.442695
        %v6097 = vpow.pop %v6096
        %v6098 = vmul.f32 %v5384, 1.442695
        %v6099 = vpow.pop %v6098
        %v6100 = vmul.f32 %v5385, 1.442695
        %v6101 = vpow.pop %v6100
        %v6102 = vmul.f32 %v5386, 1.442695
        %v6103 = vpow.pop %v6102
        %v6104 = vmul.f32 %v5387, 1.442695
        %v6105 = vpow.pop %v6104
        %v6106 = vmul.f32 %v5388, 1.442695
        %v6107 = vpow.pop %v6106
        %v6108 = vmul.f32 %v5389, 1.442695
        %v6109 = vpow.pop %v6108
        %v6110 = vmul.f32 %v5390, 1.442695
        %v6111 = vpow.pop %v6110
        %v6112 = vmul.f32 %v5391, 1.442695
        %v6113 = vpow.pop %v6112
        %v6114 = vmul.f32 %v5392, 1.442695
        %v6115 = vpow.pop %v6114
        %v6116 = vmul.f32 %v5393, 1.442695
        %v6117 = vpow.pop %v6116
        %v6118 = vmul.f32 %v5394, 1.442695
        %v6119 = vpow.pop %v6118
        %v6120 = vmul.f32 %v5395, 1.442695
        %v6121 = vpow.pop %v6120
        %v6122 = vmul.f32 %v5396, 1.442695
        %v6123 = vpow.pop %v6122
        %v6124 = vmul.f32 %v5397, 1.442695
        %v6125 = vpow.pop %v6124
        %v6126 = vmul.f32 %v5398, 1.442695
        %v6127 = vpow.pop %v6126
        %v6128 = vmul.f32 %v5399, 1.442695
        %v6129 = vpow.pop %v6128
        %v6130 = vmul.f32 %v5400, 1.442695
        %v6131 = vpow.pop %v6130
        %v6132 = vmul.f32 %v5401, 1.442695
        %v6133 = vpow.pop %v6132
        %v6134 = vmul.f32 %v5402, 1.442695
        %v6135 = vpow.pop %v6134
        %v6136 = vmul.f32 %v5403, 1.442695
        %v6137 = vpow.pop %v6136
        %v6138 = vmul.f32 %v5404, 1.442695
        %v6139 = vpow.pop %v6138
        %v6140 = vmul.f32 %v5405, 1.442695
        %v6141 = vpow.pop %v6140
        %v6142 = vmul.f32 %v5406, 1.442695
        %v6143 = vpow.pop %v6142
        %v6144 = vmul.f32 %v5407, 1.442695
        %v6145 = vpow.pop %v6144
        %v6146 = vmul.f32 %v5408, 1.442695
        %v6147 = vpow.pop %v6146
        %v6148 = vmul.f32 %v5409, 1.442695
        %v6149 = vpow.pop %v6148
        %v6150 = vmul.f32 %v5410, 1.442695
        %v6151 = vpow.pop %v6150
        %v6152 = vmul.f32 %v5411, 1.442695
        %v6153 = vpow.pop %v6152
        %v6154 = vmul.f32 %v5412, 1.442695
        %v6155 = vpow.pop %v6154
        %v6156 = vmul.f32 %v5413, 1.442695
        %v6157 = vpow.pop %v6156
        %v6158 = vmul.f32 %v5414, 1.442695
        %v6159 = vpow.pop %v6158
        %v6160 = vmul.f32 %v5415, 1.442695
        %v6161 = vpow.pop %v6160
        %v6162 = vmul.f32 %v5416, 1.442695
        %v6163 = vpow.pop %v6162
        %v6164 = vmul.f32 %v5417, 1.442695
        %v6165 = vpow.pop %v6164
        %v6166 = vmul.f32 %v5418, 1.442695
        %v6167 = vpow.pop %v6166
        %v6168 = vmul.f32 %v5419, 1.442695
        %v6169 = vpow.pop %v6168
        %v6170 = vmul.f32 %v5420, 1.442695
        %v6171 = vpow.pop %v6170
        %v6172 = vmul.f32 %v5421, 1.442695
        %v6173 = vpow.pop %v6172
        %v6174 = vmul.f32 %v5422, 1.442695
        %v6175 = vpow.pop %v6174
        %v6176 = vmul.f32 %v5423, 1.442695
        %v6177 = vpow.pop %v6176
        %v6178 = vmul.f32 %v5424, 1.442695
        %v6179 = vpow.pop %v6178
        %v6180 = vmul.f32 %v5425, 1.442695
        %v6181 = vpow.pop %v6180
        %v6182 = vmul.f32 %v5426, 1.442695
        %v6183 = vpow.pop %v6182
        %v6184 = vmul.f32 %v5427, 1.442695
        %v6185 = vpow.pop %v6184
        %v6186 = vmul.f32 %v5428, 1.442695
        %v6187 = vpow.pop %v6186
        %v6188 = vmul.f32 %v5429, 1.442695
        %v6189 = vpow.pop %v6188
        %v6190 = vmul.f32 %v5430, 1.442695
        %v6191 = vpow.pop %v6190
        %v6192 = vmul.f32 %v5431, 1.442695
        %v6193 = vpow.pop %v6192
        %v6194 = vmul.f32 %v5432, 1.442695
        %v6195 = vpow.pop %v6194
        %v6196 = vmul.f32 %v5433, 1.442695
        %v6197 = vpow.pop %v6196
        %v6198 = vmul.f32 %v5434, 1.442695
        %v6199 = vpow.pop %v6198
        %v6200 = vmul.f32 %v5435, 1.442695
        %v6201 = vpow.pop %v6200
        %v6202 = vmul.f32 %v5436, 1.442695
        %v6203 = vpow.pop %v6202
        %v6204 = vmul.f32 %v5437, 1.442695
        %v6205 = vpow.pop %v6204
        %v6206 = vmul.f32 %v5438, 1.442695
        %v6207 = vpow.pop %v6206
        %v6208 = vmul.f32 %v5439, 1.442695
        %v6209 = vpow.pop %v6208
        %v6210 = vmul.f32 %v5440, 1.442695
        %v6211 = vpow.pop %v6210
        %v6212 = vmul.f32 %v5441, 1.442695
        %v6213 = vpow.pop %v6212
        %v6214 = vmul.f32 %v5442, 1.442695
        %v6215 = vpow.pop %v6214
        %v6216 = vmul.f32 %v5443, 1.442695
        %v6217 = vpow.pop %v6216
        %v6218 = vmul.f32 %v5444, 1.442695
        %v6219 = vpow.pop %v6218
        %v6220 = vmul.f32 %v5445, 1.442695
        %v6221 = vpow.pop %v6220
        %v6222 = vmul.f32 %v5446, 1.442695
        %v6223 = vpow.pop %v6222
        %v6224 = vmul.f32 %v5447, 1.442695
        %v6225 = vpow.pop %v6224
        %v6226 = vmul.f32 %v5448, 1.442695
        %v6227 = vpow.pop %v6226
        %v6228 = vmul.f32 %v5449, 1.442695
        %v6229 = vpow.pop %v6228
        %v6230 = vmul.f32 %v5450, 1.442695
        %v6231 = vpow.pop %v6230
        %v6232 = vmul.f32 %v5451, 1.442695
        %v6233 = vpow.pop %v6232
        %v6234 = vmul.f32 %v5452, 1.442695
        %v6235 = vpow.pop %v6234
        %v6236 = vmul.f32 %v5453, 1.442695
        %v6237 = vpow.pop %v6236
        %v6238 = vmul.f32 %v5454, 1.442695
        %v6239 = vpow.pop %v6238
        %v6240 = vmul.f32 %v5455, 1.442695
        %v6241 = vpow.pop %v6240
        %v6242 = vmul.f32 %v5456, 1.442695
        %v6243 = vpow.pop %v6242
        %v6244 = vmul.f32 %v5457, 1.442695
        %v6245 = vpow.pop %v6244
        %v6246 = vmul.f32 %v5458, 1.442695
        %v6247 = vpow.pop %v6246
        %v6248 = vmul.f32 %v5459, 1.442695
        %v6249 = vpow.pop %v6248
        %v6250 = vmul.f32 %v5460, 1.442695
        %v6251 = vpow.pop %v6250
        %v6252 = vmul.f32 %v5461, 1.442695
        %v6253 = vpow.pop %v6252
        %v6254 = vmul.f32 %v5462, 1.442695
        %v6255 = vpow.pop %v6254
        %v6256 = vmul.f32 %v5463, 1.442695
        %v6257 = vpow.pop %v6256
        %v6258 = vmul.f32 %v5464, 1.442695
        %v6259 = vpow.pop %v6258
        %v6260 = vmul.f32 %v5465, 1.442695
        %v6261 = vpow.pop %v6260
        %v6262 = vmul.f32 %v5466, 1.442695
        %v6263 = vpow.pop %v6262
        %v6264 = vmul.f32 %v5467, 1.442695
        %v6265 = vpow.pop %v6264
        %v6266 = vmul.f32 %v5468, 1.442695
        %v6267 = vpow.pop %v6266
        %v6268 = vmul.f32 %v5469, 1.442695
        %v6269 = vpow.pop %v6268
        %v6270 = vmul.f32 %v5470, 1.442695
        %v6271 = vpow.pop %v6270
        %v6272 = vmul.f32 %v5471, 1.442695
        %v6273 = vpow.pop %v6272
        %v6274 = vmul.f32 %v5472, 1.442695
        %v6275 = vpow.pop %v6274
        %v6276 = vmul.f32 %v5473, 1.442695
        %v6277 = vpow.pop %v6276
        %v6278 = vmul.f32 %v5474, 1.442695
        %v6279 = vpow.pop %v6278
        %v6280 = vmul.f32 %v5475, 1.442695
        %v6281 = vpow.pop %v6280
        %v6282 = vmul.f32 %v5476, 1.442695
        %v6283 = vpow.pop %v6282
        %v6284 = vmul.f32 %v5477, 1.442695
        %v6285 = vpow.pop %v6284
        %v6286 = vmul.f32 %v5478, 1.442695
        %v6287 = vpow.pop %v6286
        %v6288 = vmul.f32 %v5479, 1.442695
        %v6289 = vpow.pop %v6288
        %v6290 = vmul.f32 %v5480, 1.442695
        %v6291 = vpow.pop %v6290
        %v6292 = vmul.f32 %v5481, 1.442695
        %v6293 = vpow.pop %v6292
        %v6294 = vmul.f32 %v5482, 1.442695
        %v6295 = vpow.pop %v6294
        %v6296 = vmul.f32 %v5483, 1.442695
        %v6297 = vpow.pop %v6296
        %v6298 = vmul.f32 %v5484, 1.442695
        %v6299 = vpow.pop %v6298
        %v6300 = vmul.f32 %v5485, 1.442695
        %v6301 = vpow.pop %v6300
        %v6302 = vmul.f32 %v5486, 1.442695
        %v6303 = vpow.pop %v6302
        %v6304 = vmul.f32 %v5487, 1.442695
        %v6305 = vpow.pop %v6304
        %v6306 = vmul.f32 %v5488, 1.442695
        %v6307 = vpow.pop %v6306
        %v6308 = vmul.f32 %v5489, 1.442695
        %v6309 = vpow.pop %v6308
        %v6310 = vmul.f32 %v5490, 1.442695
        %v6311 = vpow.pop %v6310
        %v6312 = vmul.f32 %v5491, 1.442695
        %v6313 = vpow.pop %v6312
        %v6314 = vmul.f32 %v5492, 1.442695
        %v6315 = vpow.pop %v6314
        %v6316 = vmul.f32 %v5493, 1.442695
        %v6317 = vpow.pop %v6316
        %v6318 = vmul.f32 %v5494, 1.442695
        %v6319 = vpow.pop %v6318
        %v6320 = vmul.f32 %v5495, 1.442695
        %v6321 = vpow.pop %v6320
        %v6322 = vmul.f32 %v5496, 1.442695
        %v6323 = vpow.pop %v6322
        %v6324 = vmul.f32 %v5497, 1.442695
        %v6325 = vpow.pop %v6324
        %v6326 = vmul.f32 %v5498, 1.442695
        %v6327 = vpow.pop %v6326
        %v6328 = vmul.f32 %v5499, 1.442695
        %v6329 = vpow.pop %v6328
        %v6330 = vmul.f32 %v5500, 1.442695
        %v6331 = vpow.pop %v6330
        %v6332 = vmul.f32 %v5501, 1.442695
        %v6333 = vpow.pop %v6332
        %v6334 = vmul.f32 %v5502, 1.442695
        %v6335 = vpow.pop %v6334
        %v6336 = vmul.f32 %v5503, 1.442695
        %v6337 = vpow.pop %v6336
        %v6338 = vmul.f32 %v5504, 1.442695
        %v6339 = vpow.pop %v6338
        %v6340 = vmul.f32 %v5505, 1.442695
        %v6341 = vpow.pop %v6340
        %v6342 = vmul.f32 %v5506, 1.442695
        %v6343 = vpow.pop %v6342
        %v6344 = vmul.f32 %v5507, 1.442695
        %v6345 = vpow.pop %v6344
        %v6346 = vmul.f32 %v5508, 1.442695
        %v6347 = vpow.pop %v6346
        %v6348 = vmul.f32 %v5509, 1.442695
        %v6349 = vpow.pop %v6348
        %v6350 = vmul.f32 %v5510, 1.442695
        %v6351 = vpow.pop %v6350
        %v6352 = vmul.f32 %v5511, 1.442695
        %v6353 = vpow.pop %v6352
        %v6354 = vmul.f32 %v5512, 1.442695
        %v6355 = vpow.pop %v6354
        %v6356 = vmul.f32 %v5513, 1.442695
        %v6357 = vpow.pop %v6356
        %v6358 = vmul.f32 %v5514, 1.442695
        %v6359 = vpow.pop %v6358
        %v6360 = vmul.f32 %v5515, 1.442695
        %v6361 = vpow.pop %v6360
        %v6362 = vmul.f32 %v5516, 1.442695
        %v6363 = vpow.pop %v6362
        %v6364 = vmul.f32 %v5517, 1.442695
        %v6365 = vpow.pop %v6364
        %v6366 = vmul.f32 %v5518, 1.442695
        %v6367 = vpow.pop %v6366
        %v6368 = vmul.f32 %v5519, 1.442695
        %v6369 = vpow.pop %v6368
        %v6370 = vmul.f32 %v5520, 1.442695
        %v6371 = vpow.pop %v6370
        %v6372 = vmul.f32 %v5521, 1.442695
        %v6373 = vpow.pop %v6372
        %v6374 = vmul.f32 %v5522, 1.442695
        %v6375 = vpow.pop %v6374
        %v6376 = vmul.f32 %v5523, 1.442695
        %v6377 = vpow.pop %v6376
        %v6378 = vmul.f32 %v5524, 1.442695
        %v6379 = vpow.pop %v6378
        %v6380 = vmul.f32 %v5525, 1.442695
        %v6381 = vpow.pop %v6380
        %v6382 = vmul.f32 %v5526, 1.442695
        %v6383 = vpow.pop %v6382
        %v6384 = vmul.f32 %v5527, 1.442695
        %v6385 = vpow.pop %v6384
        %v6386 = vmul.f32 %v5528, 1.442695
        %v6387 = vpow.pop %v6386
        %v6388 = vmul.f32 %v5529, 1.442695
        %v6389 = vpow.pop %v6388
        %v6390 = vmul.f32 %v5530, 1.442695
        %v6391 = vpow.pop %v6390
        %v6392 = vmul.f32 %v5531, 1.442695
        %v6393 = vpow.pop %v6392
        %v6394 = vmul.f32 %v5532, 1.442695
        %v6395 = vpow.pop %v6394
        %v6396 = vmul.f32 %v5533, 1.442695
        %v6397 = vpow.pop %v6396
        %v6398 = vmul.f32 %v5534, 1.442695
        %v6399 = vpow.pop %v6398
        %v6400 = vmul.f32 %v5535, 1.442695
        %v6401 = vpow.pop %v6400
        %v6402 = vmul.f32 %v5536, 1.442695
        %v6403 = vpow.pop %v6402
        %v6404 = vmul.f32 %v5537, 1.442695
        %v6405 = vpow.pop %v6404
        %v6406 = vmul.f32 %v5538, 1.442695
        %v6407 = vpow.pop %v6406
        %v6408 = vmul.f32 %v5539, 1.442695
        %v6409 = vpow.pop %v6408
        %v6410 = vmul.f32 %v5540, 1.442695
        %v6411 = vpow.pop %v6410
        %v6412 = vmul.f32 %v5541, 1.442695
        %v6413 = vpow.pop %v6412
        %v6414 = vmul.f32 %v5542, 1.442695
        %v6415 = vpow.pop %v6414
        %v6416 = vmul.f32 %v5543, 1.442695
        %v6417 = vpow.pop %v6416
        %v6418 = vmul.f32 %v5544, 1.442695
        %v6419 = vpow.pop %v6418
        %v6420 = vmul.f32 %v5545, 1.442695
        %v6421 = vpow.pop %v6420
        %v6422 = vmul.f32 %v5546, 1.442695
        %v6423 = vpow.pop %v6422
        %v6424 = vmul.f32 %v5547, 1.442695
        %v6425 = vpow.pop %v6424
        %v6426 = vmul.f32 %v5548, 1.442695
        %v6427 = vpow.pop %v6426
        %v6428 = vmul.f32 %v5549, 1.442695
        %v6429 = vpow.pop %v6428
        %v6430 = vmul.f32 %v5550, 1.442695
        %v6431 = vpow.pop %v6430
        %v6432 = vmul.f32 %v5551, 1.442695
        %v6433 = vpow.pop %v6432
        %v6434 = vmul.f32 %v5552, 1.442695
        %v6435 = vpow.pop %v6434
        %v6436 = vmul.f32 %v5553, 1.442695
        %v6437 = vpow.pop %v6436
        %v6438 = vmul.f32 %v5554, 1.442695
        %v6439 = vpow.pop %v6438
        %v6440 = vmul.f32 %v5555, 1.442695
        %v6441 = vpow.pop %v6440
        %v6442 = vmul.f32 %v5556, 1.442695
        %v6443 = vpow.pop %v6442
        %v6444 = vmul.f32 %v5557, 1.442695
        %v6445 = vpow.pop %v6444
        %v6446 = vmul.f32 %v5558, 1.442695
        %v6447 = vpow.pop %v6446
        %v6448 = vmul.f32 %v5559, 1.442695
        %v6449 = vpow.pop %v6448
        %v6450 = vmul.f32 %v5560, 1.442695
        %v6451 = vpow.pop %v6450
        %v6452 = vmul.f32 %v5561, 1.442695
        %v6453 = vpow.pop %v6452
        %v6454 = vmul.f32 %v5562, 1.442695
        %v6455 = vpow.pop %v6454
        %v6456 = vmul.f32 %v5563, 1.442695
        %v6457 = vpow.pop %v6456
        %v6458 = vmul.f32 %v5564, 1.442695
        %v6459 = vpow.pop %v6458
        %v6460 = vmul.f32 %v5565, 1.442695
        %v6461 = vpow.pop %v6460
        %v6462 = vmul.f32 %v5566, 1.442695
        %v6463 = vpow.pop %v6462
        %v6464 = vmul.f32 %v5567, 1.442695
        %v6465 = vpow.pop %v6464
        %v6466 = vmul.f32 %v5568, 1.442695
        %v6467 = vpow.pop %v6466
        %v6468 = vmul.f32 %v5569, 1.442695
        %v6469 = vpow.pop %v6468
        %v6470 = vmul.f32 %v5570, 1.442695
        %v6471 = vpow.pop %v6470
        %v6472 = vmul.f32 %v5571, 1.442695
        %v6473 = vpow.pop %v6472
        %v6474 = vmul.f32 %v5572, 1.442695
        %v6475 = vpow.pop %v6474
        %v6476 = vmul.f32 %v5573, 1.442695
        %v6477 = vpow.pop %v6476
        %v6478 = vmul.f32 %v5574, 1.442695
        %v6479 = vpow.pop %v6478
        %v6480 = vmul.f32 %v5575, 1.442695
        %v6481 = vpow.pop %v6480
        %v6482 = vmul.f32 %v5576, 1.442695
        %v6483 = vpow.pop %v6482
        %v6484 = vmul.f32 %v5577, 1.442695
        %v6485 = vpow.pop %v6484
        %v6486 = vmul.f32 %v5578, 1.442695
        %v6487 = vpow.pop %v6486
        %v6488 = vmul.f32 %v5579, 1.442695
        %v6489 = vpow.pop %v6488
        %v6490 = vmul.f32 %v5580, 1.442695
        %v6491 = vpow.pop %v6490
        %v6492 = vmul.f32 %v5581, 1.442695
        %v6493 = vpow.pop %v6492
        %v6494 = vmul.f32 %v5582, 1.442695
        %v6495 = vpow.pop %v6494
        %v6496 = vmul.f32 %v5583, 1.442695
        %v6497 = vpow.pop %v6496
        %v6498 = vmul.f32 %v5584, 1.442695
        %v6499 = vpow.pop %v6498
        %v6500 = vmul.f32 %v5585, 1.442695
        %v6501 = vpow.pop %v6500
        %v6502 = vmul.f32 %v5586, 1.442695
        %v6503 = vpow.pop %v6502
        %v6504 = vmul.f32 %v5587, 1.442695
        %v6505 = vpow.pop %v6504
        %v6506 = vmul.f32 %v5588, 1.442695
        %v6507 = vpow.pop %v6506
        %v6508 = vmul.f32 %v5589, 1.442695
        %v6509 = vpow.pop %v6508
        %v6510 = vmul.f32 %v5590, 1.442695
        %v6511 = vpow.pop %v6510
        %v6512 = vmul.f32 %v5591, 1.442695
        %v6513 = vpow.pop %v6512
        %v6514 = vmul.f32 %v5592, 1.442695
        %v6515 = vpow.pop %v6514
        %v6516 = vmul.f32 %v5593, 1.442695
        %v6517 = vpow.pop %v6516
        %v6518 = vmul.f32 %v5594, 1.442695
        %v6519 = vpow.pop %v6518
        %v6520 = vmul.f32 %v5595, 1.442695
        %v6521 = vpow.pop %v6520
        %v6522 = vmul.f32 %v5596, 1.442695
        %v6523 = vpow.pop %v6522
        %v6524 = vmul.f32 %v5597, 1.442695
        %v6525 = vpow.pop %v6524
        %v6526 = vmul.f32 %v5598, 1.442695
        %v6527 = vpow.pop %v6526
        %v6528 = vmul.f32 %v5599, 1.442695
        %v6529 = vpow.pop %v6528
        %v6530 = vmul.f32 %v5600, 1.442695
        %v6531 = vpow.pop %v6530
        %v6532 = vmul.f32 %v5601, 1.442695
        %v6533 = vpow.pop %v6532
        %v6534 = vmul.f32 %v5602, 1.442695
        %v6535 = vpow.pop %v6534
        %v6536 = vmul.f32 %v5603, 1.442695
        %v6537 = vpow.pop %v6536
        %v6538 = vmul.f32 %v5604, 1.442695
        %v6539 = vpow.pop %v6538
        %v6540 = vmul.f32 %v5605, 1.442695
        %v6541 = vpow.pop %v6540
        %v6542 = vmul.f32 %v5606, 1.442695
        %v6543 = vpow.pop %v6542
        %v6544 = vmul.f32 %v5607, 1.442695
        %v6545 = vpow.pop %v6544
        %v6546 = vmul.f32 %v5608, 1.442695
        %v6547 = vpow.pop %v6546
        %v6548 = vmul.f32 %v5609, 1.442695
        %v6549 = vpow.pop %v6548
        %v6550 = vmul.f32 %v5610, 1.442695
        %v6551 = vpow.pop %v6550
        %v6552 = vmul.f32 %v5611, 1.442695
        %v6553 = vpow.pop %v6552
        %v6554 = vmul.f32 %v5612, 1.442695
        %v6555 = vpow.pop %v6554
        %v6556 = vmul.f32 %v5613, 1.442695
        %v6557 = vpow.pop %v6556
        %v6558 = vmul.f32 %v5614, 1.442695
        %v6559 = vpow.pop %v6558
        %v6560 = vmul.f32 %v5615, 1.442695
        %v6561 = vpow.pop %v6560
        %v6562 = vmul.f32 %v5616, 1.442695
        %v6563 = vpow.pop %v6562
        %v6564 = vmul.f32 %v5617, 1.442695
        %v6565 = vpow.pop %v6564
        %v6566 = vmul.f32 %v5618, 1.442695
        %v6567 = vpow.pop %v6566
        %v6568 = vmul.f32 %v5619, 1.442695
        %v6569 = vpow.pop %v6568
        %v6570 = vmul.f32 %v5620, 1.442695
        %v6571 = vpow.pop %v6570
        %v6572 = vmul.f32 %v5621, 1.442695
        %v6573 = vpow.pop %v6572
        %v6574 = vmul.f32 %v5622, 1.442695
        %v6575 = vpow.pop %v6574
        %v6576 = vmul.f32 %v5623, 1.442695
        %v6577 = vpow.pop %v6576
        %v6578 = vmul.f32 %v5624, 1.442695
        %v6579 = vpow.pop %v6578
        %v6580 = vmul.f32 %v5625, 1.442695
        %v6581 = vpow.pop %v6580
        %v6582 = vmul.f32 %v5626, 1.442695
        %v6583 = vpow.pop %v6582
        %v6584 = vmul.f32 %v5627, 1.442695
        %v6585 = vpow.pop %v6584
        %v6586 = vmul.f32 %v5628, 1.442695
        %v6587 = vpow.pop %v6586
        %v6588 = vmul.f32 %v5629, 1.442695
        %v6589 = vpow.pop %v6588
        %v6590 = vmul.f32 %v5630, 1.442695
        %v6591 = vpow.pop %v6590
        %v6592 = vmul.f32 %v5631, 1.442695
        %v6593 = vpow.pop %v6592
        %v6594 = vmul.f32 %v5632, 1.442695
        %v6595 = vpow.pop %v6594
        %v6596 = vmul.f32 %v5633, 1.442695
        %v6597 = vpow.pop %v6596
        %v6598 = vmul.f32 %v5634, 1.442695
        %v6599 = vpow.pop %v6598
        %v6600 = vmul.f32 %v5635, 1.442695
        %v6601 = vpow.pop %v6600
        %v6602 = vmul.f32 %v5636, 1.442695
        %v6603 = vpow.pop %v6602
        %v6604 = vmul.f32 %v5637, 1.442695
        %v6605 = vpow.pop %v6604
        %v6606 = vmul.f32 %v5638, 1.442695
        %v6607 = vpow.pop %v6606
        %v6608 = vmul.f32 %v5639, 1.442695
        %v6609 = vpow.pop %v6608
        %v6610 = vmul.f32 %v5640, 1.442695
        %v6611 = vpow.pop %v6610
        %v6612 = vmul.f32 %v5641, 1.442695
        %v6613 = vpow.pop %v6612
        %v6614 = vmul.f32 %v5642, 1.442695
        %v6615 = vpow.pop %v6614
        %v6616 = vmul.f32 %v5643, 1.442695
        %v6617 = vpow.pop %v6616
        %v6618 = vmul.f32 %v5644, 1.442695
        %v6619 = vpow.pop %v6618
        %v6620 = vmul.f32 %v5645, 1.442695
        %v6621 = vpow.pop %v6620
        %v6622 = vmul.f32 %v5646, 1.442695
        %v6623 = vpow.pop %v6622
        %v6624 = vmul.f32 %v5647, 1.442695
        %v6625 = vpow.pop %v6624
        %v6626 = vmul.f32 %v5648, 1.442695
        %v6627 = vpow.pop %v6626
        %v6628 = vmul.f32 %v5649, 1.442695
        %v6629 = vpow.pop %v6628
        %v6630 = vmul.f32 %v5650, 1.442695
        %v6631 = vpow.pop %v6630
        %v6632 = vmul.f32 %v5651, 1.442695
        %v6633 = vpow.pop %v6632
        %v6634 = vmul.f32 %v5652, 1.442695
        %v6635 = vpow.pop %v6634
        %v6636 = vmul.f32 %v5653, 1.442695
        %v6637 = vpow.pop %v6636
        %v6638 = vmul.f32 %v5654, 1.442695
        %v6639 = vpow.pop %v6638
        %v6640 = vmul.f32 %v5655, 1.442695
        %v6641 = vpow.pop %v6640
        %v6642 = vmul.f32 %v5656, 1.442695
        %v6643 = vpow.pop %v6642
        %v6644 = vmul.f32 %v5657, 1.442695
        %v6645 = vpow.pop %v6644
        %v6646 = vmul.f32 %v5658, 1.442695
        %v6647 = vpow.pop %v6646
        %v6648 = vmul.f32 %v5659, 1.442695
        %v6649 = vpow.pop %v6648
        %v6650 = vmul.f32 %v5660, 1.442695
        %v6651 = vpow.pop %v6650
        %v6652 = vmul.f32 %v5661, 1.442695
        %v6653 = vpow.pop %v6652
        %v6654 = vmul.f32 %v5662, 1.442695
        %v6655 = vpow.pop %v6654
        %v6656 = vmul.f32 %v5663, 1.442695
        %v6657 = vpow.pop %v6656
        %v6658 = vmul.f32 %v5664, 1.442695
        %v6659 = vpow.pop %v6658
        %v6660 = vmul.f32 %v5665, 1.442695
        %v6661 = vpow.pop %v6660
        %v6662 = vmul.f32 %v5666, 1.442695
        %v6663 = vpow.pop %v6662
        %v6664 = vmul.f32 %v5667, 1.442695
        %v6665 = vpow.pop %v6664
        %v6666 = vmul.f32 %v5668, 1.442695
        %v6667 = vpow.pop %v6666
        %v6668 = vmul.f32 %v5669, 1.442695
        %v6669 = vpow.pop %v6668
        %v6670 = vmul.f32 %v5670, 1.442695
        %v6671 = vpow.pop %v6670
        %v6672 = vmul.f32 %v5671, 1.442695
        %v6673 = vpow.pop %v6672
        %v6674 = vmul.f32 %v5672, 1.442695
        %v6675 = vpow.pop %v6674
        %v6676 = vmul.f32 %v5673, 1.442695
        %v6677 = vpow.pop %v6676
        %v6678 = vmul.f32 %v5674, 1.442695
        %v6679 = vpow.pop %v6678
        %v6680 = vmul.f32 %v5675, 1.442695
        %v6681 = vpow.pop %v6680
        %v6682 = vmul.f32 %v5676, 1.442695
        %v6683 = vpow.pop %v6682
        %v6684 = vmul.f32 %v5677, 1.442695
        %v6685 = vpow.pop %v6684
        %v6686 = vmul.f32 %v5678, 1.442695
        %v6687 = vpow.pop %v6686
        %v6688 = vmul.f32 %v5679, 1.442695
        %v6689 = vpow.pop %v6688
        %v6690 = vmul.f32 %v5680, 1.442695
        %v6691 = vpow.pop %v6690
        %v6692 = vmul.f32 %v5681, 1.442695
        %v6693 = vpow.pop %v6692
        %v6694 = vmul.f32 %v5682, 1.442695
        %v6695 = vpow.pop %v6694
        %v6696 = vmul.f32 %v5683, 1.442695
        %v6697 = vpow.pop %v6696
        %v6698 = vmul.f32 %v5684, 1.442695
        %v6699 = vpow.pop %v6698
        %v6700 = vmul.f32 %v5685, 1.442695
        %v6701 = vpow.pop %v6700
        %v6702 = vmul.f32 %v5686, 1.442695
        %v6703 = vpow.pop %v6702
        %v6704 = vmul.f32 %v5687, 1.442695
        %v6705 = vpow.pop %v6704
        %v6706 = vmul.f32 %v5688, 1.442695
        %v6707 = vpow.pop %v6706
        %v6708 = vmul.f32 %v5689, 1.442695
        %v6709 = vpow.pop %v6708
        %v6710 = vmul.f32 %v5690, 1.442695
        %v6711 = vpow.pop %v6710
        %v6712 = vmul.f32 %v5691, 1.442695
        %v6713 = vpow.pop %v6712
        %v6714 = vmul.f32 %v5692, 1.442695
        %v6715 = vpow.pop %v6714
        %v6716 = vmul.f32 %v5693, 1.442695
        %v6717 = vpow.pop %v6716
        %v6718 = vadd.f32 %v5695, %v5697
        %6719 = vadd.xlane.f32.xlu0 %v6718
        %v6720 = vpop.xlane.xlu0 %6719
        %v6721 = vadd.f32 %v5699, %v5701
        %6722 = vadd.xlane.f32.xlu0 %v6721
        %v6723 = vpop.xlane.xlu0 %6722
        %v6724 = vadd.f32 %v5703, %v5705
        %6725 = vadd.xlane.f32.xlu0 %v6724
        %v6726 = vpop.xlane.xlu0 %6725
        %v6727 = vadd.f32 %v5707, %v5709
        %6728 = vadd.xlane.f32.xlu0 %v6727
        %v6729 = vpop.xlane.xlu0 %6728
        %v6730 = vadd.f32 %v5711, %v5713
        %6731 = vadd.xlane.f32.xlu0 %v6730
        %v6732 = vpop.xlane.xlu0 %6731
        %v6733 = vadd.f32 %v5715, %v5717
        %6734 = vadd.xlane.f32.xlu0 %v6733
        %v6735 = vpop.xlane.xlu0 %6734
        %v6736 = vadd.f32 %v5719, %v5721
        %6737 = vadd.xlane.f32.xlu0 %v6736
        %v6738 = vpop.xlane.xlu0 %6737
        %v6739 = vadd.f32 %v5723, %v5725
        %6740 = vadd.xlane.f32.xlu0 %v6739
        %v6741 = vpop.xlane.xlu0 %6740
        %v6742 = vadd.f32 %v5727, %v5729
        %6743 = vadd.xlane.f32.xlu0 %v6742
        %v6744 = vpop.xlane.xlu0 %6743
        %v6745 = vadd.f32 %v5731, %v5733
        %6746 = vadd.xlane.f32.xlu0 %v6745
        %v6747 = vpop.xlane.xlu0 %6746
        %v6748 = vadd.f32 %v5735, %v5737
        %6749 = vadd.xlane.f32.xlu0 %v6748
        %v6750 = vpop.xlane.xlu0 %6749
        %v6751 = vadd.f32 %v5739, %v5741
        %6752 = vadd.xlane.f32.xlu0 %v6751
        %v6753 = vpop.xlane.xlu0 %6752
        %v6754 = vadd.f32 %v5743, %v5745
        %6755 = vadd.xlane.f32.xlu0 %v6754
        %v6756 = vpop.xlane.xlu0 %6755
        %v6757 = vadd.f32 %v5747, %v5749
        %6758 = vadd.xlane.f32.xlu0 %v6757
        %v6759 = vpop.xlane.xlu0 %6758
        %v6760 = vadd.f32 %v5751, %v5753
        %6761 = vadd.xlane.f32.xlu0 %v6760
        %v6762 = vpop.xlane.xlu0 %6761
        %v6763 = vadd.f32 %v5755, %v5757
        %6764 = vadd.xlane.f32.xlu0 %v6763
        %v6765 = vpop.xlane.xlu0 %6764
        %v6766 = vadd.f32 %v5759, %v5761
        %6767 = vadd.xlane.f32.xlu0 %v6766
        %v6768 = vpop.xlane.xlu0 %6767
        %v6769 = vadd.f32 %v5763, %v5765
        %6770 = vadd.xlane.f32.xlu0 %v6769
        %v6771 = vpop.xlane.xlu0 %6770
        %v6772 = vadd.f32 %v5767, %v5769
        %6773 = vadd.xlane.f32.xlu0 %v6772
        %v6774 = vpop.xlane.xlu0 %6773
        %v6775 = vadd.f32 %v5771, %v5773
        %6776 = vadd.xlane.f32.xlu0 %v6775
        %v6777 = vpop.xlane.xlu0 %6776
        %v6778 = vadd.f32 %v5775, %v5777
        %6779 = vadd.xlane.f32.xlu0 %v6778
        %v6780 = vpop.xlane.xlu0 %6779
        %v6781 = vadd.f32 %v5779, %v5781
        %6782 = vadd.xlane.f32.xlu0 %v6781
        %v6783 = vpop.xlane.xlu0 %6782
        %v6784 = vadd.f32 %v5783, %v5785
        %6785 = vadd.xlane.f32.xlu0 %v6784
        %v6786 = vpop.xlane.xlu0 %6785
        %v6787 = vadd.f32 %v5787, %v5789
        %6788 = vadd.xlane.f32.xlu0 %v6787
        %v6789 = vpop.xlane.xlu0 %6788
        %v6790 = vadd.f32 %v5791, %v5793
        %6791 = vadd.xlane.f32.xlu0 %v6790
        %v6792 = vpop.xlane.xlu0 %6791
        %v6793 = vadd.f32 %v5795, %v5797
        %6794 = vadd.xlane.f32.xlu0 %v6793
        %v6795 = vpop.xlane.xlu0 %6794
        %v6796 = vadd.f32 %v5799, %v5801
        %6797 = vadd.xlane.f32.xlu0 %v6796
        %v6798 = vpop.xlane.xlu0 %6797
        %v6799 = vadd.f32 %v5803, %v5805
        %6800 = vadd.xlane.f32.xlu0 %v6799
        %v6801 = vpop.xlane.xlu0 %6800
        %v6802 = vadd.f32 %v5807, %v5809
        %6803 = vadd.xlane.f32.xlu0 %v6802
        %v6804 = vpop.xlane.xlu0 %6803
        %v6805 = vadd.f32 %v5811, %v5813
        %6806 = vadd.xlane.f32.xlu0 %v6805
        %v6807 = vpop.xlane.xlu0 %6806
        %v6808 = vadd.f32 %v5815, %v5817
        %6809 = vadd.xlane.f32.xlu0 %v6808
        %v6810 = vpop.xlane.xlu0 %6809
        %v6811 = vadd.f32 %v5819, %v5821
        %6812 = vadd.xlane.f32.xlu0 %v6811
        %v6813 = vpop.xlane.xlu0 %6812
        %v6814 = vadd.f32 %v5823, %v5825
        %6815 = vadd.xlane.f32.xlu0 %v6814
        %v6816 = vpop.xlane.xlu0 %6815
        %v6817 = vadd.f32 %v5827, %v5829
        %6818 = vadd.xlane.f32.xlu0 %v6817
        %v6819 = vpop.xlane.xlu0 %6818
        %v6820 = vadd.f32 %v5831, %v5833
        %6821 = vadd.xlane.f32.xlu0 %v6820
        %v6822 = vpop.xlane.xlu0 %6821
        %v6823 = vadd.f32 %v5835, %v5837
        %6824 = vadd.xlane.f32.xlu0 %v6823
        %v6825 = vpop.xlane.xlu0 %6824
        %v6826 = vadd.f32 %v5839, %v5841
        %6827 = vadd.xlane.f32.xlu0 %v6826
        %v6828 = vpop.xlane.xlu0 %6827
        %v6829 = vadd.f32 %v5843, %v5845
        %6830 = vadd.xlane.f32.xlu0 %v6829
        %v6831 = vpop.xlane.xlu0 %6830
        %v6832 = vadd.f32 %v5847, %v5849
        %6833 = vadd.xlane.f32.xlu0 %v6832
        %v6834 = vpop.xlane.xlu0 %6833
        %v6835 = vadd.f32 %v5851, %v5853
        %6836 = vadd.xlane.f32.xlu0 %v6835
        %v6837 = vpop.xlane.xlu0 %6836
        %v6838 = vadd.f32 %v5855, %v5857
        %6839 = vadd.xlane.f32.xlu0 %v6838
        %v6840 = vpop.xlane.xlu0 %6839
        %v6841 = vadd.f32 %v5859, %v5861
        %6842 = vadd.xlane.f32.xlu0 %v6841
        %v6843 = vpop.xlane.xlu0 %6842
        %v6844 = vadd.f32 %v5863, %v5865
        %6845 = vadd.xlane.f32.xlu0 %v6844
        %v6846 = vpop.xlane.xlu0 %6845
        %v6847 = vadd.f32 %v5867, %v5869
        %6848 = vadd.xlane.f32.xlu0 %v6847
        %v6849 = vpop.xlane.xlu0 %6848
        %v6850 = vadd.f32 %v5871, %v5873
        %6851 = vadd.xlane.f32.xlu0 %v6850
        %v6852 = vpop.xlane.xlu0 %6851
        %v6853 = vadd.f32 %v5875, %v5877
        %6854 = vadd.xlane.f32.xlu0 %v6853
        %v6855 = vpop.xlane.xlu0 %6854
        %v6856 = vadd.f32 %v5879, %v5881
        %6857 = vadd.xlane.f32.xlu0 %v6856
        %v6858 = vpop.xlane.xlu0 %6857
        %v6859 = vadd.f32 %v5883, %v5885
        %6860 = vadd.xlane.f32.xlu0 %v6859
        %v6861 = vpop.xlane.xlu0 %6860
        %v6862 = vadd.f32 %v5887, %v5889
        %6863 = vadd.xlane.f32.xlu0 %v6862
        %v6864 = vpop.xlane.xlu0 %6863
        %v6865 = vadd.f32 %v5891, %v5893
        %6866 = vadd.xlane.f32.xlu0 %v6865
        %v6867 = vpop.xlane.xlu0 %6866
        %v6868 = vadd.f32 %v5895, %v5897
        %6869 = vadd.xlane.f32.xlu0 %v6868
        %v6870 = vpop.xlane.xlu0 %6869
        %v6871 = vadd.f32 %v5899, %v5901
        %6872 = vadd.xlane.f32.xlu0 %v6871
        %v6873 = vpop.xlane.xlu0 %6872
        %v6874 = vadd.f32 %v5903, %v5905
        %6875 = vadd.xlane.f32.xlu0 %v6874
        %v6876 = vpop.xlane.xlu0 %6875
        %v6877 = vadd.f32 %v5907, %v5909
        %6878 = vadd.xlane.f32.xlu0 %v6877
        %v6879 = vpop.xlane.xlu0 %6878
        %v6880 = vadd.f32 %v5911, %v5913
        %6881 = vadd.xlane.f32.xlu0 %v6880
        %v6882 = vpop.xlane.xlu0 %6881
        %v6883 = vadd.f32 %v5915, %v5917
        %6884 = vadd.xlane.f32.xlu0 %v6883
        %v6885 = vpop.xlane.xlu0 %6884
        %v6886 = vadd.f32 %v5919, %v5921
        %6887 = vadd.xlane.f32.xlu0 %v6886
        %v6888 = vpop.xlane.xlu0 %6887
        %v6889 = vadd.f32 %v5923, %v5925
        %6890 = vadd.xlane.f32.xlu0 %v6889
        %v6891 = vpop.xlane.xlu0 %6890
        %v6892 = vadd.f32 %v5927, %v5929
        %6893 = vadd.xlane.f32.xlu0 %v6892
        %v6894 = vpop.xlane.xlu0 %6893
        %v6895 = vadd.f32 %v5931, %v5933
        %6896 = vadd.xlane.f32.xlu0 %v6895
        %v6897 = vpop.xlane.xlu0 %6896
        %v6898 = vadd.f32 %v5935, %v5937
        %6899 = vadd.xlane.f32.xlu0 %v6898
        %v6900 = vpop.xlane.xlu0 %6899
        %v6901 = vadd.f32 %v5939, %v5941
        %6902 = vadd.xlane.f32.xlu0 %v6901
        %v6903 = vpop.xlane.xlu0 %6902
        %v6904 = vadd.f32 %v5943, %v5945
        %6905 = vadd.xlane.f32.xlu0 %v6904
        %v6906 = vpop.xlane.xlu0 %6905
        %v6907 = vadd.f32 %v5947, %v5949
        %6908 = vadd.xlane.f32.xlu0 %v6907
        %v6909 = vpop.xlane.xlu0 %6908
        %v6910 = vadd.f32 %v5951, %v5953
        %6911 = vadd.xlane.f32.xlu0 %v6910
        %v6912 = vpop.xlane.xlu0 %6911
        %v6913 = vadd.f32 %v5955, %v5957
        %6914 = vadd.xlane.f32.xlu0 %v6913
        %v6915 = vpop.xlane.xlu0 %6914
        %v6916 = vadd.f32 %v5959, %v5961
        %6917 = vadd.xlane.f32.xlu0 %v6916
        %v6918 = vpop.xlane.xlu0 %6917
        %v6919 = vadd.f32 %v5963, %v5965
        %6920 = vadd.xlane.f32.xlu0 %v6919
        %v6921 = vpop.xlane.xlu0 %6920
        %v6922 = vadd.f32 %v5967, %v5969
        %6923 = vadd.xlane.f32.xlu0 %v6922
        %v6924 = vpop.xlane.xlu0 %6923
        %v6925 = vadd.f32 %v5971, %v5973
        %6926 = vadd.xlane.f32.xlu0 %v6925
        %v6927 = vpop.xlane.xlu0 %6926
        %v6928 = vadd.f32 %v5975, %v5977
        %6929 = vadd.xlane.f32.xlu0 %v6928
        %v6930 = vpop.xlane.xlu0 %6929
        %v6931 = vadd.f32 %v5979, %v5981
        %6932 = vadd.xlane.f32.xlu0 %v6931
        %v6933 = vpop.xlane.xlu0 %6932
        %v6934 = vadd.f32 %v5983, %v5985
        %6935 = vadd.xlane.f32.xlu0 %v6934
        %v6936 = vpop.xlane.xlu0 %6935
        %v6937 = vadd.f32 %v5987, %v5989
        %6938 = vadd.xlane.f32.xlu0 %v6937
        %v6939 = vpop.xlane.xlu0 %6938
        %v6940 = vadd.f32 %v5991, %v5993
        %6941 = vadd.xlane.f32.xlu0 %v6940
        %v6942 = vpop.xlane.xlu0 %6941
        %v6943 = vadd.f32 %v5995, %v5997
        %6944 = vadd.xlane.f32.xlu0 %v6943
        %v6945 = vpop.xlane.xlu0 %6944
        %v6946 = vadd.f32 %v5999, %v6001
        %6947 = vadd.xlane.f32.xlu0 %v6946
        %v6948 = vpop.xlane.xlu0 %6947
        %v6949 = vadd.f32 %v6003, %v6005
        %6950 = vadd.xlane.f32.xlu0 %v6949
        %v6951 = vpop.xlane.xlu0 %6950
        %v6952 = vadd.f32 %v6007, %v6009
        %6953 = vadd.xlane.f32.xlu0 %v6952
        %v6954 = vpop.xlane.xlu0 %6953
        %v6955 = vadd.f32 %v6011, %v6013
        %6956 = vadd.xlane.f32.xlu0 %v6955
        %v6957 = vpop.xlane.xlu0 %6956
        %v6958 = vadd.f32 %v6015, %v6017
        %6959 = vadd.xlane.f32.xlu0 %v6958
        %v6960 = vpop.xlane.xlu0 %6959
        %v6961 = vadd.f32 %v6019, %v6021
        %6962 = vadd.xlane.f32.xlu0 %v6961
        %v6963 = vpop.xlane.xlu0 %6962
        %v6964 = vadd.f32 %v6023, %v6025
        %6965 = vadd.xlane.f32.xlu0 %v6964
        %v6966 = vpop.xlane.xlu0 %6965
        %v6967 = vadd.f32 %v6027, %v6029
        %6968 = vadd.xlane.f32.xlu0 %v6967
        %v6969 = vpop.xlane.xlu0 %6968
        %v6970 = vadd.f32 %v6031, %v6033
        %6971 = vadd.xlane.f32.xlu0 %v6970
        %v6972 = vpop.xlane.xlu0 %6971
        %v6973 = vadd.f32 %v6035, %v6037
        %6974 = vadd.xlane.f32.xlu0 %v6973
        %v6975 = vpop.xlane.xlu0 %6974
        %v6976 = vadd.f32 %v6039, %v6041
        %6977 = vadd.xlane.f32.xlu0 %v6976
        %v6978 = vpop.xlane.xlu0 %6977
        %v6979 = vadd.f32 %v6043, %v6045
        %6980 = vadd.xlane.f32.xlu0 %v6979
        %v6981 = vpop.xlane.xlu0 %6980
        %v6982 = vadd.f32 %v6047, %v6049
        %6983 = vadd.xlane.f32.xlu0 %v6982
        %v6984 = vpop.xlane.xlu0 %6983
        %v6985 = vadd.f32 %v6051, %v6053
        %6986 = vadd.xlane.f32.xlu0 %v6985
        %v6987 = vpop.xlane.xlu0 %6986
        %v6988 = vadd.f32 %v6055, %v6057
        %6989 = vadd.xlane.f32.xlu0 %v6988
        %v6990 = vpop.xlane.xlu0 %6989
        %v6991 = vadd.f32 %v6059, %v6061
        %6992 = vadd.xlane.f32.xlu0 %v6991
        %v6993 = vpop.xlane.xlu0 %6992
        %v6994 = vadd.f32 %v6063, %v6065
        %6995 = vadd.xlane.f32.xlu0 %v6994
        %v6996 = vpop.xlane.xlu0 %6995
        %v6997 = vadd.f32 %v6067, %v6069
        %6998 = vadd.xlane.f32.xlu0 %v6997
        %v6999 = vpop.xlane.xlu0 %6998
        %v7000 = vadd.f32 %v6071, %v6073
        %7001 = vadd.xlane.f32.xlu0 %v7000
        %v7002 = vpop.xlane.xlu0 %7001
        %v7003 = vadd.f32 %v6075, %v6077
        %7004 = vadd.xlane.f32.xlu0 %v7003
        %v7005 = vpop.xlane.xlu0 %7004
        %v7006 = vadd.f32 %v6079, %v6081
        %7007 = vadd.xlane.f32.xlu0 %v7006
        %v7008 = vpop.xlane.xlu0 %7007
        %v7009 = vadd.f32 %v6083, %v6085
        %7010 = vadd.xlane.f32.xlu0 %v7009
        %v7011 = vpop.xlane.xlu0 %7010
        %v7012 = vadd.f32 %v6087, %v6089
        %7013 = vadd.xlane.f32.xlu0 %v7012
        %v7014 = vpop.xlane.xlu0 %7013
        %v7015 = vadd.f32 %v6091, %v6093
        %7016 = vadd.xlane.f32.xlu0 %v7015
        %v7017 = vpop.xlane.xlu0 %7016
        %v7018 = vadd.f32 %v6095, %v6097
        %7019 = vadd.xlane.f32.xlu0 %v7018
        %v7020 = vpop.xlane.xlu0 %7019
        %v7021 = vadd.f32 %v6099, %v6101
        %7022 = vadd.xlane.f32.xlu0 %v7021
        %v7023 = vpop.xlane.xlu0 %7022
        %v7024 = vadd.f32 %v6103, %v6105
        %7025 = vadd.xlane.f32.xlu0 %v7024
        %v7026 = vpop.xlane.xlu0 %7025
        %v7027 = vadd.f32 %v6107, %v6109
        %7028 = vadd.xlane.f32.xlu0 %v7027
        %v7029 = vpop.xlane.xlu0 %7028
        %v7030 = vadd.f32 %v6111, %v6113
        %7031 = vadd.xlane.f32.xlu0 %v7030
        %v7032 = vpop.xlane.xlu0 %7031
        %v7033 = vadd.f32 %v6115, %v6117
        %7034 = vadd.xlane.f32.xlu0 %v7033
        %v7035 = vpop.xlane.xlu0 %7034
        %v7036 = vadd.f32 %v6119, %v6121
        %7037 = vadd.xlane.f32.xlu0 %v7036
        %v7038 = vpop.xlane.xlu0 %7037
        %v7039 = vadd.f32 %v6123, %v6125
        %7040 = vadd.xlane.f32.xlu0 %v7039
        %v7041 = vpop.xlane.xlu0 %7040
        %v7042 = vadd.f32 %v6127, %v6129
        %7043 = vadd.xlane.f32.xlu0 %v7042
        %v7044 = vpop.xlane.xlu0 %7043
        %v7045 = vadd.f32 %v6131, %v6133
        %7046 = vadd.xlane.f32.xlu0 %v7045
        %v7047 = vpop.xlane.xlu0 %7046
        %v7048 = vadd.f32 %v6135, %v6137
        %7049 = vadd.xlane.f32.xlu0 %v7048
        %v7050 = vpop.xlane.xlu0 %7049
        %v7051 = vadd.f32 %v6139, %v6141
        %7052 = vadd.xlane.f32.xlu0 %v7051
        %v7053 = vpop.xlane.xlu0 %7052
        %v7054 = vadd.f32 %v6143, %v6145
        %7055 = vadd.xlane.f32.xlu0 %v7054
        %v7056 = vpop.xlane.xlu0 %7055
        %v7057 = vadd.f32 %v6147, %v6149
        %7058 = vadd.xlane.f32.xlu0 %v7057
        %v7059 = vpop.xlane.xlu0 %7058
        %v7060 = vadd.f32 %v6151, %v6153
        %7061 = vadd.xlane.f32.xlu0 %v7060
        %v7062 = vpop.xlane.xlu0 %7061
        %v7063 = vadd.f32 %v6155, %v6157
        %7064 = vadd.xlane.f32.xlu0 %v7063
        %v7065 = vpop.xlane.xlu0 %7064
        %v7066 = vadd.f32 %v6159, %v6161
        %7067 = vadd.xlane.f32.xlu0 %v7066
        %v7068 = vpop.xlane.xlu0 %7067
        %v7069 = vadd.f32 %v6163, %v6165
        %7070 = vadd.xlane.f32.xlu0 %v7069
        %v7071 = vpop.xlane.xlu0 %7070
        %v7072 = vadd.f32 %v6167, %v6169
        %7073 = vadd.xlane.f32.xlu0 %v7072
        %v7074 = vpop.xlane.xlu0 %7073
        %v7075 = vadd.f32 %v6171, %v6173
        %7076 = vadd.xlane.f32.xlu0 %v7075
        %v7077 = vpop.xlane.xlu0 %7076
        %v7078 = vadd.f32 %v6175, %v6177
        %7079 = vadd.xlane.f32.xlu0 %v7078
        %v7080 = vpop.xlane.xlu0 %7079
        %v7081 = vadd.f32 %v6179, %v6181
        %7082 = vadd.xlane.f32.xlu0 %v7081
        %v7083 = vpop.xlane.xlu0 %7082
        %v7084 = vadd.f32 %v6183, %v6185
        %7085 = vadd.xlane.f32.xlu0 %v7084
        %v7086 = vpop.xlane.xlu0 %7085
        %v7087 = vadd.f32 %v6187, %v6189
        %7088 = vadd.xlane.f32.xlu0 %v7087
        %v7089 = vpop.xlane.xlu0 %7088
        %v7090 = vadd.f32 %v6191, %v6193
        %7091 = vadd.xlane.f32.xlu0 %v7090
        %v7092 = vpop.xlane.xlu0 %7091
        %v7093 = vadd.f32 %v6195, %v6197
        %7094 = vadd.xlane.f32.xlu0 %v7093
        %v7095 = vpop.xlane.xlu0 %7094
        %v7096 = vadd.f32 %v6199, %v6201
        %7097 = vadd.xlane.f32.xlu0 %v7096
        %v7098 = vpop.xlane.xlu0 %7097
        %v7099 = vadd.f32 %v6203, %v6205
        %7100 = vadd.xlane.f32.xlu0 %v7099
        %v7101 = vpop.xlane.xlu0 %7100
        %v7102 = vadd.f32 %v6207, %v6209
        %7103 = vadd.xlane.f32.xlu0 %v7102
        %v7104 = vpop.xlane.xlu0 %7103
        %v7105 = vadd.f32 %v6211, %v6213
        %7106 = vadd.xlane.f32.xlu0 %v7105
        %v7107 = vpop.xlane.xlu0 %7106
        %v7108 = vadd.f32 %v6215, %v6217
        %7109 = vadd.xlane.f32.xlu0 %v7108
        %v7110 = vpop.xlane.xlu0 %7109
        %v7111 = vadd.f32 %v6219, %v6221
        %7112 = vadd.xlane.f32.xlu0 %v7111
        %v7113 = vpop.xlane.xlu0 %7112
        %v7114 = vadd.f32 %v6223, %v6225
        %7115 = vadd.xlane.f32.xlu0 %v7114
        %v7116 = vpop.xlane.xlu0 %7115
        %v7117 = vadd.f32 %v6227, %v6229
        %7118 = vadd.xlane.f32.xlu0 %v7117
        %v7119 = vpop.xlane.xlu0 %7118
        %v7120 = vadd.f32 %v6231, %v6233
        %7121 = vadd.xlane.f32.xlu0 %v7120
        %v7122 = vpop.xlane.xlu0 %7121
        %v7123 = vadd.f32 %v6235, %v6237
        %7124 = vadd.xlane.f32.xlu0 %v7123
        %v7125 = vpop.xlane.xlu0 %7124
        %v7126 = vadd.f32 %v6239, %v6241
        %7127 = vadd.xlane.f32.xlu0 %v7126
        %v7128 = vpop.xlane.xlu0 %7127
        %v7129 = vadd.f32 %v6243, %v6245
        %7130 = vadd.xlane.f32.xlu0 %v7129
        %v7131 = vpop.xlane.xlu0 %7130
        %v7132 = vadd.f32 %v6247, %v6249
        %7133 = vadd.xlane.f32.xlu0 %v7132
        %v7134 = vpop.xlane.xlu0 %7133
        %v7135 = vadd.f32 %v6251, %v6253
        %7136 = vadd.xlane.f32.xlu0 %v7135
        %v7137 = vpop.xlane.xlu0 %7136
        %v7138 = vadd.f32 %v6255, %v6257
        %7139 = vadd.xlane.f32.xlu0 %v7138
        %v7140 = vpop.xlane.xlu0 %7139
        %v7141 = vadd.f32 %v6259, %v6261
        %7142 = vadd.xlane.f32.xlu0 %v7141
        %v7143 = vpop.xlane.xlu0 %7142
        %v7144 = vadd.f32 %v6263, %v6265
        %7145 = vadd.xlane.f32.xlu0 %v7144
        %v7146 = vpop.xlane.xlu0 %7145
        %v7147 = vadd.f32 %v6267, %v6269
        %7148 = vadd.xlane.f32.xlu0 %v7147
        %v7149 = vpop.xlane.xlu0 %7148
        %v7150 = vadd.f32 %v6271, %v6273
        %7151 = vadd.xlane.f32.xlu0 %v7150
        %v7152 = vpop.xlane.xlu0 %7151
        %v7153 = vadd.f32 %v6275, %v6277
        %7154 = vadd.xlane.f32.xlu0 %v7153
        %v7155 = vpop.xlane.xlu0 %7154
        %v7156 = vadd.f32 %v6279, %v6281
        %7157 = vadd.xlane.f32.xlu0 %v7156
        %v7158 = vpop.xlane.xlu0 %7157
        %v7159 = vadd.f32 %v6283, %v6285
        %7160 = vadd.xlane.f32.xlu0 %v7159
        %v7161 = vpop.xlane.xlu0 %7160
        %v7162 = vadd.f32 %v6287, %v6289
        %7163 = vadd.xlane.f32.xlu0 %v7162
        %v7164 = vpop.xlane.xlu0 %7163
        %v7165 = vadd.f32 %v6291, %v6293
        %7166 = vadd.xlane.f32.xlu0 %v7165
        %v7167 = vpop.xlane.xlu0 %7166
        %v7168 = vadd.f32 %v6295, %v6297
        %7169 = vadd.xlane.f32.xlu0 %v7168
        %v7170 = vpop.xlane.xlu0 %7169
        %v7171 = vadd.f32 %v6299, %v6301
        %7172 = vadd.xlane.f32.xlu0 %v7171
        %v7173 = vpop.xlane.xlu0 %7172
        %v7174 = vadd.f32 %v6303, %v6305
        %7175 = vadd.xlane.f32.xlu0 %v7174
        %v7176 = vpop.xlane.xlu0 %7175
        %v7177 = vadd.f32 %v6307, %v6309
        %7178 = vadd.xlane.f32.xlu0 %v7177
        %v7179 = vpop.xlane.xlu0 %7178
        %v7180 = vadd.f32 %v6311, %v6313
        %7181 = vadd.xlane.f32.xlu0 %v7180
        %v7182 = vpop.xlane.xlu0 %7181
        %v7183 = vadd.f32 %v6315, %v6317
        %7184 = vadd.xlane.f32.xlu0 %v7183
        %v7185 = vpop.xlane.xlu0 %7184
        %v7186 = vadd.f32 %v6319, %v6321
        %7187 = vadd.xlane.f32.xlu0 %v7186
        %v7188 = vpop.xlane.xlu0 %7187
        %v7189 = vadd.f32 %v6323, %v6325
        %7190 = vadd.xlane.f32.xlu0 %v7189
        %v7191 = vpop.xlane.xlu0 %7190
        %v7192 = vadd.f32 %v6327, %v6329
        %7193 = vadd.xlane.f32.xlu0 %v7192
        %v7194 = vpop.xlane.xlu0 %7193
        %v7195 = vadd.f32 %v6331, %v6333
        %7196 = vadd.xlane.f32.xlu0 %v7195
        %v7197 = vpop.xlane.xlu0 %7196
        %v7198 = vadd.f32 %v6335, %v6337
        %7199 = vadd.xlane.f32.xlu0 %v7198
        %v7200 = vpop.xlane.xlu0 %7199
        %v7201 = vadd.f32 %v6339, %v6341
        %7202 = vadd.xlane.f32.xlu0 %v7201
        %v7203 = vpop.xlane.xlu0 %7202
        %v7204 = vadd.f32 %v6343, %v6345
        %7205 = vadd.xlane.f32.xlu0 %v7204
        %v7206 = vpop.xlane.xlu0 %7205
        %v7207 = vadd.f32 %v6347, %v6349
        %7208 = vadd.xlane.f32.xlu0 %v7207
        %v7209 = vpop.xlane.xlu0 %7208
        %v7210 = vadd.f32 %v6351, %v6353
        %7211 = vadd.xlane.f32.xlu0 %v7210
        %v7212 = vpop.xlane.xlu0 %7211
        %v7213 = vadd.f32 %v6355, %v6357
        %7214 = vadd.xlane.f32.xlu0 %v7213
        %v7215 = vpop.xlane.xlu0 %7214
        %v7216 = vadd.f32 %v6359, %v6361
        %7217 = vadd.xlane.f32.xlu0 %v7216
        %v7218 = vpop.xlane.xlu0 %7217
        %v7219 = vadd.f32 %v6363, %v6365
        %7220 = vadd.xlane.f32.xlu0 %v7219
        %v7221 = vpop.xlane.xlu0 %7220
        %v7222 = vadd.f32 %v6367, %v6369
        %7223 = vadd.xlane.f32.xlu0 %v7222
        %v7224 = vpop.xlane.xlu0 %7223
        %v7225 = vadd.f32 %v6371, %v6373
        %7226 = vadd.xlane.f32.xlu0 %v7225
        %v7227 = vpop.xlane.xlu0 %7226
        %v7228 = vadd.f32 %v6375, %v6377
        %7229 = vadd.xlane.f32.xlu0 %v7228
        %v7230 = vpop.xlane.xlu0 %7229
        %v7231 = vadd.f32 %v6379, %v6381
        %7232 = vadd.xlane.f32.xlu0 %v7231
        %v7233 = vpop.xlane.xlu0 %7232
        %v7234 = vadd.f32 %v6383, %v6385
        %7235 = vadd.xlane.f32.xlu0 %v7234
        %v7236 = vpop.xlane.xlu0 %7235
        %v7237 = vadd.f32 %v6387, %v6389
        %7238 = vadd.xlane.f32.xlu0 %v7237
        %v7239 = vpop.xlane.xlu0 %7238
        %v7240 = vadd.f32 %v6391, %v6393
        %7241 = vadd.xlane.f32.xlu0 %v7240
        %v7242 = vpop.xlane.xlu0 %7241
        %v7243 = vadd.f32 %v6395, %v6397
        %7244 = vadd.xlane.f32.xlu0 %v7243
        %v7245 = vpop.xlane.xlu0 %7244
        %v7246 = vadd.f32 %v6399, %v6401
        %7247 = vadd.xlane.f32.xlu0 %v7246
        %v7248 = vpop.xlane.xlu0 %7247
        %v7249 = vadd.f32 %v6403, %v6405
        %7250 = vadd.xlane.f32.xlu0 %v7249
        %v7251 = vpop.xlane.xlu0 %7250
        %v7252 = vadd.f32 %v6407, %v6409
        %7253 = vadd.xlane.f32.xlu0 %v7252
        %v7254 = vpop.xlane.xlu0 %7253
        %v7255 = vadd.f32 %v6411, %v6413
        %7256 = vadd.xlane.f32.xlu0 %v7255
        %v7257 = vpop.xlane.xlu0 %7256
        %v7258 = vadd.f32 %v6415, %v6417
        %7259 = vadd.xlane.f32.xlu0 %v7258
        %v7260 = vpop.xlane.xlu0 %7259
        %v7261 = vadd.f32 %v6419, %v6421
        %7262 = vadd.xlane.f32.xlu0 %v7261
        %v7263 = vpop.xlane.xlu0 %7262
        %v7264 = vadd.f32 %v6423, %v6425
        %7265 = vadd.xlane.f32.xlu0 %v7264
        %v7266 = vpop.xlane.xlu0 %7265
        %v7267 = vadd.f32 %v6427, %v6429
        %7268 = vadd.xlane.f32.xlu0 %v7267
        %v7269 = vpop.xlane.xlu0 %7268
        %v7270 = vadd.f32 %v6431, %v6433
        %7271 = vadd.xlane.f32.xlu0 %v7270
        %v7272 = vpop.xlane.xlu0 %7271
        %v7273 = vadd.f32 %v6435, %v6437
        %7274 = vadd.xlane.f32.xlu0 %v7273
        %v7275 = vpop.xlane.xlu0 %7274
        %v7276 = vadd.f32 %v6439, %v6441
        %7277 = vadd.xlane.f32.xlu0 %v7276
        %v7278 = vpop.xlane.xlu0 %7277
        %v7279 = vadd.f32 %v6443, %v6445
        %7280 = vadd.xlane.f32.xlu0 %v7279
        %v7281 = vpop.xlane.xlu0 %7280
        %v7282 = vadd.f32 %v6447, %v6449
        %7283 = vadd.xlane.f32.xlu0 %v7282
        %v7284 = vpop.xlane.xlu0 %7283
        %v7285 = vadd.f32 %v6451, %v6453
        %7286 = vadd.xlane.f32.xlu0 %v7285
        %v7287 = vpop.xlane.xlu0 %7286
        %v7288 = vadd.f32 %v6455, %v6457
        %7289 = vadd.xlane.f32.xlu0 %v7288
        %v7290 = vpop.xlane.xlu0 %7289
        %v7291 = vadd.f32 %v6459, %v6461
        %7292 = vadd.xlane.f32.xlu0 %v7291
        %v7293 = vpop.xlane.xlu0 %7292
        %v7294 = vadd.f32 %v6463, %v6465
        %7295 = vadd.xlane.f32.xlu0 %v7294
        %v7296 = vpop.xlane.xlu0 %7295
        %v7297 = vadd.f32 %v6467, %v6469
        %7298 = vadd.xlane.f32.xlu0 %v7297
        %v7299 = vpop.xlane.xlu0 %7298
        %v7300 = vadd.f32 %v6471, %v6473
        %7301 = vadd.xlane.f32.xlu0 %v7300
        %v7302 = vpop.xlane.xlu0 %7301
        %v7303 = vadd.f32 %v6475, %v6477
        %7304 = vadd.xlane.f32.xlu0 %v7303
        %v7305 = vpop.xlane.xlu0 %7304
        %v7306 = vadd.f32 %v6479, %v6481
        %7307 = vadd.xlane.f32.xlu0 %v7306
        %v7308 = vpop.xlane.xlu0 %7307
        %v7309 = vadd.f32 %v6483, %v6485
        %7310 = vadd.xlane.f32.xlu0 %v7309
        %v7311 = vpop.xlane.xlu0 %7310
        %v7312 = vadd.f32 %v6487, %v6489
        %7313 = vadd.xlane.f32.xlu0 %v7312
        %v7314 = vpop.xlane.xlu0 %7313
        %v7315 = vadd.f32 %v6491, %v6493
        %7316 = vadd.xlane.f32.xlu0 %v7315
        %v7317 = vpop.xlane.xlu0 %7316
        %v7318 = vadd.f32 %v6495, %v6497
        %7319 = vadd.xlane.f32.xlu0 %v7318
        %v7320 = vpop.xlane.xlu0 %7319
        %v7321 = vadd.f32 %v6499, %v6501
        %7322 = vadd.xlane.f32.xlu0 %v7321
        %v7323 = vpop.xlane.xlu0 %7322
        %v7324 = vadd.f32 %v6503, %v6505
        %7325 = vadd.xlane.f32.xlu0 %v7324
        %v7326 = vpop.xlane.xlu0 %7325
        %v7327 = vadd.f32 %v6507, %v6509
        %7328 = vadd.xlane.f32.xlu0 %v7327
        %v7329 = vpop.xlane.xlu0 %7328
        %v7330 = vadd.f32 %v6511, %v6513
        %7331 = vadd.xlane.f32.xlu0 %v7330
        %v7332 = vpop.xlane.xlu0 %7331
        %v7333 = vadd.f32 %v6515, %v6517
        %7334 = vadd.xlane.f32.xlu0 %v7333
        %v7335 = vpop.xlane.xlu0 %7334
        %v7336 = vadd.f32 %v6519, %v6521
        %7337 = vadd.xlane.f32.xlu0 %v7336
        %v7338 = vpop.xlane.xlu0 %7337
        %v7339 = vadd.f32 %v6523, %v6525
        %7340 = vadd.xlane.f32.xlu0 %v7339
        %v7341 = vpop.xlane.xlu0 %7340
        %v7342 = vadd.f32 %v6527, %v6529
        %7343 = vadd.xlane.f32.xlu0 %v7342
        %v7344 = vpop.xlane.xlu0 %7343
        %v7345 = vadd.f32 %v6531, %v6533
        %7346 = vadd.xlane.f32.xlu0 %v7345
        %v7347 = vpop.xlane.xlu0 %7346
        %v7348 = vadd.f32 %v6535, %v6537
        %7349 = vadd.xlane.f32.xlu0 %v7348
        %v7350 = vpop.xlane.xlu0 %7349
        %v7351 = vadd.f32 %v6539, %v6541
        %7352 = vadd.xlane.f32.xlu0 %v7351
        %v7353 = vpop.xlane.xlu0 %7352
        %v7354 = vadd.f32 %v6543, %v6545
        %7355 = vadd.xlane.f32.xlu0 %v7354
        %v7356 = vpop.xlane.xlu0 %7355
        %v7357 = vadd.f32 %v6547, %v6549
        %7358 = vadd.xlane.f32.xlu0 %v7357
        %v7359 = vpop.xlane.xlu0 %7358
        %v7360 = vadd.f32 %v6551, %v6553
        %7361 = vadd.xlane.f32.xlu0 %v7360
        %v7362 = vpop.xlane.xlu0 %7361
        %v7363 = vadd.f32 %v6555, %v6557
        %7364 = vadd.xlane.f32.xlu0 %v7363
        %v7365 = vpop.xlane.xlu0 %7364
        %v7366 = vadd.f32 %v6559, %v6561
        %7367 = vadd.xlane.f32.xlu0 %v7366
        %v7368 = vpop.xlane.xlu0 %7367
        %v7369 = vadd.f32 %v6563, %v6565
        %7370 = vadd.xlane.f32.xlu0 %v7369
        %v7371 = vpop.xlane.xlu0 %7370
        %v7372 = vadd.f32 %v6567, %v6569
        %7373 = vadd.xlane.f32.xlu0 %v7372
        %v7374 = vpop.xlane.xlu0 %7373
        %v7375 = vadd.f32 %v6571, %v6573
        %7376 = vadd.xlane.f32.xlu0 %v7375
        %v7377 = vpop.xlane.xlu0 %7376
        %v7378 = vadd.f32 %v6575, %v6577
        %7379 = vadd.xlane.f32.xlu0 %v7378
        %v7380 = vpop.xlane.xlu0 %7379
        %v7381 = vadd.f32 %v6579, %v6581
        %7382 = vadd.xlane.f32.xlu0 %v7381
        %v7383 = vpop.xlane.xlu0 %7382
        %v7384 = vadd.f32 %v6583, %v6585
        %7385 = vadd.xlane.f32.xlu0 %v7384
        %v7386 = vpop.xlane.xlu0 %7385
        %v7387 = vadd.f32 %v6587, %v6589
        %7388 = vadd.xlane.f32.xlu0 %v7387
        %v7389 = vpop.xlane.xlu0 %7388
        %v7390 = vadd.f32 %v6591, %v6593
        %7391 = vadd.xlane.f32.xlu0 %v7390
        %v7392 = vpop.xlane.xlu0 %7391
        %v7393 = vadd.f32 %v6595, %v6597
        %7394 = vadd.xlane.f32.xlu0 %v7393
        %v7395 = vpop.xlane.xlu0 %7394
        %v7396 = vadd.f32 %v6599, %v6601
        %7397 = vadd.xlane.f32.xlu0 %v7396
        %v7398 = vpop.xlane.xlu0 %7397
        %v7399 = vadd.f32 %v6603, %v6605
        %7400 = vadd.xlane.f32.xlu0 %v7399
        %v7401 = vpop.xlane.xlu0 %7400
        %v7402 = vadd.f32 %v6607, %v6609
        %7403 = vadd.xlane.f32.xlu0 %v7402
        %v7404 = vpop.xlane.xlu0 %7403
        %v7405 = vadd.f32 %v6611, %v6613
        %7406 = vadd.xlane.f32.xlu0 %v7405
        %v7407 = vpop.xlane.xlu0 %7406
        %v7408 = vadd.f32 %v6615, %v6617
        %7409 = vadd.xlane.f32.xlu0 %v7408
        %v7410 = vpop.xlane.xlu0 %7409
        %v7411 = vadd.f32 %v6619, %v6621
        %7412 = vadd.xlane.f32.xlu0 %v7411
        %v7413 = vpop.xlane.xlu0 %7412
        %v7414 = vadd.f32 %v6623, %v6625
        %7415 = vadd.xlane.f32.xlu0 %v7414
        %v7416 = vpop.xlane.xlu0 %7415
        %v7417 = vadd.f32 %v6627, %v6629
        %7418 = vadd.xlane.f32.xlu0 %v7417
        %v7419 = vpop.xlane.xlu0 %7418
        %v7420 = vadd.f32 %v6631, %v6633
        %7421 = vadd.xlane.f32.xlu0 %v7420
        %v7422 = vpop.xlane.xlu0 %7421
        %v7423 = vadd.f32 %v6635, %v6637
        %7424 = vadd.xlane.f32.xlu0 %v7423
        %v7425 = vpop.xlane.xlu0 %7424
        %v7426 = vadd.f32 %v6639, %v6641
        %7427 = vadd.xlane.f32.xlu0 %v7426
        %v7428 = vpop.xlane.xlu0 %7427
        %v7429 = vadd.f32 %v6643, %v6645
        %7430 = vadd.xlane.f32.xlu0 %v7429
        %v7431 = vpop.xlane.xlu0 %7430
        %v7432 = vadd.f32 %v6647, %v6649
        %7433 = vadd.xlane.f32.xlu0 %v7432
        %v7434 = vpop.xlane.xlu0 %7433
        %v7435 = vadd.f32 %v6651, %v6653
        %7436 = vadd.xlane.f32.xlu0 %v7435
        %v7437 = vpop.xlane.xlu0 %7436
        %v7438 = vadd.f32 %v6655, %v6657
        %7439 = vadd.xlane.f32.xlu0 %v7438
        %v7440 = vpop.xlane.xlu0 %7439
        %v7441 = vadd.f32 %v6659, %v6661
        %7442 = vadd.xlane.f32.xlu0 %v7441
        %v7443 = vpop.xlane.xlu0 %7442
        %v7444 = vadd.f32 %v6663, %v6665
        %7445 = vadd.xlane.f32.xlu0 %v7444
        %v7446 = vpop.xlane.xlu0 %7445
        %v7447 = vadd.f32 %v6667, %v6669
        %7448 = vadd.xlane.f32.xlu0 %v7447
        %v7449 = vpop.xlane.xlu0 %7448
        %v7450 = vadd.f32 %v6671, %v6673
        %7451 = vadd.xlane.f32.xlu0 %v7450
        %v7452 = vpop.xlane.xlu0 %7451
        %v7453 = vadd.f32 %v6675, %v6677
        %7454 = vadd.xlane.f32.xlu0 %v7453
        %v7455 = vpop.xlane.xlu0 %7454
        %v7456 = vadd.f32 %v6679, %v6681
        %7457 = vadd.xlane.f32.xlu0 %v7456
        %v7458 = vpop.xlane.xlu0 %7457
        %v7459 = vadd.f32 %v6683, %v6685
        %7460 = vadd.xlane.f32.xlu0 %v7459
        %v7461 = vpop.xlane.xlu0 %7460
        %v7462 = vadd.f32 %v6687, %v6689
        %7463 = vadd.xlane.f32.xlu0 %v7462
        %v7464 = vpop.xlane.xlu0 %7463
        %v7465 = vadd.f32 %v6691, %v6693
        %7466 = vadd.xlane.f32.xlu0 %v7465
        %v7467 = vpop.xlane.xlu0 %7466
        %v7468 = vadd.f32 %v6695, %v6697
        %7469 = vadd.xlane.f32.xlu0 %v7468
        %v7470 = vpop.xlane.xlu0 %7469
        %v7471 = vadd.f32 %v6699, %v6701
        %7472 = vadd.xlane.f32.xlu0 %v7471
        %v7473 = vpop.xlane.xlu0 %7472
        %v7474 = vadd.f32 %v6703, %v6705
        %7475 = vadd.xlane.f32.xlu0 %v7474
        %v7476 = vpop.xlane.xlu0 %7475
        %v7477 = vadd.f32 %v6707, %v6709
        %7478 = vadd.xlane.f32.xlu0 %v7477
        %v7479 = vpop.xlane.xlu0 %7478
        %v7480 = vadd.f32 %v6711, %v6713
        %7481 = vadd.xlane.f32.xlu0 %v7480
        %v7482 = vpop.xlane.xlu0 %7481
        %v7483 = vadd.f32 %v6715, %v6717
        %7484 = vadd.xlane.f32.xlu0 %v7483
        %v7485 = vpop.xlane.xlu0 %7484
        %v7486 = vrcp.pop %v6720
        %v7487 = vrcp.pop %v6723
        %v7488 = vrcp.pop %v6726
        %v7489 = vrcp.pop %v6729
        %v7490 = vrcp.pop %v6732
        %v7491 = vrcp.pop %v6735
        %v7492 = vrcp.pop %v6738
        %v7493 = vrcp.pop %v6741
        %v7494 = vrcp.pop %v6744
        %v7495 = vrcp.pop %v6747
        %v7496 = vrcp.pop %v6750
        %v7497 = vrcp.pop %v6753
        %v7498 = vrcp.pop %v6756
        %v7499 = vrcp.pop %v6759
        %v7500 = vrcp.pop %v6762
        %v7501 = vrcp.pop %v6765
        %v7502 = vrcp.pop %v6768
        %v7503 = vrcp.pop %v6771
        %v7504 = vrcp.pop %v6774
        %v7505 = vrcp.pop %v6777
        %v7506 = vrcp.pop %v6780
        %v7507 = vrcp.pop %v6783
        %v7508 = vrcp.pop %v6786
        %v7509 = vrcp.pop %v6789
        %v7510 = vrcp.pop %v6792
        %v7511 = vrcp.pop %v6795
        %v7512 = vrcp.pop %v6798
        %v7513 = vrcp.pop %v6801
        %v7514 = vrcp.pop %v6804
        %v7515 = vrcp.pop %v6807
        %v7516 = vrcp.pop %v6810
        %v7517 = vrcp.pop %v6813
        %v7518 = vrcp.pop %v6816
        %v7519 = vrcp.pop %v6819
        %v7520 = vrcp.pop %v6822
        %v7521 = vrcp.pop %v6825
        %v7522 = vrcp.pop %v6828
        %v7523 = vrcp.pop %v6831
        %v7524 = vrcp.pop %v6834
        %v7525 = vrcp.pop %v6837
        %v7526 = vrcp.pop %v6840
        %v7527 = vrcp.pop %v6843
        %v7528 = vrcp.pop %v6846
        %v7529 = vrcp.pop %v6849
        %v7530 = vrcp.pop %v6852
        %v7531 = vrcp.pop %v6855
        %v7532 = vrcp.pop %v6858
        %v7533 = vrcp.pop %v6861
        %v7534 = vrcp.pop %v6864
        %v7535 = vrcp.pop %v6867
        %v7536 = vrcp.pop %v6870
        %v7537 = vrcp.pop %v6873
        %v7538 = vrcp.pop %v6876
        %v7539 = vrcp.pop %v6879
        %v7540 = vrcp.pop %v6882
        %v7541 = vrcp.pop %v6885
        %v7542 = vrcp.pop %v6888
        %v7543 = vrcp.pop %v6891
        %v7544 = vrcp.pop %v6894
        %v7545 = vrcp.pop %v6897
        %v7546 = vrcp.pop %v6900
        %v7547 = vrcp.pop %v6903
        %v7548 = vrcp.pop %v6906
        %v7549 = vrcp.pop %v6909
        %v7550 = vrcp.pop %v6912
        %v7551 = vrcp.pop %v6915
        %v7552 = vrcp.pop %v6918
        %v7553 = vrcp.pop %v6921
        %v7554 = vrcp.pop %v6924
        %v7555 = vrcp.pop %v6927
        %v7556 = vrcp.pop %v6930
        %v7557 = vrcp.pop %v6933
        %v7558 = vrcp.pop %v6936
        %v7559 = vrcp.pop %v6939
        %v7560 = vrcp.pop %v6942
        %v7561 = vrcp.pop %v6945
        %v7562 = vrcp.pop %v6948
        %v7563 = vrcp.pop %v6951
        %v7564 = vrcp.pop %v6954
        %v7565 = vrcp.pop %v6957
        %v7566 = vrcp.pop %v6960
        %v7567 = vrcp.pop %v6963
        %v7568 = vrcp.pop %v6966
        %v7569 = vrcp.pop %v6969
        %v7570 = vrcp.pop %v6972
        %v7571 = vrcp.pop %v6975
        %v7572 = vrcp.pop %v6978
        %v7573 = vrcp.pop %v6981
        %v7574 = vrcp.pop %v6984
        %v7575 = vrcp.pop %v6987
        %v7576 = vrcp.pop %v6990
        %v7577 = vrcp.pop %v6993
        %v7578 = vrcp.pop %v6996
        %v7579 = vrcp.pop %v6999
        %v7580 = vrcp.pop %v7002
        %v7581 = vrcp.pop %v7005
        %v7582 = vrcp.pop %v7008
        %v7583 = vrcp.pop %v7011
        %v7584 = vrcp.pop %v7014
        %v7585 = vrcp.pop %v7017
        %v7586 = vrcp.pop %v7020
        %v7587 = vrcp.pop %v7023
        %v7588 = vrcp.pop %v7026
        %v7589 = vrcp.pop %v7029
        %v7590 = vrcp.pop %v7032
        %v7591 = vrcp.pop %v7035
        %v7592 = vrcp.pop %v7038
        %v7593 = vrcp.pop %v7041
        %v7594 = vrcp.pop %v7044
        %v7595 = vrcp.pop %v7047
        %v7596 = vrcp.pop %v7050
        %v7597 = vrcp.pop %v7053
        %v7598 = vrcp.pop %v7056
        %v7599 = vrcp.pop %v7059
        %v7600 = vrcp.pop %v7062
        %v7601 = vrcp.pop %v7065
        %v7602 = vrcp.pop %v7068
        %v7603 = vrcp.pop %v7071
        %v7604 = vrcp.pop %v7074
        %v7605 = vrcp.pop %v7077
        %v7606 = vrcp.pop %v7080
        %v7607 = vrcp.pop %v7083
        %v7608 = vrcp.pop %v7086
        %v7609 = vrcp.pop %v7089
        %v7610 = vrcp.pop %v7092
        %v7611 = vrcp.pop %v7095
        %v7612 = vrcp.pop %v7098
        %v7613 = vrcp.pop %v7101
        %v7614 = vrcp.pop %v7104
        %v7615 = vrcp.pop %v7107
        %v7616 = vrcp.pop %v7110
        %v7617 = vrcp.pop %v7113
        %v7618 = vrcp.pop %v7116
        %v7619 = vrcp.pop %v7119
        %v7620 = vrcp.pop %v7122
        %v7621 = vrcp.pop %v7125
        %v7622 = vrcp.pop %v7128
        %v7623 = vrcp.pop %v7131
        %v7624 = vrcp.pop %v7134
        %v7625 = vrcp.pop %v7137
        %v7626 = vrcp.pop %v7140
        %v7627 = vrcp.pop %v7143
        %v7628 = vrcp.pop %v7146
        %v7629 = vrcp.pop %v7149
        %v7630 = vrcp.pop %v7152
        %v7631 = vrcp.pop %v7155
        %v7632 = vrcp.pop %v7158
        %v7633 = vrcp.pop %v7161
        %v7634 = vrcp.pop %v7164
        %v7635 = vrcp.pop %v7167
        %v7636 = vrcp.pop %v7170
        %v7637 = vrcp.pop %v7173
        %v7638 = vrcp.pop %v7176
        %v7639 = vrcp.pop %v7179
        %v7640 = vrcp.pop %v7182
        %v7641 = vrcp.pop %v7185
        %v7642 = vrcp.pop %v7188
        %v7643 = vrcp.pop %v7191
        %v7644 = vrcp.pop %v7194
        %v7645 = vrcp.pop %v7197
        %v7646 = vrcp.pop %v7200
        %v7647 = vrcp.pop %v7203
        %v7648 = vrcp.pop %v7206
        %v7649 = vrcp.pop %v7209
        %v7650 = vrcp.pop %v7212
        %v7651 = vrcp.pop %v7215
        %v7652 = vrcp.pop %v7218
        %v7653 = vrcp.pop %v7221
        %v7654 = vrcp.pop %v7224
        %v7655 = vrcp.pop %v7227
        %v7656 = vrcp.pop %v7230
        %v7657 = vrcp.pop %v7233
        %v7658 = vrcp.pop %v7236
        %v7659 = vrcp.pop %v7239
        %v7660 = vrcp.pop %v7242
        %v7661 = vrcp.pop %v7245
        %v7662 = vrcp.pop %v7248
        %v7663 = vrcp.pop %v7251
        %v7664 = vrcp.pop %v7254
        %v7665 = vrcp.pop %v7257
        %v7666 = vrcp.pop %v7260
        %v7667 = vrcp.pop %v7263
        %v7668 = vrcp.pop %v7266
        %v7669 = vrcp.pop %v7269
        %v7670 = vrcp.pop %v7272
        %v7671 = vrcp.pop %v7275
        %v7672 = vrcp.pop %v7278
        %v7673 = vrcp.pop %v7281
        %v7674 = vrcp.pop %v7284
        %v7675 = vrcp.pop %v7287
        %v7676 = vrcp.pop %v7290
        %v7677 = vrcp.pop %v7293
        %v7678 = vrcp.pop %v7296
        %v7679 = vrcp.pop %v7299
        %v7680 = vrcp.pop %v7302
        %v7681 = vrcp.pop %v7305
        %v7682 = vrcp.pop %v7308
        %v7683 = vrcp.pop %v7311
        %v7684 = vrcp.pop %v7314
        %v7685 = vrcp.pop %v7317
        %v7686 = vrcp.pop %v7320
        %v7687 = vrcp.pop %v7323
        %v7688 = vrcp.pop %v7326
        %v7689 = vrcp.pop %v7329
        %v7690 = vrcp.pop %v7332
        %v7691 = vrcp.pop %v7335
        %v7692 = vrcp.pop %v7338
        %v7693 = vrcp.pop %v7341
        %v7694 = vrcp.pop %v7344
        %v7695 = vrcp.pop %v7347
        %v7696 = vrcp.pop %v7350
        %v7697 = vrcp.pop %v7353
        %v7698 = vrcp.pop %v7356
        %v7699 = vrcp.pop %v7359
        %v7700 = vrcp.pop %v7362
        %v7701 = vrcp.pop %v7365
        %v7702 = vrcp.pop %v7368
        %v7703 = vrcp.pop %v7371
        %v7704 = vrcp.pop %v7374
        %v7705 = vrcp.pop %v7377
        %v7706 = vrcp.pop %v7380
        %v7707 = vrcp.pop %v7383
        %v7708 = vrcp.pop %v7386
        %v7709 = vrcp.pop %v7389
        %v7710 = vrcp.pop %v7392
        %v7711 = vrcp.pop %v7395
        %v7712 = vrcp.pop %v7398
        %v7713 = vrcp.pop %v7401
        %v7714 = vrcp.pop %v7404
        %v7715 = vrcp.pop %v7407
        %v7716 = vrcp.pop %v7410
        %v7717 = vrcp.pop %v7413
        %v7718 = vrcp.pop %v7416
        %v7719 = vrcp.pop %v7419
        %v7720 = vrcp.pop %v7422
        %v7721 = vrcp.pop %v7425
        %v7722 = vrcp.pop %v7428
        %v7723 = vrcp.pop %v7431
        %v7724 = vrcp.pop %v7434
        %v7725 = vrcp.pop %v7437
        %v7726 = vrcp.pop %v7440
        %v7727 = vrcp.pop %v7443
        %v7728 = vrcp.pop %v7446
        %v7729 = vrcp.pop %v7449
        %v7730 = vrcp.pop %v7452
        %v7731 = vrcp.pop %v7455
        %v7732 = vrcp.pop %v7458
        %v7733 = vrcp.pop %v7461
        %v7734 = vrcp.pop %v7464
        %v7735 = vrcp.pop %v7467
        %v7736 = vrcp.pop %v7470
        %v7737 = vrcp.pop %v7473
        %v7738 = vrcp.pop %v7476
        %v7739 = vrcp.pop %v7479
        %v7740 = vrcp.pop %v7482
        %v7741 = vrcp.pop %v7485
        %v7742 = vmul.f32 %v5695, %v7486
        %v7743 = vmul.f32 %v5697, %v7486
        %v7744 = vmul.f32 %v5699, %v7487
        %v7745 = vmul.f32 %v5701, %v7487
        %v7746 = vmul.f32 %v5703, %v7488
        %v7747 = vmul.f32 %v5705, %v7488
        %v7748 = vmul.f32 %v5707, %v7489
        %v7749 = vmul.f32 %v5709, %v7489
        %v7750 = vmul.f32 %v5711, %v7490
        %v7751 = vmul.f32 %v5713, %v7490
        %v7752 = vmul.f32 %v5715, %v7491
        %v7753 = vmul.f32 %v5717, %v7491
        %v7754 = vmul.f32 %v5719, %v7492
        %v7755 = vmul.f32 %v5721, %v7492
        %v7756 = vmul.f32 %v5723, %v7493
        %v7757 = vmul.f32 %v5725, %v7493
        %v7758 = vmul.f32 %v5727, %v7494
        %v7759 = vmul.f32 %v5729, %v7494
        %v7760 = vmul.f32 %v5731, %v7495
        %v7761 = vmul.f32 %v5733, %v7495
        %v7762 = vmul.f32 %v5735, %v7496
        %v7763 = vmul.f32 %v5737, %v7496
        %v7764 = vmul.f32 %v5739, %v7497
        %v7765 = vmul.f32 %v5741, %v7497
        %v7766 = vmul.f32 %v5743, %v7498
        %v7767 = vmul.f32 %v5745, %v7498
        %v7768 = vmul.f32 %v5747, %v7499
        %v7769 = vmul.f32 %v5749, %v7499
        %v7770 = vmul.f32 %v5751, %v7500
        %v7771 = vmul.f32 %v5753, %v7500
        %v7772 = vmul.f32 %v5755, %v7501
        %v7773 = vmul.f32 %v5757, %v7501
        %v7774 = vmul.f32 %v5759, %v7502
        %v7775 = vmul.f32 %v5761, %v7502
        %v7776 = vmul.f32 %v5763, %v7503
        %v7777 = vmul.f32 %v5765, %v7503
        %v7778 = vmul.f32 %v5767, %v7504
        %v7779 = vmul.f32 %v5769, %v7504
        %v7780 = vmul.f32 %v5771, %v7505
        %v7781 = vmul.f32 %v5773, %v7505
        %v7782 = vmul.f32 %v5775, %v7506
        %v7783 = vmul.f32 %v5777, %v7506
        %v7784 = vmul.f32 %v5779, %v7507
        %v7785 = vmul.f32 %v5781, %v7507
        %v7786 = vmul.f32 %v5783, %v7508
        %v7787 = vmul.f32 %v5785, %v7508
        %v7788 = vmul.f32 %v5787, %v7509
        %v7789 = vmul.f32 %v5789, %v7509
        %v7790 = vmul.f32 %v5791, %v7510
        %v7791 = vmul.f32 %v5793, %v7510
        %v7792 = vmul.f32 %v5795, %v7511
        %v7793 = vmul.f32 %v5797, %v7511
        %v7794 = vmul.f32 %v5799, %v7512
        %v7795 = vmul.f32 %v5801, %v7512
        %v7796 = vmul.f32 %v5803, %v7513
        %v7797 = vmul.f32 %v5805, %v7513
        %v7798 = vmul.f32 %v5807, %v7514
        %v7799 = vmul.f32 %v5809, %v7514
        %v7800 = vmul.f32 %v5811, %v7515
        %v7801 = vmul.f32 %v5813, %v7515
        %v7802 = vmul.f32 %v5815, %v7516
        %v7803 = vmul.f32 %v5817, %v7516
        %v7804 = vmul.f32 %v5819, %v7517
        %v7805 = vmul.f32 %v5821, %v7517
        %v7806 = vmul.f32 %v5823, %v7518
        %v7807 = vmul.f32 %v5825, %v7518
        %v7808 = vmul.f32 %v5827, %v7519
        %v7809 = vmul.f32 %v5829, %v7519
        %v7810 = vmul.f32 %v5831, %v7520
        %v7811 = vmul.f32 %v5833, %v7520
        %v7812 = vmul.f32 %v5835, %v7521
        %v7813 = vmul.f32 %v5837, %v7521
        %v7814 = vmul.f32 %v5839, %v7522
        %v7815 = vmul.f32 %v5841, %v7522
        %v7816 = vmul.f32 %v5843, %v7523
        %v7817 = vmul.f32 %v5845, %v7523
        %v7818 = vmul.f32 %v5847, %v7524
        %v7819 = vmul.f32 %v5849, %v7524
        %v7820 = vmul.f32 %v5851, %v7525
        %v7821 = vmul.f32 %v5853, %v7525
        %v7822 = vmul.f32 %v5855, %v7526
        %v7823 = vmul.f32 %v5857, %v7526
        %v7824 = vmul.f32 %v5859, %v7527
        %v7825 = vmul.f32 %v5861, %v7527
        %v7826 = vmul.f32 %v5863, %v7528
        %v7827 = vmul.f32 %v5865, %v7528
        %v7828 = vmul.f32 %v5867, %v7529
        %v7829 = vmul.f32 %v5869, %v7529
        %v7830 = vmul.f32 %v5871, %v7530
        %v7831 = vmul.f32 %v5873, %v7530
        %v7832 = vmul.f32 %v5875, %v7531
        %v7833 = vmul.f32 %v5877, %v7531
        %v7834 = vmul.f32 %v5879, %v7532
        %v7835 = vmul.f32 %v5881, %v7532
        %v7836 = vmul.f32 %v5883, %v7533
        %v7837 = vmul.f32 %v5885, %v7533
        %v7838 = vmul.f32 %v5887, %v7534
        %v7839 = vmul.f32 %v5889, %v7534
        %v7840 = vmul.f32 %v5891, %v7535
        %v7841 = vmul.f32 %v5893, %v7535
        %v7842 = vmul.f32 %v5895, %v7536
        %v7843 = vmul.f32 %v5897, %v7536
        %v7844 = vmul.f32 %v5899, %v7537
        %v7845 = vmul.f32 %v5901, %v7537
        %v7846 = vmul.f32 %v5903, %v7538
        %v7847 = vmul.f32 %v5905, %v7538
        %v7848 = vmul.f32 %v5907, %v7539
        %v7849 = vmul.f32 %v5909, %v7539
        %v7850 = vmul.f32 %v5911, %v7540
        %v7851 = vmul.f32 %v5913, %v7540
        %v7852 = vmul.f32 %v5915, %v7541
        %v7853 = vmul.f32 %v5917, %v7541
        %v7854 = vmul.f32 %v5919, %v7542
        %v7855 = vmul.f32 %v5921, %v7542
        %v7856 = vmul.f32 %v5923, %v7543
        %v7857 = vmul.f32 %v5925, %v7543
        %v7858 = vmul.f32 %v5927, %v7544
        %v7859 = vmul.f32 %v5929, %v7544
        %v7860 = vmul.f32 %v5931, %v7545
        %v7861 = vmul.f32 %v5933, %v7545
        %v7862 = vmul.f32 %v5935, %v7546
        %v7863 = vmul.f32 %v5937, %v7546
        %v7864 = vmul.f32 %v5939, %v7547
        %v7865 = vmul.f32 %v5941, %v7547
        %v7866 = vmul.f32 %v5943, %v7548
        %v7867 = vmul.f32 %v5945, %v7548
        %v7868 = vmul.f32 %v5947, %v7549
        %v7869 = vmul.f32 %v5949, %v7549
        %v7870 = vmul.f32 %v5951, %v7550
        %v7871 = vmul.f32 %v5953, %v7550
        %v7872 = vmul.f32 %v5955, %v7551
        %v7873 = vmul.f32 %v5957, %v7551
        %v7874 = vmul.f32 %v5959, %v7552
        %v7875 = vmul.f32 %v5961, %v7552
        %v7876 = vmul.f32 %v5963, %v7553
        %v7877 = vmul.f32 %v5965, %v7553
        %v7878 = vmul.f32 %v5967, %v7554
        %v7879 = vmul.f32 %v5969, %v7554
        %v7880 = vmul.f32 %v5971, %v7555
        %v7881 = vmul.f32 %v5973, %v7555
        %v7882 = vmul.f32 %v5975, %v7556
        %v7883 = vmul.f32 %v5977, %v7556
        %v7884 = vmul.f32 %v5979, %v7557
        %v7885 = vmul.f32 %v5981, %v7557
        %v7886 = vmul.f32 %v5983, %v7558
        %v7887 = vmul.f32 %v5985, %v7558
        %v7888 = vmul.f32 %v5987, %v7559
        %v7889 = vmul.f32 %v5989, %v7559
        %v7890 = vmul.f32 %v5991, %v7560
        %v7891 = vmul.f32 %v5993, %v7560
        %v7892 = vmul.f32 %v5995, %v7561
        %v7893 = vmul.f32 %v5997, %v7561
        %v7894 = vmul.f32 %v5999, %v7562
        %v7895 = vmul.f32 %v6001, %v7562
        %v7896 = vmul.f32 %v6003, %v7563
        %v7897 = vmul.f32 %v6005, %v7563
        %v7898 = vmul.f32 %v6007, %v7564
        %v7899 = vmul.f32 %v6009, %v7564
        %v7900 = vmul.f32 %v6011, %v7565
        %v7901 = vmul.f32 %v6013, %v7565
        %v7902 = vmul.f32 %v6015, %v7566
        %v7903 = vmul.f32 %v6017, %v7566
        %v7904 = vmul.f32 %v6019, %v7567
        %v7905 = vmul.f32 %v6021, %v7567
        %v7906 = vmul.f32 %v6023, %v7568
        %v7907 = vmul.f32 %v6025, %v7568
        %v7908 = vmul.f32 %v6027, %v7569
        %v7909 = vmul.f32 %v6029, %v7569
        %v7910 = vmul.f32 %v6031, %v7570
        %v7911 = vmul.f32 %v6033, %v7570
        %v7912 = vmul.f32 %v6035, %v7571
        %v7913 = vmul.f32 %v6037, %v7571
        %v7914 = vmul.f32 %v6039, %v7572
        %v7915 = vmul.f32 %v6041, %v7572
        %v7916 = vmul.f32 %v6043, %v7573
        %v7917 = vmul.f32 %v6045, %v7573
        %v7918 = vmul.f32 %v6047, %v7574
        %v7919 = vmul.f32 %v6049, %v7574
        %v7920 = vmul.f32 %v6051, %v7575
        %v7921 = vmul.f32 %v6053, %v7575
        %v7922 = vmul.f32 %v6055, %v7576
        %v7923 = vmul.f32 %v6057, %v7576
        %v7924 = vmul.f32 %v6059, %v7577
        %v7925 = vmul.f32 %v6061, %v7577
        %v7926 = vmul.f32 %v6063, %v7578
        %v7927 = vmul.f32 %v6065, %v7578
        %v7928 = vmul.f32 %v6067, %v7579
        %v7929 = vmul.f32 %v6069, %v7579
        %v7930 = vmul.f32 %v6071, %v7580
        %v7931 = vmul.f32 %v6073, %v7580
        %v7932 = vmul.f32 %v6075, %v7581
        %v7933 = vmul.f32 %v6077, %v7581
        %v7934 = vmul.f32 %v6079, %v7582
        %v7935 = vmul.f32 %v6081, %v7582
        %v7936 = vmul.f32 %v6083, %v7583
        %v7937 = vmul.f32 %v6085, %v7583
        %v7938 = vmul.f32 %v6087, %v7584
        %v7939 = vmul.f32 %v6089, %v7584
        %v7940 = vmul.f32 %v6091, %v7585
        %v7941 = vmul.f32 %v6093, %v7585
        %v7942 = vmul.f32 %v6095, %v7586
        %v7943 = vmul.f32 %v6097, %v7586
        %v7944 = vmul.f32 %v6099, %v7587
        %v7945 = vmul.f32 %v6101, %v7587
        %v7946 = vmul.f32 %v6103, %v7588
        %v7947 = vmul.f32 %v6105, %v7588
        %v7948 = vmul.f32 %v6107, %v7589
        %v7949 = vmul.f32 %v6109, %v7589
        %v7950 = vmul.f32 %v6111, %v7590
        %v7951 = vmul.f32 %v6113, %v7590
        %v7952 = vmul.f32 %v6115, %v7591
        %v7953 = vmul.f32 %v6117, %v7591
        %v7954 = vmul.f32 %v6119, %v7592
        %v7955 = vmul.f32 %v6121, %v7592
        %v7956 = vmul.f32 %v6123, %v7593
        %v7957 = vmul.f32 %v6125, %v7593
        %v7958 = vmul.f32 %v6127, %v7594
        %v7959 = vmul.f32 %v6129, %v7594
        %v7960 = vmul.f32 %v6131, %v7595
        %v7961 = vmul.f32 %v6133, %v7595
        %v7962 = vmul.f32 %v6135, %v7596
        %v7963 = vmul.f32 %v6137, %v7596
        %v7964 = vmul.f32 %v6139, %v7597
        %v7965 = vmul.f32 %v6141, %v7597
        %v7966 = vmul.f32 %v6143, %v7598
        %v7967 = vmul.f32 %v6145, %v7598
        %v7968 = vmul.f32 %v6147, %v7599
        %v7969 = vmul.f32 %v6149, %v7599
        %v7970 = vmul.f32 %v6151, %v7600
        %v7971 = vmul.f32 %v6153, %v7600
        %v7972 = vmul.f32 %v6155, %v7601
        %v7973 = vmul.f32 %v6157, %v7601
        %v7974 = vmul.f32 %v6159, %v7602
        %v7975 = vmul.f32 %v6161, %v7602
        %v7976 = vmul.f32 %v6163, %v7603
        %v7977 = vmul.f32 %v6165, %v7603
        %v7978 = vmul.f32 %v6167, %v7604
        %v7979 = vmul.f32 %v6169, %v7604
        %v7980 = vmul.f32 %v6171, %v7605
        %v7981 = vmul.f32 %v6173, %v7605
        %v7982 = vmul.f32 %v6175, %v7606
        %v7983 = vmul.f32 %v6177, %v7606
        %v7984 = vmul.f32 %v6179, %v7607
        %v7985 = vmul.f32 %v6181, %v7607
        %v7986 = vmul.f32 %v6183, %v7608
        %v7987 = vmul.f32 %v6185, %v7608
        %v7988 = vmul.f32 %v6187, %v7609
        %v7989 = vmul.f32 %v6189, %v7609
        %v7990 = vmul.f32 %v6191, %v7610
        %v7991 = vmul.f32 %v6193, %v7610
        %v7992 = vmul.f32 %v6195, %v7611
        %v7993 = vmul.f32 %v6197, %v7611
        %v7994 = vmul.f32 %v6199, %v7612
        %v7995 = vmul.f32 %v6201, %v7612
        %v7996 = vmul.f32 %v6203, %v7613
        %v7997 = vmul.f32 %v6205, %v7613
        %v7998 = vmul.f32 %v6207, %v7614
        %v7999 = vmul.f32 %v6209, %v7614
        %v8000 = vmul.f32 %v6211, %v7615
        %v8001 = vmul.f32 %v6213, %v7615
        %v8002 = vmul.f32 %v6215, %v7616
        %v8003 = vmul.f32 %v6217, %v7616
        %v8004 = vmul.f32 %v6219, %v7617
        %v8005 = vmul.f32 %v6221, %v7617
        %v8006 = vmul.f32 %v6223, %v7618
        %v8007 = vmul.f32 %v6225, %v7618
        %v8008 = vmul.f32 %v6227, %v7619
        %v8009 = vmul.f32 %v6229, %v7619
        %v8010 = vmul.f32 %v6231, %v7620
        %v8011 = vmul.f32 %v6233, %v7620
        %v8012 = vmul.f32 %v6235, %v7621
        %v8013 = vmul.f32 %v6237, %v7621
        %v8014 = vmul.f32 %v6239, %v7622
        %v8015 = vmul.f32 %v6241, %v7622
        %v8016 = vmul.f32 %v6243, %v7623
        %v8017 = vmul.f32 %v6245, %v7623
        %v8018 = vmul.f32 %v6247, %v7624
        %v8019 = vmul.f32 %v6249, %v7624
        %v8020 = vmul.f32 %v6251, %v7625
        %v8021 = vmul.f32 %v6253, %v7625
        %v8022 = vmul.f32 %v6255, %v7626
        %v8023 = vmul.f32 %v6257, %v7626
        %v8024 = vmul.f32 %v6259, %v7627
        %v8025 = vmul.f32 %v6261, %v7627
        %v8026 = vmul.f32 %v6263, %v7628
        %v8027 = vmul.f32 %v6265, %v7628
        %v8028 = vmul.f32 %v6267, %v7629
        %v8029 = vmul.f32 %v6269, %v7629
        %v8030 = vmul.f32 %v6271, %v7630
        %v8031 = vmul.f32 %v6273, %v7630
        %v8032 = vmul.f32 %v6275, %v7631
        %v8033 = vmul.f32 %v6277, %v7631
        %v8034 = vmul.f32 %v6279, %v7632
        %v8035 = vmul.f32 %v6281, %v7632
        %v8036 = vmul.f32 %v6283, %v7633
        %v8037 = vmul.f32 %v6285, %v7633
        %v8038 = vmul.f32 %v6287, %v7634
        %v8039 = vmul.f32 %v6289, %v7634
        %v8040 = vmul.f32 %v6291, %v7635
        %v8041 = vmul.f32 %v6293, %v7635
        %v8042 = vmul.f32 %v6295, %v7636
        %v8043 = vmul.f32 %v6297, %v7636
        %v8044 = vmul.f32 %v6299, %v7637
        %v8045 = vmul.f32 %v6301, %v7637
        %v8046 = vmul.f32 %v6303, %v7638
        %v8047 = vmul.f32 %v6305, %v7638
        %v8048 = vmul.f32 %v6307, %v7639
        %v8049 = vmul.f32 %v6309, %v7639
        %v8050 = vmul.f32 %v6311, %v7640
        %v8051 = vmul.f32 %v6313, %v7640
        %v8052 = vmul.f32 %v6315, %v7641
        %v8053 = vmul.f32 %v6317, %v7641
        %v8054 = vmul.f32 %v6319, %v7642
        %v8055 = vmul.f32 %v6321, %v7642
        %v8056 = vmul.f32 %v6323, %v7643
        %v8057 = vmul.f32 %v6325, %v7643
        %v8058 = vmul.f32 %v6327, %v7644
        %v8059 = vmul.f32 %v6329, %v7644
        %v8060 = vmul.f32 %v6331, %v7645
        %v8061 = vmul.f32 %v6333, %v7645
        %v8062 = vmul.f32 %v6335, %v7646
        %v8063 = vmul.f32 %v6337, %v7646
        %v8064 = vmul.f32 %v6339, %v7647
        %v8065 = vmul.f32 %v6341, %v7647
        %v8066 = vmul.f32 %v6343, %v7648
        %v8067 = vmul.f32 %v6345, %v7648
        %v8068 = vmul.f32 %v6347, %v7649
        %v8069 = vmul.f32 %v6349, %v7649
        %v8070 = vmul.f32 %v6351, %v7650
        %v8071 = vmul.f32 %v6353, %v7650
        %v8072 = vmul.f32 %v6355, %v7651
        %v8073 = vmul.f32 %v6357, %v7651
        %v8074 = vmul.f32 %v6359, %v7652
        %v8075 = vmul.f32 %v6361, %v7652
        %v8076 = vmul.f32 %v6363, %v7653
        %v8077 = vmul.f32 %v6365, %v7653
        %v8078 = vmul.f32 %v6367, %v7654
        %v8079 = vmul.f32 %v6369, %v7654
        %v8080 = vmul.f32 %v6371, %v7655
        %v8081 = vmul.f32 %v6373, %v7655
        %v8082 = vmul.f32 %v6375, %v7656
        %v8083 = vmul.f32 %v6377, %v7656
        %v8084 = vmul.f32 %v6379, %v7657
        %v8085 = vmul.f32 %v6381, %v7657
        %v8086 = vmul.f32 %v6383, %v7658
        %v8087 = vmul.f32 %v6385, %v7658
        %v8088 = vmul.f32 %v6387, %v7659
        %v8089 = vmul.f32 %v6389, %v7659
        %v8090 = vmul.f32 %v6391, %v7660
        %v8091 = vmul.f32 %v6393, %v7660
        %v8092 = vmul.f32 %v6395, %v7661
        %v8093 = vmul.f32 %v6397, %v7661
        %v8094 = vmul.f32 %v6399, %v7662
        %v8095 = vmul.f32 %v6401, %v7662
        %v8096 = vmul.f32 %v6403, %v7663
        %v8097 = vmul.f32 %v6405, %v7663
        %v8098 = vmul.f32 %v6407, %v7664
        %v8099 = vmul.f32 %v6409, %v7664
        %v8100 = vmul.f32 %v6411, %v7665
        %v8101 = vmul.f32 %v6413, %v7665
        %v8102 = vmul.f32 %v6415, %v7666
        %v8103 = vmul.f32 %v6417, %v7666
        %v8104 = vmul.f32 %v6419, %v7667
        %v8105 = vmul.f32 %v6421, %v7667
        %v8106 = vmul.f32 %v6423, %v7668
        %v8107 = vmul.f32 %v6425, %v7668
        %v8108 = vmul.f32 %v6427, %v7669
        %v8109 = vmul.f32 %v6429, %v7669
        %v8110 = vmul.f32 %v6431, %v7670
        %v8111 = vmul.f32 %v6433, %v7670
        %v8112 = vmul.f32 %v6435, %v7671
        %v8113 = vmul.f32 %v6437, %v7671
        %v8114 = vmul.f32 %v6439, %v7672
        %v8115 = vmul.f32 %v6441, %v7672
        %v8116 = vmul.f32 %v6443, %v7673
        %v8117 = vmul.f32 %v6445, %v7673
        %v8118 = vmul.f32 %v6447, %v7674
        %v8119 = vmul.f32 %v6449, %v7674
        %v8120 = vmul.f32 %v6451, %v7675
        %v8121 = vmul.f32 %v6453, %v7675
        %v8122 = vmul.f32 %v6455, %v7676
        %v8123 = vmul.f32 %v6457, %v7676
        %v8124 = vmul.f32 %v6459, %v7677
        %v8125 = vmul.f32 %v6461, %v7677
        %v8126 = vmul.f32 %v6463, %v7678
        %v8127 = vmul.f32 %v6465, %v7678
        %v8128 = vmul.f32 %v6467, %v7679
        %v8129 = vmul.f32 %v6469, %v7679
        %v8130 = vmul.f32 %v6471, %v7680
        %v8131 = vmul.f32 %v6473, %v7680
        %v8132 = vmul.f32 %v6475, %v7681
        %v8133 = vmul.f32 %v6477, %v7681
        %v8134 = vmul.f32 %v6479, %v7682
        %v8135 = vmul.f32 %v6481, %v7682
        %v8136 = vmul.f32 %v6483, %v7683
        %v8137 = vmul.f32 %v6485, %v7683
        %v8138 = vmul.f32 %v6487, %v7684
        %v8139 = vmul.f32 %v6489, %v7684
        %v8140 = vmul.f32 %v6491, %v7685
        %v8141 = vmul.f32 %v6493, %v7685
        %v8142 = vmul.f32 %v6495, %v7686
        %v8143 = vmul.f32 %v6497, %v7686
        %v8144 = vmul.f32 %v6499, %v7687
        %v8145 = vmul.f32 %v6501, %v7687
        %v8146 = vmul.f32 %v6503, %v7688
        %v8147 = vmul.f32 %v6505, %v7688
        %v8148 = vmul.f32 %v6507, %v7689
        %v8149 = vmul.f32 %v6509, %v7689
        %v8150 = vmul.f32 %v6511, %v7690
        %v8151 = vmul.f32 %v6513, %v7690
        %v8152 = vmul.f32 %v6515, %v7691
        %v8153 = vmul.f32 %v6517, %v7691
        %v8154 = vmul.f32 %v6519, %v7692
        %v8155 = vmul.f32 %v6521, %v7692
        %v8156 = vmul.f32 %v6523, %v7693
        %v8157 = vmul.f32 %v6525, %v7693
        %v8158 = vmul.f32 %v6527, %v7694
        %v8159 = vmul.f32 %v6529, %v7694
        %v8160 = vmul.f32 %v6531, %v7695
        %v8161 = vmul.f32 %v6533, %v7695
        %v8162 = vmul.f32 %v6535, %v7696
        %v8163 = vmul.f32 %v6537, %v7696
        %v8164 = vmul.f32 %v6539, %v7697
        %v8165 = vmul.f32 %v6541, %v7697
        %v8166 = vmul.f32 %v6543, %v7698
        %v8167 = vmul.f32 %v6545, %v7698
        %v8168 = vmul.f32 %v6547, %v7699
        %v8169 = vmul.f32 %v6549, %v7699
        %v8170 = vmul.f32 %v6551, %v7700
        %v8171 = vmul.f32 %v6553, %v7700
        %v8172 = vmul.f32 %v6555, %v7701
        %v8173 = vmul.f32 %v6557, %v7701
        %v8174 = vmul.f32 %v6559, %v7702
        %v8175 = vmul.f32 %v6561, %v7702
        %v8176 = vmul.f32 %v6563, %v7703
        %v8177 = vmul.f32 %v6565, %v7703
        %v8178 = vmul.f32 %v6567, %v7704
        %v8179 = vmul.f32 %v6569, %v7704
        %v8180 = vmul.f32 %v6571, %v7705
        %v8181 = vmul.f32 %v6573, %v7705
        %v8182 = vmul.f32 %v6575, %v7706
        %v8183 = vmul.f32 %v6577, %v7706
        %v8184 = vmul.f32 %v6579, %v7707
        %v8185 = vmul.f32 %v6581, %v7707
        %v8186 = vmul.f32 %v6583, %v7708
        %v8187 = vmul.f32 %v6585, %v7708
        %v8188 = vmul.f32 %v6587, %v7709
        %v8189 = vmul.f32 %v6589, %v7709
        %v8190 = vmul.f32 %v6591, %v7710
        %v8191 = vmul.f32 %v6593, %v7710
        %v8192 = vmul.f32 %v6595, %v7711
        %v8193 = vmul.f32 %v6597, %v7711
        %v8194 = vmul.f32 %v6599, %v7712
        %v8195 = vmul.f32 %v6601, %v7712
        %v8196 = vmul.f32 %v6603, %v7713
        %v8197 = vmul.f32 %v6605, %v7713
        %v8198 = vmul.f32 %v6607, %v7714
        %v8199 = vmul.f32 %v6609, %v7714
        %v8200 = vmul.f32 %v6611, %v7715
        %v8201 = vmul.f32 %v6613, %v7715
        %v8202 = vmul.f32 %v6615, %v7716
        %v8203 = vmul.f32 %v6617, %v7716
        %v8204 = vmul.f32 %v6619, %v7717
        %v8205 = vmul.f32 %v6621, %v7717
        %v8206 = vmul.f32 %v6623, %v7718
        %v8207 = vmul.f32 %v6625, %v7718
        %v8208 = vmul.f32 %v6627, %v7719
        %v8209 = vmul.f32 %v6629, %v7719
        %v8210 = vmul.f32 %v6631, %v7720
        %v8211 = vmul.f32 %v6633, %v7720
        %v8212 = vmul.f32 %v6635, %v7721
        %v8213 = vmul.f32 %v6637, %v7721
        %v8214 = vmul.f32 %v6639, %v7722
        %v8215 = vmul.f32 %v6641, %v7722
        %v8216 = vmul.f32 %v6643, %v7723
        %v8217 = vmul.f32 %v6645, %v7723
        %v8218 = vmul.f32 %v6647, %v7724
        %v8219 = vmul.f32 %v6649, %v7724
        %v8220 = vmul.f32 %v6651, %v7725
        %v8221 = vmul.f32 %v6653, %v7725
        %v8222 = vmul.f32 %v6655, %v7726
        %v8223 = vmul.f32 %v6657, %v7726
        %v8224 = vmul.f32 %v6659, %v7727
        %v8225 = vmul.f32 %v6661, %v7727
        %v8226 = vmul.f32 %v6663, %v7728
        %v8227 = vmul.f32 %v6665, %v7728
        %v8228 = vmul.f32 %v6667, %v7729
        %v8229 = vmul.f32 %v6669, %v7729
        %v8230 = vmul.f32 %v6671, %v7730
        %v8231 = vmul.f32 %v6673, %v7730
        %v8232 = vmul.f32 %v6675, %v7731
        %v8233 = vmul.f32 %v6677, %v7731
        %v8234 = vmul.f32 %v6679, %v7732
        %v8235 = vmul.f32 %v6681, %v7732
        %v8236 = vmul.f32 %v6683, %v7733
        %v8237 = vmul.f32 %v6685, %v7733
        %v8238 = vmul.f32 %v6687, %v7734
        %v8239 = vmul.f32 %v6689, %v7734
        %v8240 = vmul.f32 %v6691, %v7735
        %v8241 = vmul.f32 %v6693, %v7735
        %v8242 = vmul.f32 %v6695, %v7736
        %v8243 = vmul.f32 %v6697, %v7736
        %v8244 = vmul.f32 %v6699, %v7737
        %v8245 = vmul.f32 %v6701, %v7737
        %v8246 = vmul.f32 %v6703, %v7738
        %v8247 = vmul.f32 %v6705, %v7738
        %v8248 = vmul.f32 %v6707, %v7739
        %v8249 = vmul.f32 %v6709, %v7739
        %v8250 = vmul.f32 %v6711, %v7740
        %v8251 = vmul.f32 %v6713, %v7740
        %v8252 = vmul.f32 %v6715, %v7741
        %v8253 = vmul.f32 %v6717, %v7741
        %v8255 = vunpack.c.l.s4 1983009808
        %v8256 = vunpack.c.0.s8 %v8255
        %v8257 = vlaneseq
        %v8258 = vshrl.u32 %v8257, 7
        %v8259 = vsub.s32 %v8256, %v8258
        %v8260 = vrot.slane %v872, %v8259
        %v8261 = vcombine.high %v8260, %v8260
        %8264 = vmatprep.subr.mxu0 %v7743
        %8265 = vmatpush1.xpose.msra.mxu0 %v7742
        %8266 = vmatprep.subr.mxu0 %v7745
        %8267 = vmatpush1.xpose.msra.mxu0 %v7744
        %8268 = vmatprep.subr.mxu0 %v7747
        %8269 = vmatpush1.xpose.msra.mxu0 %v7746
        %8270 = vmatprep.subr.mxu0 %v7749
        %8271 = vmatpush1.xpose.msra.mxu0 %v7748
        %8272 = vmatprep.subr.mxu0 %v7751
        %8273 = vmatpush1.xpose.msra.mxu0 %v7750
        %8274 = vmatprep.subr.mxu0 %v7753
        %8275 = vmatpush1.xpose.msra.mxu0 %v7752
        %8276 = vmatprep.subr.mxu0 %v7755
        %8277 = vmatpush1.xpose.msra.mxu0 %v7754
        %8278 = vmatprep.subr.mxu0 %v7757
        %8279 = vmatpush1.xpose.msra.mxu0 %v7756
        %8280 = vmatprep.subr.mxu0 %v7759
        %8281 = vmatpush1.xpose.msra.mxu0 %v7758
        %8282 = vmatprep.subr.mxu0 %v7761
        %8283 = vmatpush1.xpose.msra.mxu0 %v7760
        %8284 = vmatprep.subr.mxu0 %v7763
        %8285 = vmatpush1.xpose.msra.mxu0 %v7762
        %8286 = vmatprep.subr.mxu0 %v7765
        %8287 = vmatpush1.xpose.msra.mxu0 %v7764
        %8288 = vmatprep.subr.mxu0 %v7767
        %8289 = vmatpush1.xpose.msra.mxu0 %v7766
        %8290 = vmatprep.subr.mxu0 %v7769
        %8291 = vmatpush1.xpose.msra.mxu0 %v7768
        %8292 = vmatprep.subr.mxu0 %v7771
        %8293 = vmatpush1.xpose.msra.mxu0 %v7770
        %8294 = vmatprep.subr.mxu0 %v7773
        %8295 = vmatpush1.xpose.msra.mxu0 %v7772
        %8296 = vmatprep.subr.mxu0 %v7775
        %8297 = vmatpush1.xpose.msra.mxu0 %v7774
        %8298 = vmatprep.subr.mxu0 %v7777
        %8299 = vmatpush1.xpose.msra.mxu0 %v7776
        %8300 = vmatprep.subr.mxu0 %v7779
        %8301 = vmatpush1.xpose.msra.mxu0 %v7778
        %8302 = vmatprep.subr.mxu0 %v7781
        %8303 = vmatpush1.xpose.msra.mxu0 %v7780
        %8304 = vmatprep.subr.mxu0 %v7783
        %8305 = vmatpush1.xpose.msra.mxu0 %v7782
        %8306 = vmatprep.subr.mxu0 %v7785
        %8307 = vmatpush1.xpose.msra.mxu0 %v7784
        %8308 = vmatprep.subr.mxu0 %v7787
        %8309 = vmatpush1.xpose.msra.mxu0 %v7786
        %8310 = vmatprep.subr.mxu0 %v7789
        %8311 = vmatpush1.xpose.msra.mxu0 %v7788
        %8312 = vmatprep.subr.mxu0 %v7791
        %8313 = vmatpush1.xpose.msra.mxu0 %v7790
        %8314 = vmatprep.subr.mxu0 %v7793
        %8315 = vmatpush1.xpose.msra.mxu0 %v7792
        %8316 = vmatprep.subr.mxu0 %v7795
        %8317 = vmatpush1.xpose.msra.mxu0 %v7794
        %8318 = vmatprep.subr.mxu0 %v7797
        %8319 = vmatpush1.xpose.msra.mxu0 %v7796
        %8320 = vmatprep.subr.mxu0 %v7799
        %8321 = vmatpush1.xpose.msra.mxu0 %v7798
        %8322 = vmatprep.subr.mxu0 %v7801
        %8323 = vmatpush1.xpose.msra.mxu0 %v7800
        %8324 = vmatprep.subr.mxu0 %v7803
        %8325 = vmatpush1.xpose.msra.mxu0 %v7802
        %8326 = vmatprep.subr.mxu0 %v7805
        %8327 = vmatpush1.xpose.msra.mxu0 %v7804
        %8328 = vmatprep.mubr.f32.mxu0 %v8261
        %8329 = vmatmul.mubr.f32.gmra.mrb[0].mxu0 %v8260
        %v8330 = vpop.f32.mrb[0].mxu0
        %v8331 = vadd.f32 0.0, %v8330
        %v8332 = vpop.f32.mrb[0].mxu0
        %v8333 = vadd.f32 0.0, %v8332
        %8334 = vdwg.mxu0
        %v8336 = vunpack.c.l.s4 1983009808
        %v8337 = vunpack.c.0.s8 %v8336
        %v8338 = vlaneseq
        %v8339 = vshrl.u32 %v8338, 7
        %v8340 = vsub.s32 %v8337, %v8339
        %v8341 = vrot.slane %v880, %v8340
        %v8342 = vcombine.high %v8341, %v8341
        %8345 = vmatprep.subr.mxu0 %v7807
        %8346 = vmatpush1.xpose.msra.mxu0 %v7806
        %8347 = vmatprep.subr.mxu0 %v7809
        %8348 = vmatpush1.xpose.msra.mxu0 %v7808
        %8349 = vmatprep.subr.mxu0 %v7811
        %8350 = vmatpush1.xpose.msra.mxu0 %v7810
        %8351 = vmatprep.subr.mxu0 %v7813
        %8352 = vmatpush1.xpose.msra.mxu0 %v7812
        %8353 = vmatprep.subr.mxu0 %v7815
        %8354 = vmatpush1.xpose.msra.mxu0 %v7814
        %8355 = vmatprep.subr.mxu0 %v7817
        %8356 = vmatpush1.xpose.msra.mxu0 %v7816
        %8357 = vmatprep.subr.mxu0 %v7819
        %8358 = vmatpush1.xpose.msra.mxu0 %v7818
        %8359 = vmatprep.subr.mxu0 %v7821
        %8360 = vmatpush1.xpose.msra.mxu0 %v7820
        %8361 = vmatprep.subr.mxu0 %v7823
        %8362 = vmatpush1.xpose.msra.mxu0 %v7822
        %8363 = vmatprep.subr.mxu0 %v7825
        %8364 = vmatpush1.xpose.msra.mxu0 %v7824
        %8365 = vmatprep.subr.mxu0 %v7827
        %8366 = vmatpush1.xpose.msra.mxu0 %v7826
        %8367 = vmatprep.subr.mxu0 %v7829
        %8368 = vmatpush1.xpose.msra.mxu0 %v7828
        %8369 = vmatprep.subr.mxu0 %v7831
        %8370 = vmatpush1.xpose.msra.mxu0 %v7830
        %8371 = vmatprep.subr.mxu0 %v7833
        %8372 = vmatpush1.xpose.msra.mxu0 %v7832
        %8373 = vmatprep.subr.mxu0 %v7835
        %8374 = vmatpush1.xpose.msra.mxu0 %v7834
        %8375 = vmatprep.subr.mxu0 %v7837
        %8376 = vmatpush1.xpose.msra.mxu0 %v7836
        %8377 = vmatprep.subr.mxu0 %v7839
        %8378 = vmatpush1.xpose.msra.mxu0 %v7838
        %8379 = vmatprep.subr.mxu0 %v7841
        %8380 = vmatpush1.xpose.msra.mxu0 %v7840
        %8381 = vmatprep.subr.mxu0 %v7843
        %8382 = vmatpush1.xpose.msra.mxu0 %v7842
        %8383 = vmatprep.subr.mxu0 %v7845
        %8384 = vmatpush1.xpose.msra.mxu0 %v7844
        %8385 = vmatprep.subr.mxu0 %v7847
        %8386 = vmatpush1.xpose.msra.mxu0 %v7846
        %8387 = vmatprep.subr.mxu0 %v7849
        %8388 = vmatpush1.xpose.msra.mxu0 %v7848
        %8389 = vmatprep.subr.mxu0 %v7851
        %8390 = vmatpush1.xpose.msra.mxu0 %v7850
        %8391 = vmatprep.subr.mxu0 %v7853
        %8392 = vmatpush1.xpose.msra.mxu0 %v7852
        %8393 = vmatprep.subr.mxu0 %v7855
        %8394 = vmatpush1.xpose.msra.mxu0 %v7854
        %8395 = vmatprep.subr.mxu0 %v7857
        %8396 = vmatpush1.xpose.msra.mxu0 %v7856
        %8397 = vmatprep.subr.mxu0 %v7859
        %8398 = vmatpush1.xpose.msra.mxu0 %v7858
        %8399 = vmatprep.subr.mxu0 %v7861
        %8400 = vmatpush1.xpose.msra.mxu0 %v7860
        %8401 = vmatprep.subr.mxu0 %v7863
        %8402 = vmatpush1.xpose.msra.mxu0 %v7862
        %8403 = vmatprep.subr.mxu0 %v7865
        %8404 = vmatpush1.xpose.msra.mxu0 %v7864
        %8405 = vmatprep.subr.mxu0 %v7867
        %8406 = vmatpush1.xpose.msra.mxu0 %v7866
        %8407 = vmatprep.subr.mxu0 %v7869
        %8408 = vmatpush1.xpose.msra.mxu0 %v7868
        %8409 = vmatprep.mubr.f32.mxu0 %v8342
        %8410 = vmatmul.mubr.f32.gmra.mrb[0].mxu0 %v8341
        %v8411 = vpop.f32.mrb[0].mxu0
        %v8412 = vadd.f32 0.0, %v8411
        %v8413 = vpop.f32.mrb[0].mxu0
        %v8414 = vadd.f32 0.0, %v8413
        %8415 = vdwg.mxu0
        %v8417 = vunpack.c.l.s4 1983009808
        %v8418 = vunpack.c.0.s8 %v8417
        %v8419 = vlaneseq
        %v8420 = vshrl.u32 %v8419, 7
        %v8421 = vsub.s32 %v8418, %v8420
        %v8422 = vrot.slane %v879, %v8421
        %v8423 = vcombine.high %v8422, %v8422
        %8426 = vmatprep.subr.mxu0 %v7871
        %8427 = vmatpush1.xpose.msra.mxu0 %v7870
        %8428 = vmatprep.subr.mxu0 %v7873
        %8429 = vmatpush1.xpose.msra.mxu0 %v7872
        %8430 = vmatprep.subr.mxu0 %v7875
        %8431 = vmatpush1.xpose.msra.mxu0 %v7874
        %8432 = vmatprep.subr.mxu0 %v7877
        %8433 = vmatpush1.xpose.msra.mxu0 %v7876
        %8434 = vmatprep.subr.mxu0 %v7879
        %8435 = vmatpush1.xpose.msra.mxu0 %v7878
        %8436 = vmatprep.subr.mxu0 %v7881
        %8437 = vmatpush1.xpose.msra.mxu0 %v7880
        %8438 = vmatprep.subr.mxu0 %v7883
        %8439 = vmatpush1.xpose.msra.mxu0 %v7882
        %8440 = vmatprep.subr.mxu0 %v7885
        %8441 = vmatpush1.xpose.msra.mxu0 %v7884
        %8442 = vmatprep.subr.mxu0 %v7887
        %8443 = vmatpush1.xpose.msra.mxu0 %v7886
        %8444 = vmatprep.subr.mxu0 %v7889
        %8445 = vmatpush1.xpose.msra.mxu0 %v7888
        %8446 = vmatprep.subr.mxu0 %v7891
        %8447 = vmatpush1.xpose.msra.mxu0 %v7890
        %8448 = vmatprep.subr.mxu0 %v7893
        %8449 = vmatpush1.xpose.msra.mxu0 %v7892
        %8450 = vmatprep.subr.mxu0 %v7895
        %8451 = vmatpush1.xpose.msra.mxu0 %v7894
        %8452 = vmatprep.subr.mxu0 %v7897
        %8453 = vmatpush1.xpose.msra.mxu0 %v7896
        %8454 = vmatprep.subr.mxu0 %v7899
        %8455 = vmatpush1.xpose.msra.mxu0 %v7898
        %8456 = vmatprep.subr.mxu0 %v7901
        %8457 = vmatpush1.xpose.msra.mxu0 %v7900
        %8458 = vmatprep.subr.mxu0 %v7903
        %8459 = vmatpush1.xpose.msra.mxu0 %v7902
        %8460 = vmatprep.subr.mxu0 %v7905
        %8461 = vmatpush1.xpose.msra.mxu0 %v7904
        %8462 = vmatprep.subr.mxu0 %v7907
        %8463 = vmatpush1.xpose.msra.mxu0 %v7906
        %8464 = vmatprep.subr.mxu0 %v7909
        %8465 = vmatpush1.xpose.msra.mxu0 %v7908
        %8466 = vmatprep.subr.mxu0 %v7911
        %8467 = vmatpush1.xpose.msra.mxu0 %v7910
        %8468 = vmatprep.subr.mxu0 %v7913
        %8469 = vmatpush1.xpose.msra.mxu0 %v7912
        %8470 = vmatprep.subr.mxu0 %v7915
        %8471 = vmatpush1.xpose.msra.mxu0 %v7914
        %8472 = vmatprep.subr.mxu0 %v7917
        %8473 = vmatpush1.xpose.msra.mxu0 %v7916
        %8474 = vmatprep.subr.mxu0 %v7919
        %8475 = vmatpush1.xpose.msra.mxu0 %v7918
        %8476 = vmatprep.subr.mxu0 %v7921
        %8477 = vmatpush1.xpose.msra.mxu0 %v7920
        %8478 = vmatprep.subr.mxu0 %v7923
        %8479 = vmatpush1.xpose.msra.mxu0 %v7922
        %8480 = vmatprep.subr.mxu0 %v7925
        %8481 = vmatpush1.xpose.msra.mxu0 %v7924
        %8482 = vmatprep.subr.mxu0 %v7927
        %8483 = vmatpush1.xpose.msra.mxu0 %v7926
        %8484 = vmatprep.subr.mxu0 %v7929
        %8485 = vmatpush1.xpose.msra.mxu0 %v7928
        %8486 = vmatprep.subr.mxu0 %v7931
        %8487 = vmatpush1.xpose.msra.mxu0 %v7930
        %8488 = vmatprep.subr.mxu0 %v7933
        %8489 = vmatpush1.xpose.msra.mxu0 %v7932
        %8490 = vmatprep.mubr.f32.mxu0 %v8423
        %8491 = vmatmul.mubr.f32.gmra.mrb[0].mxu0 %v8422
        %v8492 = vpop.f32.mrb[0].mxu0
        %v8493 = vadd.f32 0.0, %v8492
        %v8494 = vpop.f32.mrb[0].mxu0
        %v8495 = vadd.f32 0.0, %v8494
        %8496 = vdwg.mxu0
        %v8498 = vunpack.c.l.s4 1983009808
        %v8499 = vunpack.c.0.s8 %v8498
        %v8500 = vlaneseq
        %v8501 = vshrl.u32 %v8500, 7
        %v8502 = vsub.s32 %v8499, %v8501
        %v8503 = vrot.slane %v881, %v8502
        %v8504 = vcombine.high %v8503, %v8503
        %8507 = vmatprep.subr.mxu0 %v7935
        %8508 = vmatpush1.xpose.msra.mxu0 %v7934
        %8509 = vmatprep.subr.mxu0 %v7937
        %8510 = vmatpush1.xpose.msra.mxu0 %v7936
        %8511 = vmatprep.subr.mxu0 %v7939
        %8512 = vmatpush1.xpose.msra.mxu0 %v7938
        %8513 = vmatprep.subr.mxu0 %v7941
        %8514 = vmatpush1.xpose.msra.mxu0 %v7940
        %8515 = vmatprep.subr.mxu0 %v7943
        %8516 = vmatpush1.xpose.msra.mxu0 %v7942
        %8517 = vmatprep.subr.mxu0 %v7945
        %8518 = vmatpush1.xpose.msra.mxu0 %v7944
        %8519 = vmatprep.subr.mxu0 %v7947
        %8520 = vmatpush1.xpose.msra.mxu0 %v7946
        %8521 = vmatprep.subr.mxu0 %v7949
        %8522 = vmatpush1.xpose.msra.mxu0 %v7948
        %8523 = vmatprep.subr.mxu0 %v7951
        %8524 = vmatpush1.xpose.msra.mxu0 %v7950
        %8525 = vmatprep.subr.mxu0 %v7953
        %8526 = vmatpush1.xpose.msra.mxu0 %v7952
        %8527 = vmatprep.subr.mxu0 %v7955
        %8528 = vmatpush1.xpose.msra.mxu0 %v7954
        %8529 = vmatprep.subr.mxu0 %v7957
        %8530 = vmatpush1.xpose.msra.mxu0 %v7956
        %8531 = vmatprep.subr.mxu0 %v7959
        %8532 = vmatpush1.xpose.msra.mxu0 %v7958
        %8533 = vmatprep.subr.mxu0 %v7961
        %8534 = vmatpush1.xpose.msra.mxu0 %v7960
        %8535 = vmatprep.subr.mxu0 %v7963
        %8536 = vmatpush1.xpose.msra.mxu0 %v7962
        %8537 = vmatprep.subr.mxu0 %v7965
        %8538 = vmatpush1.xpose.msra.mxu0 %v7964
        %8539 = vmatprep.subr.mxu0 %v7967
        %8540 = vmatpush1.xpose.msra.mxu0 %v7966
        %8541 = vmatprep.subr.mxu0 %v7969
        %8542 = vmatpush1.xpose.msra.mxu0 %v7968
        %8543 = vmatprep.subr.mxu0 %v7971
        %8544 = vmatpush1.xpose.msra.mxu0 %v7970
        %8545 = vmatprep.subr.mxu0 %v7973
        %8546 = vmatpush1.xpose.msra.mxu0 %v7972
        %8547 = vmatprep.subr.mxu0 %v7975
        %8548 = vmatpush1.xpose.msra.mxu0 %v7974
        %8549 = vmatprep.subr.mxu0 %v7977
        %8550 = vmatpush1.xpose.msra.mxu0 %v7976
        %8551 = vmatprep.subr.mxu0 %v7979
        %8552 = vmatpush1.xpose.msra.mxu0 %v7978
        %8553 = vmatprep.subr.mxu0 %v7981
        %8554 = vmatpush1.xpose.msra.mxu0 %v7980
        %8555 = vmatprep.subr.mxu0 %v7983
        %8556 = vmatpush1.xpose.msra.mxu0 %v7982
        %8557 = vmatprep.subr.mxu0 %v7985
        %8558 = vmatpush1.xpose.msra.mxu0 %v7984
        %8559 = vmatprep.subr.mxu0 %v7987
        %8560 = vmatpush1.xpose.msra.mxu0 %v7986
        %8561 = vmatprep.subr.mxu0 %v7989
        %8562 = vmatpush1.xpose.msra.mxu0 %v7988
        %8563 = vmatprep.subr.mxu0 %v7991
        %8564 = vmatpush1.xpose.msra.mxu0 %v7990
        %8565 = vmatprep.subr.mxu0 %v7993
        %8566 = vmatpush1.xpose.msra.mxu0 %v7992
        %8567 = vmatprep.subr.mxu0 %v7995
        %8568 = vmatpush1.xpose.msra.mxu0 %v7994
        %8569 = vmatprep.subr.mxu0 %v7997
        %8570 = vmatpush1.xpose.msra.mxu0 %v7996
        %8571 = vmatprep.mubr.f32.mxu0 %v8504
        %8572 = vmatmul.mubr.f32.gmra.mrb[0].mxu0 %v8503
        %v8573 = vpop.f32.mrb[0].mxu0
        %v8574 = vadd.f32 0.0, %v8573
        %v8575 = vpop.f32.mrb[0].mxu0
        %v8576 = vadd.f32 0.0, %v8575
        %8577 = vdwg.mxu0
        %v8579 = vunpack.c.l.s4 1983009808
        %v8580 = vunpack.c.0.s8 %v8579
        %v8581 = vlaneseq
        %v8582 = vshrl.u32 %v8581, 7
        %v8583 = vsub.s32 %v8580, %v8582
        %v8584 = vrot.slane %v890, %v8583
        %v8585 = vcombine.high %v8584, %v8584
        %8588 = vmatprep.subr.mxu0 %v7999
        %8589 = vmatpush1.xpose.msra.mxu0 %v7998
        %8590 = vmatprep.subr.mxu0 %v8001
        %8591 = vmatpush1.xpose.msra.mxu0 %v8000
        %8592 = vmatprep.subr.mxu0 %v8003
        %8593 = vmatpush1.xpose.msra.mxu0 %v8002
        %8594 = vmatprep.subr.mxu0 %v8005
        %8595 = vmatpush1.xpose.msra.mxu0 %v8004
        %8596 = vmatprep.subr.mxu0 %v8007
        %8597 = vmatpush1.xpose.msra.mxu0 %v8006
        %8598 = vmatprep.subr.mxu0 %v8009
        %8599 = vmatpush1.xpose.msra.mxu0 %v8008
        %8600 = vmatprep.subr.mxu0 %v8011
        %8601 = vmatpush1.xpose.msra.mxu0 %v8010
        %8602 = vmatprep.subr.mxu0 %v8013
        %8603 = vmatpush1.xpose.msra.mxu0 %v8012
        %8604 = vmatprep.subr.mxu0 %v8015
        %8605 = vmatpush1.xpose.msra.mxu0 %v8014
        %8606 = vmatprep.subr.mxu0 %v8017
        %8607 = vmatpush1.xpose.msra.mxu0 %v8016
        %8608 = vmatprep.subr.mxu0 %v8019
        %8609 = vmatpush1.xpose.msra.mxu0 %v8018
        %8610 = vmatprep.subr.mxu0 %v8021
        %8611 = vmatpush1.xpose.msra.mxu0 %v8020
        %8612 = vmatprep.subr.mxu0 %v8023
        %8613 = vmatpush1.xpose.msra.mxu0 %v8022
        %8614 = vmatprep.subr.mxu0 %v8025
        %8615 = vmatpush1.xpose.msra.mxu0 %v8024
        %8616 = vmatprep.subr.mxu0 %v8027
        %8617 = vmatpush1.xpose.msra.mxu0 %v8026
        %8618 = vmatprep.subr.mxu0 %v8029
        %8619 = vmatpush1.xpose.msra.mxu0 %v8028
        %8620 = vmatprep.subr.mxu0 %v8031
        %8621 = vmatpush1.xpose.msra.mxu0 %v8030
        %8622 = vmatprep.subr.mxu0 %v8033
        %8623 = vmatpush1.xpose.msra.mxu0 %v8032
        %8624 = vmatprep.subr.mxu0 %v8035
        %8625 = vmatpush1.xpose.msra.mxu0 %v8034
        %8626 = vmatprep.subr.mxu0 %v8037
        %8627 = vmatpush1.xpose.msra.mxu0 %v8036
        %8628 = vmatprep.subr.mxu0 %v8039
        %8629 = vmatpush1.xpose.msra.mxu0 %v8038
        %8630 = vmatprep.subr.mxu0 %v8041
        %8631 = vmatpush1.xpose.msra.mxu0 %v8040
        %8632 = vmatprep.subr.mxu0 %v8043
        %8633 = vmatpush1.xpose.msra.mxu0 %v8042
        %8634 = vmatprep.subr.mxu0 %v8045
        %8635 = vmatpush1.xpose.msra.mxu0 %v8044
        %8636 = vmatprep.subr.mxu0 %v8047
        %8637 = vmatpush1.xpose.msra.mxu0 %v8046
        %8638 = vmatprep.subr.mxu0 %v8049
        %8639 = vmatpush1.xpose.msra.mxu0 %v8048
        %8640 = vmatprep.subr.mxu0 %v8051
        %8641 = vmatpush1.xpose.msra.mxu0 %v8050
        %8642 = vmatprep.subr.mxu0 %v8053
        %8643 = vmatpush1.xpose.msra.mxu0 %v8052
        %8644 = vmatprep.subr.mxu0 %v8055
        %8645 = vmatpush1.xpose.msra.mxu0 %v8054
        %8646 = vmatprep.subr.mxu0 %v8057
        %8647 = vmatpush1.xpose.msra.mxu0 %v8056
        %8648 = vmatprep.subr.mxu0 %v8059
        %8649 = vmatpush1.xpose.msra.mxu0 %v8058
        %8650 = vmatprep.subr.mxu0 %v8061
        %8651 = vmatpush1.xpose.msra.mxu0 %v8060
        %8652 = vmatprep.mubr.f32.mxu0 %v8585
        %8653 = vmatmul.mubr.f32.gmra.mrb[0].mxu0 %v8584
        %v8654 = vpop.f32.mrb[0].mxu0
        %v8655 = vadd.f32 0.0, %v8654
        %v8656 = vpop.f32.mrb[0].mxu0
        %v8657 = vadd.f32 0.0, %v8656
        %8658 = vdwg.mxu0
        %v8660 = vunpack.c.l.s4 1983009808
        %v8661 = vunpack.c.0.s8 %v8660
        %v8662 = vlaneseq
        %v8663 = vshrl.u32 %v8662, 7
        %v8664 = vsub.s32 %v8661, %v8663
        %v8665 = vrot.slane %v898, %v8664
        %v8666 = vcombine.high %v8665, %v8665
        %8669 = vmatprep.subr.mxu0 %v8063
        %8670 = vmatpush1.xpose.msra.mxu0 %v8062
        %8671 = vmatprep.subr.mxu0 %v8065
        %8672 = vmatpush1.xpose.msra.mxu0 %v8064
        %8673 = vmatprep.subr.mxu0 %v8067
        %8674 = vmatpush1.xpose.msra.mxu0 %v8066
        %8675 = vmatprep.subr.mxu0 %v8069
        %8676 = vmatpush1.xpose.msra.mxu0 %v8068
        %8677 = vmatprep.subr.mxu0 %v8071
        %8678 = vmatpush1.xpose.msra.mxu0 %v8070
        %8679 = vmatprep.subr.mxu0 %v8073
        %8680 = vmatpush1.xpose.msra.mxu0 %v8072
        %8681 = vmatprep.subr.mxu0 %v8075
        %8682 = vmatpush1.xpose.msra.mxu0 %v8074
        %8683 = vmatprep.subr.mxu0 %v8077
        %8684 = vmatpush1.xpose.msra.mxu0 %v8076
        %8685 = vmatprep.subr.mxu0 %v8079
        %8686 = vmatpush1.xpose.msra.mxu0 %v8078
        %8687 = vmatprep.subr.mxu0 %v8081
        %8688 = vmatpush1.xpose.msra.mxu0 %v8080
        %8689 = vmatprep.subr.mxu0 %v8083
        %8690 = vmatpush1.xpose.msra.mxu0 %v8082
        %8691 = vmatprep.subr.mxu0 %v8085
        %8692 = vmatpush1.xpose.msra.mxu0 %v8084
        %8693 = vmatprep.subr.mxu0 %v8087
        %8694 = vmatpush1.xpose.msra.mxu0 %v8086
        %8695 = vmatprep.subr.mxu0 %v8089
        %8696 = vmatpush1.xpose.msra.mxu0 %v8088
        %8697 = vmatprep.subr.mxu0 %v8091
        %8698 = vmatpush1.xpose.msra.mxu0 %v8090
        %8699 = vmatprep.subr.mxu0 %v8093
        %8700 = vmatpush1.xpose.msra.mxu0 %v8092
        %8701 = vmatprep.subr.mxu0 %v8095
        %8702 = vmatpush1.xpose.msra.mxu0 %v8094
        %8703 = vmatprep.subr.mxu0 %v8097
        %8704 = vmatpush1.xpose.msra.mxu0 %v8096
        %8705 = vmatprep.subr.mxu0 %v8099
        %8706 = vmatpush1.xpose.msra.mxu0 %v8098
        %8707 = vmatprep.subr.mxu0 %v8101
        %8708 = vmatpush1.xpose.msra.mxu0 %v8100
        %8709 = vmatprep.subr.mxu0 %v8103
        %8710 = vmatpush1.xpose.msra.mxu0 %v8102
        %8711 = vmatprep.subr.mxu0 %v8105
        %8712 = vmatpush1.xpose.msra.mxu0 %v8104
        %8713 = vmatprep.subr.mxu0 %v8107
        %8714 = vmatpush1.xpose.msra.mxu0 %v8106
        %8715 = vmatprep.subr.mxu0 %v8109
        %8716 = vmatpush1.xpose.msra.mxu0 %v8108
        %8717 = vmatprep.subr.mxu0 %v8111
        %8718 = vmatpush1.xpose.msra.mxu0 %v8110
        %8719 = vmatprep.subr.mxu0 %v8113
        %8720 = vmatpush1.xpose.msra.mxu0 %v8112
        %8721 = vmatprep.subr.mxu0 %v8115
        %8722 = vmatpush1.xpose.msra.mxu0 %v8114
        %8723 = vmatprep.subr.mxu0 %v8117
        %8724 = vmatpush1.xpose.msra.mxu0 %v8116
        %8725 = vmatprep.subr.mxu0 %v8119
        %8726 = vmatpush1.xpose.msra.mxu0 %v8118
        %8727 = vmatprep.subr.mxu0 %v8121
        %8728 = vmatpush1.xpose.msra.mxu0 %v8120
        %8729 = vmatprep.subr.mxu0 %v8123
        %8730 = vmatpush1.xpose.msra.mxu0 %v8122
        %8731 = vmatprep.subr.mxu0 %v8125
        %8732 = vmatpush1.xpose.msra.mxu0 %v8124
        %8733 = vmatprep.mubr.f32.mxu0 %v8666
        %8734 = vmatmul.mubr.f32.gmra.mrb[0].mxu0 %v8665
        %v8735 = vpop.f32.mrb[0].mxu0
        %v8736 = vadd.f32 0.0, %v8735
        %v8737 = vpop.f32.mrb[0].mxu0
        %v8738 = vadd.f32 0.0, %v8737
        %8739 = vdwg.mxu0
        %v8741 = vunpack.c.l.s4 1983009808
        %v8742 = vunpack.c.0.s8 %v8741
        %v8743 = vlaneseq
        %v8744 = vshrl.u32 %v8743, 7
        %v8745 = vsub.s32 %v8742, %v8744
        %v8746 = vrot.slane %v897, %v8745
        %v8747 = vcombine.high %v8746, %v8746
        %8750 = vmatprep.subr.mxu0 %v8127
        %8751 = vmatpush1.xpose.msra.mxu0 %v8126
        %8752 = vmatprep.subr.mxu0 %v8129
        %8753 = vmatpush1.xpose.msra.mxu0 %v8128
        %8754 = vmatprep.subr.mxu0 %v8131
        %8755 = vmatpush1.xpose.msra.mxu0 %v8130
        %8756 = vmatprep.subr.mxu0 %v8133
        %8757 = vmatpush1.xpose.msra.mxu0 %v8132
        %8758 = vmatprep.subr.mxu0 %v8135
        %8759 = vmatpush1.xpose.msra.mxu0 %v8134
        %8760 = vmatprep.subr.mxu0 %v8137
        %8761 = vmatpush1.xpose.msra.mxu0 %v8136
        %8762 = vmatprep.subr.mxu0 %v8139
        %8763 = vmatpush1.xpose.msra.mxu0 %v8138
        %8764 = vmatprep.subr.mxu0 %v8141
        %8765 = vmatpush1.xpose.msra.mxu0 %v8140
        %8766 = vmatprep.subr.mxu0 %v8143
        %8767 = vmatpush1.xpose.msra.mxu0 %v8142
        %8768 = vmatprep.subr.mxu0 %v8145
        %8769 = vmatpush1.xpose.msra.mxu0 %v8144
        %8770 = vmatprep.subr.mxu0 %v8147
        %8771 = vmatpush1.xpose.msra.mxu0 %v8146
        %8772 = vmatprep.subr.mxu0 %v8149
        %8773 = vmatpush1.xpose.msra.mxu0 %v8148
        %8774 = vmatprep.subr.mxu0 %v8151
        %8775 = vmatpush1.xpose.msra.mxu0 %v8150
        %8776 = vmatprep.subr.mxu0 %v8153
        %8777 = vmatpush1.xpose.msra.mxu0 %v8152
        %8778 = vmatprep.subr.mxu0 %v8155
        %8779 = vmatpush1.xpose.msra.mxu0 %v8154
        %8780 = vmatprep.subr.mxu0 %v8157
        %8781 = vmatpush1.xpose.msra.mxu0 %v8156
        %8782 = vmatprep.subr.mxu0 %v8159
        %8783 = vmatpush1.xpose.msra.mxu0 %v8158
        %8784 = vmatprep.subr.mxu0 %v8161
        %8785 = vmatpush1.xpose.msra.mxu0 %v8160
        %8786 = vmatprep.subr.mxu0 %v8163
        %8787 = vmatpush1.xpose.msra.mxu0 %v8162
        %8788 = vmatprep.subr.mxu0 %v8165
        %8789 = vmatpush1.xpose.msra.mxu0 %v8164
        %8790 = vmatprep.subr.mxu0 %v8167
        %8791 = vmatpush1.xpose.msra.mxu0 %v8166
        %8792 = vmatprep.subr.mxu0 %v8169
        %8793 = vmatpush1.xpose.msra.mxu0 %v8168
        %8794 = vmatprep.subr.mxu0 %v8171
        %8795 = vmatpush1.xpose.msra.mxu0 %v8170
        %8796 = vmatprep.subr.mxu0 %v8173
        %8797 = vmatpush1.xpose.msra.mxu0 %v8172
        %8798 = vmatprep.subr.mxu0 %v8175
        %8799 = vmatpush1.xpose.msra.mxu0 %v8174
        %8800 = vmatprep.subr.mxu0 %v8177
        %8801 = vmatpush1.xpose.msra.mxu0 %v8176
        %8802 = vmatprep.subr.mxu0 %v8179
        %8803 = vmatpush1.xpose.msra.mxu0 %v8178
        %8804 = vmatprep.subr.mxu0 %v8181
        %8805 = vmatpush1.xpose.msra.mxu0 %v8180
        %8806 = vmatprep.subr.mxu0 %v8183
        %8807 = vmatpush1.xpose.msra.mxu0 %v8182
        %8808 = vmatprep.subr.mxu0 %v8185
        %8809 = vmatpush1.xpose.msra.mxu0 %v8184
        %8810 = vmatprep.subr.mxu0 %v8187
        %8811 = vmatpush1.xpose.msra.mxu0 %v8186
        %8812 = vmatprep.subr.mxu0 %v8189
        %8813 = vmatpush1.xpose.msra.mxu0 %v8188
        %8814 = vmatprep.mubr.f32.mxu0 %v8747
        %8815 = vmatmul.mubr.f32.gmra.mrb[0].mxu0 %v8746
        %v8816 = vpop.f32.mrb[0].mxu0
        %v8817 = vadd.f32 0.0, %v8816
        %v8818 = vpop.f32.mrb[0].mxu0
        %v8819 = vadd.f32 0.0, %v8818
        %8820 = vdwg.mxu0
        %v8822 = vunpack.c.l.s4 1983009808
        %v8823 = vunpack.c.0.s8 %v8822
        %v8824 = vlaneseq
        %v8825 = vshrl.u32 %v8824, 7
        %v8826 = vsub.s32 %v8823, %v8825
        %v8827 = vrot.slane %v899, %v8826
        %v8828 = vcombine.high %v8827, %v8827
        %8831 = vmatprep.subr.mxu0 %v8191
        %8832 = vmatpush1.xpose.msra.mxu0 %v8190
        %8833 = vmatprep.subr.mxu0 %v8193
        %8834 = vmatpush1.xpose.msra.mxu0 %v8192
        %8835 = vmatprep.subr.mxu0 %v8195
        %8836 = vmatpush1.xpose.msra.mxu0 %v8194
        %8837 = vmatprep.subr.mxu0 %v8197
        %8838 = vmatpush1.xpose.msra.mxu0 %v8196
        %8839 = vmatprep.subr.mxu0 %v8199
        %8840 = vmatpush1.xpose.msra.mxu0 %v8198
        %8841 = vmatprep.subr.mxu0 %v8201
        %8842 = vmatpush1.xpose.msra.mxu0 %v8200
        %8843 = vmatprep.subr.mxu0 %v8203
        %8844 = vmatpush1.xpose.msra.mxu0 %v8202
        %8845 = vmatprep.subr.mxu0 %v8205
        %8846 = vmatpush1.xpose.msra.mxu0 %v8204
        %8847 = vmatprep.subr.mxu0 %v8207
        %8848 = vmatpush1.xpose.msra.mxu0 %v8206
        %8849 = vmatprep.subr.mxu0 %v8209
        %8850 = vmatpush1.xpose.msra.mxu0 %v8208
        %8851 = vmatprep.subr.mxu0 %v8211
        %8852 = vmatpush1.xpose.msra.mxu0 %v8210
        %8853 = vmatprep.subr.mxu0 %v8213
        %8854 = vmatpush1.xpose.msra.mxu0 %v8212
        %8855 = vmatprep.subr.mxu0 %v8215
        %8856 = vmatpush1.xpose.msra.mxu0 %v8214
        %8857 = vmatprep.subr.mxu0 %v8217
        %8858 = vmatpush1.xpose.msra.mxu0 %v8216
        %8859 = vmatprep.subr.mxu0 %v8219
        %8860 = vmatpush1.xpose.msra.mxu0 %v8218
        %8861 = vmatprep.subr.mxu0 %v8221
        %8862 = vmatpush1.xpose.msra.mxu0 %v8220
        %8863 = vmatprep.subr.mxu0 %v8223
        %8864 = vmatpush1.xpose.msra.mxu0 %v8222
        %8865 = vmatprep.subr.mxu0 %v8225
        %8866 = vmatpush1.xpose.msra.mxu0 %v8224
        %8867 = vmatprep.subr.mxu0 %v8227
        %8868 = vmatpush1.xpose.msra.mxu0 %v8226
        %8869 = vmatprep.subr.mxu0 %v8229
        %8870 = vmatpush1.xpose.msra.mxu0 %v8228
        %8871 = vmatprep.subr.mxu0 %v8231
        %8872 = vmatpush1.xpose.msra.mxu0 %v8230
        %8873 = vmatprep.subr.mxu0 %v8233
        %8874 = vmatpush1.xpose.msra.mxu0 %v8232
        %8875 = vmatprep.subr.mxu0 %v8235
        %8876 = vmatpush1.xpose.msra.mxu0 %v8234
        %8877 = vmatprep.subr.mxu0 %v8237
        %8878 = vmatpush1.xpose.msra.mxu0 %v8236
        %8879 = vmatprep.subr.mxu0 %v8239
        %8880 = vmatpush1.xpose.msra.mxu0 %v8238
        %8881 = vmatprep.subr.mxu0 %v8241
        %8882 = vmatpush1.xpose.msra.mxu0 %v8240
        %8883 = vmatprep.subr.mxu0 %v8243
        %8884 = vmatpush1.xpose.msra.mxu0 %v8242
        %8885 = vmatprep.subr.mxu0 %v8245
        %8886 = vmatpush1.xpose.msra.mxu0 %v8244
        %8887 = vmatprep.subr.mxu0 %v8247
        %8888 = vmatpush1.xpose.msra.mxu0 %v8246
        %8889 = vmatprep.subr.mxu0 %v8249
        %8890 = vmatpush1.xpose.msra.mxu0 %v8248
        %8891 = vmatprep.subr.mxu0 %v8251
        %8892 = vmatpush1.xpose.msra.mxu0 %v8250
        %8893 = vmatprep.subr.mxu0 %v8253
        %8894 = vmatpush1.xpose.msra.mxu0 %v8252
        %8895 = vmatprep.mubr.f32.mxu0 %v8828
        %8896 = vmatmul.mubr.f32.gmra.mrb[0].mxu0 %v8827
        %v8897 = vpop.f32.mrb[0].mxu0
        %v8898 = vadd.f32 0.0, %v8897
        %v8899 = vpop.f32.mrb[0].mxu0
        %v8900 = vadd.f32 0.0, %v8899
        %8901 = vdwg.mxu0
        %v8918 = vcombine.low %v8331, %v8333
        %v8920 = vunpack.c.l.s4 1983009808
        %v8921 = vunpack.c.0.s8 %v8920
        %v8922 = vlaneseq
        %v8923 = vshrl.u32 %v8922, 7
        %v8924 = vsub.s32 %v8921, %v8923
        %v8925 = vrot.slane %v8918, %v8924
        %v8926 = vcombine.low %v8412, %v8414
        %v8928 = vunpack.c.l.s4 1983009808
        %v8929 = vunpack.c.0.s8 %v8928
        %v8930 = vlaneseq
        %v8931 = vshrl.u32 %v8930, 7
        %v8932 = vsub.s32 %v8929, %v8931
        %v8933 = vrot.slane %v8926, %v8932
        %v8934 = vcombine.low %v8493, %v8495
        %v8936 = vunpack.c.l.s4 1983009808
        %v8937 = vunpack.c.0.s8 %v8936
        %v8938 = vlaneseq
        %v8939 = vshrl.u32 %v8938, 7
        %v8940 = vsub.s32 %v8937, %v8939
        %v8941 = vrot.slane %v8934, %v8940
        %v8942 = vcombine.low %v8574, %v8576
        %v8944 = vunpack.c.l.s4 1983009808
        %v8945 = vunpack.c.0.s8 %v8944
        %v8946 = vlaneseq
        %v8947 = vshrl.u32 %v8946, 7
        %v8948 = vsub.s32 %v8945, %v8947
        %v8949 = vrot.slane %v8942, %v8948
        %v8950 = vcombine.low %v8655, %v8657
        %v8952 = vunpack.c.l.s4 1983009808
        %v8953 = vunpack.c.0.s8 %v8952
        %v8954 = vlaneseq
        %v8955 = vshrl.u32 %v8954, 7
        %v8956 = vsub.s32 %v8953, %v8955
        %v8957 = vrot.slane %v8950, %v8956
        %v8958 = vcombine.low %v8736, %v8738
        %v8960 = vunpack.c.l.s4 1983009808
        %v8961 = vunpack.c.0.s8 %v8960
        %v8962 = vlaneseq
        %v8963 = vshrl.u32 %v8962, 7
        %v8964 = vsub.s32 %v8961, %v8963
        %v8965 = vrot.slane %v8958, %v8964
        %v8966 = vcombine.low %v8817, %v8819
        %v8968 = vunpack.c.l.s4 1983009808
        %v8969 = vunpack.c.0.s8 %v8968
        %v8970 = vlaneseq
        %v8971 = vshrl.u32 %v8970, 7
        %v8972 = vsub.s32 %v8969, %v8971
        %v8973 = vrot.slane %v8966, %v8972
        %v8974 = vcombine.low %v8898, %v8900
        %v8976 = vunpack.c.l.s4 1983009808
        %v8977 = vunpack.c.0.s8 %v8976
        %v8978 = vlaneseq
        %v8979 = vshrl.u32 %v8978, 7
        %v8980 = vsub.s32 %v8977, %v8979
        %v8981 = vrot.slane %v8974, %v8980
        %v8982 = vld [vmem:[%s5] sm:$0xff]
        %v8983 = vld [vmem:[%s5 + $0x8] sm:$0xff]
        %v8984 = vld [vmem:[%s6] sm:$0xff]
        %v8985 = vld [vmem:[%s6 + $0x8] sm:$0xff]
        %8987 = vset.pattern.permute.xlu0 0
        %8988 = vperm.xlu0 %8987, %v8984
        %v8989 = vpop.permute.xlu0 %8988
        %8992 = vset.pattern.permute.xlu0 0
        %8993 = vperm.xlu0 %8992, %v8985
        %v8994 = vpop.permute.xlu0 %8993
        %v8996 = vcombine.low %v8925, %v8933
        %v8997 = vcombine.low %v8941, %v8949
        %v8999 = vunpack.c.l.s4 1983009808
        %v9000 = vunpack.c.0.s8 %v8999
        %v9001 = vlaneseq
        %v9002 = vshrl.u32 %v9001, 7
        %v9003 = vsub.s32 %v9000, %v9002
        %v9004 = vrot.slane %v8996, %v9003
        %v9006 = vunpack.c.l.s4 1983009808
        %v9007 = vunpack.c.0.s8 %v9006
        %v9008 = vlaneseq
        %v9009 = vshrl.u32 %v9008, 7
        %v9010 = vsub.s32 %v9007, %v9009
        %v9011 = vrot.slane %v8997, %v9010
        %v9012 = vcombine.low %v9004, %v9011
        %v9013 = vcombine.high %v9004, %v9011
        %v9014 = vcombine.low %v8957, %v8965
        %v9015 = vcombine.low %v8973, %v8981
        %v9017 = vunpack.c.l.s4 1983009808
        %v9018 = vunpack.c.0.s8 %v9017
        %v9019 = vlaneseq
        %v9020 = vshrl.u32 %v9019, 7
        %v9021 = vsub.s32 %v9018, %v9020
        %v9022 = vrot.slane %v9014, %v9021
        %v9024 = vunpack.c.l.s4 1983009808
        %v9025 = vunpack.c.0.s8 %v9024
        %v9026 = vlaneseq
        %v9027 = vshrl.u32 %v9026, 7
        %v9028 = vsub.s32 %v9025, %v9027
        %v9029 = vrot.slane %v9015, %v9028
        %v9030 = vcombine.low %v9022, %v9029
        %v9031 = vcombine.high %v9022, %v9029
        %v9037 = vsel %vm435, %v8982, 0
        %v9040 = vsel %vm435, %v8983, 0
        %9042 = vmatprep.subr.mxu0 %v9013
        %9043 = vmatpush1.msra.mxu0 %v9012
        %9044 = vmatprep.subr.mxu0 %v9031
        %9045 = vmatpush1.msra.mxu0 %v9030
        %9046 = vmatprep.subr.mxu0 0.0
        %9047 = vmatpush1.msra.mxu0 0.0
        %9048 = vmatprep.subr.mxu0 0.0
        %9049 = vmatpush1.msra.mxu0 0.0
        %9050 = vmatprep.subr.mxu0 0.0
        %9051 = vmatpush1.msra.mxu0 0.0
        %9052 = vmatprep.subr.mxu0 0.0
        %9053 = vmatpush1.msra.mxu0 0.0
        %9054 = vmatprep.subr.mxu0 0.0
        %9055 = vmatpush1.msra.mxu0 0.0
        %9056 = vmatprep.subr.mxu0 0.0
        %9057 = vmatpush1.msra.mxu0 0.0
        %9058 = vmatprep.subr.mxu0 0.0
        %9059 = vmatpush1.msra.mxu0 0.0
        %9060 = vmatprep.subr.mxu0 0.0
        %9061 = vmatpush1.msra.mxu0 0.0
        %9062 = vmatprep.subr.mxu0 0.0
        %9063 = vmatpush1.msra.mxu0 0.0
        %9064 = vmatprep.subr.mxu0 0.0
        %9065 = vmatpush1.msra.mxu0 0.0
        %9066 = vmatprep.subr.mxu0 0.0
        %9067 = vmatpush1.msra.mxu0 0.0
        %9068 = vmatprep.subr.mxu0 0.0
        %9069 = vmatpush1.msra.mxu0 0.0
        %9070 = vmatprep.subr.mxu0 0.0
        %9071 = vmatpush1.msra.mxu0 0.0
        %9072 = vmatprep.subr.mxu0 0.0
        %9073 = vmatpush1.msra.mxu0 0.0
        %9074 = vmatprep.subr.mxu0 0.0
        %9075 = vmatpush1.msra.mxu0 0.0
        %9076 = vmatprep.subr.mxu0 0.0
        %9077 = vmatpush1.msra.mxu0 0.0
        %9078 = vmatprep.subr.mxu0 0.0
        %9079 = vmatpush1.msra.mxu0 0.0
        %9080 = vmatprep.subr.mxu0 0.0
        %9081 = vmatpush1.msra.mxu0 0.0
        %9082 = vmatprep.subr.mxu0 0.0
        %9083 = vmatpush1.msra.mxu0 0.0
        %9084 = vmatprep.subr.mxu0 0.0
        %9085 = vmatpush1.msra.mxu0 0.0
        %9086 = vmatprep.subr.mxu0 0.0
        %9087 = vmatpush1.msra.mxu0 0.0
        %9088 = vmatprep.subr.mxu0 0.0
        %9089 = vmatpush1.msra.mxu0 0.0
        %9090 = vmatprep.subr.mxu0 0.0
        %9091 = vmatpush1.msra.mxu0 0.0
        %9092 = vmatprep.subr.mxu0 0.0
        %9093 = vmatpush1.msra.mxu0 0.0
        %9094 = vmatprep.subr.mxu0 0.0
        %9095 = vmatpush1.msra.mxu0 0.0
        %9096 = vmatprep.subr.mxu0 0.0
        %9097 = vmatpush1.msra.mxu0 0.0
        %9098 = vmatprep.subr.mxu0 0.0
        %9099 = vmatpush1.msra.mxu0 0.0
        %9100 = vmatprep.subr.mxu0 0.0
        %9101 = vmatpush1.msra.mxu0 0.0
        %9102 = vmatprep.subr.mxu0 0.0
        %9103 = vmatpush1.msra.mxu0 0.0
        %9104 = vmatprep.subr.mxu0 0.0
        %9105 = vmatpush1.msra.mxu0 0.0
        %9106 = vmatprep.mubr.f32.mxu0 0.0
        %9107 = vmatmul.mubr.f32.gmra.mrb[0].mxu0 %v9037
        %v9108 = vpop.f32.mrb[0].mxu0
        %v9109 = vadd.f32 %v8989, %v9108
        %v9110 = vpop.f32.mrb[0].mxu0
        %v9111 = vadd.f32 %v8989, %v9110
        %9112 = vmatprep.mubr.f32.mxu0 0.0
        %9113 = vmatmul.mubr.f32.gmra.mrb[0].mxu0 %v9040
        %v9114 = vpop.f32.mrb[0].mxu0
        %v9115 = vadd.f32 %v8994, %v9114
        %v9116 = vpop.f32.mrb[0].mxu0
        %v9117 = vadd.f32 %v8994, %v9116
        %9118 = vdwg.mxu0
        %s9119 = sld [smem:[#allocation3]]
        %v9120 = vstv %s9119
        %v9121 = vmul.f32 %v9120, %v609
        %v9122 = vmul.f32 %v9120, %v611
        %s9123 = sld [smem:[#allocation3 + $0x1]]
        %v9124 = vstv %s9123
        %v9125 = vmul.f32 %v9124, %v618
        %9127 = vset.pattern.permute.xlu0 0
        %9128 = vperm.xlu0 %9127, %v9121
        %v9129 = vpop.permute.xlu0 %9128
        %9132 = vset.pattern.permute.xlu0 0
        %9133 = vperm.xlu0 %9132, %v9122
        %v9134 = vpop.permute.xlu0 %9133
        %v9137 = vlaneseq
        %v9138 = vshrl.u32 %v9137, 7
        %v9139 = vsub.s32 0, %v9138
        %v9140 = vrot.slane %v9125, %v9139
        %v9141 = vlaneseq
        %v9142 = vshrl.u32 %v9141, 7
        %v9143 = vsub.s32 1, %v9142
        %v9144 = vrot.slane %v9125, %v9143
        %v9147 = vadd.f32 %v9129, %v9140
        %v9148 = vadd.f32 %v9129, %v9144
        %v9149 = vadd.f32 %v9134, %v9140
        %v9150 = vadd.f32 %v9134, %v9144
        %s9151 = sld [smem:[#allocation3 + $0x2]]
        %v9152 = vstv %s9151
        %v9153 = vmul.f32 %v9152, %v9109
        %v9154 = vmul.f32 %v9152, %v9111
        %v9155 = vmul.f32 %v9152, %v9115
        %v9156 = vmul.f32 %v9152, %v9117
        %v9157 = vadd.f32 %v9147, %v9153
        %v9158 = vadd.f32 %v9148, %v9154
        %v9159 = vadd.f32 %v9149, %v9155
        %v9160 = vadd.f32 %v9150, %v9156
        %s9161 = sld [smem:[#allocation3 + $0x3]]
        %v9162 = vstv %s9161
        %v9163 = vmul.f32 %v9162, %v420
        %v9164 = vmul.f32 %v9162, %v421
        %v9165 = vmul.f32 %v9162, %v422
        %v9166 = vmul.f32 %v9162, %v423
        %v9167 = vadd.f32 %v9157, %v9163
        %v9168 = vadd.f32 %v9158, %v9164
        %v9169 = vadd.f32 %v9159, %v9165
        %v9170 = vadd.f32 %v9160, %v9166
        %9171 = vst [vmem:[%s419] sm:$0xff] %v9167
        %9172 = vst [vmem:[%s419 + $0x8] sm:$0xff] %v9168
        %9173 = vst [vmem:[%s419 + $0x10] sm:$0xff] %v9169
        %9174 = vst [vmem:[%s419 + $0x18] sm:$0xff] %v9170
        %p9175 = scmp.lt.s32.totalorder %s25, 1
        %s9176 = scalar_select %p9175, %s25, 1
        %s9177 = smul.addr %s9176, 4
        %s9178 = smul.addr %s9177, 8
        %s9179 = scalar_lea.vmem %s11, %s9178
        // Predicated region
        $region69: #{searchable_attention_block.1} parent=63 // pred_check
          %p9180 = pneg %p284
        $region70: #{searchable_attention_block.1} parent=63 // pred_check_branch
          %9182 = sbr.rel (%p9180) target = $region72
        $region71: #{searchable_attention_block.1} parent=63 // pred_region
          _
        $region72: #{searchable_attention_block.1} parent=63 // pred_fallthru
          _
      $region64: #{searchable_attention_block.1} parent=5 // pred_fallthru
        _
      %p9183 = scmp.le.s32.totalorder 2, %s20
      // Predicated region
      $region73: #{searchable_attention_block.1} parent=5 // pred_check
        %p9184 = pneg %p9183
      $region74: #{searchable_attention_block.1} parent=5 // pred_check_branch
        %9186 = sbr.rel (%p9184) target = $region76
      $region75: #{searchable_attention_block.1} parent=5 // pred_region
        %s9187 = ssub.s32 %s20, 2
        // Predicated region
        $region77: #{searchable_attention_block.1} parent=75 // pred_check
          %p9188 = pneg %p290
        $region78: #{searchable_attention_block.1} parent=75 // pred_check_branch
          %9190 = sbr.rel (%p9188) target = $region80
        $region79: #{searchable_attention_block.1} parent=75 // pred_region
          %p9191 = scmp.lt.s32.totalorder %s26, 1
          %s9192 = scalar_select %p9191, %s26, 1
          %s9193 = smul.addr %s9192, 4
          %s9194 = smul.addr %s9193, 8
          %s9195 = scalar_lea.vmem %s11, %s9194
        $region80: #{searchable_attention_block.1} parent=75 // pred_fallthru
          _
      $region76: #{searchable_attention_block.1} parent=5 // pred_fallthru
        _
    $region6: #{searchable_attention_block.1} parent=1 // loop_footer
      %s24 = sadd.s32 1, %s20
    $region7: #{searchable_attention_block.1} parent=1 // loop_footer_branch
      %19 = sbr.rel target = $region3
    $region8: #{searchable_attention_block.1} parent=1 // loop_exit
      _
    %9196 = vsyncpa [#allocation4], 1
    %s9197 = scalar_lea.sflag [#allocation4], 1
    %9198 = vsyncpa %s9197, 1

</llo_original>
